<compile_context>
chip_gen: v7x
topology: tpu7x:2x2x1
jax: 0.10.0
libtpu: 0.0.40
codegen_flags: <defaults>
</compile_context>

<pallas_src>
import functools
import math

import jax
import jax.numpy as jnp
from jax.experimental import pallas as pl
from jax.experimental.pallas import tpu as pltpu

HIDDEN = 16            # TAGConv out_channels
K_HOPS = 3             # PyG TAGConv default K
LEAKY_SLOPE = 0.02
BN_EPS = 1e-5          # PyG MLP default norm='batch_norm'; eval mode, default stats
LANES = 128
MXU_PREC = jax.lax.Precision.HIGHEST


def _round8(n):
    return ((n + 7) // 8) * 8


def _param_layout(num_features, num_classes):
    """Row offsets (all multiples of 8) of each block in the packed [rows, 128] slab."""
    del num_classes  # classes live on lanes; no extra rows needed
    layout, off = {}, 0

    def add(name, nrows):
        nonlocal off
        layout[name] = off
        off += _round8(nrows)

    add("cw1", (K_HOPS + 1) * num_features)   # conv1 hop weights [(K+1)*F, 16]
    add("cw2", (K_HOPS + 1) * HIDDEN)         # conv2 hop weights [(K+1)*16, 16]
    add("cw3", (K_HOPS + 1) * HIDDEN)         # conv3 hop weights [(K+1)*16, 16]
    add("cb", 3)                              # conv biases: one row/layer, lanes 0:16
    add("w1", HIDDEN)                         # MLP lin1 [16, 64]   (BN folded)
    add("w2", 64)                             # MLP lin2 [64, 16]   (BN folded)
    add("w3", HIDDEN)                         # MLP lin3 [16, C]
    add("mb", 3)                              # MLP biases: b1(64) / b2(16) / b3(C)
    return layout, off


def tagcn_kernel(x_ref, adj_ref, params_ref, out_ref, hops_ref, *, layout):
    adj = adj_ref[...]
    num_classes = out_ref.shape[1]
    cb_off, mb_off = layout["cb"], layout["mb"]

    def leaky(v):
        return jnp.where(v >= 0, v, LEAKY_SLOPE * v)

    def dot(a, b):
        return jnp.dot(a, b, preferred_element_type=jnp.float32, precision=MXU_PREC)

    def tag_conv(h, w_off, layer):
        """TAGConv: out = concat_k(A_hat^k h) @ W_packed + b, via one packed matmul."""
        din = h.shape[1]
        packed = (K_HOPS + 1) * din
        hops_ref[:, 0:din] = h                       # hop 0
        for k in range(1, K_HOPS + 1):
            # TODO(synk): cast adj/h to bf16 here for large N (v6e/v7x MXU is bf16-native).
            h = dot(adj, h)                          # A_hat^k h
            hops_ref[:, k * din:(k + 1) * din] = h   # cheap masked lane store
        w = params_ref[w_off:w_off + packed, 0:HIDDEN]
        b = params_ref[cb_off + layer:cb_off + layer + 1, 0:HIDDEN]
        return dot(hops_ref[:, 0:packed], w) + b

    # conv1 -> leaky -> conv2 -> leaky -> conv3   (dropout=False in the module)
    h = leaky(tag_conv(x_ref[...], layout["cw1"], 0))
    h = leaky(tag_conv(h, layout["cw2"], 1))
    h = tag_conv(h, layout["cw3"], 2)

    # MLP [16, 64, 16, C]: lin -> batch_norm -> leaky_relu (hidden), plain last layer.
    # Eval-mode default-stat BN was folded into w1/w2/b1/b2 on the host.
    # TODO(synk): with *trained* BN running stats, fold the per-channel scale/shift
    # into w1/b1 and w2/b2 the same way on the host before packing the slab.
    w1 = params_ref[layout["w1"]:layout["w1"] + HIDDEN, 0:64]
    b1 = params_ref[mb_off:mb_off + 1, 0:64]
    z = leaky(dot(h, w1) + b1)
    w2 = params_ref[layout["w2"]:layout["w2"] + 64, 0:HIDDEN]
    b2 = params_ref[mb_off + 1:mb_off + 2, 0:HIDDEN]
    z = leaky(dot(z, w2) + b2)
    w3 = params_ref[layout["w3"]:layout["w3"] + HIDDEN, 0:num_classes]
    b3 = params_ref[mb_off + 2:mb_off + 3, 0:num_classes]
    z = dot(z, w3) + b3

    # log_softmax over the class axis (dim=1)
    m = jnp.max(z, axis=-1, keepdims=True)
    lse = jnp.log(jnp.sum(jnp.exp(z - m), axis=-1, keepdims=True)) + m
    out_ref[...] = z - lse


def build_normalized_adjacency(edge_index, num_nodes):
    """gcn_norm (symmetric, add_self_loops=False) as a dense matrix.

    adj[i, j] = d_i^-1/2 * d_j^-1/2 for every edge j -> i (PyG message direction).
    Static per graph -- build once and reuse across forward calls.
    """
    src, dst = edge_index[0], edge_index[1]
    a = jnp.zeros((num_nodes, num_nodes), jnp.float32).at[dst, src].add(1.0)
    deg = jnp.sum(a, axis=1)
    d_inv_sqrt = jnp.where(deg > 0, jax.lax.rsqrt(jnp.maximum(deg, 1e-12)), 0.0)
    return d_inv_sqrt[:, None] * a * d_inv_sqrt[None, :]


def tagcn_forward(x, adj, params, num_classes):
    """Forward pass matching TAGCN.forward(x, edge_index) in eval mode."""
    n, num_features = x.shape
    layout, total_rows = _param_layout(num_features, num_classes)
    assert params.shape == (total_rows, LANES)

    # Hop scratch: [N, (K+1)*max(din)] rounded up to a lane-dense width.
    hops_w = max((K_HOPS + 1) * num_features, (K_HOPS + 1) * HIDDEN)
    hops_w = ((hops_w + LANES - 1) // LANES) * LANES

    # Everything lives in VMEM; size the scoped limit from the actual buffers
    # (v5e's default is only 16 MiB) and cap below v7x's 64 MiB physical VMEM.
    buffer_bytes = 4 * (x.size + adj.size + params.size + n * hops_w + n * num_classes)
    vmem_limit = int(min(64 * 1024 * 1024, max(4 * buffer_bytes, 4 * 1024 * 1024)))

    # Advisory cost estimate so XLA schedules around this tiny custom call.
    prop_flops = 2 * n * n * K_HOPS * (num_features + 2 * HIDDEN)
    weight_flops = 2 * n * HIDDEN * (K_HOPS + 1) * (num_features + 2 * HIDDEN)
    mlp_flops = 2 * n * (HIDDEN * 64 + 64 * HIDDEN + HIDDEN * num_classes)
    cost = pl.CostEstimate(
        flops=prop_flops + weight_flops + mlp_flops,
        transcendentals=n * (num_classes + 1),
        bytes_accessed=int(buffer_bytes),
    )

    kernel = functools.partial(tagcn_kernel, layout=layout)
    vmem = lambda: pl.BlockSpec(memory_space=pltpu.MemorySpace.VMEM)

    # TODO(synk): for large N, pad out_shape to (N, 128) lane-dense and slice [:, :C]
    # in the wrapper; negligible at these sizes.
    return pl.pallas_call(
        kernel,
        in_specs=[vmem(), vmem(), vmem()],
        out_specs=vmem(),
        out_shape=jax.ShapeDtypeStruct((n, num_classes), jnp.float32),
        scratch_shapes=[pltpu.VMEM((n, hops_w), jnp.float32)],
        compiler_params=pltpu.CompilerParams(vmem_limit_bytes=vmem_limit),
        cost_estimate=cost,
    )(x, adj, params)


def make_params(key, num_features, num_classes):
    """Deterministic synthetic parameters packed into one [rows, 128] f32 slab."""
    layout, total_rows = _param_layout(num_features, num_classes)
    k = key

    def nxt():
        nonlocal k
        k, sub = jax.random.split(k)
        return sub

    def dense(din, dout):
        return jax.random.normal(nxt(), (din, dout), jnp.float32) / math.sqrt(float(din))

    slab = jnp.zeros((total_rows, LANES), jnp.float32)

    def put(name, val):
        nonlocal slab
        r0 = layout[name]
        slab = slab.at[r0:r0 + val.shape[0], 0:val.shape[1]].set(val)

    # --- 3 TAGConv layers: row-packed (K+1)-hop weights + one bias row per layer. ---
    conv_b = jnp.zeros((3, HIDDEN), jnp.float32)
    for i, (name, din) in enumerate((("cw1", num_features), ("cw2", HIDDEN), ("cw3", HIDDEN))):
        put(name, dense((K_HOPS + 1) * din, HIDDEN))
        conv_b = conv_b.at[i].set(jax.random.normal(nxt(), (HIDDEN,), jnp.float32) * 0.01)
    put("cb", conv_b)

    # --- MLP [16, 64, 16, C]; fold eval-mode default-stat BN scale into w/b. --------
    bn_scale = 1.0 / math.sqrt(1.0 + BN_EPS)
    put("w1", dense(HIDDEN, 64) * bn_scale)
    put("w2", dense(64, HIDDEN) * bn_scale)
    put("w3", dense(HIDDEN, num_classes))
    mlp_b = jnp.zeros((3, LANES), jnp.float32)
    mlp_b = mlp_b.at[0, :64].set(jax.random.normal(nxt(), (64,), jnp.float32) * 0.01 * bn_scale)
    mlp_b = mlp_b.at[1, :HIDDEN].set(jax.random.normal(nxt(), (HIDDEN,), jnp.float32) * 0.01 * bn_scale)
    mlp_b = mlp_b.at[2, :num_classes].set(jax.random.normal(nxt(), (num_classes,), jnp.float32) * 0.01)
    put("mb", mlp_b)

    return slab


if __name__ == "__main__":
    key = jax.random.PRNGKey(0)
    N = 16                 # number of graph nodes
    num_features = 8
    num_classes = 4

    key, kx = jax.random.split(key)
    x = jax.random.normal(kx, (N, num_features), jnp.float32)

    # Deterministic graph: ring edges j -> (j+1) % N plus self loops, PyG-style [2, E].
    src = jnp.concatenate([jnp.arange(N), jnp.arange(N)]).astype(jnp.int32)
    dst = jnp.concatenate([(jnp.arange(N) + 1) % N, jnp.arange(N)]).astype(jnp.int32)
    edge_index = jnp.stack([src, dst])

    # Static per graph: build the normalized dense adjacency ONCE, reuse every call.
    adj = build_normalized_adjacency(edge_index, N)
    params = make_params(key, num_features, num_classes)

    out = tagcn_forward(x, adj, params, num_classes)
    jax.block_until_ready(out)
    assert out.shape == (N, num_classes)
    assert bool(jnp.all(jnp.isfinite(out)))
    print("KERNEL_OK")
</pallas_src>

<mosaic_0001>
module attributes {stable_mosaic.version = 11 : i64} {
  func.func @tagcn_kernel(%arg0: memref<16x8xf32, #tpu.memory_space<vmem>>, %arg1: memref<16x16xf32, #tpu.memory_space<vmem>>, %arg2: memref<272x128xf32, #tpu.memory_space<vmem>>, %arg3: memref<16x4xf32, #tpu.memory_space<vmem>>, %arg4: memref<16x128xf32, #tpu.memory_space<vmem>>) attributes {dimension_semantics = [], scalar_prefetch = 0 : i64, scratch_operands = 1 : i64, tpu.core_type = #tpu.core_type<tc>} {
    %c0 = arith.constant 0 : index
    %c0_0 = arith.constant 0 : index
    %0 = vector.load %arg1[%c0, %c0_0] : memref<16x16xf32, #tpu.memory_space<vmem>>, vector<16x16xf32>
    %c0_1 = arith.constant 0 : index
    %c0_2 = arith.constant 0 : index
    %1 = vector.load %arg0[%c0_1, %c0_2] : memref<16x8xf32, #tpu.memory_space<vmem>>, vector<16x8xf32>
    %c0_3 = arith.constant 0 : index
    %c0_4 = arith.constant 0 : index
    %2 = vector.load %arg4[%c0_3, %c0_4] : memref<16x128xf32, #tpu.memory_space<vmem>>, vector<16x8xf32>
    tpu.vector_store %arg4[%c0_3, %c0_4], %1 {strides = array<i32>} : memref<16x128xf32, #tpu.memory_space<vmem>>, vector<16x8xf32>,
    %cst = arith.constant dense<0.000000e+00> : vector<16x8xf32>
    %3 = tpu.matmul %0, %1, %cst {dimension_numbers = #tpu.dot_dimension_numbers<[1], [0], [0], [1], [0, 0, 1, 1], [], []>, precision = #tpu.contract_precision<fp32>} : vector<16x16xf32>, vector<16x8xf32>, vector<16x8xf32> -> vector<16x8xf32>
    %c0_5 = arith.constant 0 : index
    %c8 = arith.constant 8 : index
    %4 = vector.load %arg4[%c0_5, %c8] : memref<16x128xf32, #tpu.memory_space<vmem>>, vector<16x8xf32>
    tpu.vector_store %arg4[%c0_5, %c8], %3 {strides = array<i32>} : memref<16x128xf32, #tpu.memory_space<vmem>>, vector<16x8xf32>,
    %cst_6 = arith.constant dense<0.000000e+00> : vector<16x8xf32>
    %5 = tpu.matmul %0, %3, %cst_6 {dimension_numbers = #tpu.dot_dimension_numbers<[1], [0], [0], [1], [0, 0, 1, 1], [], []>, precision = #tpu.contract_precision<fp32>} : vector<16x16xf32>, vector<16x8xf32>, vector<16x8xf32> -> vector<16x8xf32>
    %c0_7 = arith.constant 0 : index
    %c16 = arith.constant 16 : index
    %6 = vector.load %arg4[%c0_7, %c16] : memref<16x128xf32, #tpu.memory_space<vmem>>, vector<16x8xf32>
    tpu.vector_store %arg4[%c0_7, %c16], %5 {strides = array<i32>} : memref<16x128xf32, #tpu.memory_space<vmem>>, vector<16x8xf32>,
    %cst_8 = arith.constant dense<0.000000e+00> : vector<16x8xf32>
    %7 = tpu.matmul %0, %5, %cst_8 {dimension_numbers = #tpu.dot_dimension_numbers<[1], [0], [0], [1], [0, 0, 1, 1], [], []>, precision = #tpu.contract_precision<fp32>} : vector<16x16xf32>, vector<16x8xf32>, vector<16x8xf32> -> vector<16x8xf32>
    %c0_9 = arith.constant 0 : index
    %c24 = arith.constant 24 : index
    %8 = vector.load %arg4[%c0_9, %c24] : memref<16x128xf32, #tpu.memory_space<vmem>>, vector<16x8xf32>
    tpu.vector_store %arg4[%c0_9, %c24], %7 {strides = array<i32>} : memref<16x128xf32, #tpu.memory_space<vmem>>, vector<16x8xf32>,
    %c0_10 = arith.constant 0 : index
    %c0_11 = arith.constant 0 : index
    %9 = vector.load %arg2[%c0_10, %c0_11] : memref<272x128xf32, #tpu.memory_space<vmem>>, vector<32x16xf32>
    %c160 = arith.constant 160 : index
    %c0_12 = arith.constant 0 : index
    %10 = vector.load %arg2[%c160, %c0_12] : memref<272x128xf32, #tpu.memory_space<vmem>>, vector<1x16xf32>
    %c0_13 = arith.constant 0 : index
    %c0_14 = arith.constant 0 : index
    %11 = vector.load %arg4[%c0_13, %c0_14] : memref<16x128xf32, #tpu.memory_space<vmem>>, vector<16x32xf32>
    %cst_15 = arith.constant dense<0.000000e+00> : vector<16x16xf32>
    %12 = tpu.matmul %11, %9, %cst_15 {dimension_numbers = #tpu.dot_dimension_numbers<[1], [0], [0], [1], [0, 0, 1, 1], [], []>, precision = #tpu.contract_precision<fp32>} : vector<16x32xf32>, vector<32x16xf32>, vector<16x16xf32> -> vector<16x16xf32>
    %13 = vector.broadcast %10 : vector<1x16xf32> to vector<16x16xf32>
    %14 = arith.addf %12, %13 : vector<16x16xf32>
    %cst_16 = arith.constant 0.000000e+00 : f32
    %15 = vector.broadcast %cst_16 : f32 to vector<16x16xf32>
    %16 = arith.cmpf oge, %14, %15 : vector<16x16xf32>
    %cst_17 = arith.constant 2.000000e-02 : f32
    %17 = vector.broadcast %cst_17 : f32 to vector<16x16xf32>
    %18 = arith.mulf %17, %14 : vector<16x16xf32>
    %19 = arith.select %16, %14, %18 : vector<16x16xi1>, vector<16x16xf32>
    %c0_18 = arith.constant 0 : index
    %c0_19 = arith.constant 0 : index
    %20 = vector.load %arg4[%c0_18, %c0_19] : memref<16x128xf32, #tpu.memory_space<vmem>>, vector<16x16xf32>
    tpu.vector_store %arg4[%c0_18, %c0_19], %19 {strides = array<i32>} : memref<16x128xf32, #tpu.memory_space<vmem>>, vector<16x16xf32>,
    %cst_20 = arith.constant dense<0.000000e+00> : vector<16x16xf32>
    %21 = tpu.matmul %0, %19, %cst_20 {dimension_numbers = #tpu.dot_dimension_numbers<[1], [0], [0], [1], [0, 0, 1, 1], [], []>, precision = #tpu.contract_precision<fp32>} : vector<16x16xf32>, vector<16x16xf32>, vector<16x16xf32> -> vector<16x16xf32>
    %c0_21 = arith.constant 0 : index
    %c16_22 = arith.constant 16 : index
    %22 = vector.load %arg4[%c0_21, %c16_22] : memref<16x128xf32, #tpu.memory_space<vmem>>, vector<16x16xf32>
    tpu.vector_store %arg4[%c0_21, %c16_22], %21 {strides = array<i32>} : memref<16x128xf32, #tpu.memory_space<vmem>>, vector<16x16xf32>,
    %cst_23 = arith.constant dense<0.000000e+00> : vector<16x16xf32>
    %23 = tpu.matmul %0, %21, %cst_23 {dimension_numbers = #tpu.dot_dimension_numbers<[1], [0], [0], [1], [0, 0, 1, 1], [], []>, precision = #tpu.contract_precision<fp32>} : vector<16x16xf32>, vector<16x16xf32>, vector<16x16xf32> -> vector<16x16xf32>
    %c0_24 = arith.constant 0 : index
    %c32 = arith.constant 32 : index
    %24 = vector.load %arg4[%c0_24, %c32] : memref<16x128xf32, #tpu.memory_space<vmem>>, vector<16x16xf32>
    tpu.vector_store %arg4[%c0_24, %c32], %23 {strides = array<i32>} : memref<16x128xf32, #tpu.memory_space<vmem>>, vector<16x16xf32>,
    %cst_25 = arith.constant dense<0.000000e+00> : vector<16x16xf32>
    %25 = tpu.matmul %0, %23, %cst_25 {dimension_numbers = #tpu.dot_dimension_numbers<[1], [0], [0], [1], [0, 0, 1, 1], [], []>, precision = #tpu.contract_precision<fp32>} : vector<16x16xf32>, vector<16x16xf32>, vector<16x16xf32> -> vector<16x16xf32>
    %c0_26 = arith.constant 0 : index
    %c48 = arith.constant 48 : index
    %26 = vector.load %arg4[%c0_26, %c48] : memref<16x128xf32, #tpu.memory_space<vmem>>, vector<16x16xf32>
    tpu.vector_store %arg4[%c0_26, %c48], %25 {strides = array<i32>} : memref<16x128xf32, #tpu.memory_space<vmem>>, vector<16x16xf32>,
    %c32_27 = arith.constant 32 : index
    %c0_28 = arith.constant 0 : index
    %27 = vector.load %arg2[%c32_27, %c0_28] : memref<272x128xf32, #tpu.memory_space<vmem>>, vector<64x16xf32>
    %c161 = arith.constant 161 : index
    %c0_29 = arith.constant 0 : index
    %28 = vector.load %arg2[%c161, %c0_29] : memref<272x128xf32, #tpu.memory_space<vmem>>, vector<1x16xf32>
    %c0_30 = arith.constant 0 : index
    %c0_31 = arith.constant 0 : index
    %29 = vector.load %arg4[%c0_30, %c0_31] : memref<16x128xf32, #tpu.memory_space<vmem>>, vector<16x64xf32>
    %cst_32 = arith.constant dense<0.000000e+00> : vector<16x16xf32>
    %30 = tpu.matmul %29, %27, %cst_32 {dimension_numbers = #tpu.dot_dimension_numbers<[1], [0], [0], [1], [0, 0, 1, 1], [], []>, precision = #tpu.contract_precision<fp32>} : vector<16x64xf32>, vector<64x16xf32>, vector<16x16xf32> -> vector<16x16xf32>
    %31 = vector.broadcast %28 : vector<1x16xf32> to vector<16x16xf32>
    %32 = arith.addf %30, %31 : vector<16x16xf32>
    %cst_33 = arith.constant 0.000000e+00 : f32
    %33 = vector.broadcast %cst_33 : f32 to vector<16x16xf32>
    %34 = arith.cmpf oge, %32, %33 : vector<16x16xf32>
    %cst_34 = arith.constant 2.000000e-02 : f32
    %35 = vector.broadcast %cst_34 : f32 to vector<16x16xf32>
    %36 = arith.mulf %35, %32 : vector<16x16xf32>
    %37 = arith.select %34, %32, %36 : vector<16x16xi1>, vector<16x16xf32>
    %c0_35 = arith.constant 0 : index
    %c0_36 = arith.constant 0 : index
    %38 = vector.load %arg4[%c0_35, %c0_36] : memref<16x128xf32, #tpu.memory_space<vmem>>, vector<16x16xf32>
    tpu.vector_store %arg4[%c0_35, %c0_36], %37 {strides = array<i32>} : memref<16x128xf32, #tpu.memory_space<vmem>>, vector<16x16xf32>,
    %cst_37 = arith.constant dense<0.000000e+00> : vector<16x16xf32>
    %39 = tpu.matmul %0, %37, %cst_37 {dimension_numbers = #tpu.dot_dimension_numbers<[1], [0], [0], [1], [0, 0, 1, 1], [], []>, precision = #tpu.contract_precision<fp32>} : vector<16x16xf32>, vector<16x16xf32>, vector<16x16xf32> -> vector<16x16xf32>
    %c0_38 = arith.constant 0 : index
    %c16_39 = arith.constant 16 : index
    %40 = vector.load %arg4[%c0_38, %c16_39] : memref<16x128xf32, #tpu.memory_space<vmem>>, vector<16x16xf32>
    tpu.vector_store %arg4[%c0_38, %c16_39], %39 {strides = array<i32>} : memref<16x128xf32, #tpu.memory_space<vmem>>, vector<16x16xf32>,
    %cst_40 = arith.constant dense<0.000000e+00> : vector<16x16xf32>
    %41 = tpu.matmul %0, %39, %cst_40 {dimension_numbers = #tpu.dot_dimension_numbers<[1], [0], [0], [1], [0, 0, 1, 1], [], []>, precision = #tpu.contract_precision<fp32>} : vector<16x16xf32>, vector<16x16xf32>, vector<16x16xf32> -> vector<16x16xf32>
    %c0_41 = arith.constant 0 : index
    %c32_42 = arith.constant 32 : index
    %42 = vector.load %arg4[%c0_41, %c32_42] : memref<16x128xf32, #tpu.memory_space<vmem>>, vector<16x16xf32>
    tpu.vector_store %arg4[%c0_41, %c32_42], %41 {strides = array<i32>} : memref<16x128xf32, #tpu.memory_space<vmem>>, vector<16x16xf32>,
    %cst_43 = arith.constant dense<0.000000e+00> : vector<16x16xf32>
    %43 = tpu.matmul %0, %41, %cst_43 {dimension_numbers = #tpu.dot_dimension_numbers<[1], [0], [0], [1], [0, 0, 1, 1], [], []>, precision = #tpu.contract_precision<fp32>} : vector<16x16xf32>, vector<16x16xf32>, vector<16x16xf32> -> vector<16x16xf32>
    %c0_44 = arith.constant 0 : index
    %c48_45 = arith.constant 48 : index
    %44 = vector.load %arg4[%c0_44, %c48_45] : memref<16x128xf32, #tpu.memory_space<vmem>>, vector<16x16xf32>
    tpu.vector_store %arg4[%c0_44, %c48_45], %43 {strides = array<i32>} : memref<16x128xf32, #tpu.memory_space<vmem>>, vector<16x16xf32>,
    %c96 = arith.constant 96 : index
    %c0_46 = arith.constant 0 : index
    %45 = vector.load %arg2[%c96, %c0_46] : memref<272x128xf32, #tpu.memory_space<vmem>>, vector<64x16xf32>
    %c162 = arith.constant 162 : index
    %c0_47 = arith.constant 0 : index
    %46 = vector.load %arg2[%c162, %c0_47] : memref<272x128xf32, #tpu.memory_space<vmem>>, vector<1x16xf32>
    %c0_48 = arith.constant 0 : index
    %c0_49 = arith.constant 0 : index
    %47 = vector.load %arg4[%c0_48, %c0_49] : memref<16x128xf32, #tpu.memory_space<vmem>>, vector<16x64xf32>
    %cst_50 = arith.constant dense<0.000000e+00> : vector<16x16xf32>
    %48 = tpu.matmul %47, %45, %cst_50 {dimension_numbers = #tpu.dot_dimension_numbers<[1], [0], [0], [1], [0, 0, 1, 1], [], []>, precision = #tpu.contract_precision<fp32>} : vector<16x64xf32>, vector<64x16xf32>, vector<16x16xf32> -> vector<16x16xf32>
    %49 = vector.broadcast %46 : vector<1x16xf32> to vector<16x16xf32>
    %50 = arith.addf %48, %49 : vector<16x16xf32>
    %c168 = arith.constant 168 : index
    %c0_51 = arith.constant 0 : index
    %51 = vector.load %arg2[%c168, %c0_51] : memref<272x128xf32, #tpu.memory_space<vmem>>, vector<16x64xf32>
    %c264 = arith.constant 264 : index
    %c0_52 = arith.constant 0 : index
    %52 = vector.load %arg2[%c264, %c0_52] : memref<272x128xf32, #tpu.memory_space<vmem>>, vector<1x64xf32>
    %cst_53 = arith.constant dense<0.000000e+00> : vector<16x64xf32>
    %53 = tpu.matmul %50, %51, %cst_53 {dimension_numbers = #tpu.dot_dimension_numbers<[1], [0], [0], [1], [0, 0, 1, 1], [], []>, precision = #tpu.contract_precision<fp32>} : vector<16x16xf32>, vector<16x64xf32>, vector<16x64xf32> -> vector<16x64xf32>
    %54 = vector.broadcast %52 : vector<1x64xf32> to vector<16x64xf32>
    %55 = arith.addf %53, %54 : vector<16x64xf32>
    %cst_54 = arith.constant 0.000000e+00 : f32
    %56 = vector.broadcast %cst_54 : f32 to vector<16x64xf32>
    %57 = arith.cmpf oge, %55, %56 : vector<16x64xf32>
    %cst_55 = arith.constant 2.000000e-02 : f32
    %58 = vector.broadcast %cst_55 : f32 to vector<16x64xf32>
    %59 = arith.mulf %58, %55 : vector<16x64xf32>
    %60 = arith.select %57, %55, %59 : vector<16x64xi1>, vector<16x64xf32>
    %c184 = arith.constant 184 : index
    %c0_56 = arith.constant 0 : index
    %61 = vector.load %arg2[%c184, %c0_56] : memref<272x128xf32, #tpu.memory_space<vmem>>, vector<64x16xf32>
    %c265 = arith.constant 265 : index
    %c0_57 = arith.constant 0 : index
    %62 = vector.load %arg2[%c265, %c0_57] : memref<272x128xf32, #tpu.memory_space<vmem>>, vector<1x16xf32>
    %cst_58 = arith.constant dense<0.000000e+00> : vector<16x16xf32>
    %63 = tpu.matmul %60, %61, %cst_58 {dimension_numbers = #tpu.dot_dimension_numbers<[1], [0], [0], [1], [0, 0, 1, 1], [], []>, precision = #tpu.contract_precision<fp32>} : vector<16x64xf32>, vector<64x16xf32>, vector<16x16xf32> -> vector<16x16xf32>
    %64 = vector.broadcast %62 : vector<1x16xf32> to vector<16x16xf32>
    %65 = arith.addf %63, %64 : vector<16x16xf32>
    %cst_59 = arith.constant 0.000000e+00 : f32
    %66 = vector.broadcast %cst_59 : f32 to vector<16x16xf32>
    %67 = arith.cmpf oge, %65, %66 : vector<16x16xf32>
    %cst_60 = arith.constant 2.000000e-02 : f32
    %68 = vector.broadcast %cst_60 : f32 to vector<16x16xf32>
    %69 = arith.mulf %68, %65 : vector<16x16xf32>
    %70 = arith.select %67, %65, %69 : vector<16x16xi1>, vector<16x16xf32>
    %c248 = arith.constant 248 : index
    %c0_61 = arith.constant 0 : index
    %71 = vector.load %arg2[%c248, %c0_61] : memref<272x128xf32, #tpu.memory_space<vmem>>, vector<16x4xf32>
    %c266 = arith.constant 266 : index
    %c0_62 = arith.constant 0 : index
    %72 = vector.load %arg2[%c266, %c0_62] : memref<272x128xf32, #tpu.memory_space<vmem>>, vector<1x4xf32>
    %cst_63 = arith.constant dense<0.000000e+00> : vector<16x4xf32>
    %73 = tpu.matmul %70, %71, %cst_63 {dimension_numbers = #tpu.dot_dimension_numbers<[1], [0], [0], [1], [0, 0, 1, 1], [], []>, precision = #tpu.contract_precision<fp32>} : vector<16x16xf32>, vector<16x4xf32>, vector<16x4xf32> -> vector<16x4xf32>
    %74 = vector.broadcast %72 : vector<1x4xf32> to vector<16x4xf32>
    %75 = arith.addf %73, %74 : vector<16x4xf32>
    %cst_64 = arith.constant dense<0xFF800000> : vector<16xf32>
    %76 = vector.multi_reduction <maximumf>, %75, %cst_64 [1] : vector<16x4xf32> to vector<16xf32>
    %77 = vector.shape_cast %76 : vector<16xf32> to vector<16x1xf32>
    %78 = vector.broadcast %77 : vector<16x1xf32> to vector<16x4xf32>
    %79 = arith.subf %75, %78 : vector<16x4xf32>
    %80 = math.exp %79 : vector<16x4xf32>
    %cst_65 = arith.constant dense<0.000000e+00> : vector<16xf32>
    %81 = vector.multi_reduction <add>, %80, %cst_65 [1] : vector<16x4xf32> to vector<16xf32>
    %82 = vector.shape_cast %81 : vector<16xf32> to vector<16x1xf32>
    %83 = math.log %82 : vector<16x1xf32>
    %84 = arith.addf %83, %77 : vector<16x1xf32>
    %85 = vector.broadcast %84 : vector<16x1xf32> to vector<16x4xf32>
    %86 = arith.subf %75, %85 : vector<16x4xf32>
    %c0_66 = arith.constant 0 : index
    %c0_67 = arith.constant 0 : index
    %87 = vector.load %arg3[%c0_66, %c0_67] : memref<16x4xf32, #tpu.memory_space<vmem>>, vector<16x4xf32>
    tpu.vector_store %arg3[%c0_66, %c0_67], %86 {strides = array<i32>} : memref<16x4xf32, #tpu.memory_space<vmem>>, vector<16x4xf32>,
    return
  }
}

</mosaic_0001>

<llo_original>
// kernel: tpu_custom_call.1
$region0: #{tpu_custom_call.1}
  #allocation0 [shape = 'u32[]', space=smem, size = 0x4, offset = 0x4, fixed_abs, tag = 'smem constant byte address 0x4 - core index']
  #allocation1 [shape = 'u32[144,128]{1,0:T(1,128)}', space=vmem, size = 0x12000, scoped, tag = 'internal scratch']
  #allocation2 [shape = 'f32[16,128]{1,0:T(8,128)}', space=vmem, size = 0x2000, scoped, tag = 'scratch operand']
  %s0 = inlined_call_operand.vmem [shape: f32[16,8], index: 0, kind: input, shape index: {}]
  %s1 = inlined_call_operand.vmem [shape: f32[16,16], index: 1, kind: input, shape index: {}]
  %s2 = inlined_call_operand.hbm [shape: f32[272,128], index: 2, kind: input, shape index: {}]
  %s3 = inlined_call_operand.vmem [shape: f32[16,4], index: 3, kind: output, shape index: {}]
  %s4 = sld [smem:[#allocation0]]
  $region26: #{tpu_custom_call.1} parent=0
    _
  %s6 = ssub.s32 1, %s4
  %s7 = scalar_select 0, %s6, %s4
  $region1: #{tpu_custom_call.1} parent=0
    #allocation3 [shape = 'u8[139264]{0}', space=vmem, size = 0x22000, scoped, tag = 'input window, operand 2, single buffered']
    #allocation4 [shape = 's32[1]{0}', space=sflag, size = 0x4, scoped, tag = 'scoped memory for tpu_custom_call.1']
    %8 = vsyncpa [#allocation4], 0
    // Predicated region
    $region2: #{tpu_custom_call.1} parent=1 // pred_check
      _
    $region3: #{tpu_custom_call.1} parent=1 // pred_check_branch
      %10 = sbr.rel (0) target = $region5
    $region4: #{tpu_custom_call.1} parent=1 // pred_region
      _
    $region5: #{tpu_custom_call.1} parent=1 // pred_fallthru
      _
    // Predicated region
    $region6: #{tpu_custom_call.1} parent=1 // pred_check
      _
    $region7: #{tpu_custom_call.1} parent=1 // pred_check_branch
      %12 = sbr.rel (0) target = $region9
    $region8: #{tpu_custom_call.1} parent=1 // pred_region
      _
    $region9: #{tpu_custom_call.1} parent=1 // pred_fallthru
      _
    // Predicated region
    $region10: #{tpu_custom_call.1} parent=1 // pred_check
      _
    $region11: #{tpu_custom_call.1} parent=1 // pred_check_branch
      %14 = sbr.rel (0) target = $region13
    $region12: #{tpu_custom_call.1} parent=1 // pred_region
      %s16 = ssub.s32 4352, 4352
      %17 = vsyncadd [#allocation4], %s16
      %s18 = sshll.u32 [#allocation3], 4
      %s19 = int_to_ptr.vmem [resolvable:$true] %s18
      %24 = dma.hbm_to_vmem [thread:$0]  %s2, 4352, %s19, [#allocation4], 128, 128, 8
    $region13: #{tpu_custom_call.1} parent=1 // pred_fallthru
      _
    // Predicated region
    $region14: #{tpu_custom_call.1} parent=1 // pred_check
      _
    $region15: #{tpu_custom_call.1} parent=1 // pred_check_branch
      %26 = sbr.rel (0) target = $region17
    $region16: #{tpu_custom_call.1} parent=1 // pred_region
      %27 = dma.done [#allocation4], 4352
    $region17: #{tpu_custom_call.1} parent=1 // pred_fallthru
      _
    %v28 = vld [vmem:[%s1] sm:$0xff]
    %v29 = vld [vmem:[%s1 + $0x8] sm:$0xff]
    %v30 = vld [vmem:[%s0] sm:$0xff]
    %v31 = vld [vmem:[%s0 + $0x8] sm:$0xff]
    %vm32 = vcmask 64512
    %33 = vst.msk [vmem:[#allocation2] sm:$0xff] %vm32, %v30
    %34 = vst.msk [vmem:[#allocation2 + $0x8] sm:$0xff] %vm32, %v31
    %vm35 = vcmask 130048
    %v37 = vsel %vm35, %v28, 0
    %v40 = vsel %vm35, %v29, 0
    %42 = vmatprep.subr.mxu0 0.0
    %v43 = vand.u32 %v30, 4294901760
    %44 = vmatpush1.msra.mxu0 %v43
    %45 = vmatprep.subr.mxu0 0.0
    %v46 = vand.u32 %v31, 4294901760
    %47 = vmatpush1.msra.mxu0 %v46
    %48 = vmatprep.subr.mxu0 0.0
    %49 = vmatpush1.msra.mxu0 0.0
    %50 = vmatprep.subr.mxu0 0.0
    %51 = vmatpush1.msra.mxu0 0.0
    %52 = vmatprep.subr.mxu0 0.0
    %53 = vmatpush1.msra.mxu0 0.0
    %54 = vmatprep.subr.mxu0 0.0
    %55 = vmatpush1.msra.mxu0 0.0
    %56 = vmatprep.subr.mxu0 0.0
    %57 = vmatpush1.msra.mxu0 0.0
    %58 = vmatprep.subr.mxu0 0.0
    %59 = vmatpush1.msra.mxu0 0.0
    %60 = vmatprep.subr.mxu0 0.0
    %61 = vmatpush1.msra.mxu0 0.0
    %62 = vmatprep.subr.mxu0 0.0
    %63 = vmatpush1.msra.mxu0 0.0
    %64 = vmatprep.subr.mxu0 0.0
    %65 = vmatpush1.msra.mxu0 0.0
    %66 = vmatprep.subr.mxu0 0.0
    %67 = vmatpush1.msra.mxu0 0.0
    %68 = vmatprep.subr.mxu0 0.0
    %69 = vmatpush1.msra.mxu0 0.0
    %70 = vmatprep.subr.mxu0 0.0
    %71 = vmatpush1.msra.mxu0 0.0
    %72 = vmatprep.subr.mxu0 0.0
    %73 = vmatpush1.msra.mxu0 0.0
    %74 = vmatprep.subr.mxu0 0.0
    %75 = vmatpush1.msra.mxu0 0.0
    %76 = vmatprep.subr.mxu0 0.0
    %77 = vmatpush1.msra.mxu0 0.0
    %78 = vmatprep.subr.mxu0 0.0
    %79 = vmatpush1.msra.mxu0 0.0
    %80 = vmatprep.subr.mxu0 0.0
    %81 = vmatpush1.msra.mxu0 0.0
    %82 = vmatprep.subr.mxu0 0.0
    %83 = vmatpush1.msra.mxu0 0.0
    %84 = vmatprep.subr.mxu0 0.0
    %85 = vmatpush1.msra.mxu0 0.0
    %86 = vmatprep.subr.mxu0 0.0
    %87 = vmatpush1.msra.mxu0 0.0
    %88 = vmatprep.subr.mxu0 0.0
    %89 = vmatpush1.msra.mxu0 0.0
    %90 = vmatprep.subr.mxu0 0.0
    %91 = vmatpush1.msra.mxu0 0.0
    %92 = vmatprep.subr.mxu0 0.0
    %93 = vmatpush1.msra.mxu0 0.0
    %94 = vmatprep.subr.mxu0 0.0
    %95 = vmatpush1.msra.mxu0 0.0
    %96 = vmatprep.subr.mxu0 0.0
    %97 = vmatpush1.msra.mxu0 0.0
    %98 = vmatprep.subr.mxu0 0.0
    %99 = vmatpush1.msra.mxu0 0.0
    %100 = vmatprep.subr.mxu0 0.0
    %101 = vmatpush1.msra.mxu0 0.0
    %102 = vmatprep.subr.mxu0 0.0
    %103 = vmatpush1.msra.mxu0 0.0
    %104 = vmatprep.subr.mxu0 0.0
    %105 = vmatpush1.msra.mxu0 0.0
    %106 = vmatprep.subr.mxu0 0.0
    %107 = vmatpush1.msra.mxu0 0.0
    %108 = vmatprep.mubr.f32.mxu0 0.0
    %v109 = vand.u32 %v37, 4294901760
    %v110 = vsub.f32 %v37, %v109
    %v111 = vand.u32 %v110, 4294901760
    %v112 = vsub.f32 %v110, %v111
    %v113 = vand.u32 %v112, 4294901760
    %114 = vmatmul.mubr.f32.gmra.mrb[0].mxu0 %v113
    %v115 = vpop.f32.mrb[0].mxu0
    %v116 = vadd.f32 0.0, %v115
    %v117 = vpop.f32.mrb[0].mxu0
    %118 = vmatprep.mubr.f32.mxu0 0.0
    %v119 = vand.u32 %v40, 4294901760
    %v120 = vsub.f32 %v40, %v119
    %v121 = vand.u32 %v120, 4294901760
    %v122 = vsub.f32 %v120, %v121
    %v123 = vand.u32 %v122, 4294901760
    %124 = vmatmul.mubr.f32.gmra.mrb[0].mxu0 %v123
    %v125 = vpop.f32.mrb[0].mxu0
    %v126 = vadd.f32 0.0, %v125
    %v127 = vpop.f32.mrb[0].mxu0
    %128 = vdwg.mxu0
    %129 = vmatprep.subr.mxu0 0.0
    %v130 = vand.u32 %v30, 4294901760
    %v131 = vsub.f32 %v30, %v130
    %v132 = vand.u32 %v131, 4294901760
    %v133 = vsub.f32 %v131, %v132
    %v134 = vand.u32 %v133, 4294901760
    %135 = vmatpush1.msra.mxu0 %v134
    %136 = vmatprep.subr.mxu0 0.0
    %v137 = vand.u32 %v31, 4294901760
    %v138 = vsub.f32 %v31, %v137
    %v139 = vand.u32 %v138, 4294901760
    %v140 = vsub.f32 %v138, %v139
    %v141 = vand.u32 %v140, 4294901760
    %142 = vmatpush1.msra.mxu0 %v141
    %143 = vmatprep.subr.mxu0 0.0
    %144 = vmatpush1.msra.mxu0 0.0
    %145 = vmatprep.subr.mxu0 0.0
    %146 = vmatpush1.msra.mxu0 0.0
    %147 = vmatprep.subr.mxu0 0.0
    %148 = vmatpush1.msra.mxu0 0.0
    %149 = vmatprep.subr.mxu0 0.0
    %150 = vmatpush1.msra.mxu0 0.0
    %151 = vmatprep.subr.mxu0 0.0
    %152 = vmatpush1.msra.mxu0 0.0
    %153 = vmatprep.subr.mxu0 0.0
    %154 = vmatpush1.msra.mxu0 0.0
    %155 = vmatprep.subr.mxu0 0.0
    %156 = vmatpush1.msra.mxu0 0.0
    %157 = vmatprep.subr.mxu0 0.0
    %158 = vmatpush1.msra.mxu0 0.0
    %159 = vmatprep.subr.mxu0 0.0
    %160 = vmatpush1.msra.mxu0 0.0
    %161 = vmatprep.subr.mxu0 0.0
    %162 = vmatpush1.msra.mxu0 0.0
    %163 = vmatprep.subr.mxu0 0.0
    %164 = vmatpush1.msra.mxu0 0.0
    %165 = vmatprep.subr.mxu0 0.0
    %166 = vmatpush1.msra.mxu0 0.0
    %167 = vmatprep.subr.mxu0 0.0
    %168 = vmatpush1.msra.mxu0 0.0
    %169 = vmatprep.subr.mxu0 0.0
    %170 = vmatpush1.msra.mxu0 0.0
    %171 = vmatprep.subr.mxu0 0.0
    %172 = vmatpush1.msra.mxu0 0.0
    %173 = vmatprep.subr.mxu0 0.0
    %174 = vmatpush1.msra.mxu0 0.0
    %175 = vmatprep.subr.mxu0 0.0
    %176 = vmatpush1.msra.mxu0 0.0
    %177 = vmatprep.subr.mxu0 0.0
    %178 = vmatpush1.msra.mxu0 0.0
    %179 = vmatprep.subr.mxu0 0.0
    %180 = vmatpush1.msra.mxu0 0.0
    %181 = vmatprep.subr.mxu0 0.0
    %182 = vmatpush1.msra.mxu0 0.0
    %183 = vmatprep.subr.mxu0 0.0
    %184 = vmatpush1.msra.mxu0 0.0
    %185 = vmatprep.subr.mxu0 0.0
    %186 = vmatpush1.msra.mxu0 0.0
    %187 = vmatprep.subr.mxu0 0.0
    %188 = vmatpush1.msra.mxu0 0.0
    %189 = vmatprep.subr.mxu0 0.0
    %190 = vmatpush1.msra.mxu0 0.0
    %191 = vmatprep.subr.mxu0 0.0
    %192 = vmatpush1.msra.mxu0 0.0
    %193 = vmatprep.subr.mxu0 0.0
    %194 = vmatpush1.msra.mxu0 0.0
    %195 = vmatprep.subr.mxu0 0.0
    %196 = vmatpush1.msra.mxu0 0.0
    %197 = vmatprep.subr.mxu0 0.0
    %198 = vmatpush1.msra.mxu0 0.0
    %199 = vmatprep.subr.mxu0 0.0
    %200 = vmatpush1.msra.mxu0 0.0
    %201 = vmatprep.subr.mxu0 0.0
    %202 = vmatpush1.msra.mxu0 0.0
    %203 = vmatprep.mubr.f32.mxu0 0.0
    %v204 = vand.u32 %v37, 4294901760
    %205 = vmatmul.mubr.f32.gmra.mrb[0].mxu0 %v204
    %v206 = vpop.f32.mrb[0].mxu0
    %v207 = vadd.f32 %v116, %v206
    %v208 = vpop.f32.mrb[0].mxu0
    %209 = vmatprep.mubr.f32.mxu0 0.0
    %v210 = vand.u32 %v40, 4294901760
    %211 = vmatmul.mubr.f32.gmra.mrb[0].mxu0 %v210
    %v212 = vpop.f32.mrb[0].mxu0
    %v213 = vadd.f32 %v126, %v212
    %v214 = vpop.f32.mrb[0].mxu0
    %215 = vdwg.mxu0
    %216 = vmatprep.subr.mxu0 0.0
    %v217 = vand.u32 %v30, 4294901760
    %v218 = vsub.f32 %v30, %v217
    %219 = vmatpush1.msra.mxu0 %v218
    %220 = vmatprep.subr.mxu0 0.0
    %v221 = vand.u32 %v31, 4294901760
    %v222 = vsub.f32 %v31, %v221
    %223 = vmatpush1.msra.mxu0 %v222
    %224 = vmatprep.subr.mxu0 0.0
    %225 = vmatpush1.msra.mxu0 0.0
    %226 = vmatprep.subr.mxu0 0.0
    %227 = vmatpush1.msra.mxu0 0.0
    %228 = vmatprep.subr.mxu0 0.0
    %229 = vmatpush1.msra.mxu0 0.0
    %230 = vmatprep.subr.mxu0 0.0
    %231 = vmatpush1.msra.mxu0 0.0
    %232 = vmatprep.subr.mxu0 0.0
    %233 = vmatpush1.msra.mxu0 0.0
    %234 = vmatprep.subr.mxu0 0.0
    %235 = vmatpush1.msra.mxu0 0.0
    %236 = vmatprep.subr.mxu0 0.0
    %237 = vmatpush1.msra.mxu0 0.0
    %238 = vmatprep.subr.mxu0 0.0
    %239 = vmatpush1.msra.mxu0 0.0
    %240 = vmatprep.subr.mxu0 0.0
    %241 = vmatpush1.msra.mxu0 0.0
    %242 = vmatprep.subr.mxu0 0.0
    %243 = vmatpush1.msra.mxu0 0.0
    %244 = vmatprep.subr.mxu0 0.0
    %245 = vmatpush1.msra.mxu0 0.0
    %246 = vmatprep.subr.mxu0 0.0
    %247 = vmatpush1.msra.mxu0 0.0
    %248 = vmatprep.subr.mxu0 0.0
    %249 = vmatpush1.msra.mxu0 0.0
    %250 = vmatprep.subr.mxu0 0.0
    %251 = vmatpush1.msra.mxu0 0.0
    %252 = vmatprep.subr.mxu0 0.0
    %253 = vmatpush1.msra.mxu0 0.0
    %254 = vmatprep.subr.mxu0 0.0
    %255 = vmatpush1.msra.mxu0 0.0
    %256 = vmatprep.subr.mxu0 0.0
    %257 = vmatpush1.msra.mxu0 0.0
    %258 = vmatprep.subr.mxu0 0.0
    %259 = vmatpush1.msra.mxu0 0.0
    %260 = vmatprep.subr.mxu0 0.0
    %261 = vmatpush1.msra.mxu0 0.0
    %262 = vmatprep.subr.mxu0 0.0
    %263 = vmatpush1.msra.mxu0 0.0
    %264 = vmatprep.subr.mxu0 0.0
    %265 = vmatpush1.msra.mxu0 0.0
    %266 = vmatprep.subr.mxu0 0.0
    %267 = vmatpush1.msra.mxu0 0.0
    %268 = vmatprep.subr.mxu0 0.0
    %269 = vmatpush1.msra.mxu0 0.0
    %270 = vmatprep.subr.mxu0 0.0
    %271 = vmatpush1.msra.mxu0 0.0
    %272 = vmatprep.subr.mxu0 0.0
    %273 = vmatpush1.msra.mxu0 0.0
    %274 = vmatprep.subr.mxu0 0.0
    %275 = vmatpush1.msra.mxu0 0.0
    %276 = vmatprep.subr.mxu0 0.0
    %277 = vmatpush1.msra.mxu0 0.0
    %278 = vmatprep.subr.mxu0 0.0
    %279 = vmatpush1.msra.mxu0 0.0
    %280 = vmatprep.subr.mxu0 0.0
    %281 = vmatpush1.msra.mxu0 0.0
    %282 = vmatprep.subr.mxu0 0.0
    %283 = vmatpush1.msra.mxu0 0.0
    %284 = vmatprep.mubr.f32.mxu0 0.0
    %v285 = vand.u32 %v37, 4294901760
    %v286 = vsub.f32 %v37, %v285
    %287 = vmatmul.mubr.f32.gmra.mrb[0].mxu0 %v286
    %v288 = vpop.f32.mrb[0].mxu0
    %v289 = vadd.f32 %v207, %v288
    %v290 = vpop.f32.mrb[0].mxu0
    %291 = vmatprep.mubr.f32.mxu0 0.0
    %v292 = vand.u32 %v40, 4294901760
    %v293 = vsub.f32 %v40, %v292
    %294 = vmatmul.mubr.f32.gmra.mrb[0].mxu0 %v293
    %v295 = vpop.f32.mrb[0].mxu0
    %v296 = vadd.f32 %v213, %v295
    %v297 = vpop.f32.mrb[0].mxu0
    %298 = vdwg.mxu0
    %299 = vmatprep.subr.mxu0 0.0
    %v300 = vand.u32 %v30, 4294901760
    %301 = vmatpush1.msra.mxu0 %v300
    %302 = vmatprep.subr.mxu0 0.0
    %v303 = vand.u32 %v31, 4294901760
    %304 = vmatpush1.msra.mxu0 %v303
    %305 = vmatprep.subr.mxu0 0.0
    %306 = vmatpush1.msra.mxu0 0.0
    %307 = vmatprep.subr.mxu0 0.0
    %308 = vmatpush1.msra.mxu0 0.0
    %309 = vmatprep.subr.mxu0 0.0
    %310 = vmatpush1.msra.mxu0 0.0
    %311 = vmatprep.subr.mxu0 0.0
    %312 = vmatpush1.msra.mxu0 0.0
    %313 = vmatprep.subr.mxu0 0.0
    %314 = vmatpush1.msra.mxu0 0.0
    %315 = vmatprep.subr.mxu0 0.0
    %316 = vmatpush1.msra.mxu0 0.0
    %317 = vmatprep.subr.mxu0 0.0
    %318 = vmatpush1.msra.mxu0 0.0
    %319 = vmatprep.subr.mxu0 0.0
    %320 = vmatpush1.msra.mxu0 0.0
    %321 = vmatprep.subr.mxu0 0.0
    %322 = vmatpush1.msra.mxu0 0.0
    %323 = vmatprep.subr.mxu0 0.0
    %324 = vmatpush1.msra.mxu0 0.0
    %325 = vmatprep.subr.mxu0 0.0
    %326 = vmatpush1.msra.mxu0 0.0
    %327 = vmatprep.subr.mxu0 0.0
    %328 = vmatpush1.msra.mxu0 0.0
    %329 = vmatprep.subr.mxu0 0.0
    %330 = vmatpush1.msra.mxu0 0.0
    %331 = vmatprep.subr.mxu0 0.0
    %332 = vmatpush1.msra.mxu0 0.0
    %333 = vmatprep.subr.mxu0 0.0
    %334 = vmatpush1.msra.mxu0 0.0
    %335 = vmatprep.subr.mxu0 0.0
    %336 = vmatpush1.msra.mxu0 0.0
    %337 = vmatprep.subr.mxu0 0.0
    %338 = vmatpush1.msra.mxu0 0.0
    %339 = vmatprep.subr.mxu0 0.0
    %340 = vmatpush1.msra.mxu0 0.0
    %341 = vmatprep.subr.mxu0 0.0
    %342 = vmatpush1.msra.mxu0 0.0
    %343 = vmatprep.subr.mxu0 0.0
    %344 = vmatpush1.msra.mxu0 0.0
    %345 = vmatprep.subr.mxu0 0.0
    %346 = vmatpush1.msra.mxu0 0.0
    %347 = vmatprep.subr.mxu0 0.0
    %348 = vmatpush1.msra.mxu0 0.0
    %349 = vmatprep.subr.mxu0 0.0
    %350 = vmatpush1.msra.mxu0 0.0
    %351 = vmatprep.subr.mxu0 0.0
    %352 = vmatpush1.msra.mxu0 0.0
    %353 = vmatprep.subr.mxu0 0.0
    %354 = vmatpush1.msra.mxu0 0.0
    %355 = vmatprep.subr.mxu0 0.0
    %356 = vmatpush1.msra.mxu0 0.0
    %357 = vmatprep.subr.mxu0 0.0
    %358 = vmatpush1.msra.mxu0 0.0
    %359 = vmatprep.subr.mxu0 0.0
    %360 = vmatpush1.msra.mxu0 0.0
    %361 = vmatprep.subr.mxu0 0.0
    %362 = vmatpush1.msra.mxu0 0.0
    %363 = vmatprep.subr.mxu0 0.0
    %364 = vmatpush1.msra.mxu0 0.0
    %365 = vmatprep.mubr.f32.mxu0 0.0
    %v366 = vand.u32 %v37, 4294901760
    %v367 = vsub.f32 %v37, %v366
    %v368 = vand.u32 %v367, 4294901760
    %369 = vmatmul.mubr.f32.gmra.mrb[0].mxu0 %v368
    %v370 = vpop.f32.mrb[0].mxu0
    %v371 = vadd.f32 %v289, %v370
    %v372 = vpop.f32.mrb[0].mxu0
    %373 = vmatprep.mubr.f32.mxu0 0.0
    %v374 = vand.u32 %v40, 4294901760
    %v375 = vsub.f32 %v40, %v374
    %v376 = vand.u32 %v375, 4294901760
    %377 = vmatmul.mubr.f32.gmra.mrb[0].mxu0 %v376
    %v378 = vpop.f32.mrb[0].mxu0
    %v379 = vadd.f32 %v296, %v378
    %v380 = vpop.f32.mrb[0].mxu0
    %381 = vdwg.mxu0
    %382 = vmatprep.subr.mxu0 0.0
    %v383 = vand.u32 %v30, 4294901760
    %v384 = vsub.f32 %v30, %v383
    %v385 = vand.u32 %v384, 4294901760
    %386 = vmatpush1.msra.mxu0 %v385
    %387 = vmatprep.subr.mxu0 0.0
    %v388 = vand.u32 %v31, 4294901760
    %v389 = vsub.f32 %v31, %v388
    %v390 = vand.u32 %v389, 4294901760
    %391 = vmatpush1.msra.mxu0 %v390
    %392 = vmatprep.subr.mxu0 0.0
    %393 = vmatpush1.msra.mxu0 0.0
    %394 = vmatprep.subr.mxu0 0.0
    %395 = vmatpush1.msra.mxu0 0.0
    %396 = vmatprep.subr.mxu0 0.0
    %397 = vmatpush1.msra.mxu0 0.0
    %398 = vmatprep.subr.mxu0 0.0
    %399 = vmatpush1.msra.mxu0 0.0
    %400 = vmatprep.subr.mxu0 0.0
    %401 = vmatpush1.msra.mxu0 0.0
    %402 = vmatprep.subr.mxu0 0.0
    %403 = vmatpush1.msra.mxu0 0.0
    %404 = vmatprep.subr.mxu0 0.0
    %405 = vmatpush1.msra.mxu0 0.0
    %406 = vmatprep.subr.mxu0 0.0
    %407 = vmatpush1.msra.mxu0 0.0
    %408 = vmatprep.subr.mxu0 0.0
    %409 = vmatpush1.msra.mxu0 0.0
    %410 = vmatprep.subr.mxu0 0.0
    %411 = vmatpush1.msra.mxu0 0.0
    %412 = vmatprep.subr.mxu0 0.0
    %413 = vmatpush1.msra.mxu0 0.0
    %414 = vmatprep.subr.mxu0 0.0
    %415 = vmatpush1.msra.mxu0 0.0
    %416 = vmatprep.subr.mxu0 0.0
    %417 = vmatpush1.msra.mxu0 0.0
    %418 = vmatprep.subr.mxu0 0.0
    %419 = vmatpush1.msra.mxu0 0.0
    %420 = vmatprep.subr.mxu0 0.0
    %421 = vmatpush1.msra.mxu0 0.0
    %422 = vmatprep.subr.mxu0 0.0
    %423 = vmatpush1.msra.mxu0 0.0
    %424 = vmatprep.subr.mxu0 0.0
    %425 = vmatpush1.msra.mxu0 0.0
    %426 = vmatprep.subr.mxu0 0.0
    %427 = vmatpush1.msra.mxu0 0.0
    %428 = vmatprep.subr.mxu0 0.0
    %429 = vmatpush1.msra.mxu0 0.0
    %430 = vmatprep.subr.mxu0 0.0
    %431 = vmatpush1.msra.mxu0 0.0
    %432 = vmatprep.subr.mxu0 0.0
    %433 = vmatpush1.msra.mxu0 0.0
    %434 = vmatprep.subr.mxu0 0.0
    %435 = vmatpush1.msra.mxu0 0.0
    %436 = vmatprep.subr.mxu0 0.0
    %437 = vmatpush1.msra.mxu0 0.0
    %438 = vmatprep.subr.mxu0 0.0
    %439 = vmatpush1.msra.mxu0 0.0
    %440 = vmatprep.subr.mxu0 0.0
    %441 = vmatpush1.msra.mxu0 0.0
    %442 = vmatprep.subr.mxu0 0.0
    %443 = vmatpush1.msra.mxu0 0.0
    %444 = vmatprep.subr.mxu0 0.0
    %445 = vmatpush1.msra.mxu0 0.0
    %446 = vmatprep.subr.mxu0 0.0
    %447 = vmatpush1.msra.mxu0 0.0
    %448 = vmatprep.subr.mxu0 0.0
    %449 = vmatpush1.msra.mxu0 0.0
    %450 = vmatprep.subr.mxu0 0.0
    %451 = vmatpush1.msra.mxu0 0.0
    %452 = vmatprep.mubr.f32.mxu0 0.0
    %v453 = vand.u32 %v37, 4294901760
    %454 = vmatmul.mubr.f32.gmra.mrb[0].mxu0 %v453
    %v455 = vpop.f32.mrb[0].mxu0
    %v456 = vadd.f32 %v371, %v455
    %v457 = vpop.f32.mrb[0].mxu0
    %458 = vmatprep.mubr.f32.mxu0 0.0
    %v459 = vand.u32 %v40, 4294901760
    %460 = vmatmul.mubr.f32.gmra.mrb[0].mxu0 %v459
    %v461 = vpop.f32.mrb[0].mxu0
    %v462 = vadd.f32 %v379, %v461
    %v463 = vpop.f32.mrb[0].mxu0
    %464 = vdwg.mxu0
    %465 = vmatprep.subr.mxu0 0.0
    %v466 = vand.u32 %v30, 4294901760
    %467 = vmatpush1.msra.mxu0 %v466
    %468 = vmatprep.subr.mxu0 0.0
    %v469 = vand.u32 %v31, 4294901760
    %470 = vmatpush1.msra.mxu0 %v469
    %471 = vmatprep.subr.mxu0 0.0
    %472 = vmatpush1.msra.mxu0 0.0
    %473 = vmatprep.subr.mxu0 0.0
    %474 = vmatpush1.msra.mxu0 0.0
    %475 = vmatprep.subr.mxu0 0.0
    %476 = vmatpush1.msra.mxu0 0.0
    %477 = vmatprep.subr.mxu0 0.0
    %478 = vmatpush1.msra.mxu0 0.0
    %479 = vmatprep.subr.mxu0 0.0
    %480 = vmatpush1.msra.mxu0 0.0
    %481 = vmatprep.subr.mxu0 0.0
    %482 = vmatpush1.msra.mxu0 0.0
    %483 = vmatprep.subr.mxu0 0.0
    %484 = vmatpush1.msra.mxu0 0.0
    %485 = vmatprep.subr.mxu0 0.0
    %486 = vmatpush1.msra.mxu0 0.0
    %487 = vmatprep.subr.mxu0 0.0
    %488 = vmatpush1.msra.mxu0 0.0
    %489 = vmatprep.subr.mxu0 0.0
    %490 = vmatpush1.msra.mxu0 0.0
    %491 = vmatprep.subr.mxu0 0.0
    %492 = vmatpush1.msra.mxu0 0.0
    %493 = vmatprep.subr.mxu0 0.0
    %494 = vmatpush1.msra.mxu0 0.0
    %495 = vmatprep.subr.mxu0 0.0
    %496 = vmatpush1.msra.mxu0 0.0
    %497 = vmatprep.subr.mxu0 0.0
    %498 = vmatpush1.msra.mxu0 0.0
    %499 = vmatprep.subr.mxu0 0.0
    %500 = vmatpush1.msra.mxu0 0.0
    %501 = vmatprep.subr.mxu0 0.0
    %502 = vmatpush1.msra.mxu0 0.0
    %503 = vmatprep.subr.mxu0 0.0
    %504 = vmatpush1.msra.mxu0 0.0
    %505 = vmatprep.subr.mxu0 0.0
    %506 = vmatpush1.msra.mxu0 0.0
    %507 = vmatprep.subr.mxu0 0.0
    %508 = vmatpush1.msra.mxu0 0.0
    %509 = vmatprep.subr.mxu0 0.0
    %510 = vmatpush1.msra.mxu0 0.0
    %511 = vmatprep.subr.mxu0 0.0
    %512 = vmatpush1.msra.mxu0 0.0
    %513 = vmatprep.subr.mxu0 0.0
    %514 = vmatpush1.msra.mxu0 0.0
    %515 = vmatprep.subr.mxu0 0.0
    %516 = vmatpush1.msra.mxu0 0.0
    %517 = vmatprep.subr.mxu0 0.0
    %518 = vmatpush1.msra.mxu0 0.0
    %519 = vmatprep.subr.mxu0 0.0
    %520 = vmatpush1.msra.mxu0 0.0
    %521 = vmatprep.subr.mxu0 0.0
    %522 = vmatpush1.msra.mxu0 0.0
    %523 = vmatprep.subr.mxu0 0.0
    %524 = vmatpush1.msra.mxu0 0.0
    %525 = vmatprep.subr.mxu0 0.0
    %526 = vmatpush1.msra.mxu0 0.0
    %527 = vmatprep.subr.mxu0 0.0
    %528 = vmatpush1.msra.mxu0 0.0
    %529 = vmatprep.subr.mxu0 0.0
    %530 = vmatpush1.msra.mxu0 0.0
    %531 = vmatprep.mubr.f32.mxu0 0.0
    %v532 = vand.u32 %v37, 4294901760
    %533 = vmatmul.mubr.f32.gmra.mrb[0].mxu0 %v532
    %v534 = vpop.f32.mrb[0].mxu0
    %v535 = vadd.f32 %v456, %v534
    %v536 = vpop.f32.mrb[0].mxu0
    %537 = vmatprep.mubr.f32.mxu0 0.0
    %v538 = vand.u32 %v40, 4294901760
    %539 = vmatmul.mubr.f32.gmra.mrb[0].mxu0 %v538
    %v540 = vpop.f32.mrb[0].mxu0
    %v541 = vadd.f32 %v462, %v540
    %v542 = vpop.f32.mrb[0].mxu0
    %543 = vdwg.mxu0
    %546 = vrot.lane.b32.xlu0 %v535, 8
    %v547 = vpop.permute.xlu0 %546
    %548 = vrot.lane.b32.xlu0 %v541, 8
    %v549 = vpop.permute.xlu0 %548
    %vm552 = vcmask 130112
    %553 = vst.msk [vmem:[#allocation2] sm:$0xff] %vm552, %v547
    %554 = vst.msk [vmem:[#allocation2 + $0x8] sm:$0xff] %vm552, %v549
    %555 = vmatprep.subr.mxu0 0.0
    %v556 = vand.u32 %v535, 4294901760
    %557 = vmatpush1.msra.mxu0 %v556
    %558 = vmatprep.subr.mxu0 0.0
    %v559 = vand.u32 %v541, 4294901760
    %560 = vmatpush1.msra.mxu0 %v559
    %561 = vmatprep.subr.mxu0 0.0
    %562 = vmatpush1.msra.mxu0 0.0
    %563 = vmatprep.subr.mxu0 0.0
    %564 = vmatpush1.msra.mxu0 0.0
    %565 = vmatprep.subr.mxu0 0.0
    %566 = vmatpush1.msra.mxu0 0.0
    %567 = vmatprep.subr.mxu0 0.0
    %568 = vmatpush1.msra.mxu0 0.0
    %569 = vmatprep.subr.mxu0 0.0
    %570 = vmatpush1.msra.mxu0 0.0
    %571 = vmatprep.subr.mxu0 0.0
    %572 = vmatpush1.msra.mxu0 0.0
    %573 = vmatprep.subr.mxu0 0.0
    %574 = vmatpush1.msra.mxu0 0.0
    %575 = vmatprep.subr.mxu0 0.0
    %576 = vmatpush1.msra.mxu0 0.0
    %577 = vmatprep.subr.mxu0 0.0
    %578 = vmatpush1.msra.mxu0 0.0
    %579 = vmatprep.subr.mxu0 0.0
    %580 = vmatpush1.msra.mxu0 0.0
    %581 = vmatprep.subr.mxu0 0.0
    %582 = vmatpush1.msra.mxu0 0.0
    %583 = vmatprep.subr.mxu0 0.0
    %584 = vmatpush1.msra.mxu0 0.0
    %585 = vmatprep.subr.mxu0 0.0
    %586 = vmatpush1.msra.mxu0 0.0
    %587 = vmatprep.subr.mxu0 0.0
    %588 = vmatpush1.msra.mxu0 0.0
    %589 = vmatprep.subr.mxu0 0.0
    %590 = vmatpush1.msra.mxu0 0.0
    %591 = vmatprep.subr.mxu0 0.0
    %592 = vmatpush1.msra.mxu0 0.0
    %593 = vmatprep.subr.mxu0 0.0
    %594 = vmatpush1.msra.mxu0 0.0
    %595 = vmatprep.subr.mxu0 0.0
    %596 = vmatpush1.msra.mxu0 0.0
    %597 = vmatprep.subr.mxu0 0.0
    %598 = vmatpush1.msra.mxu0 0.0
    %599 = vmatprep.subr.mxu0 0.0
    %600 = vmatpush1.msra.mxu0 0.0
    %601 = vmatprep.subr.mxu0 0.0
    %602 = vmatpush1.msra.mxu0 0.0
    %603 = vmatprep.subr.mxu0 0.0
    %604 = vmatpush1.msra.mxu0 0.0
    %605 = vmatprep.subr.mxu0 0.0
    %606 = vmatpush1.msra.mxu0 0.0
    %607 = vmatprep.subr.mxu0 0.0
    %608 = vmatpush1.msra.mxu0 0.0
    %609 = vmatprep.subr.mxu0 0.0
    %610 = vmatpush1.msra.mxu0 0.0
    %611 = vmatprep.subr.mxu0 0.0
    %612 = vmatpush1.msra.mxu0 0.0
    %613 = vmatprep.subr.mxu0 0.0
    %614 = vmatpush1.msra.mxu0 0.0
    %615 = vmatprep.subr.mxu0 0.0
    %616 = vmatpush1.msra.mxu0 0.0
    %617 = vmatprep.subr.mxu0 0.0
    %618 = vmatpush1.msra.mxu0 0.0
    %619 = vmatprep.subr.mxu0 0.0
    %620 = vmatpush1.msra.mxu0 0.0
    %621 = vmatprep.mubr.f32.mxu0 0.0
    %v622 = vand.u32 %v37, 4294901760
    %v623 = vsub.f32 %v37, %v622
    %v624 = vand.u32 %v623, 4294901760
    %v625 = vsub.f32 %v623, %v624
    %v626 = vand.u32 %v625, 4294901760
    %627 = vmatmul.mubr.f32.gmra.mrb[0].mxu0 %v626
    %v628 = vpop.f32.mrb[0].mxu0
    %v629 = vadd.f32 0.0, %v628
    %v630 = vpop.f32.mrb[0].mxu0
    %631 = vmatprep.mubr.f32.mxu0 0.0
    %v632 = vand.u32 %v40, 4294901760
    %v633 = vsub.f32 %v40, %v632
    %v634 = vand.u32 %v633, 4294901760
    %v635 = vsub.f32 %v633, %v634
    %v636 = vand.u32 %v635, 4294901760
    %637 = vmatmul.mubr.f32.gmra.mrb[0].mxu0 %v636
    %v638 = vpop.f32.mrb[0].mxu0
    %v639 = vadd.f32 0.0, %v638
    %v640 = vpop.f32.mrb[0].mxu0
    %641 = vdwg.mxu0
    %642 = vmatprep.subr.mxu0 0.0
    %v643 = vand.u32 %v535, 4294901760
    %v644 = vsub.f32 %v535, %v643
    %v645 = vand.u32 %v644, 4294901760
    %v646 = vsub.f32 %v644, %v645
    %v647 = vand.u32 %v646, 4294901760
    %648 = vmatpush1.msra.mxu0 %v647
    %649 = vmatprep.subr.mxu0 0.0
    %v650 = vand.u32 %v541, 4294901760
    %v651 = vsub.f32 %v541, %v650
    %v652 = vand.u32 %v651, 4294901760
    %v653 = vsub.f32 %v651, %v652
    %v654 = vand.u32 %v653, 4294901760
    %655 = vmatpush1.msra.mxu0 %v654
    %656 = vmatprep.subr.mxu0 0.0
    %657 = vmatpush1.msra.mxu0 0.0
    %658 = vmatprep.subr.mxu0 0.0
    %659 = vmatpush1.msra.mxu0 0.0
    %660 = vmatprep.subr.mxu0 0.0
    %661 = vmatpush1.msra.mxu0 0.0
    %662 = vmatprep.subr.mxu0 0.0
    %663 = vmatpush1.msra.mxu0 0.0
    %664 = vmatprep.subr.mxu0 0.0
    %665 = vmatpush1.msra.mxu0 0.0
    %666 = vmatprep.subr.mxu0 0.0
    %667 = vmatpush1.msra.mxu0 0.0
    %668 = vmatprep.subr.mxu0 0.0
    %669 = vmatpush1.msra.mxu0 0.0
    %670 = vmatprep.subr.mxu0 0.0
    %671 = vmatpush1.msra.mxu0 0.0
    %672 = vmatprep.subr.mxu0 0.0
    %673 = vmatpush1.msra.mxu0 0.0
    %674 = vmatprep.subr.mxu0 0.0
    %675 = vmatpush1.msra.mxu0 0.0
    %676 = vmatprep.subr.mxu0 0.0
    %677 = vmatpush1.msra.mxu0 0.0
    %678 = vmatprep.subr.mxu0 0.0
    %679 = vmatpush1.msra.mxu0 0.0
    %680 = vmatprep.subr.mxu0 0.0
    %681 = vmatpush1.msra.mxu0 0.0
    %682 = vmatprep.subr.mxu0 0.0
    %683 = vmatpush1.msra.mxu0 0.0
    %684 = vmatprep.subr.mxu0 0.0
    %685 = vmatpush1.msra.mxu0 0.0
    %686 = vmatprep.subr.mxu0 0.0
    %687 = vmatpush1.msra.mxu0 0.0
    %688 = vmatprep.subr.mxu0 0.0
    %689 = vmatpush1.msra.mxu0 0.0
    %690 = vmatprep.subr.mxu0 0.0
    %691 = vmatpush1.msra.mxu0 0.0
    %692 = vmatprep.subr.mxu0 0.0
    %693 = vmatpush1.msra.mxu0 0.0
    %694 = vmatprep.subr.mxu0 0.0
    %695 = vmatpush1.msra.mxu0 0.0
    %696 = vmatprep.subr.mxu0 0.0
    %697 = vmatpush1.msra.mxu0 0.0
    %698 = vmatprep.subr.mxu0 0.0
    %699 = vmatpush1.msra.mxu0 0.0
    %700 = vmatprep.subr.mxu0 0.0
    %701 = vmatpush1.msra.mxu0 0.0
    %702 = vmatprep.subr.mxu0 0.0
    %703 = vmatpush1.msra.mxu0 0.0
    %704 = vmatprep.subr.mxu0 0.0
    %705 = vmatpush1.msra.mxu0 0.0
    %706 = vmatprep.subr.mxu0 0.0
    %707 = vmatpush1.msra.mxu0 0.0
    %708 = vmatprep.subr.mxu0 0.0
    %709 = vmatpush1.msra.mxu0 0.0
    %710 = vmatprep.subr.mxu0 0.0
    %711 = vmatpush1.msra.mxu0 0.0
    %712 = vmatprep.subr.mxu0 0.0
    %713 = vmatpush1.msra.mxu0 0.0
    %714 = vmatprep.subr.mxu0 0.0
    %715 = vmatpush1.msra.mxu0 0.0
    %716 = vmatprep.mubr.f32.mxu0 0.0
    %v717 = vand.u32 %v37, 4294901760
    %718 = vmatmul.mubr.f32.gmra.mrb[0].mxu0 %v717
    %v719 = vpop.f32.mrb[0].mxu0
    %v720 = vadd.f32 %v629, %v719
    %v721 = vpop.f32.mrb[0].mxu0
    %722 = vmatprep.mubr.f32.mxu0 0.0
    %v723 = vand.u32 %v40, 4294901760
    %724 = vmatmul.mubr.f32.gmra.mrb[0].mxu0 %v723
    %v725 = vpop.f32.mrb[0].mxu0
    %v726 = vadd.f32 %v639, %v725
    %v727 = vpop.f32.mrb[0].mxu0
    %728 = vdwg.mxu0
    %729 = vmatprep.subr.mxu0 0.0
    %v730 = vand.u32 %v535, 4294901760
    %v731 = vsub.f32 %v535, %v730
    %732 = vmatpush1.msra.mxu0 %v731
    %733 = vmatprep.subr.mxu0 0.0
    %v734 = vand.u32 %v541, 4294901760
    %v735 = vsub.f32 %v541, %v734
    %736 = vmatpush1.msra.mxu0 %v735
    %737 = vmatprep.subr.mxu0 0.0
    %738 = vmatpush1.msra.mxu0 0.0
    %739 = vmatprep.subr.mxu0 0.0
    %740 = vmatpush1.msra.mxu0 0.0
    %741 = vmatprep.subr.mxu0 0.0
    %742 = vmatpush1.msra.mxu0 0.0
    %743 = vmatprep.subr.mxu0 0.0
    %744 = vmatpush1.msra.mxu0 0.0
    %745 = vmatprep.subr.mxu0 0.0
    %746 = vmatpush1.msra.mxu0 0.0
    %747 = vmatprep.subr.mxu0 0.0
    %748 = vmatpush1.msra.mxu0 0.0
    %749 = vmatprep.subr.mxu0 0.0
    %750 = vmatpush1.msra.mxu0 0.0
    %751 = vmatprep.subr.mxu0 0.0
    %752 = vmatpush1.msra.mxu0 0.0
    %753 = vmatprep.subr.mxu0 0.0
    %754 = vmatpush1.msra.mxu0 0.0
    %755 = vmatprep.subr.mxu0 0.0
    %756 = vmatpush1.msra.mxu0 0.0
    %757 = vmatprep.subr.mxu0 0.0
    %758 = vmatpush1.msra.mxu0 0.0
    %759 = vmatprep.subr.mxu0 0.0
    %760 = vmatpush1.msra.mxu0 0.0
    %761 = vmatprep.subr.mxu0 0.0
    %762 = vmatpush1.msra.mxu0 0.0
    %763 = vmatprep.subr.mxu0 0.0
    %764 = vmatpush1.msra.mxu0 0.0
    %765 = vmatprep.subr.mxu0 0.0
    %766 = vmatpush1.msra.mxu0 0.0
    %767 = vmatprep.subr.mxu0 0.0
    %768 = vmatpush1.msra.mxu0 0.0
    %769 = vmatprep.subr.mxu0 0.0
    %770 = vmatpush1.msra.mxu0 0.0
    %771 = vmatprep.subr.mxu0 0.0
    %772 = vmatpush1.msra.mxu0 0.0
    %773 = vmatprep.subr.mxu0 0.0
    %774 = vmatpush1.msra.mxu0 0.0
    %775 = vmatprep.subr.mxu0 0.0
    %776 = vmatpush1.msra.mxu0 0.0
    %777 = vmatprep.subr.mxu0 0.0
    %778 = vmatpush1.msra.mxu0 0.0
    %779 = vmatprep.subr.mxu0 0.0
    %780 = vmatpush1.msra.mxu0 0.0
    %781 = vmatprep.subr.mxu0 0.0
    %782 = vmatpush1.msra.mxu0 0.0
    %783 = vmatprep.subr.mxu0 0.0
    %784 = vmatpush1.msra.mxu0 0.0
    %785 = vmatprep.subr.mxu0 0.0
    %786 = vmatpush1.msra.mxu0 0.0
    %787 = vmatprep.subr.mxu0 0.0
    %788 = vmatpush1.msra.mxu0 0.0
    %789 = vmatprep.subr.mxu0 0.0
    %790 = vmatpush1.msra.mxu0 0.0
    %791 = vmatprep.subr.mxu0 0.0
    %792 = vmatpush1.msra.mxu0 0.0
    %793 = vmatprep.subr.mxu0 0.0
    %794 = vmatpush1.msra.mxu0 0.0
    %795 = vmatprep.subr.mxu0 0.0
    %796 = vmatpush1.msra.mxu0 0.0
    %797 = vmatprep.mubr.f32.mxu0 0.0
    %v798 = vand.u32 %v37, 4294901760
    %v799 = vsub.f32 %v37, %v798
    %800 = vmatmul.mubr.f32.gmra.mrb[0].mxu0 %v799
    %v801 = vpop.f32.mrb[0].mxu0
    %v802 = vadd.f32 %v720, %v801
    %v803 = vpop.f32.mrb[0].mxu0
    %804 = vmatprep.mubr.f32.mxu0 0.0
    %v805 = vand.u32 %v40, 4294901760
    %v806 = vsub.f32 %v40, %v805
    %807 = vmatmul.mubr.f32.gmra.mrb[0].mxu0 %v806
    %v808 = vpop.f32.mrb[0].mxu0
    %v809 = vadd.f32 %v726, %v808
    %v810 = vpop.f32.mrb[0].mxu0
    %811 = vdwg.mxu0
    %812 = vmatprep.subr.mxu0 0.0
    %v813 = vand.u32 %v535, 4294901760
    %814 = vmatpush1.msra.mxu0 %v813
    %815 = vmatprep.subr.mxu0 0.0
    %v816 = vand.u32 %v541, 4294901760
    %817 = vmatpush1.msra.mxu0 %v816
    %818 = vmatprep.subr.mxu0 0.0
    %819 = vmatpush1.msra.mxu0 0.0
    %820 = vmatprep.subr.mxu0 0.0
    %821 = vmatpush1.msra.mxu0 0.0
    %822 = vmatprep.subr.mxu0 0.0
    %823 = vmatpush1.msra.mxu0 0.0
    %824 = vmatprep.subr.mxu0 0.0
    %825 = vmatpush1.msra.mxu0 0.0
    %826 = vmatprep.subr.mxu0 0.0
    %827 = vmatpush1.msra.mxu0 0.0
    %828 = vmatprep.subr.mxu0 0.0
    %829 = vmatpush1.msra.mxu0 0.0
    %830 = vmatprep.subr.mxu0 0.0
    %831 = vmatpush1.msra.mxu0 0.0
    %832 = vmatprep.subr.mxu0 0.0
    %833 = vmatpush1.msra.mxu0 0.0
    %834 = vmatprep.subr.mxu0 0.0
    %835 = vmatpush1.msra.mxu0 0.0
    %836 = vmatprep.subr.mxu0 0.0
    %837 = vmatpush1.msra.mxu0 0.0
    %838 = vmatprep.subr.mxu0 0.0
    %839 = vmatpush1.msra.mxu0 0.0
    %840 = vmatprep.subr.mxu0 0.0
    %841 = vmatpush1.msra.mxu0 0.0
    %842 = vmatprep.subr.mxu0 0.0
    %843 = vmatpush1.msra.mxu0 0.0
    %844 = vmatprep.subr.mxu0 0.0
    %845 = vmatpush1.msra.mxu0 0.0
    %846 = vmatprep.subr.mxu0 0.0
    %847 = vmatpush1.msra.mxu0 0.0
    %848 = vmatprep.subr.mxu0 0.0
    %849 = vmatpush1.msra.mxu0 0.0
    %850 = vmatprep.subr.mxu0 0.0
    %851 = vmatpush1.msra.mxu0 0.0
    %852 = vmatprep.subr.mxu0 0.0
    %853 = vmatpush1.msra.mxu0 0.0
    %854 = vmatprep.subr.mxu0 0.0
    %855 = vmatpush1.msra.mxu0 0.0
    %856 = vmatprep.subr.mxu0 0.0
    %857 = vmatpush1.msra.mxu0 0.0
    %858 = vmatprep.subr.mxu0 0.0
    %859 = vmatpush1.msra.mxu0 0.0
    %860 = vmatprep.subr.mxu0 0.0
    %861 = vmatpush1.msra.mxu0 0.0
    %862 = vmatprep.subr.mxu0 0.0
    %863 = vmatpush1.msra.mxu0 0.0
    %864 = vmatprep.subr.mxu0 0.0
    %865 = vmatpush1.msra.mxu0 0.0
    %866 = vmatprep.subr.mxu0 0.0
    %867 = vmatpush1.msra.mxu0 0.0
    %868 = vmatprep.subr.mxu0 0.0
    %869 = vmatpush1.msra.mxu0 0.0
    %870 = vmatprep.subr.mxu0 0.0
    %871 = vmatpush1.msra.mxu0 0.0
    %872 = vmatprep.subr.mxu0 0.0
    %873 = vmatpush1.msra.mxu0 0.0
    %874 = vmatprep.subr.mxu0 0.0
    %875 = vmatpush1.msra.mxu0 0.0
    %876 = vmatprep.subr.mxu0 0.0
    %877 = vmatpush1.msra.mxu0 0.0
    %878 = vmatprep.mubr.f32.mxu0 0.0
    %v879 = vand.u32 %v37, 4294901760
    %v880 = vsub.f32 %v37, %v879
    %v881 = vand.u32 %v880, 4294901760
    %882 = vmatmul.mubr.f32.gmra.mrb[0].mxu0 %v881
    %v883 = vpop.f32.mrb[0].mxu0
    %v884 = vadd.f32 %v802, %v883
    %v885 = vpop.f32.mrb[0].mxu0
    %886 = vmatprep.mubr.f32.mxu0 0.0
    %v887 = vand.u32 %v40, 4294901760
    %v888 = vsub.f32 %v40, %v887
    %v889 = vand.u32 %v888, 4294901760
    %890 = vmatmul.mubr.f32.gmra.mrb[0].mxu0 %v889
    %v891 = vpop.f32.mrb[0].mxu0
    %v892 = vadd.f32 %v809, %v891
    %v893 = vpop.f32.mrb[0].mxu0
    %894 = vdwg.mxu0
    %895 = vmatprep.subr.mxu0 0.0
    %v896 = vand.u32 %v535, 4294901760
    %v897 = vsub.f32 %v535, %v896
    %v898 = vand.u32 %v897, 4294901760
    %899 = vmatpush1.msra.mxu0 %v898
    %900 = vmatprep.subr.mxu0 0.0
    %v901 = vand.u32 %v541, 4294901760
    %v902 = vsub.f32 %v541, %v901
    %v903 = vand.u32 %v902, 4294901760
    %904 = vmatpush1.msra.mxu0 %v903
    %905 = vmatprep.subr.mxu0 0.0
    %906 = vmatpush1.msra.mxu0 0.0
    %907 = vmatprep.subr.mxu0 0.0
    %908 = vmatpush1.msra.mxu0 0.0
    %909 = vmatprep.subr.mxu0 0.0
    %910 = vmatpush1.msra.mxu0 0.0
    %911 = vmatprep.subr.mxu0 0.0
    %912 = vmatpush1.msra.mxu0 0.0
    %913 = vmatprep.subr.mxu0 0.0
    %914 = vmatpush1.msra.mxu0 0.0
    %915 = vmatprep.subr.mxu0 0.0
    %916 = vmatpush1.msra.mxu0 0.0
    %917 = vmatprep.subr.mxu0 0.0
    %918 = vmatpush1.msra.mxu0 0.0
    %919 = vmatprep.subr.mxu0 0.0
    %920 = vmatpush1.msra.mxu0 0.0
    %921 = vmatprep.subr.mxu0 0.0
    %922 = vmatpush1.msra.mxu0 0.0
    %923 = vmatprep.subr.mxu0 0.0
    %924 = vmatpush1.msra.mxu0 0.0
    %925 = vmatprep.subr.mxu0 0.0
    %926 = vmatpush1.msra.mxu0 0.0
    %927 = vmatprep.subr.mxu0 0.0
    %928 = vmatpush1.msra.mxu0 0.0
    %929 = vmatprep.subr.mxu0 0.0
    %930 = vmatpush1.msra.mxu0 0.0
    %931 = vmatprep.subr.mxu0 0.0
    %932 = vmatpush1.msra.mxu0 0.0
    %933 = vmatprep.subr.mxu0 0.0
    %934 = vmatpush1.msra.mxu0 0.0
    %935 = vmatprep.subr.mxu0 0.0
    %936 = vmatpush1.msra.mxu0 0.0
    %937 = vmatprep.subr.mxu0 0.0
    %938 = vmatpush1.msra.mxu0 0.0
    %939 = vmatprep.subr.mxu0 0.0
    %940 = vmatpush1.msra.mxu0 0.0
    %941 = vmatprep.subr.mxu0 0.0
    %942 = vmatpush1.msra.mxu0 0.0
    %943 = vmatprep.subr.mxu0 0.0
    %944 = vmatpush1.msra.mxu0 0.0
    %945 = vmatprep.subr.mxu0 0.0
    %946 = vmatpush1.msra.mxu0 0.0
    %947 = vmatprep.subr.mxu0 0.0
    %948 = vmatpush1.msra.mxu0 0.0
    %949 = vmatprep.subr.mxu0 0.0
    %950 = vmatpush1.msra.mxu0 0.0
    %951 = vmatprep.subr.mxu0 0.0
    %952 = vmatpush1.msra.mxu0 0.0
    %953 = vmatprep.subr.mxu0 0.0
    %954 = vmatpush1.msra.mxu0 0.0
    %955 = vmatprep.subr.mxu0 0.0
    %956 = vmatpush1.msra.mxu0 0.0
    %957 = vmatprep.subr.mxu0 0.0
    %958 = vmatpush1.msra.mxu0 0.0
    %959 = vmatprep.subr.mxu0 0.0
    %960 = vmatpush1.msra.mxu0 0.0
    %961 = vmatprep.subr.mxu0 0.0
    %962 = vmatpush1.msra.mxu0 0.0
    %963 = vmatprep.subr.mxu0 0.0
    %964 = vmatpush1.msra.mxu0 0.0
    %965 = vmatprep.mubr.f32.mxu0 0.0
    %v966 = vand.u32 %v37, 4294901760
    %967 = vmatmul.mubr.f32.gmra.mrb[0].mxu0 %v966
    %v968 = vpop.f32.mrb[0].mxu0
    %v969 = vadd.f32 %v884, %v968
    %v970 = vpop.f32.mrb[0].mxu0
    %971 = vmatprep.mubr.f32.mxu0 0.0
    %v972 = vand.u32 %v40, 4294901760
    %973 = vmatmul.mubr.f32.gmra.mrb[0].mxu0 %v972
    %v974 = vpop.f32.mrb[0].mxu0
    %v975 = vadd.f32 %v892, %v974
    %v976 = vpop.f32.mrb[0].mxu0
    %977 = vdwg.mxu0
    %978 = vmatprep.subr.mxu0 0.0
    %v979 = vand.u32 %v535, 4294901760
    %980 = vmatpush1.msra.mxu0 %v979
    %981 = vmatprep.subr.mxu0 0.0
    %v982 = vand.u32 %v541, 4294901760
    %983 = vmatpush1.msra.mxu0 %v982
    %984 = vmatprep.subr.mxu0 0.0
    %985 = vmatpush1.msra.mxu0 0.0
    %986 = vmatprep.subr.mxu0 0.0
    %987 = vmatpush1.msra.mxu0 0.0
    %988 = vmatprep.subr.mxu0 0.0
    %989 = vmatpush1.msra.mxu0 0.0
    %990 = vmatprep.subr.mxu0 0.0
    %991 = vmatpush1.msra.mxu0 0.0
    %992 = vmatprep.subr.mxu0 0.0
    %993 = vmatpush1.msra.mxu0 0.0
    %994 = vmatprep.subr.mxu0 0.0
    %995 = vmatpush1.msra.mxu0 0.0
    %996 = vmatprep.subr.mxu0 0.0
    %997 = vmatpush1.msra.mxu0 0.0
    %998 = vmatprep.subr.mxu0 0.0
    %999 = vmatpush1.msra.mxu0 0.0
    %1000 = vmatprep.subr.mxu0 0.0
    %1001 = vmatpush1.msra.mxu0 0.0
    %1002 = vmatprep.subr.mxu0 0.0
    %1003 = vmatpush1.msra.mxu0 0.0
    %1004 = vmatprep.subr.mxu0 0.0
    %1005 = vmatpush1.msra.mxu0 0.0
    %1006 = vmatprep.subr.mxu0 0.0
    %1007 = vmatpush1.msra.mxu0 0.0
    %1008 = vmatprep.subr.mxu0 0.0
    %1009 = vmatpush1.msra.mxu0 0.0
    %1010 = vmatprep.subr.mxu0 0.0
    %1011 = vmatpush1.msra.mxu0 0.0
    %1012 = vmatprep.subr.mxu0 0.0
    %1013 = vmatpush1.msra.mxu0 0.0
    %1014 = vmatprep.subr.mxu0 0.0
    %1015 = vmatpush1.msra.mxu0 0.0
    %1016 = vmatprep.subr.mxu0 0.0
    %1017 = vmatpush1.msra.mxu0 0.0
    %1018 = vmatprep.subr.mxu0 0.0
    %1019 = vmatpush1.msra.mxu0 0.0
    %1020 = vmatprep.subr.mxu0 0.0
    %1021 = vmatpush1.msra.mxu0 0.0
    %1022 = vmatprep.subr.mxu0 0.0
    %1023 = vmatpush1.msra.mxu0 0.0
    %1024 = vmatprep.subr.mxu0 0.0
    %1025 = vmatpush1.msra.mxu0 0.0
    %1026 = vmatprep.subr.mxu0 0.0
    %1027 = vmatpush1.msra.mxu0 0.0
    %1028 = vmatprep.subr.mxu0 0.0
    %1029 = vmatpush1.msra.mxu0 0.0
    %1030 = vmatprep.subr.mxu0 0.0
    %1031 = vmatpush1.msra.mxu0 0.0
    %1032 = vmatprep.subr.mxu0 0.0
    %1033 = vmatpush1.msra.mxu0 0.0
    %1034 = vmatprep.subr.mxu0 0.0
    %1035 = vmatpush1.msra.mxu0 0.0
    %1036 = vmatprep.subr.mxu0 0.0
    %1037 = vmatpush1.msra.mxu0 0.0
    %1038 = vmatprep.subr.mxu0 0.0
    %1039 = vmatpush1.msra.mxu0 0.0
    %1040 = vmatprep.subr.mxu0 0.0
    %1041 = vmatpush1.msra.mxu0 0.0
    %1042 = vmatprep.subr.mxu0 0.0
    %1043 = vmatpush1.msra.mxu0 0.0
    %1044 = vmatprep.mubr.f32.mxu0 0.0
    %v1045 = vand.u32 %v37, 4294901760
    %1046 = vmatmul.mubr.f32.gmra.mrb[0].mxu0 %v1045
    %v1047 = vpop.f32.mrb[0].mxu0
    %v1048 = vadd.f32 %v969, %v1047
    %v1049 = vpop.f32.mrb[0].mxu0
    %1050 = vmatprep.mubr.f32.mxu0 0.0
    %v1051 = vand.u32 %v40, 4294901760
    %1052 = vmatmul.mubr.f32.gmra.mrb[0].mxu0 %v1051
    %v1053 = vpop.f32.mrb[0].mxu0
    %v1054 = vadd.f32 %v975, %v1053
    %v1055 = vpop.f32.mrb[0].mxu0
    %1056 = vdwg.mxu0
    %1059 = vrot.lane.b32.xlu0 %v1048, 16
    %v1060 = vpop.permute.xlu0 %1059
    %1061 = vrot.lane.b32.xlu0 %v1054, 16
    %v1062 = vpop.permute.xlu0 %1061
    %vm1065 = vcmask 195712
    %1066 = vst.msk [vmem:[#allocation2] sm:$0xff] %vm1065, %v1060
    %1067 = vst.msk [vmem:[#allocation2 + $0x8] sm:$0xff] %vm1065, %v1062
    %1068 = vmatprep.subr.mxu0 0.0
    %v1069 = vand.u32 %v1048, 4294901760
    %1070 = vmatpush1.msra.mxu0 %v1069
    %1071 = vmatprep.subr.mxu0 0.0
    %v1072 = vand.u32 %v1054, 4294901760
    %1073 = vmatpush1.msra.mxu0 %v1072
    %1074 = vmatprep.subr.mxu0 0.0
    %1075 = vmatpush1.msra.mxu0 0.0
    %1076 = vmatprep.subr.mxu0 0.0
    %1077 = vmatpush1.msra.mxu0 0.0
    %1078 = vmatprep.subr.mxu0 0.0
    %1079 = vmatpush1.msra.mxu0 0.0
    %1080 = vmatprep.subr.mxu0 0.0
    %1081 = vmatpush1.msra.mxu0 0.0
    %1082 = vmatprep.subr.mxu0 0.0
    %1083 = vmatpush1.msra.mxu0 0.0
    %1084 = vmatprep.subr.mxu0 0.0
    %1085 = vmatpush1.msra.mxu0 0.0
    %1086 = vmatprep.subr.mxu0 0.0
    %1087 = vmatpush1.msra.mxu0 0.0
    %1088 = vmatprep.subr.mxu0 0.0
    %1089 = vmatpush1.msra.mxu0 0.0
    %1090 = vmatprep.subr.mxu0 0.0
    %1091 = vmatpush1.msra.mxu0 0.0
    %1092 = vmatprep.subr.mxu0 0.0
    %1093 = vmatpush1.msra.mxu0 0.0
    %1094 = vmatprep.subr.mxu0 0.0
    %1095 = vmatpush1.msra.mxu0 0.0
    %1096 = vmatprep.subr.mxu0 0.0
    %1097 = vmatpush1.msra.mxu0 0.0
    %1098 = vmatprep.subr.mxu0 0.0
    %1099 = vmatpush1.msra.mxu0 0.0
    %1100 = vmatprep.subr.mxu0 0.0
    %1101 = vmatpush1.msra.mxu0 0.0
    %1102 = vmatprep.subr.mxu0 0.0
    %1103 = vmatpush1.msra.mxu0 0.0
    %1104 = vmatprep.subr.mxu0 0.0
    %1105 = vmatpush1.msra.mxu0 0.0
    %1106 = vmatprep.subr.mxu0 0.0
    %1107 = vmatpush1.msra.mxu0 0.0
    %1108 = vmatprep.subr.mxu0 0.0
    %1109 = vmatpush1.msra.mxu0 0.0
    %1110 = vmatprep.subr.mxu0 0.0
    %1111 = vmatpush1.msra.mxu0 0.0
    %1112 = vmatprep.subr.mxu0 0.0
    %1113 = vmatpush1.msra.mxu0 0.0
    %1114 = vmatprep.subr.mxu0 0.0
    %1115 = vmatpush1.msra.mxu0 0.0
    %1116 = vmatprep.subr.mxu0 0.0
    %1117 = vmatpush1.msra.mxu0 0.0
    %1118 = vmatprep.subr.mxu0 0.0
    %1119 = vmatpush1.msra.mxu0 0.0
    %1120 = vmatprep.subr.mxu0 0.0
    %1121 = vmatpush1.msra.mxu0 0.0
    %1122 = vmatprep.subr.mxu0 0.0
    %1123 = vmatpush1.msra.mxu0 0.0
    %1124 = vmatprep.subr.mxu0 0.0
    %1125 = vmatpush1.msra.mxu0 0.0
    %1126 = vmatprep.subr.mxu0 0.0
    %1127 = vmatpush1.msra.mxu0 0.0
    %1128 = vmatprep.subr.mxu0 0.0
    %1129 = vmatpush1.msra.mxu0 0.0
    %1130 = vmatprep.subr.mxu0 0.0
    %1131 = vmatpush1.msra.mxu0 0.0
    %1132 = vmatprep.subr.mxu0 0.0
    %1133 = vmatpush1.msra.mxu0 0.0
    %1134 = vmatprep.mubr.f32.mxu0 0.0
    %v1135 = vand.u32 %v37, 4294901760
    %v1136 = vsub.f32 %v37, %v1135
    %v1137 = vand.u32 %v1136, 4294901760
    %v1138 = vsub.f32 %v1136, %v1137
    %v1139 = vand.u32 %v1138, 4294901760
    %1140 = vmatmul.mubr.f32.gmra.mrb[0].mxu0 %v1139
    %v1141 = vpop.f32.mrb[0].mxu0
    %v1142 = vadd.f32 0.0, %v1141
    %v1143 = vpop.f32.mrb[0].mxu0
    %1144 = vmatprep.mubr.f32.mxu0 0.0
    %v1145 = vand.u32 %v40, 4294901760
    %v1146 = vsub.f32 %v40, %v1145
    %v1147 = vand.u32 %v1146, 4294901760
    %v1148 = vsub.f32 %v1146, %v1147
    %v1149 = vand.u32 %v1148, 4294901760
    %1150 = vmatmul.mubr.f32.gmra.mrb[0].mxu0 %v1149
    %v1151 = vpop.f32.mrb[0].mxu0
    %v1152 = vadd.f32 0.0, %v1151
    %v1153 = vpop.f32.mrb[0].mxu0
    %1154 = vdwg.mxu0
    %1155 = vmatprep.subr.mxu0 0.0
    %v1156 = vand.u32 %v1048, 4294901760
    %v1157 = vsub.f32 %v1048, %v1156
    %v1158 = vand.u32 %v1157, 4294901760
    %v1159 = vsub.f32 %v1157, %v1158
    %v1160 = vand.u32 %v1159, 4294901760
    %1161 = vmatpush1.msra.mxu0 %v1160
    %1162 = vmatprep.subr.mxu0 0.0
    %v1163 = vand.u32 %v1054, 4294901760
    %v1164 = vsub.f32 %v1054, %v1163
    %v1165 = vand.u32 %v1164, 4294901760
    %v1166 = vsub.f32 %v1164, %v1165
    %v1167 = vand.u32 %v1166, 4294901760
    %1168 = vmatpush1.msra.mxu0 %v1167
    %1169 = vmatprep.subr.mxu0 0.0
    %1170 = vmatpush1.msra.mxu0 0.0
    %1171 = vmatprep.subr.mxu0 0.0
    %1172 = vmatpush1.msra.mxu0 0.0
    %1173 = vmatprep.subr.mxu0 0.0
    %1174 = vmatpush1.msra.mxu0 0.0
    %1175 = vmatprep.subr.mxu0 0.0
    %1176 = vmatpush1.msra.mxu0 0.0
    %1177 = vmatprep.subr.mxu0 0.0
    %1178 = vmatpush1.msra.mxu0 0.0
    %1179 = vmatprep.subr.mxu0 0.0
    %1180 = vmatpush1.msra.mxu0 0.0
    %1181 = vmatprep.subr.mxu0 0.0
    %1182 = vmatpush1.msra.mxu0 0.0
    %1183 = vmatprep.subr.mxu0 0.0
    %1184 = vmatpush1.msra.mxu0 0.0
    %1185 = vmatprep.subr.mxu0 0.0
    %1186 = vmatpush1.msra.mxu0 0.0
    %1187 = vmatprep.subr.mxu0 0.0
    %1188 = vmatpush1.msra.mxu0 0.0
    %1189 = vmatprep.subr.mxu0 0.0
    %1190 = vmatpush1.msra.mxu0 0.0
    %1191 = vmatprep.subr.mxu0 0.0
    %1192 = vmatpush1.msra.mxu0 0.0
    %1193 = vmatprep.subr.mxu0 0.0
    %1194 = vmatpush1.msra.mxu0 0.0
    %1195 = vmatprep.subr.mxu0 0.0
    %1196 = vmatpush1.msra.mxu0 0.0
    %1197 = vmatprep.subr.mxu0 0.0
    %1198 = vmatpush1.msra.mxu0 0.0
    %1199 = vmatprep.subr.mxu0 0.0
    %1200 = vmatpush1.msra.mxu0 0.0
    %1201 = vmatprep.subr.mxu0 0.0
    %1202 = vmatpush1.msra.mxu0 0.0
    %1203 = vmatprep.subr.mxu0 0.0
    %1204 = vmatpush1.msra.mxu0 0.0
    %1205 = vmatprep.subr.mxu0 0.0
    %1206 = vmatpush1.msra.mxu0 0.0
    %1207 = vmatprep.subr.mxu0 0.0
    %1208 = vmatpush1.msra.mxu0 0.0
    %1209 = vmatprep.subr.mxu0 0.0
    %1210 = vmatpush1.msra.mxu0 0.0
    %1211 = vmatprep.subr.mxu0 0.0
    %1212 = vmatpush1.msra.mxu0 0.0
    %1213 = vmatprep.subr.mxu0 0.0
    %1214 = vmatpush1.msra.mxu0 0.0
    %1215 = vmatprep.subr.mxu0 0.0
    %1216 = vmatpush1.msra.mxu0 0.0
    %1217 = vmatprep.subr.mxu0 0.0
    %1218 = vmatpush1.msra.mxu0 0.0
    %1219 = vmatprep.subr.mxu0 0.0
    %1220 = vmatpush1.msra.mxu0 0.0
    %1221 = vmatprep.subr.mxu0 0.0
    %1222 = vmatpush1.msra.mxu0 0.0
    %1223 = vmatprep.subr.mxu0 0.0
    %1224 = vmatpush1.msra.mxu0 0.0
    %1225 = vmatprep.subr.mxu0 0.0
    %1226 = vmatpush1.msra.mxu0 0.0
    %1227 = vmatprep.subr.mxu0 0.0
    %1228 = vmatpush1.msra.mxu0 0.0
    %1229 = vmatprep.mubr.f32.mxu0 0.0
    %v1230 = vand.u32 %v37, 4294901760
    %1231 = vmatmul.mubr.f32.gmra.mrb[0].mxu0 %v1230
    %v1232 = vpop.f32.mrb[0].mxu0
    %v1233 = vadd.f32 %v1142, %v1232
    %v1234 = vpop.f32.mrb[0].mxu0
    %1235 = vmatprep.mubr.f32.mxu0 0.0
    %v1236 = vand.u32 %v40, 4294901760
    %1237 = vmatmul.mubr.f32.gmra.mrb[0].mxu0 %v1236
    %v1238 = vpop.f32.mrb[0].mxu0
    %v1239 = vadd.f32 %v1152, %v1238
    %v1240 = vpop.f32.mrb[0].mxu0
    %1241 = vdwg.mxu0
    %1242 = vmatprep.subr.mxu0 0.0
    %v1243 = vand.u32 %v1048, 4294901760
    %v1244 = vsub.f32 %v1048, %v1243
    %1245 = vmatpush1.msra.mxu0 %v1244
    %1246 = vmatprep.subr.mxu0 0.0
    %v1247 = vand.u32 %v1054, 4294901760
    %v1248 = vsub.f32 %v1054, %v1247
    %1249 = vmatpush1.msra.mxu0 %v1248
    %1250 = vmatprep.subr.mxu0 0.0
    %1251 = vmatpush1.msra.mxu0 0.0
    %1252 = vmatprep.subr.mxu0 0.0
    %1253 = vmatpush1.msra.mxu0 0.0
    %1254 = vmatprep.subr.mxu0 0.0
    %1255 = vmatpush1.msra.mxu0 0.0
    %1256 = vmatprep.subr.mxu0 0.0
    %1257 = vmatpush1.msra.mxu0 0.0
    %1258 = vmatprep.subr.mxu0 0.0
    %1259 = vmatpush1.msra.mxu0 0.0
    %1260 = vmatprep.subr.mxu0 0.0
    %1261 = vmatpush1.msra.mxu0 0.0
    %1262 = vmatprep.subr.mxu0 0.0
    %1263 = vmatpush1.msra.mxu0 0.0
    %1264 = vmatprep.subr.mxu0 0.0
    %1265 = vmatpush1.msra.mxu0 0.0
    %1266 = vmatprep.subr.mxu0 0.0
    %1267 = vmatpush1.msra.mxu0 0.0
    %1268 = vmatprep.subr.mxu0 0.0
    %1269 = vmatpush1.msra.mxu0 0.0
    %1270 = vmatprep.subr.mxu0 0.0
    %1271 = vmatpush1.msra.mxu0 0.0
    %1272 = vmatprep.subr.mxu0 0.0
    %1273 = vmatpush1.msra.mxu0 0.0
    %1274 = vmatprep.subr.mxu0 0.0
    %1275 = vmatpush1.msra.mxu0 0.0
    %1276 = vmatprep.subr.mxu0 0.0
    %1277 = vmatpush1.msra.mxu0 0.0
    %1278 = vmatprep.subr.mxu0 0.0
    %1279 = vmatpush1.msra.mxu0 0.0
    %1280 = vmatprep.subr.mxu0 0.0
    %1281 = vmatpush1.msra.mxu0 0.0
    %1282 = vmatprep.subr.mxu0 0.0
    %1283 = vmatpush1.msra.mxu0 0.0
    %1284 = vmatprep.subr.mxu0 0.0
    %1285 = vmatpush1.msra.mxu0 0.0
    %1286 = vmatprep.subr.mxu0 0.0
    %1287 = vmatpush1.msra.mxu0 0.0
    %1288 = vmatprep.subr.mxu0 0.0
    %1289 = vmatpush1.msra.mxu0 0.0
    %1290 = vmatprep.subr.mxu0 0.0
    %1291 = vmatpush1.msra.mxu0 0.0
    %1292 = vmatprep.subr.mxu0 0.0
    %1293 = vmatpush1.msra.mxu0 0.0
    %1294 = vmatprep.subr.mxu0 0.0
    %1295 = vmatpush1.msra.mxu0 0.0
    %1296 = vmatprep.subr.mxu0 0.0
    %1297 = vmatpush1.msra.mxu0 0.0
    %1298 = vmatprep.subr.mxu0 0.0
    %1299 = vmatpush1.msra.mxu0 0.0
    %1300 = vmatprep.subr.mxu0 0.0
    %1301 = vmatpush1.msra.mxu0 0.0
    %1302 = vmatprep.subr.mxu0 0.0
    %1303 = vmatpush1.msra.mxu0 0.0
    %1304 = vmatprep.subr.mxu0 0.0
    %1305 = vmatpush1.msra.mxu0 0.0
    %1306 = vmatprep.subr.mxu0 0.0
    %1307 = vmatpush1.msra.mxu0 0.0
    %1308 = vmatprep.subr.mxu0 0.0
    %1309 = vmatpush1.msra.mxu0 0.0
    %1310 = vmatprep.mubr.f32.mxu0 0.0
    %v1311 = vand.u32 %v37, 4294901760
    %v1312 = vsub.f32 %v37, %v1311
    %1313 = vmatmul.mubr.f32.gmra.mrb[0].mxu0 %v1312
    %v1314 = vpop.f32.mrb[0].mxu0
    %v1315 = vadd.f32 %v1233, %v1314
    %v1316 = vpop.f32.mrb[0].mxu0
    %1317 = vmatprep.mubr.f32.mxu0 0.0
    %v1318 = vand.u32 %v40, 4294901760
    %v1319 = vsub.f32 %v40, %v1318
    %1320 = vmatmul.mubr.f32.gmra.mrb[0].mxu0 %v1319
    %v1321 = vpop.f32.mrb[0].mxu0
    %v1322 = vadd.f32 %v1239, %v1321
    %v1323 = vpop.f32.mrb[0].mxu0
    %1324 = vdwg.mxu0
    %1325 = vmatprep.subr.mxu0 0.0
    %v1326 = vand.u32 %v1048, 4294901760
    %1327 = vmatpush1.msra.mxu0 %v1326
    %1328 = vmatprep.subr.mxu0 0.0
    %v1329 = vand.u32 %v1054, 4294901760
    %1330 = vmatpush1.msra.mxu0 %v1329
    %1331 = vmatprep.subr.mxu0 0.0
    %1332 = vmatpush1.msra.mxu0 0.0
    %1333 = vmatprep.subr.mxu0 0.0
    %1334 = vmatpush1.msra.mxu0 0.0
    %1335 = vmatprep.subr.mxu0 0.0
    %1336 = vmatpush1.msra.mxu0 0.0
    %1337 = vmatprep.subr.mxu0 0.0
    %1338 = vmatpush1.msra.mxu0 0.0
    %1339 = vmatprep.subr.mxu0 0.0
    %1340 = vmatpush1.msra.mxu0 0.0
    %1341 = vmatprep.subr.mxu0 0.0
    %1342 = vmatpush1.msra.mxu0 0.0
    %1343 = vmatprep.subr.mxu0 0.0
    %1344 = vmatpush1.msra.mxu0 0.0
    %1345 = vmatprep.subr.mxu0 0.0
    %1346 = vmatpush1.msra.mxu0 0.0
    %1347 = vmatprep.subr.mxu0 0.0
    %1348 = vmatpush1.msra.mxu0 0.0
    %1349 = vmatprep.subr.mxu0 0.0
    %1350 = vmatpush1.msra.mxu0 0.0
    %1351 = vmatprep.subr.mxu0 0.0
    %1352 = vmatpush1.msra.mxu0 0.0
    %1353 = vmatprep.subr.mxu0 0.0
    %1354 = vmatpush1.msra.mxu0 0.0
    %1355 = vmatprep.subr.mxu0 0.0
    %1356 = vmatpush1.msra.mxu0 0.0
    %1357 = vmatprep.subr.mxu0 0.0
    %1358 = vmatpush1.msra.mxu0 0.0
    %1359 = vmatprep.subr.mxu0 0.0
    %1360 = vmatpush1.msra.mxu0 0.0
    %1361 = vmatprep.subr.mxu0 0.0
    %1362 = vmatpush1.msra.mxu0 0.0
    %1363 = vmatprep.subr.mxu0 0.0
    %1364 = vmatpush1.msra.mxu0 0.0
    %1365 = vmatprep.subr.mxu0 0.0
    %1366 = vmatpush1.msra.mxu0 0.0
    %1367 = vmatprep.subr.mxu0 0.0
    %1368 = vmatpush1.msra.mxu0 0.0
    %1369 = vmatprep.subr.mxu0 0.0
    %1370 = vmatpush1.msra.mxu0 0.0
    %1371 = vmatprep.subr.mxu0 0.0
    %1372 = vmatpush1.msra.mxu0 0.0
    %1373 = vmatprep.subr.mxu0 0.0
    %1374 = vmatpush1.msra.mxu0 0.0
    %1375 = vmatprep.subr.mxu0 0.0
    %1376 = vmatpush1.msra.mxu0 0.0
    %1377 = vmatprep.subr.mxu0 0.0
    %1378 = vmatpush1.msra.mxu0 0.0
    %1379 = vmatprep.subr.mxu0 0.0
    %1380 = vmatpush1.msra.mxu0 0.0
    %1381 = vmatprep.subr.mxu0 0.0
    %1382 = vmatpush1.msra.mxu0 0.0
    %1383 = vmatprep.subr.mxu0 0.0
    %1384 = vmatpush1.msra.mxu0 0.0
    %1385 = vmatprep.subr.mxu0 0.0
    %1386 = vmatpush1.msra.mxu0 0.0
    %1387 = vmatprep.subr.mxu0 0.0
    %1388 = vmatpush1.msra.mxu0 0.0
    %1389 = vmatprep.subr.mxu0 0.0
    %1390 = vmatpush1.msra.mxu0 0.0
    %1391 = vmatprep.mubr.f32.mxu0 0.0
    %v1392 = vand.u32 %v37, 4294901760
    %v1393 = vsub.f32 %v37, %v1392
    %v1394 = vand.u32 %v1393, 4294901760
    %1395 = vmatmul.mubr.f32.gmra.mrb[0].mxu0 %v1394
    %v1396 = vpop.f32.mrb[0].mxu0
    %v1397 = vadd.f32 %v1315, %v1396
    %v1398 = vpop.f32.mrb[0].mxu0
    %1399 = vmatprep.mubr.f32.mxu0 0.0
    %v1400 = vand.u32 %v40, 4294901760
    %v1401 = vsub.f32 %v40, %v1400
    %v1402 = vand.u32 %v1401, 4294901760
    %1403 = vmatmul.mubr.f32.gmra.mrb[0].mxu0 %v1402
    %v1404 = vpop.f32.mrb[0].mxu0
    %v1405 = vadd.f32 %v1322, %v1404
    %v1406 = vpop.f32.mrb[0].mxu0
    %1407 = vdwg.mxu0
    %1408 = vmatprep.subr.mxu0 0.0
    %v1409 = vand.u32 %v1048, 4294901760
    %v1410 = vsub.f32 %v1048, %v1409
    %v1411 = vand.u32 %v1410, 4294901760
    %1412 = vmatpush1.msra.mxu0 %v1411
    %1413 = vmatprep.subr.mxu0 0.0
    %v1414 = vand.u32 %v1054, 4294901760
    %v1415 = vsub.f32 %v1054, %v1414
    %v1416 = vand.u32 %v1415, 4294901760
    %1417 = vmatpush1.msra.mxu0 %v1416
    %1418 = vmatprep.subr.mxu0 0.0
    %1419 = vmatpush1.msra.mxu0 0.0
    %1420 = vmatprep.subr.mxu0 0.0
    %1421 = vmatpush1.msra.mxu0 0.0
    %1422 = vmatprep.subr.mxu0 0.0
    %1423 = vmatpush1.msra.mxu0 0.0
    %1424 = vmatprep.subr.mxu0 0.0
    %1425 = vmatpush1.msra.mxu0 0.0
    %1426 = vmatprep.subr.mxu0 0.0
    %1427 = vmatpush1.msra.mxu0 0.0
    %1428 = vmatprep.subr.mxu0 0.0
    %1429 = vmatpush1.msra.mxu0 0.0
    %1430 = vmatprep.subr.mxu0 0.0
    %1431 = vmatpush1.msra.mxu0 0.0
    %1432 = vmatprep.subr.mxu0 0.0
    %1433 = vmatpush1.msra.mxu0 0.0
    %1434 = vmatprep.subr.mxu0 0.0
    %1435 = vmatpush1.msra.mxu0 0.0
    %1436 = vmatprep.subr.mxu0 0.0
    %1437 = vmatpush1.msra.mxu0 0.0
    %1438 = vmatprep.subr.mxu0 0.0
    %1439 = vmatpush1.msra.mxu0 0.0
    %1440 = vmatprep.subr.mxu0 0.0
    %1441 = vmatpush1.msra.mxu0 0.0
    %1442 = vmatprep.subr.mxu0 0.0
    %1443 = vmatpush1.msra.mxu0 0.0
    %1444 = vmatprep.subr.mxu0 0.0
    %1445 = vmatpush1.msra.mxu0 0.0
    %1446 = vmatprep.subr.mxu0 0.0
    %1447 = vmatpush1.msra.mxu0 0.0
    %1448 = vmatprep.subr.mxu0 0.0
    %1449 = vmatpush1.msra.mxu0 0.0
    %1450 = vmatprep.subr.mxu0 0.0
    %1451 = vmatpush1.msra.mxu0 0.0
    %1452 = vmatprep.subr.mxu0 0.0
    %1453 = vmatpush1.msra.mxu0 0.0
    %1454 = vmatprep.subr.mxu0 0.0
    %1455 = vmatpush1.msra.mxu0 0.0
    %1456 = vmatprep.subr.mxu0 0.0
    %1457 = vmatpush1.msra.mxu0 0.0
    %1458 = vmatprep.subr.mxu0 0.0
    %1459 = vmatpush1.msra.mxu0 0.0
    %1460 = vmatprep.subr.mxu0 0.0
    %1461 = vmatpush1.msra.mxu0 0.0
    %1462 = vmatprep.subr.mxu0 0.0
    %1463 = vmatpush1.msra.mxu0 0.0
    %1464 = vmatprep.subr.mxu0 0.0
    %1465 = vmatpush1.msra.mxu0 0.0
    %1466 = vmatprep.subr.mxu0 0.0
    %1467 = vmatpush1.msra.mxu0 0.0
    %1468 = vmatprep.subr.mxu0 0.0
    %1469 = vmatpush1.msra.mxu0 0.0
    %1470 = vmatprep.subr.mxu0 0.0
    %1471 = vmatpush1.msra.mxu0 0.0
    %1472 = vmatprep.subr.mxu0 0.0
    %1473 = vmatpush1.msra.mxu0 0.0
    %1474 = vmatprep.subr.mxu0 0.0
    %1475 = vmatpush1.msra.mxu0 0.0
    %1476 = vmatprep.subr.mxu0 0.0
    %1477 = vmatpush1.msra.mxu0 0.0
    %1478 = vmatprep.mubr.f32.mxu0 0.0
    %v1479 = vand.u32 %v37, 4294901760
    %1480 = vmatmul.mubr.f32.gmra.mrb[0].mxu0 %v1479
    %v1481 = vpop.f32.mrb[0].mxu0
    %v1482 = vadd.f32 %v1397, %v1481
    %v1483 = vpop.f32.mrb[0].mxu0
    %1484 = vmatprep.mubr.f32.mxu0 0.0
    %v1485 = vand.u32 %v40, 4294901760
    %1486 = vmatmul.mubr.f32.gmra.mrb[0].mxu0 %v1485
    %v1487 = vpop.f32.mrb[0].mxu0
    %v1488 = vadd.f32 %v1405, %v1487
    %v1489 = vpop.f32.mrb[0].mxu0
    %1490 = vdwg.mxu0
    %1491 = vmatprep.subr.mxu0 0.0
    %v1492 = vand.u32 %v1048, 4294901760
    %1493 = vmatpush1.msra.mxu0 %v1492
    %1494 = vmatprep.subr.mxu0 0.0
    %v1495 = vand.u32 %v1054, 4294901760
    %1496 = vmatpush1.msra.mxu0 %v1495
    %1497 = vmatprep.subr.mxu0 0.0
    %1498 = vmatpush1.msra.mxu0 0.0
    %1499 = vmatprep.subr.mxu0 0.0
    %1500 = vmatpush1.msra.mxu0 0.0
    %1501 = vmatprep.subr.mxu0 0.0
    %1502 = vmatpush1.msra.mxu0 0.0
    %1503 = vmatprep.subr.mxu0 0.0
    %1504 = vmatpush1.msra.mxu0 0.0
    %1505 = vmatprep.subr.mxu0 0.0
    %1506 = vmatpush1.msra.mxu0 0.0
    %1507 = vmatprep.subr.mxu0 0.0
    %1508 = vmatpush1.msra.mxu0 0.0
    %1509 = vmatprep.subr.mxu0 0.0
    %1510 = vmatpush1.msra.mxu0 0.0
    %1511 = vmatprep.subr.mxu0 0.0
    %1512 = vmatpush1.msra.mxu0 0.0
    %1513 = vmatprep.subr.mxu0 0.0
    %1514 = vmatpush1.msra.mxu0 0.0
    %1515 = vmatprep.subr.mxu0 0.0
    %1516 = vmatpush1.msra.mxu0 0.0
    %1517 = vmatprep.subr.mxu0 0.0
    %1518 = vmatpush1.msra.mxu0 0.0
    %1519 = vmatprep.subr.mxu0 0.0
    %1520 = vmatpush1.msra.mxu0 0.0
    %1521 = vmatprep.subr.mxu0 0.0
    %1522 = vmatpush1.msra.mxu0 0.0
    %1523 = vmatprep.subr.mxu0 0.0
    %1524 = vmatpush1.msra.mxu0 0.0
    %1525 = vmatprep.subr.mxu0 0.0
    %1526 = vmatpush1.msra.mxu0 0.0
    %1527 = vmatprep.subr.mxu0 0.0
    %1528 = vmatpush1.msra.mxu0 0.0
    %1529 = vmatprep.subr.mxu0 0.0
    %1530 = vmatpush1.msra.mxu0 0.0
    %1531 = vmatprep.subr.mxu0 0.0
    %1532 = vmatpush1.msra.mxu0 0.0
    %1533 = vmatprep.subr.mxu0 0.0
    %1534 = vmatpush1.msra.mxu0 0.0
    %1535 = vmatprep.subr.mxu0 0.0
    %1536 = vmatpush1.msra.mxu0 0.0
    %1537 = vmatprep.subr.mxu0 0.0
    %1538 = vmatpush1.msra.mxu0 0.0
    %1539 = vmatprep.subr.mxu0 0.0
    %1540 = vmatpush1.msra.mxu0 0.0
    %1541 = vmatprep.subr.mxu0 0.0
    %1542 = vmatpush1.msra.mxu0 0.0
    %1543 = vmatprep.subr.mxu0 0.0
    %1544 = vmatpush1.msra.mxu0 0.0
    %1545 = vmatprep.subr.mxu0 0.0
    %1546 = vmatpush1.msra.mxu0 0.0
    %1547 = vmatprep.subr.mxu0 0.0
    %1548 = vmatpush1.msra.mxu0 0.0
    %1549 = vmatprep.subr.mxu0 0.0
    %1550 = vmatpush1.msra.mxu0 0.0
    %1551 = vmatprep.subr.mxu0 0.0
    %1552 = vmatpush1.msra.mxu0 0.0
    %1553 = vmatprep.subr.mxu0 0.0
    %1554 = vmatpush1.msra.mxu0 0.0
    %1555 = vmatprep.subr.mxu0 0.0
    %1556 = vmatpush1.msra.mxu0 0.0
    %1557 = vmatprep.mubr.f32.mxu0 0.0
    %v1558 = vand.u32 %v37, 4294901760
    %1559 = vmatmul.mubr.f32.gmra.mrb[0].mxu0 %v1558
    %v1560 = vpop.f32.mrb[0].mxu0
    %v1561 = vadd.f32 %v1482, %v1560
    %v1562 = vpop.f32.mrb[0].mxu0
    %1563 = vmatprep.mubr.f32.mxu0 0.0
    %v1564 = vand.u32 %v40, 4294901760
    %1565 = vmatmul.mubr.f32.gmra.mrb[0].mxu0 %v1564
    %v1566 = vpop.f32.mrb[0].mxu0
    %v1567 = vadd.f32 %v1488, %v1566
    %v1568 = vpop.f32.mrb[0].mxu0
    %1569 = vdwg.mxu0
    %1572 = vrot.lane.b32.xlu0 %v1561, 24
    %v1573 = vpop.permute.xlu0 %1572
    %1574 = vrot.lane.b32.xlu0 %v1567, 24
    %v1575 = vpop.permute.xlu0 %1574
    %vm1578 = vcmask 261312
    %1579 = vst.msk [vmem:[#allocation2] sm:$0xff] %vm1578, %v1573
    %1580 = vst.msk [vmem:[#allocation2 + $0x8] sm:$0xff] %vm1578, %v1575
    %v1581 = vld [vmem:[#allocation3] sm:$0xff]
    %v1582 = vld [vmem:[#allocation3 + $0x8] sm:$0xff]
    %v1583 = vld [vmem:[#allocation3 + $0x10] sm:$0xff]
    %v1584 = vld [vmem:[#allocation3 + $0x18] sm:$0xff]
    %v1585 = vld [vmem:[#allocation3 + $0xa0] sm:$0x1]
    %v1586 = vld [vmem:[#allocation2] sm:$0xff]
    %v1587 = vld [vmem:[#allocation2 + $0x8] sm:$0xff]
    %v1588 = vlaneseq
    %v1589 = vshrl.u32 %v1588, 7
    %v1590 = vsub.s32 0, %v1589
    %v1591 = vrot.slane %v1585, %v1590
    %vm1592 = vcmask 261120
    %v1594 = vsel %vm1592, %v1586, 0
    %v1597 = vsel %vm1592, %v1587, 0
    %1599 = vmatprep.subr.mxu0 0.0
    %v1600 = vand.u32 %v1581, 4294901760
    %1601 = vmatpush1.msra.mxu0 %v1600
    %1602 = vmatprep.subr.mxu0 0.0
    %v1603 = vand.u32 %v1582, 4294901760
    %1604 = vmatpush1.msra.mxu0 %v1603
    %1605 = vmatprep.subr.mxu0 0.0
    %v1606 = vand.u32 %v1583, 4294901760
    %1607 = vmatpush1.msra.mxu0 %v1606
    %1608 = vmatprep.subr.mxu0 0.0
    %v1609 = vand.u32 %v1584, 4294901760
    %1610 = vmatpush1.msra.mxu0 %v1609
    %1611 = vmatprep.subr.mxu0 0.0
    %1612 = vmatpush1.msra.mxu0 0.0
    %1613 = vmatprep.subr.mxu0 0.0
    %1614 = vmatpush1.msra.mxu0 0.0
    %1615 = vmatprep.subr.mxu0 0.0
    %1616 = vmatpush1.msra.mxu0 0.0
    %1617 = vmatprep.subr.mxu0 0.0
    %1618 = vmatpush1.msra.mxu0 0.0
    %1619 = vmatprep.subr.mxu0 0.0
    %1620 = vmatpush1.msra.mxu0 0.0
    %1621 = vmatprep.subr.mxu0 0.0
    %1622 = vmatpush1.msra.mxu0 0.0
    %1623 = vmatprep.subr.mxu0 0.0
    %1624 = vmatpush1.msra.mxu0 0.0
    %1625 = vmatprep.subr.mxu0 0.0
    %1626 = vmatpush1.msra.mxu0 0.0
    %1627 = vmatprep.subr.mxu0 0.0
    %1628 = vmatpush1.msra.mxu0 0.0
    %1629 = vmatprep.subr.mxu0 0.0
    %1630 = vmatpush1.msra.mxu0 0.0
    %1631 = vmatprep.subr.mxu0 0.0
    %1632 = vmatpush1.msra.mxu0 0.0
    %1633 = vmatprep.subr.mxu0 0.0
    %1634 = vmatpush1.msra.mxu0 0.0
    %1635 = vmatprep.subr.mxu0 0.0
    %1636 = vmatpush1.msra.mxu0 0.0
    %1637 = vmatprep.subr.mxu0 0.0
    %1638 = vmatpush1.msra.mxu0 0.0
    %1639 = vmatprep.subr.mxu0 0.0
    %1640 = vmatpush1.msra.mxu0 0.0
    %1641 = vmatprep.subr.mxu0 0.0
    %1642 = vmatpush1.msra.mxu0 0.0
    %1643 = vmatprep.subr.mxu0 0.0
    %1644 = vmatpush1.msra.mxu0 0.0
    %1645 = vmatprep.subr.mxu0 0.0
    %1646 = vmatpush1.msra.mxu0 0.0
    %1647 = vmatprep.subr.mxu0 0.0
    %1648 = vmatpush1.msra.mxu0 0.0
    %1649 = vmatprep.subr.mxu0 0.0
    %1650 = vmatpush1.msra.mxu0 0.0
    %1651 = vmatprep.subr.mxu0 0.0
    %1652 = vmatpush1.msra.mxu0 0.0
    %1653 = vmatprep.subr.mxu0 0.0
    %1654 = vmatpush1.msra.mxu0 0.0
    %1655 = vmatprep.subr.mxu0 0.0
    %1656 = vmatpush1.msra.mxu0 0.0
    %1657 = vmatprep.subr.mxu0 0.0
    %1658 = vmatpush1.msra.mxu0 0.0
    %1659 = vmatprep.subr.mxu0 0.0
    %1660 = vmatpush1.msra.mxu0 0.0
    %1661 = vmatprep.subr.mxu0 0.0
    %1662 = vmatpush1.msra.mxu0 0.0
    %1663 = vmatprep.subr.mxu0 0.0
    %1664 = vmatpush1.msra.mxu0 0.0
    %1665 = vmatprep.subr.mxu0 0.0
    %1666 = vmatpush1.msra.mxu0 0.0
    %1667 = vmatprep.mubr.f32.mxu0 0.0
    %v1668 = vand.u32 %v1594, 4294901760
    %v1669 = vsub.f32 %v1594, %v1668
    %v1670 = vand.u32 %v1669, 4294901760
    %v1671 = vsub.f32 %v1669, %v1670
    %v1672 = vand.u32 %v1671, 4294901760
    %1673 = vmatmul.mubr.f32.gmra.mrb[0].mxu0 %v1672
    %v1674 = vpop.f32.mrb[0].mxu0
    %v1675 = vadd.f32 %v1591, %v1674
    %v1676 = vpop.f32.mrb[0].mxu0
    %1677 = vmatprep.mubr.f32.mxu0 0.0
    %v1678 = vand.u32 %v1597, 4294901760
    %v1679 = vsub.f32 %v1597, %v1678
    %v1680 = vand.u32 %v1679, 4294901760
    %v1681 = vsub.f32 %v1679, %v1680
    %v1682 = vand.u32 %v1681, 4294901760
    %1683 = vmatmul.mubr.f32.gmra.mrb[0].mxu0 %v1682
    %v1684 = vpop.f32.mrb[0].mxu0
    %v1685 = vadd.f32 %v1591, %v1684
    %v1686 = vpop.f32.mrb[0].mxu0
    %1687 = vdwg.mxu0
    %1688 = vmatprep.subr.mxu0 0.0
    %v1689 = vand.u32 %v1581, 4294901760
    %v1690 = vsub.f32 %v1581, %v1689
    %v1691 = vand.u32 %v1690, 4294901760
    %v1692 = vsub.f32 %v1690, %v1691
    %v1693 = vand.u32 %v1692, 4294901760
    %1694 = vmatpush1.msra.mxu0 %v1693
    %1695 = vmatprep.subr.mxu0 0.0
    %v1696 = vand.u32 %v1582, 4294901760
    %v1697 = vsub.f32 %v1582, %v1696
    %v1698 = vand.u32 %v1697, 4294901760
    %v1699 = vsub.f32 %v1697, %v1698
    %v1700 = vand.u32 %v1699, 4294901760
    %1701 = vmatpush1.msra.mxu0 %v1700
    %1702 = vmatprep.subr.mxu0 0.0
    %v1703 = vand.u32 %v1583, 4294901760
    %v1704 = vsub.f32 %v1583, %v1703
    %v1705 = vand.u32 %v1704, 4294901760
    %v1706 = vsub.f32 %v1704, %v1705
    %v1707 = vand.u32 %v1706, 4294901760
    %1708 = vmatpush1.msra.mxu0 %v1707
    %1709 = vmatprep.subr.mxu0 0.0
    %v1710 = vand.u32 %v1584, 4294901760
    %v1711 = vsub.f32 %v1584, %v1710
    %v1712 = vand.u32 %v1711, 4294901760
    %v1713 = vsub.f32 %v1711, %v1712
    %v1714 = vand.u32 %v1713, 4294901760
    %1715 = vmatpush1.msra.mxu0 %v1714
    %1716 = vmatprep.subr.mxu0 0.0
    %1717 = vmatpush1.msra.mxu0 0.0
    %1718 = vmatprep.subr.mxu0 0.0
    %1719 = vmatpush1.msra.mxu0 0.0
    %1720 = vmatprep.subr.mxu0 0.0
    %1721 = vmatpush1.msra.mxu0 0.0
    %1722 = vmatprep.subr.mxu0 0.0
    %1723 = vmatpush1.msra.mxu0 0.0
    %1724 = vmatprep.subr.mxu0 0.0
    %1725 = vmatpush1.msra.mxu0 0.0
    %1726 = vmatprep.subr.mxu0 0.0
    %1727 = vmatpush1.msra.mxu0 0.0
    %1728 = vmatprep.subr.mxu0 0.0
    %1729 = vmatpush1.msra.mxu0 0.0
    %1730 = vmatprep.subr.mxu0 0.0
    %1731 = vmatpush1.msra.mxu0 0.0
    %1732 = vmatprep.subr.mxu0 0.0
    %1733 = vmatpush1.msra.mxu0 0.0
    %1734 = vmatprep.subr.mxu0 0.0
    %1735 = vmatpush1.msra.mxu0 0.0
    %1736 = vmatprep.subr.mxu0 0.0
    %1737 = vmatpush1.msra.mxu0 0.0
    %1738 = vmatprep.subr.mxu0 0.0
    %1739 = vmatpush1.msra.mxu0 0.0
    %1740 = vmatprep.subr.mxu0 0.0
    %1741 = vmatpush1.msra.mxu0 0.0
    %1742 = vmatprep.subr.mxu0 0.0
    %1743 = vmatpush1.msra.mxu0 0.0
    %1744 = vmatprep.subr.mxu0 0.0
    %1745 = vmatpush1.msra.mxu0 0.0
    %1746 = vmatprep.subr.mxu0 0.0
    %1747 = vmatpush1.msra.mxu0 0.0
    %1748 = vmatprep.subr.mxu0 0.0
    %1749 = vmatpush1.msra.mxu0 0.0
    %1750 = vmatprep.subr.mxu0 0.0
    %1751 = vmatpush1.msra.mxu0 0.0
    %1752 = vmatprep.subr.mxu0 0.0
    %1753 = vmatpush1.msra.mxu0 0.0
    %1754 = vmatprep.subr.mxu0 0.0
    %1755 = vmatpush1.msra.mxu0 0.0
    %1756 = vmatprep.subr.mxu0 0.0
    %1757 = vmatpush1.msra.mxu0 0.0
    %1758 = vmatprep.subr.mxu0 0.0
    %1759 = vmatpush1.msra.mxu0 0.0
    %1760 = vmatprep.subr.mxu0 0.0
    %1761 = vmatpush1.msra.mxu0 0.0
    %1762 = vmatprep.subr.mxu0 0.0
    %1763 = vmatpush1.msra.mxu0 0.0
    %1764 = vmatprep.subr.mxu0 0.0
    %1765 = vmatpush1.msra.mxu0 0.0
    %1766 = vmatprep.subr.mxu0 0.0
    %1767 = vmatpush1.msra.mxu0 0.0
    %1768 = vmatprep.subr.mxu0 0.0
    %1769 = vmatpush1.msra.mxu0 0.0
    %1770 = vmatprep.subr.mxu0 0.0
    %1771 = vmatpush1.msra.mxu0 0.0
    %1772 = vmatprep.mubr.f32.mxu0 0.0
    %v1773 = vand.u32 %v1594, 4294901760
    %1774 = vmatmul.mubr.f32.gmra.mrb[0].mxu0 %v1773
    %v1775 = vpop.f32.mrb[0].mxu0
    %v1776 = vadd.f32 %v1675, %v1775
    %v1777 = vpop.f32.mrb[0].mxu0
    %1778 = vmatprep.mubr.f32.mxu0 0.0
    %v1779 = vand.u32 %v1597, 4294901760
    %1780 = vmatmul.mubr.f32.gmra.mrb[0].mxu0 %v1779
    %v1781 = vpop.f32.mrb[0].mxu0
    %v1782 = vadd.f32 %v1685, %v1781
    %v1783 = vpop.f32.mrb[0].mxu0
    %1784 = vdwg.mxu0
    %1785 = vmatprep.subr.mxu0 0.0
    %v1786 = vand.u32 %v1581, 4294901760
    %v1787 = vsub.f32 %v1581, %v1786
    %1788 = vmatpush1.msra.mxu0 %v1787
    %1789 = vmatprep.subr.mxu0 0.0
    %v1790 = vand.u32 %v1582, 4294901760
    %v1791 = vsub.f32 %v1582, %v1790
    %1792 = vmatpush1.msra.mxu0 %v1791
    %1793 = vmatprep.subr.mxu0 0.0
    %v1794 = vand.u32 %v1583, 4294901760
    %v1795 = vsub.f32 %v1583, %v1794
    %1796 = vmatpush1.msra.mxu0 %v1795
    %1797 = vmatprep.subr.mxu0 0.0
    %v1798 = vand.u32 %v1584, 4294901760
    %v1799 = vsub.f32 %v1584, %v1798
    %1800 = vmatpush1.msra.mxu0 %v1799
    %1801 = vmatprep.subr.mxu0 0.0
    %1802 = vmatpush1.msra.mxu0 0.0
    %1803 = vmatprep.subr.mxu0 0.0
    %1804 = vmatpush1.msra.mxu0 0.0
    %1805 = vmatprep.subr.mxu0 0.0
    %1806 = vmatpush1.msra.mxu0 0.0
    %1807 = vmatprep.subr.mxu0 0.0
    %1808 = vmatpush1.msra.mxu0 0.0
    %1809 = vmatprep.subr.mxu0 0.0
    %1810 = vmatpush1.msra.mxu0 0.0
    %1811 = vmatprep.subr.mxu0 0.0
    %1812 = vmatpush1.msra.mxu0 0.0
    %1813 = vmatprep.subr.mxu0 0.0
    %1814 = vmatpush1.msra.mxu0 0.0
    %1815 = vmatprep.subr.mxu0 0.0
    %1816 = vmatpush1.msra.mxu0 0.0
    %1817 = vmatprep.subr.mxu0 0.0
    %1818 = vmatpush1.msra.mxu0 0.0
    %1819 = vmatprep.subr.mxu0 0.0
    %1820 = vmatpush1.msra.mxu0 0.0
    %1821 = vmatprep.subr.mxu0 0.0
    %1822 = vmatpush1.msra.mxu0 0.0
    %1823 = vmatprep.subr.mxu0 0.0
    %1824 = vmatpush1.msra.mxu0 0.0
    %1825 = vmatprep.subr.mxu0 0.0
    %1826 = vmatpush1.msra.mxu0 0.0
    %1827 = vmatprep.subr.mxu0 0.0
    %1828 = vmatpush1.msra.mxu0 0.0
    %1829 = vmatprep.subr.mxu0 0.0
    %1830 = vmatpush1.msra.mxu0 0.0
    %1831 = vmatprep.subr.mxu0 0.0
    %1832 = vmatpush1.msra.mxu0 0.0
    %1833 = vmatprep.subr.mxu0 0.0
    %1834 = vmatpush1.msra.mxu0 0.0
    %1835 = vmatprep.subr.mxu0 0.0
    %1836 = vmatpush1.msra.mxu0 0.0
    %1837 = vmatprep.subr.mxu0 0.0
    %1838 = vmatpush1.msra.mxu0 0.0
    %1839 = vmatprep.subr.mxu0 0.0
    %1840 = vmatpush1.msra.mxu0 0.0
    %1841 = vmatprep.subr.mxu0 0.0
    %1842 = vmatpush1.msra.mxu0 0.0
    %1843 = vmatprep.subr.mxu0 0.0
    %1844 = vmatpush1.msra.mxu0 0.0
    %1845 = vmatprep.subr.mxu0 0.0
    %1846 = vmatpush1.msra.mxu0 0.0
    %1847 = vmatprep.subr.mxu0 0.0
    %1848 = vmatpush1.msra.mxu0 0.0
    %1849 = vmatprep.subr.mxu0 0.0
    %1850 = vmatpush1.msra.mxu0 0.0
    %1851 = vmatprep.subr.mxu0 0.0
    %1852 = vmatpush1.msra.mxu0 0.0
    %1853 = vmatprep.subr.mxu0 0.0
    %1854 = vmatpush1.msra.mxu0 0.0
    %1855 = vmatprep.subr.mxu0 0.0
    %1856 = vmatpush1.msra.mxu0 0.0
    %1857 = vmatprep.mubr.f32.mxu0 0.0
    %v1858 = vand.u32 %v1594, 4294901760
    %v1859 = vsub.f32 %v1594, %v1858
    %1860 = vmatmul.mubr.f32.gmra.mrb[0].mxu0 %v1859
    %v1861 = vpop.f32.mrb[0].mxu0
    %v1862 = vadd.f32 %v1776, %v1861
    %v1863 = vpop.f32.mrb[0].mxu0
    %1864 = vmatprep.mubr.f32.mxu0 0.0
    %v1865 = vand.u32 %v1597, 4294901760
    %v1866 = vsub.f32 %v1597, %v1865
    %1867 = vmatmul.mubr.f32.gmra.mrb[0].mxu0 %v1866
    %v1868 = vpop.f32.mrb[0].mxu0
    %v1869 = vadd.f32 %v1782, %v1868
    %v1870 = vpop.f32.mrb[0].mxu0
    %1871 = vdwg.mxu0
    %1872 = vmatprep.subr.mxu0 0.0
    %v1873 = vand.u32 %v1581, 4294901760
    %1874 = vmatpush1.msra.mxu0 %v1873
    %1875 = vmatprep.subr.mxu0 0.0
    %v1876 = vand.u32 %v1582, 4294901760
    %1877 = vmatpush1.msra.mxu0 %v1876
    %1878 = vmatprep.subr.mxu0 0.0
    %v1879 = vand.u32 %v1583, 4294901760
    %1880 = vmatpush1.msra.mxu0 %v1879
    %1881 = vmatprep.subr.mxu0 0.0
    %v1882 = vand.u32 %v1584, 4294901760
    %1883 = vmatpush1.msra.mxu0 %v1882
    %1884 = vmatprep.subr.mxu0 0.0
    %1885 = vmatpush1.msra.mxu0 0.0
    %1886 = vmatprep.subr.mxu0 0.0
    %1887 = vmatpush1.msra.mxu0 0.0
    %1888 = vmatprep.subr.mxu0 0.0
    %1889 = vmatpush1.msra.mxu0 0.0
    %1890 = vmatprep.subr.mxu0 0.0
    %1891 = vmatpush1.msra.mxu0 0.0
    %1892 = vmatprep.subr.mxu0 0.0
    %1893 = vmatpush1.msra.mxu0 0.0
    %1894 = vmatprep.subr.mxu0 0.0
    %1895 = vmatpush1.msra.mxu0 0.0
    %1896 = vmatprep.subr.mxu0 0.0
    %1897 = vmatpush1.msra.mxu0 0.0
    %1898 = vmatprep.subr.mxu0 0.0
    %1899 = vmatpush1.msra.mxu0 0.0
    %1900 = vmatprep.subr.mxu0 0.0
    %1901 = vmatpush1.msra.mxu0 0.0
    %1902 = vmatprep.subr.mxu0 0.0
    %1903 = vmatpush1.msra.mxu0 0.0
    %1904 = vmatprep.subr.mxu0 0.0
    %1905 = vmatpush1.msra.mxu0 0.0
    %1906 = vmatprep.subr.mxu0 0.0
    %1907 = vmatpush1.msra.mxu0 0.0
    %1908 = vmatprep.subr.mxu0 0.0
    %1909 = vmatpush1.msra.mxu0 0.0
    %1910 = vmatprep.subr.mxu0 0.0
    %1911 = vmatpush1.msra.mxu0 0.0
    %1912 = vmatprep.subr.mxu0 0.0
    %1913 = vmatpush1.msra.mxu0 0.0
    %1914 = vmatprep.subr.mxu0 0.0
    %1915 = vmatpush1.msra.mxu0 0.0
    %1916 = vmatprep.subr.mxu0 0.0
    %1917 = vmatpush1.msra.mxu0 0.0
    %1918 = vmatprep.subr.mxu0 0.0
    %1919 = vmatpush1.msra.mxu0 0.0
    %1920 = vmatprep.subr.mxu0 0.0
    %1921 = vmatpush1.msra.mxu0 0.0
    %1922 = vmatprep.subr.mxu0 0.0
    %1923 = vmatpush1.msra.mxu0 0.0
    %1924 = vmatprep.subr.mxu0 0.0
    %1925 = vmatpush1.msra.mxu0 0.0
    %1926 = vmatprep.subr.mxu0 0.0
    %1927 = vmatpush1.msra.mxu0 0.0
    %1928 = vmatprep.subr.mxu0 0.0
    %1929 = vmatpush1.msra.mxu0 0.0
    %1930 = vmatprep.subr.mxu0 0.0
    %1931 = vmatpush1.msra.mxu0 0.0
    %1932 = vmatprep.subr.mxu0 0.0
    %1933 = vmatpush1.msra.mxu0 0.0
    %1934 = vmatprep.subr.mxu0 0.0
    %1935 = vmatpush1.msra.mxu0 0.0
    %1936 = vmatprep.subr.mxu0 0.0
    %1937 = vmatpush1.msra.mxu0 0.0
    %1938 = vmatprep.subr.mxu0 0.0
    %1939 = vmatpush1.msra.mxu0 0.0
    %1940 = vmatprep.mubr.f32.mxu0 0.0
    %v1941 = vand.u32 %v1594, 4294901760
    %v1942 = vsub.f32 %v1594, %v1941
    %v1943 = vand.u32 %v1942, 4294901760
    %1944 = vmatmul.mubr.f32.gmra.mrb[0].mxu0 %v1943
    %v1945 = vpop.f32.mrb[0].mxu0
    %v1946 = vadd.f32 %v1862, %v1945
    %v1947 = vpop.f32.mrb[0].mxu0
    %1948 = vmatprep.mubr.f32.mxu0 0.0
    %v1949 = vand.u32 %v1597, 4294901760
    %v1950 = vsub.f32 %v1597, %v1949
    %v1951 = vand.u32 %v1950, 4294901760
    %1952 = vmatmul.mubr.f32.gmra.mrb[0].mxu0 %v1951
    %v1953 = vpop.f32.mrb[0].mxu0
    %v1954 = vadd.f32 %v1869, %v1953
    %v1955 = vpop.f32.mrb[0].mxu0
    %1956 = vdwg.mxu0
    %1957 = vmatprep.subr.mxu0 0.0
    %v1958 = vand.u32 %v1581, 4294901760
    %v1959 = vsub.f32 %v1581, %v1958
    %v1960 = vand.u32 %v1959, 4294901760
    %1961 = vmatpush1.msra.mxu0 %v1960
    %1962 = vmatprep.subr.mxu0 0.0
    %v1963 = vand.u32 %v1582, 4294901760
    %v1964 = vsub.f32 %v1582, %v1963
    %v1965 = vand.u32 %v1964, 4294901760
    %1966 = vmatpush1.msra.mxu0 %v1965
    %1967 = vmatprep.subr.mxu0 0.0
    %v1968 = vand.u32 %v1583, 4294901760
    %v1969 = vsub.f32 %v1583, %v1968
    %v1970 = vand.u32 %v1969, 4294901760
    %1971 = vmatpush1.msra.mxu0 %v1970
    %1972 = vmatprep.subr.mxu0 0.0
    %v1973 = vand.u32 %v1584, 4294901760
    %v1974 = vsub.f32 %v1584, %v1973
    %v1975 = vand.u32 %v1974, 4294901760
    %1976 = vmatpush1.msra.mxu0 %v1975
    %1977 = vmatprep.subr.mxu0 0.0
    %1978 = vmatpush1.msra.mxu0 0.0
    %1979 = vmatprep.subr.mxu0 0.0
    %1980 = vmatpush1.msra.mxu0 0.0
    %1981 = vmatprep.subr.mxu0 0.0
    %1982 = vmatpush1.msra.mxu0 0.0
    %1983 = vmatprep.subr.mxu0 0.0
    %1984 = vmatpush1.msra.mxu0 0.0
    %1985 = vmatprep.subr.mxu0 0.0
    %1986 = vmatpush1.msra.mxu0 0.0
    %1987 = vmatprep.subr.mxu0 0.0
    %1988 = vmatpush1.msra.mxu0 0.0
    %1989 = vmatprep.subr.mxu0 0.0
    %1990 = vmatpush1.msra.mxu0 0.0
    %1991 = vmatprep.subr.mxu0 0.0
    %1992 = vmatpush1.msra.mxu0 0.0
    %1993 = vmatprep.subr.mxu0 0.0
    %1994 = vmatpush1.msra.mxu0 0.0
    %1995 = vmatprep.subr.mxu0 0.0
    %1996 = vmatpush1.msra.mxu0 0.0
    %1997 = vmatprep.subr.mxu0 0.0
    %1998 = vmatpush1.msra.mxu0 0.0
    %1999 = vmatprep.subr.mxu0 0.0
    %2000 = vmatpush1.msra.mxu0 0.0
    %2001 = vmatprep.subr.mxu0 0.0
    %2002 = vmatpush1.msra.mxu0 0.0
    %2003 = vmatprep.subr.mxu0 0.0
    %2004 = vmatpush1.msra.mxu0 0.0
    %2005 = vmatprep.subr.mxu0 0.0
    %2006 = vmatpush1.msra.mxu0 0.0
    %2007 = vmatprep.subr.mxu0 0.0
    %2008 = vmatpush1.msra.mxu0 0.0
    %2009 = vmatprep.subr.mxu0 0.0
    %2010 = vmatpush1.msra.mxu0 0.0
    %2011 = vmatprep.subr.mxu0 0.0
    %2012 = vmatpush1.msra.mxu0 0.0
    %2013 = vmatprep.subr.mxu0 0.0
    %2014 = vmatpush1.msra.mxu0 0.0
    %2015 = vmatprep.subr.mxu0 0.0
    %2016 = vmatpush1.msra.mxu0 0.0
    %2017 = vmatprep.subr.mxu0 0.0
    %2018 = vmatpush1.msra.mxu0 0.0
    %2019 = vmatprep.subr.mxu0 0.0
    %2020 = vmatpush1.msra.mxu0 0.0
    %2021 = vmatprep.subr.mxu0 0.0
    %2022 = vmatpush1.msra.mxu0 0.0
    %2023 = vmatprep.subr.mxu0 0.0
    %2024 = vmatpush1.msra.mxu0 0.0
    %2025 = vmatprep.subr.mxu0 0.0
    %2026 = vmatpush1.msra.mxu0 0.0
    %2027 = vmatprep.subr.mxu0 0.0
    %2028 = vmatpush1.msra.mxu0 0.0
    %2029 = vmatprep.subr.mxu0 0.0
    %2030 = vmatpush1.msra.mxu0 0.0
    %2031 = vmatprep.subr.mxu0 0.0
    %2032 = vmatpush1.msra.mxu0 0.0
    %2033 = vmatprep.mubr.f32.mxu0 0.0
    %v2034 = vand.u32 %v1594, 4294901760
    %2035 = vmatmul.mubr.f32.gmra.mrb[0].mxu0 %v2034
    %v2036 = vpop.f32.mrb[0].mxu0
    %v2037 = vadd.f32 %v1946, %v2036
    %v2038 = vpop.f32.mrb[0].mxu0
    %2039 = vmatprep.mubr.f32.mxu0 0.0
    %v2040 = vand.u32 %v1597, 4294901760
    %2041 = vmatmul.mubr.f32.gmra.mrb[0].mxu0 %v2040
    %v2042 = vpop.f32.mrb[0].mxu0
    %v2043 = vadd.f32 %v1954, %v2042
    %v2044 = vpop.f32.mrb[0].mxu0
    %2045 = vdwg.mxu0
    %2046 = vmatprep.subr.mxu0 0.0
    %v2047 = vand.u32 %v1581, 4294901760
    %2048 = vmatpush1.msra.mxu0 %v2047
    %2049 = vmatprep.subr.mxu0 0.0
    %v2050 = vand.u32 %v1582, 4294901760
    %2051 = vmatpush1.msra.mxu0 %v2050
    %2052 = vmatprep.subr.mxu0 0.0
    %v2053 = vand.u32 %v1583, 4294901760
    %2054 = vmatpush1.msra.mxu0 %v2053
    %2055 = vmatprep.subr.mxu0 0.0
    %v2056 = vand.u32 %v1584, 4294901760
    %2057 = vmatpush1.msra.mxu0 %v2056
    %2058 = vmatprep.subr.mxu0 0.0
    %2059 = vmatpush1.msra.mxu0 0.0
    %2060 = vmatprep.subr.mxu0 0.0
    %2061 = vmatpush1.msra.mxu0 0.0
    %2062 = vmatprep.subr.mxu0 0.0
    %2063 = vmatpush1.msra.mxu0 0.0
    %2064 = vmatprep.subr.mxu0 0.0
    %2065 = vmatpush1.msra.mxu0 0.0
    %2066 = vmatprep.subr.mxu0 0.0
    %2067 = vmatpush1.msra.mxu0 0.0
    %2068 = vmatprep.subr.mxu0 0.0
    %2069 = vmatpush1.msra.mxu0 0.0
    %2070 = vmatprep.subr.mxu0 0.0
    %2071 = vmatpush1.msra.mxu0 0.0
    %2072 = vmatprep.subr.mxu0 0.0
    %2073 = vmatpush1.msra.mxu0 0.0
    %2074 = vmatprep.subr.mxu0 0.0
    %2075 = vmatpush1.msra.mxu0 0.0
    %2076 = vmatprep.subr.mxu0 0.0
    %2077 = vmatpush1.msra.mxu0 0.0
    %2078 = vmatprep.subr.mxu0 0.0
    %2079 = vmatpush1.msra.mxu0 0.0
    %2080 = vmatprep.subr.mxu0 0.0
    %2081 = vmatpush1.msra.mxu0 0.0
    %2082 = vmatprep.subr.mxu0 0.0
    %2083 = vmatpush1.msra.mxu0 0.0
    %2084 = vmatprep.subr.mxu0 0.0
    %2085 = vmatpush1.msra.mxu0 0.0
    %2086 = vmatprep.subr.mxu0 0.0
    %2087 = vmatpush1.msra.mxu0 0.0
    %2088 = vmatprep.subr.mxu0 0.0
    %2089 = vmatpush1.msra.mxu0 0.0
    %2090 = vmatprep.subr.mxu0 0.0
    %2091 = vmatpush1.msra.mxu0 0.0
    %2092 = vmatprep.subr.mxu0 0.0
    %2093 = vmatpush1.msra.mxu0 0.0
    %2094 = vmatprep.subr.mxu0 0.0
    %2095 = vmatpush1.msra.mxu0 0.0
    %2096 = vmatprep.subr.mxu0 0.0
    %2097 = vmatpush1.msra.mxu0 0.0
    %2098 = vmatprep.subr.mxu0 0.0
    %2099 = vmatpush1.msra.mxu0 0.0
    %2100 = vmatprep.subr.mxu0 0.0
    %2101 = vmatpush1.msra.mxu0 0.0
    %2102 = vmatprep.subr.mxu0 0.0
    %2103 = vmatpush1.msra.mxu0 0.0
    %2104 = vmatprep.subr.mxu0 0.0
    %2105 = vmatpush1.msra.mxu0 0.0
    %2106 = vmatprep.subr.mxu0 0.0
    %2107 = vmatpush1.msra.mxu0 0.0
    %2108 = vmatprep.subr.mxu0 0.0
    %2109 = vmatpush1.msra.mxu0 0.0
    %2110 = vmatprep.subr.mxu0 0.0
    %2111 = vmatpush1.msra.mxu0 0.0
    %2112 = vmatprep.subr.mxu0 0.0
    %2113 = vmatpush1.msra.mxu0 0.0
    %2114 = vmatprep.mubr.f32.mxu0 0.0
    %v2115 = vand.u32 %v1594, 4294901760
    %2116 = vmatmul.mubr.f32.gmra.mrb[0].mxu0 %v2115
    %v2117 = vpop.f32.mrb[0].mxu0
    %v2118 = vadd.f32 %v2037, %v2117
    %v2119 = vpop.f32.mrb[0].mxu0
    %2120 = vmatprep.mubr.f32.mxu0 0.0
    %v2121 = vand.u32 %v1597, 4294901760
    %2122 = vmatmul.mubr.f32.gmra.mrb[0].mxu0 %v2121
    %v2123 = vpop.f32.mrb[0].mxu0
    %v2124 = vadd.f32 %v2043, %v2123
    %v2125 = vpop.f32.mrb[0].mxu0
    %2126 = vdwg.mxu0
    %vm2127 = vcmp.ge.f32.partialorder %v2118, 0.0
    %vm2128 = vcmp.ge.f32.partialorder %v2124, 0.0
    %v2129 = vmul.f32 %v2118, 0.02
    %v2130 = vmul.f32 %v2124, 0.02
    %v2131 = vsel %vm2127, %v2118, %v2129
    %v2132 = vsel %vm2128, %v2124, %v2130
    %2133 = vst.msk [vmem:[#allocation2] sm:$0xff] %vm35, %v2131
    %2134 = vst.msk [vmem:[#allocation2 + $0x8] sm:$0xff] %vm35, %v2132
    %2135 = vmatprep.subr.mxu0 0.0
    %v2136 = vand.u32 %v2131, 4294901760
    %2137 = vmatpush1.msra.mxu0 %v2136
    %2138 = vmatprep.subr.mxu0 0.0
    %v2139 = vand.u32 %v2132, 4294901760
    %2140 = vmatpush1.msra.mxu0 %v2139
    %2141 = vmatprep.subr.mxu0 0.0
    %2142 = vmatpush1.msra.mxu0 0.0
    %2143 = vmatprep.subr.mxu0 0.0
    %2144 = vmatpush1.msra.mxu0 0.0
    %2145 = vmatprep.subr.mxu0 0.0
    %2146 = vmatpush1.msra.mxu0 0.0
    %2147 = vmatprep.subr.mxu0 0.0
    %2148 = vmatpush1.msra.mxu0 0.0
    %2149 = vmatprep.subr.mxu0 0.0
    %2150 = vmatpush1.msra.mxu0 0.0
    %2151 = vmatprep.subr.mxu0 0.0
    %2152 = vmatpush1.msra.mxu0 0.0
    %2153 = vmatprep.subr.mxu0 0.0
    %2154 = vmatpush1.msra.mxu0 0.0
    %2155 = vmatprep.subr.mxu0 0.0
    %2156 = vmatpush1.msra.mxu0 0.0
    %2157 = vmatprep.subr.mxu0 0.0
    %2158 = vmatpush1.msra.mxu0 0.0
    %2159 = vmatprep.subr.mxu0 0.0
    %2160 = vmatpush1.msra.mxu0 0.0
    %2161 = vmatprep.subr.mxu0 0.0
    %2162 = vmatpush1.msra.mxu0 0.0
    %2163 = vmatprep.subr.mxu0 0.0
    %2164 = vmatpush1.msra.mxu0 0.0
    %2165 = vmatprep.subr.mxu0 0.0
    %2166 = vmatpush1.msra.mxu0 0.0
    %2167 = vmatprep.subr.mxu0 0.0
    %2168 = vmatpush1.msra.mxu0 0.0
    %2169 = vmatprep.subr.mxu0 0.0
    %2170 = vmatpush1.msra.mxu0 0.0
    %2171 = vmatprep.subr.mxu0 0.0
    %2172 = vmatpush1.msra.mxu0 0.0
    %2173 = vmatprep.subr.mxu0 0.0
    %2174 = vmatpush1.msra.mxu0 0.0
    %2175 = vmatprep.subr.mxu0 0.0
    %2176 = vmatpush1.msra.mxu0 0.0
    %2177 = vmatprep.subr.mxu0 0.0
    %2178 = vmatpush1.msra.mxu0 0.0
    %2179 = vmatprep.subr.mxu0 0.0
    %2180 = vmatpush1.msra.mxu0 0.0
    %2181 = vmatprep.subr.mxu0 0.0
    %2182 = vmatpush1.msra.mxu0 0.0
    %2183 = vmatprep.subr.mxu0 0.0
    %2184 = vmatpush1.msra.mxu0 0.0
    %2185 = vmatprep.subr.mxu0 0.0
    %2186 = vmatpush1.msra.mxu0 0.0
    %2187 = vmatprep.subr.mxu0 0.0
    %2188 = vmatpush1.msra.mxu0 0.0
    %2189 = vmatprep.subr.mxu0 0.0
    %2190 = vmatpush1.msra.mxu0 0.0
    %2191 = vmatprep.subr.mxu0 0.0
    %2192 = vmatpush1.msra.mxu0 0.0
    %2193 = vmatprep.subr.mxu0 0.0
    %2194 = vmatpush1.msra.mxu0 0.0
    %2195 = vmatprep.subr.mxu0 0.0
    %2196 = vmatpush1.msra.mxu0 0.0
    %2197 = vmatprep.subr.mxu0 0.0
    %2198 = vmatpush1.msra.mxu0 0.0
    %2199 = vmatprep.subr.mxu0 0.0
    %2200 = vmatpush1.msra.mxu0 0.0
    %2201 = vmatprep.mubr.f32.mxu0 0.0
    %v2202 = vand.u32 %v37, 4294901760
    %v2203 = vsub.f32 %v37, %v2202
    %v2204 = vand.u32 %v2203, 4294901760
    %v2205 = vsub.f32 %v2203, %v2204
    %v2206 = vand.u32 %v2205, 4294901760
    %2207 = vmatmul.mubr.f32.gmra.mrb[0].mxu0 %v2206
    %v2208 = vpop.f32.mrb[0].mxu0
    %v2209 = vadd.f32 0.0, %v2208
    %v2210 = vpop.f32.mrb[0].mxu0
    %2211 = vmatprep.mubr.f32.mxu0 0.0
    %v2212 = vand.u32 %v40, 4294901760
    %v2213 = vsub.f32 %v40, %v2212
    %v2214 = vand.u32 %v2213, 4294901760
    %v2215 = vsub.f32 %v2213, %v2214
    %v2216 = vand.u32 %v2215, 4294901760
    %2217 = vmatmul.mubr.f32.gmra.mrb[0].mxu0 %v2216
    %v2218 = vpop.f32.mrb[0].mxu0
    %v2219 = vadd.f32 0.0, %v2218
    %v2220 = vpop.f32.mrb[0].mxu0
    %2221 = vdwg.mxu0
    %2222 = vmatprep.subr.mxu0 0.0
    %v2223 = vand.u32 %v2131, 4294901760
    %v2224 = vsub.f32 %v2131, %v2223
    %v2225 = vand.u32 %v2224, 4294901760
    %v2226 = vsub.f32 %v2224, %v2225
    %v2227 = vand.u32 %v2226, 4294901760
    %2228 = vmatpush1.msra.mxu0 %v2227
    %2229 = vmatprep.subr.mxu0 0.0
    %v2230 = vand.u32 %v2132, 4294901760
    %v2231 = vsub.f32 %v2132, %v2230
    %v2232 = vand.u32 %v2231, 4294901760
    %v2233 = vsub.f32 %v2231, %v2232
    %v2234 = vand.u32 %v2233, 4294901760
    %2235 = vmatpush1.msra.mxu0 %v2234
    %2236 = vmatprep.subr.mxu0 0.0
    %2237 = vmatpush1.msra.mxu0 0.0
    %2238 = vmatprep.subr.mxu0 0.0
    %2239 = vmatpush1.msra.mxu0 0.0
    %2240 = vmatprep.subr.mxu0 0.0
    %2241 = vmatpush1.msra.mxu0 0.0
    %2242 = vmatprep.subr.mxu0 0.0
    %2243 = vmatpush1.msra.mxu0 0.0
    %2244 = vmatprep.subr.mxu0 0.0
    %2245 = vmatpush1.msra.mxu0 0.0
    %2246 = vmatprep.subr.mxu0 0.0
    %2247 = vmatpush1.msra.mxu0 0.0
    %2248 = vmatprep.subr.mxu0 0.0
    %2249 = vmatpush1.msra.mxu0 0.0
    %2250 = vmatprep.subr.mxu0 0.0
    %2251 = vmatpush1.msra.mxu0 0.0
    %2252 = vmatprep.subr.mxu0 0.0
    %2253 = vmatpush1.msra.mxu0 0.0
    %2254 = vmatprep.subr.mxu0 0.0
    %2255 = vmatpush1.msra.mxu0 0.0
    %2256 = vmatprep.subr.mxu0 0.0
    %2257 = vmatpush1.msra.mxu0 0.0
    %2258 = vmatprep.subr.mxu0 0.0
    %2259 = vmatpush1.msra.mxu0 0.0
    %2260 = vmatprep.subr.mxu0 0.0
    %2261 = vmatpush1.msra.mxu0 0.0
    %2262 = vmatprep.subr.mxu0 0.0
    %2263 = vmatpush1.msra.mxu0 0.0
    %2264 = vmatprep.subr.mxu0 0.0
    %2265 = vmatpush1.msra.mxu0 0.0
    %2266 = vmatprep.subr.mxu0 0.0
    %2267 = vmatpush1.msra.mxu0 0.0
    %2268 = vmatprep.subr.mxu0 0.0
    %2269 = vmatpush1.msra.mxu0 0.0
    %2270 = vmatprep.subr.mxu0 0.0
    %2271 = vmatpush1.msra.mxu0 0.0
    %2272 = vmatprep.subr.mxu0 0.0
    %2273 = vmatpush1.msra.mxu0 0.0
    %2274 = vmatprep.subr.mxu0 0.0
    %2275 = vmatpush1.msra.mxu0 0.0
    %2276 = vmatprep.subr.mxu0 0.0
    %2277 = vmatpush1.msra.mxu0 0.0
    %2278 = vmatprep.subr.mxu0 0.0
    %2279 = vmatpush1.msra.mxu0 0.0
    %2280 = vmatprep.subr.mxu0 0.0
    %2281 = vmatpush1.msra.mxu0 0.0
    %2282 = vmatprep.subr.mxu0 0.0
    %2283 = vmatpush1.msra.mxu0 0.0
    %2284 = vmatprep.subr.mxu0 0.0
    %2285 = vmatpush1.msra.mxu0 0.0
    %2286 = vmatprep.subr.mxu0 0.0
    %2287 = vmatpush1.msra.mxu0 0.0
    %2288 = vmatprep.subr.mxu0 0.0
    %2289 = vmatpush1.msra.mxu0 0.0
    %2290 = vmatprep.subr.mxu0 0.0
    %2291 = vmatpush1.msra.mxu0 0.0
    %2292 = vmatprep.subr.mxu0 0.0
    %2293 = vmatpush1.msra.mxu0 0.0
    %2294 = vmatprep.subr.mxu0 0.0
    %2295 = vmatpush1.msra.mxu0 0.0
    %2296 = vmatprep.mubr.f32.mxu0 0.0
    %v2297 = vand.u32 %v37, 4294901760
    %2298 = vmatmul.mubr.f32.gmra.mrb[0].mxu0 %v2297
    %v2299 = vpop.f32.mrb[0].mxu0
    %v2300 = vadd.f32 %v2209, %v2299
    %v2301 = vpop.f32.mrb[0].mxu0
    %2302 = vmatprep.mubr.f32.mxu0 0.0
    %v2303 = vand.u32 %v40, 4294901760
    %2304 = vmatmul.mubr.f32.gmra.mrb[0].mxu0 %v2303
    %v2305 = vpop.f32.mrb[0].mxu0
    %v2306 = vadd.f32 %v2219, %v2305
    %v2307 = vpop.f32.mrb[0].mxu0
    %2308 = vdwg.mxu0
    %2309 = vmatprep.subr.mxu0 0.0
    %v2310 = vand.u32 %v2131, 4294901760
    %v2311 = vsub.f32 %v2131, %v2310
    %2312 = vmatpush1.msra.mxu0 %v2311
    %2313 = vmatprep.subr.mxu0 0.0
    %v2314 = vand.u32 %v2132, 4294901760
    %v2315 = vsub.f32 %v2132, %v2314
    %2316 = vmatpush1.msra.mxu0 %v2315
    %2317 = vmatprep.subr.mxu0 0.0
    %2318 = vmatpush1.msra.mxu0 0.0
    %2319 = vmatprep.subr.mxu0 0.0
    %2320 = vmatpush1.msra.mxu0 0.0
    %2321 = vmatprep.subr.mxu0 0.0
    %2322 = vmatpush1.msra.mxu0 0.0
    %2323 = vmatprep.subr.mxu0 0.0
    %2324 = vmatpush1.msra.mxu0 0.0
    %2325 = vmatprep.subr.mxu0 0.0
    %2326 = vmatpush1.msra.mxu0 0.0
    %2327 = vmatprep.subr.mxu0 0.0
    %2328 = vmatpush1.msra.mxu0 0.0
    %2329 = vmatprep.subr.mxu0 0.0
    %2330 = vmatpush1.msra.mxu0 0.0
    %2331 = vmatprep.subr.mxu0 0.0
    %2332 = vmatpush1.msra.mxu0 0.0
    %2333 = vmatprep.subr.mxu0 0.0
    %2334 = vmatpush1.msra.mxu0 0.0
    %2335 = vmatprep.subr.mxu0 0.0
    %2336 = vmatpush1.msra.mxu0 0.0
    %2337 = vmatprep.subr.mxu0 0.0
    %2338 = vmatpush1.msra.mxu0 0.0
    %2339 = vmatprep.subr.mxu0 0.0
    %2340 = vmatpush1.msra.mxu0 0.0
    %2341 = vmatprep.subr.mxu0 0.0
    %2342 = vmatpush1.msra.mxu0 0.0
    %2343 = vmatprep.subr.mxu0 0.0
    %2344 = vmatpush1.msra.mxu0 0.0
    %2345 = vmatprep.subr.mxu0 0.0
    %2346 = vmatpush1.msra.mxu0 0.0
    %2347 = vmatprep.subr.mxu0 0.0
    %2348 = vmatpush1.msra.mxu0 0.0
    %2349 = vmatprep.subr.mxu0 0.0
    %2350 = vmatpush1.msra.mxu0 0.0
    %2351 = vmatprep.subr.mxu0 0.0
    %2352 = vmatpush1.msra.mxu0 0.0
    %2353 = vmatprep.subr.mxu0 0.0
    %2354 = vmatpush1.msra.mxu0 0.0
    %2355 = vmatprep.subr.mxu0 0.0
    %2356 = vmatpush1.msra.mxu0 0.0
    %2357 = vmatprep.subr.mxu0 0.0
    %2358 = vmatpush1.msra.mxu0 0.0
    %2359 = vmatprep.subr.mxu0 0.0
    %2360 = vmatpush1.msra.mxu0 0.0
    %2361 = vmatprep.subr.mxu0 0.0
    %2362 = vmatpush1.msra.mxu0 0.0
    %2363 = vmatprep.subr.mxu0 0.0
    %2364 = vmatpush1.msra.mxu0 0.0
    %2365 = vmatprep.subr.mxu0 0.0
    %2366 = vmatpush1.msra.mxu0 0.0
    %2367 = vmatprep.subr.mxu0 0.0
    %2368 = vmatpush1.msra.mxu0 0.0
    %2369 = vmatprep.subr.mxu0 0.0
    %2370 = vmatpush1.msra.mxu0 0.0
    %2371 = vmatprep.subr.mxu0 0.0
    %2372 = vmatpush1.msra.mxu0 0.0
    %2373 = vmatprep.subr.mxu0 0.0
    %2374 = vmatpush1.msra.mxu0 0.0
    %2375 = vmatprep.subr.mxu0 0.0
    %2376 = vmatpush1.msra.mxu0 0.0
    %2377 = vmatprep.mubr.f32.mxu0 0.0
    %v2378 = vand.u32 %v37, 4294901760
    %v2379 = vsub.f32 %v37, %v2378
    %2380 = vmatmul.mubr.f32.gmra.mrb[0].mxu0 %v2379
    %v2381 = vpop.f32.mrb[0].mxu0
    %v2382 = vadd.f32 %v2300, %v2381
    %v2383 = vpop.f32.mrb[0].mxu0
    %2384 = vmatprep.mubr.f32.mxu0 0.0
    %v2385 = vand.u32 %v40, 4294901760
    %v2386 = vsub.f32 %v40, %v2385
    %2387 = vmatmul.mubr.f32.gmra.mrb[0].mxu0 %v2386
    %v2388 = vpop.f32.mrb[0].mxu0
    %v2389 = vadd.f32 %v2306, %v2388
    %v2390 = vpop.f32.mrb[0].mxu0
    %2391 = vdwg.mxu0
    %2392 = vmatprep.subr.mxu0 0.0
    %v2393 = vand.u32 %v2131, 4294901760
    %2394 = vmatpush1.msra.mxu0 %v2393
    %2395 = vmatprep.subr.mxu0 0.0
    %v2396 = vand.u32 %v2132, 4294901760
    %2397 = vmatpush1.msra.mxu0 %v2396
    %2398 = vmatprep.subr.mxu0 0.0
    %2399 = vmatpush1.msra.mxu0 0.0
    %2400 = vmatprep.subr.mxu0 0.0
    %2401 = vmatpush1.msra.mxu0 0.0
    %2402 = vmatprep.subr.mxu0 0.0
    %2403 = vmatpush1.msra.mxu0 0.0
    %2404 = vmatprep.subr.mxu0 0.0
    %2405 = vmatpush1.msra.mxu0 0.0
    %2406 = vmatprep.subr.mxu0 0.0
    %2407 = vmatpush1.msra.mxu0 0.0
    %2408 = vmatprep.subr.mxu0 0.0
    %2409 = vmatpush1.msra.mxu0 0.0
    %2410 = vmatprep.subr.mxu0 0.0
    %2411 = vmatpush1.msra.mxu0 0.0
    %2412 = vmatprep.subr.mxu0 0.0
    %2413 = vmatpush1.msra.mxu0 0.0
    %2414 = vmatprep.subr.mxu0 0.0
    %2415 = vmatpush1.msra.mxu0 0.0
    %2416 = vmatprep.subr.mxu0 0.0
    %2417 = vmatpush1.msra.mxu0 0.0
    %2418 = vmatprep.subr.mxu0 0.0
    %2419 = vmatpush1.msra.mxu0 0.0
    %2420 = vmatprep.subr.mxu0 0.0
    %2421 = vmatpush1.msra.mxu0 0.0
    %2422 = vmatprep.subr.mxu0 0.0
    %2423 = vmatpush1.msra.mxu0 0.0
    %2424 = vmatprep.subr.mxu0 0.0
    %2425 = vmatpush1.msra.mxu0 0.0
    %2426 = vmatprep.subr.mxu0 0.0
    %2427 = vmatpush1.msra.mxu0 0.0
    %2428 = vmatprep.subr.mxu0 0.0
    %2429 = vmatpush1.msra.mxu0 0.0
    %2430 = vmatprep.subr.mxu0 0.0
    %2431 = vmatpush1.msra.mxu0 0.0
    %2432 = vmatprep.subr.mxu0 0.0
    %2433 = vmatpush1.msra.mxu0 0.0
    %2434 = vmatprep.subr.mxu0 0.0
    %2435 = vmatpush1.msra.mxu0 0.0
    %2436 = vmatprep.subr.mxu0 0.0
    %2437 = vmatpush1.msra.mxu0 0.0
    %2438 = vmatprep.subr.mxu0 0.0
    %2439 = vmatpush1.msra.mxu0 0.0
    %2440 = vmatprep.subr.mxu0 0.0
    %2441 = vmatpush1.msra.mxu0 0.0
    %2442 = vmatprep.subr.mxu0 0.0
    %2443 = vmatpush1.msra.mxu0 0.0
    %2444 = vmatprep.subr.mxu0 0.0
    %2445 = vmatpush1.msra.mxu0 0.0
    %2446 = vmatprep.subr.mxu0 0.0
    %2447 = vmatpush1.msra.mxu0 0.0
    %2448 = vmatprep.subr.mxu0 0.0
    %2449 = vmatpush1.msra.mxu0 0.0
    %2450 = vmatprep.subr.mxu0 0.0
    %2451 = vmatpush1.msra.mxu0 0.0
    %2452 = vmatprep.subr.mxu0 0.0
    %2453 = vmatpush1.msra.mxu0 0.0
    %2454 = vmatprep.subr.mxu0 0.0
    %2455 = vmatpush1.msra.mxu0 0.0
    %2456 = vmatprep.subr.mxu0 0.0
    %2457 = vmatpush1.msra.mxu0 0.0
    %2458 = vmatprep.mubr.f32.mxu0 0.0
    %v2459 = vand.u32 %v37, 4294901760
    %v2460 = vsub.f32 %v37, %v2459
    %v2461 = vand.u32 %v2460, 4294901760
    %2462 = vmatmul.mubr.f32.gmra.mrb[0].mxu0 %v2461
    %v2463 = vpop.f32.mrb[0].mxu0
    %v2464 = vadd.f32 %v2382, %v2463
    %v2465 = vpop.f32.mrb[0].mxu0
    %2466 = vmatprep.mubr.f32.mxu0 0.0
    %v2467 = vand.u32 %v40, 4294901760
    %v2468 = vsub.f32 %v40, %v2467
    %v2469 = vand.u32 %v2468, 4294901760
    %2470 = vmatmul.mubr.f32.gmra.mrb[0].mxu0 %v2469
    %v2471 = vpop.f32.mrb[0].mxu0
    %v2472 = vadd.f32 %v2389, %v2471
    %v2473 = vpop.f32.mrb[0].mxu0
    %2474 = vdwg.mxu0
    %2475 = vmatprep.subr.mxu0 0.0
    %v2476 = vand.u32 %v2131, 4294901760
    %v2477 = vsub.f32 %v2131, %v2476
    %v2478 = vand.u32 %v2477, 4294901760
    %2479 = vmatpush1.msra.mxu0 %v2478
    %2480 = vmatprep.subr.mxu0 0.0
    %v2481 = vand.u32 %v2132, 4294901760
    %v2482 = vsub.f32 %v2132, %v2481
    %v2483 = vand.u32 %v2482, 4294901760
    %2484 = vmatpush1.msra.mxu0 %v2483
    %2485 = vmatprep.subr.mxu0 0.0
    %2486 = vmatpush1.msra.mxu0 0.0
    %2487 = vmatprep.subr.mxu0 0.0
    %2488 = vmatpush1.msra.mxu0 0.0
    %2489 = vmatprep.subr.mxu0 0.0
    %2490 = vmatpush1.msra.mxu0 0.0
    %2491 = vmatprep.subr.mxu0 0.0
    %2492 = vmatpush1.msra.mxu0 0.0
    %2493 = vmatprep.subr.mxu0 0.0
    %2494 = vmatpush1.msra.mxu0 0.0
    %2495 = vmatprep.subr.mxu0 0.0
    %2496 = vmatpush1.msra.mxu0 0.0
    %2497 = vmatprep.subr.mxu0 0.0
    %2498 = vmatpush1.msra.mxu0 0.0
    %2499 = vmatprep.subr.mxu0 0.0
    %2500 = vmatpush1.msra.mxu0 0.0
    %2501 = vmatprep.subr.mxu0 0.0
    %2502 = vmatpush1.msra.mxu0 0.0
    %2503 = vmatprep.subr.mxu0 0.0
    %2504 = vmatpush1.msra.mxu0 0.0
    %2505 = vmatprep.subr.mxu0 0.0
    %2506 = vmatpush1.msra.mxu0 0.0
    %2507 = vmatprep.subr.mxu0 0.0
    %2508 = vmatpush1.msra.mxu0 0.0
    %2509 = vmatprep.subr.mxu0 0.0
    %2510 = vmatpush1.msra.mxu0 0.0
    %2511 = vmatprep.subr.mxu0 0.0
    %2512 = vmatpush1.msra.mxu0 0.0
    %2513 = vmatprep.subr.mxu0 0.0
    %2514 = vmatpush1.msra.mxu0 0.0
    %2515 = vmatprep.subr.mxu0 0.0
    %2516 = vmatpush1.msra.mxu0 0.0
    %2517 = vmatprep.subr.mxu0 0.0
    %2518 = vmatpush1.msra.mxu0 0.0
    %2519 = vmatprep.subr.mxu0 0.0
    %2520 = vmatpush1.msra.mxu0 0.0
    %2521 = vmatprep.subr.mxu0 0.0
    %2522 = vmatpush1.msra.mxu0 0.0
    %2523 = vmatprep.subr.mxu0 0.0
    %2524 = vmatpush1.msra.mxu0 0.0
    %2525 = vmatprep.subr.mxu0 0.0
    %2526 = vmatpush1.msra.mxu0 0.0
    %2527 = vmatprep.subr.mxu0 0.0
    %2528 = vmatpush1.msra.mxu0 0.0
    %2529 = vmatprep.subr.mxu0 0.0
    %2530 = vmatpush1.msra.mxu0 0.0
    %2531 = vmatprep.subr.mxu0 0.0
    %2532 = vmatpush1.msra.mxu0 0.0
    %2533 = vmatprep.subr.mxu0 0.0
    %2534 = vmatpush1.msra.mxu0 0.0
    %2535 = vmatprep.subr.mxu0 0.0
    %2536 = vmatpush1.msra.mxu0 0.0
    %2537 = vmatprep.subr.mxu0 0.0
    %2538 = vmatpush1.msra.mxu0 0.0
    %2539 = vmatprep.subr.mxu0 0.0
    %2540 = vmatpush1.msra.mxu0 0.0
    %2541 = vmatprep.subr.mxu0 0.0
    %2542 = vmatpush1.msra.mxu0 0.0
    %2543 = vmatprep.subr.mxu0 0.0
    %2544 = vmatpush1.msra.mxu0 0.0
    %2545 = vmatprep.mubr.f32.mxu0 0.0
    %v2546 = vand.u32 %v37, 4294901760
    %2547 = vmatmul.mubr.f32.gmra.mrb[0].mxu0 %v2546
    %v2548 = vpop.f32.mrb[0].mxu0
    %v2549 = vadd.f32 %v2464, %v2548
    %v2550 = vpop.f32.mrb[0].mxu0
    %2551 = vmatprep.mubr.f32.mxu0 0.0
    %v2552 = vand.u32 %v40, 4294901760
    %2553 = vmatmul.mubr.f32.gmra.mrb[0].mxu0 %v2552
    %v2554 = vpop.f32.mrb[0].mxu0
    %v2555 = vadd.f32 %v2472, %v2554
    %v2556 = vpop.f32.mrb[0].mxu0
    %2557 = vdwg.mxu0
    %2558 = vmatprep.subr.mxu0 0.0
    %v2559 = vand.u32 %v2131, 4294901760
    %2560 = vmatpush1.msra.mxu0 %v2559
    %2561 = vmatprep.subr.mxu0 0.0
    %v2562 = vand.u32 %v2132, 4294901760
    %2563 = vmatpush1.msra.mxu0 %v2562
    %2564 = vmatprep.subr.mxu0 0.0
    %2565 = vmatpush1.msra.mxu0 0.0
    %2566 = vmatprep.subr.mxu0 0.0
    %2567 = vmatpush1.msra.mxu0 0.0
    %2568 = vmatprep.subr.mxu0 0.0
    %2569 = vmatpush1.msra.mxu0 0.0
    %2570 = vmatprep.subr.mxu0 0.0
    %2571 = vmatpush1.msra.mxu0 0.0
    %2572 = vmatprep.subr.mxu0 0.0
    %2573 = vmatpush1.msra.mxu0 0.0
    %2574 = vmatprep.subr.mxu0 0.0
    %2575 = vmatpush1.msra.mxu0 0.0
    %2576 = vmatprep.subr.mxu0 0.0
    %2577 = vmatpush1.msra.mxu0 0.0
    %2578 = vmatprep.subr.mxu0 0.0
    %2579 = vmatpush1.msra.mxu0 0.0
    %2580 = vmatprep.subr.mxu0 0.0
    %2581 = vmatpush1.msra.mxu0 0.0
    %2582 = vmatprep.subr.mxu0 0.0
    %2583 = vmatpush1.msra.mxu0 0.0
    %2584 = vmatprep.subr.mxu0 0.0
    %2585 = vmatpush1.msra.mxu0 0.0
    %2586 = vmatprep.subr.mxu0 0.0
    %2587 = vmatpush1.msra.mxu0 0.0
    %2588 = vmatprep.subr.mxu0 0.0
    %2589 = vmatpush1.msra.mxu0 0.0
    %2590 = vmatprep.subr.mxu0 0.0
    %2591 = vmatpush1.msra.mxu0 0.0
    %2592 = vmatprep.subr.mxu0 0.0
    %2593 = vmatpush1.msra.mxu0 0.0
    %2594 = vmatprep.subr.mxu0 0.0
    %2595 = vmatpush1.msra.mxu0 0.0
    %2596 = vmatprep.subr.mxu0 0.0
    %2597 = vmatpush1.msra.mxu0 0.0
    %2598 = vmatprep.subr.mxu0 0.0
    %2599 = vmatpush1.msra.mxu0 0.0
    %2600 = vmatprep.subr.mxu0 0.0
    %2601 = vmatpush1.msra.mxu0 0.0
    %2602 = vmatprep.subr.mxu0 0.0
    %2603 = vmatpush1.msra.mxu0 0.0
    %2604 = vmatprep.subr.mxu0 0.0
    %2605 = vmatpush1.msra.mxu0 0.0
    %2606 = vmatprep.subr.mxu0 0.0
    %2607 = vmatpush1.msra.mxu0 0.0
    %2608 = vmatprep.subr.mxu0 0.0
    %2609 = vmatpush1.msra.mxu0 0.0
    %2610 = vmatprep.subr.mxu0 0.0
    %2611 = vmatpush1.msra.mxu0 0.0
    %2612 = vmatprep.subr.mxu0 0.0
    %2613 = vmatpush1.msra.mxu0 0.0
    %2614 = vmatprep.subr.mxu0 0.0
    %2615 = vmatpush1.msra.mxu0 0.0
    %2616 = vmatprep.subr.mxu0 0.0
    %2617 = vmatpush1.msra.mxu0 0.0
    %2618 = vmatprep.subr.mxu0 0.0
    %2619 = vmatpush1.msra.mxu0 0.0
    %2620 = vmatprep.subr.mxu0 0.0
    %2621 = vmatpush1.msra.mxu0 0.0
    %2622 = vmatprep.subr.mxu0 0.0
    %2623 = vmatpush1.msra.mxu0 0.0
    %2624 = vmatprep.mubr.f32.mxu0 0.0
    %v2625 = vand.u32 %v37, 4294901760
    %2626 = vmatmul.mubr.f32.gmra.mrb[0].mxu0 %v2625
    %v2627 = vpop.f32.mrb[0].mxu0
    %v2628 = vadd.f32 %v2549, %v2627
    %v2629 = vpop.f32.mrb[0].mxu0
    %2630 = vmatprep.mubr.f32.mxu0 0.0
    %v2631 = vand.u32 %v40, 4294901760
    %2632 = vmatmul.mubr.f32.gmra.mrb[0].mxu0 %v2631
    %v2633 = vpop.f32.mrb[0].mxu0
    %v2634 = vadd.f32 %v2555, %v2633
    %v2635 = vpop.f32.mrb[0].mxu0
    %2636 = vdwg.mxu0
    %2639 = vrot.lane.b32.xlu0 %v2628, 16
    %v2640 = vpop.permute.xlu0 %2639
    %2641 = vrot.lane.b32.xlu0 %v2634, 16
    %v2642 = vpop.permute.xlu0 %2641
    %vm2645 = vcmask 261248
    %2646 = vst.msk [vmem:[#allocation2] sm:$0xff] %vm2645, %v2640
    %2647 = vst.msk [vmem:[#allocation2 + $0x8] sm:$0xff] %vm2645, %v2642
    %2648 = vmatprep.subr.mxu0 0.0
    %v2649 = vand.u32 %v2628, 4294901760
    %2650 = vmatpush1.msra.mxu0 %v2649
    %2651 = vmatprep.subr.mxu0 0.0
    %v2652 = vand.u32 %v2634, 4294901760
    %2653 = vmatpush1.msra.mxu0 %v2652
    %2654 = vmatprep.subr.mxu0 0.0
    %2655 = vmatpush1.msra.mxu0 0.0
    %2656 = vmatprep.subr.mxu0 0.0
    %2657 = vmatpush1.msra.mxu0 0.0
    %2658 = vmatprep.subr.mxu0 0.0
    %2659 = vmatpush1.msra.mxu0 0.0
    %2660 = vmatprep.subr.mxu0 0.0
    %2661 = vmatpush1.msra.mxu0 0.0
    %2662 = vmatprep.subr.mxu0 0.0
    %2663 = vmatpush1.msra.mxu0 0.0
    %2664 = vmatprep.subr.mxu0 0.0
    %2665 = vmatpush1.msra.mxu0 0.0
    %2666 = vmatprep.subr.mxu0 0.0
    %2667 = vmatpush1.msra.mxu0 0.0
    %2668 = vmatprep.subr.mxu0 0.0
    %2669 = vmatpush1.msra.mxu0 0.0
    %2670 = vmatprep.subr.mxu0 0.0
    %2671 = vmatpush1.msra.mxu0 0.0
    %2672 = vmatprep.subr.mxu0 0.0
    %2673 = vmatpush1.msra.mxu0 0.0
    %2674 = vmatprep.subr.mxu0 0.0
    %2675 = vmatpush1.msra.mxu0 0.0
    %2676 = vmatprep.subr.mxu0 0.0
    %2677 = vmatpush1.msra.mxu0 0.0
    %2678 = vmatprep.subr.mxu0 0.0
    %2679 = vmatpush1.msra.mxu0 0.0
    %2680 = vmatprep.subr.mxu0 0.0
    %2681 = vmatpush1.msra.mxu0 0.0
    %2682 = vmatprep.subr.mxu0 0.0
    %2683 = vmatpush1.msra.mxu0 0.0
    %2684 = vmatprep.subr.mxu0 0.0
    %2685 = vmatpush1.msra.mxu0 0.0
    %2686 = vmatprep.subr.mxu0 0.0
    %2687 = vmatpush1.msra.mxu0 0.0
    %2688 = vmatprep.subr.mxu0 0.0
    %2689 = vmatpush1.msra.mxu0 0.0
    %2690 = vmatprep.subr.mxu0 0.0
    %2691 = vmatpush1.msra.mxu0 0.0
    %2692 = vmatprep.subr.mxu0 0.0
    %2693 = vmatpush1.msra.mxu0 0.0
    %2694 = vmatprep.subr.mxu0 0.0
    %2695 = vmatpush1.msra.mxu0 0.0
    %2696 = vmatprep.subr.mxu0 0.0
    %2697 = vmatpush1.msra.mxu0 0.0
    %2698 = vmatprep.subr.mxu0 0.0
    %2699 = vmatpush1.msra.mxu0 0.0
    %2700 = vmatprep.subr.mxu0 0.0
    %2701 = vmatpush1.msra.mxu0 0.0
    %2702 = vmatprep.subr.mxu0 0.0
    %2703 = vmatpush1.msra.mxu0 0.0
    %2704 = vmatprep.subr.mxu0 0.0
    %2705 = vmatpush1.msra.mxu0 0.0
    %2706 = vmatprep.subr.mxu0 0.0
    %2707 = vmatpush1.msra.mxu0 0.0
    %2708 = vmatprep.subr.mxu0 0.0
    %2709 = vmatpush1.msra.mxu0 0.0
    %2710 = vmatprep.subr.mxu0 0.0
    %2711 = vmatpush1.msra.mxu0 0.0
    %2712 = vmatprep.subr.mxu0 0.0
    %2713 = vmatpush1.msra.mxu0 0.0
    %2714 = vmatprep.mubr.f32.mxu0 0.0
    %v2715 = vand.u32 %v37, 4294901760
    %v2716 = vsub.f32 %v37, %v2715
    %v2717 = vand.u32 %v2716, 4294901760
    %v2718 = vsub.f32 %v2716, %v2717
    %v2719 = vand.u32 %v2718, 4294901760
    %2720 = vmatmul.mubr.f32.gmra.mrb[0].mxu0 %v2719
    %v2721 = vpop.f32.mrb[0].mxu0
    %v2722 = vadd.f32 0.0, %v2721
    %v2723 = vpop.f32.mrb[0].mxu0
    %2724 = vmatprep.mubr.f32.mxu0 0.0
    %v2725 = vand.u32 %v40, 4294901760
    %v2726 = vsub.f32 %v40, %v2725
    %v2727 = vand.u32 %v2726, 4294901760
    %v2728 = vsub.f32 %v2726, %v2727
    %v2729 = vand.u32 %v2728, 4294901760
    %2730 = vmatmul.mubr.f32.gmra.mrb[0].mxu0 %v2729
    %v2731 = vpop.f32.mrb[0].mxu0
    %v2732 = vadd.f32 0.0, %v2731
    %v2733 = vpop.f32.mrb[0].mxu0
    %2734 = vdwg.mxu0
    %2735 = vmatprep.subr.mxu0 0.0
    %v2736 = vand.u32 %v2628, 4294901760
    %v2737 = vsub.f32 %v2628, %v2736
    %v2738 = vand.u32 %v2737, 4294901760
    %v2739 = vsub.f32 %v2737, %v2738
    %v2740 = vand.u32 %v2739, 4294901760
    %2741 = vmatpush1.msra.mxu0 %v2740
    %2742 = vmatprep.subr.mxu0 0.0
    %v2743 = vand.u32 %v2634, 4294901760
    %v2744 = vsub.f32 %v2634, %v2743
    %v2745 = vand.u32 %v2744, 4294901760
    %v2746 = vsub.f32 %v2744, %v2745
    %v2747 = vand.u32 %v2746, 4294901760
    %2748 = vmatpush1.msra.mxu0 %v2747
    %2749 = vmatprep.subr.mxu0 0.0
    %2750 = vmatpush1.msra.mxu0 0.0
    %2751 = vmatprep.subr.mxu0 0.0
    %2752 = vmatpush1.msra.mxu0 0.0
    %2753 = vmatprep.subr.mxu0 0.0
    %2754 = vmatpush1.msra.mxu0 0.0
    %2755 = vmatprep.subr.mxu0 0.0
    %2756 = vmatpush1.msra.mxu0 0.0
    %2757 = vmatprep.subr.mxu0 0.0
    %2758 = vmatpush1.msra.mxu0 0.0
    %2759 = vmatprep.subr.mxu0 0.0
    %2760 = vmatpush1.msra.mxu0 0.0
    %2761 = vmatprep.subr.mxu0 0.0
    %2762 = vmatpush1.msra.mxu0 0.0
    %2763 = vmatprep.subr.mxu0 0.0
    %2764 = vmatpush1.msra.mxu0 0.0
    %2765 = vmatprep.subr.mxu0 0.0
    %2766 = vmatpush1.msra.mxu0 0.0
    %2767 = vmatprep.subr.mxu0 0.0
    %2768 = vmatpush1.msra.mxu0 0.0
    %2769 = vmatprep.subr.mxu0 0.0
    %2770 = vmatpush1.msra.mxu0 0.0
    %2771 = vmatprep.subr.mxu0 0.0
    %2772 = vmatpush1.msra.mxu0 0.0
    %2773 = vmatprep.subr.mxu0 0.0
    %2774 = vmatpush1.msra.mxu0 0.0
    %2775 = vmatprep.subr.mxu0 0.0
    %2776 = vmatpush1.msra.mxu0 0.0
    %2777 = vmatprep.subr.mxu0 0.0
    %2778 = vmatpush1.msra.mxu0 0.0
    %2779 = vmatprep.subr.mxu0 0.0
    %2780 = vmatpush1.msra.mxu0 0.0
    %2781 = vmatprep.subr.mxu0 0.0
    %2782 = vmatpush1.msra.mxu0 0.0
    %2783 = vmatprep.subr.mxu0 0.0
    %2784 = vmatpush1.msra.mxu0 0.0
    %2785 = vmatprep.subr.mxu0 0.0
    %2786 = vmatpush1.msra.mxu0 0.0
    %2787 = vmatprep.subr.mxu0 0.0
    %2788 = vmatpush1.msra.mxu0 0.0
    %2789 = vmatprep.subr.mxu0 0.0
    %2790 = vmatpush1.msra.mxu0 0.0
    %2791 = vmatprep.subr.mxu0 0.0
    %2792 = vmatpush1.msra.mxu0 0.0
    %2793 = vmatprep.subr.mxu0 0.0
    %2794 = vmatpush1.msra.mxu0 0.0
    %2795 = vmatprep.subr.mxu0 0.0
    %2796 = vmatpush1.msra.mxu0 0.0
    %2797 = vmatprep.subr.mxu0 0.0
    %2798 = vmatpush1.msra.mxu0 0.0
    %2799 = vmatprep.subr.mxu0 0.0
    %2800 = vmatpush1.msra.mxu0 0.0
    %2801 = vmatprep.subr.mxu0 0.0
    %2802 = vmatpush1.msra.mxu0 0.0
    %2803 = vmatprep.subr.mxu0 0.0
    %2804 = vmatpush1.msra.mxu0 0.0
    %2805 = vmatprep.subr.mxu0 0.0
    %2806 = vmatpush1.msra.mxu0 0.0
    %2807 = vmatprep.subr.mxu0 0.0
    %2808 = vmatpush1.msra.mxu0 0.0
    %2809 = vmatprep.mubr.f32.mxu0 0.0
    %v2810 = vand.u32 %v37, 4294901760
    %2811 = vmatmul.mubr.f32.gmra.mrb[0].mxu0 %v2810
    %v2812 = vpop.f32.mrb[0].mxu0
    %v2813 = vadd.f32 %v2722, %v2812
    %v2814 = vpop.f32.mrb[0].mxu0
    %2815 = vmatprep.mubr.f32.mxu0 0.0
    %v2816 = vand.u32 %v40, 4294901760
    %2817 = vmatmul.mubr.f32.gmra.mrb[0].mxu0 %v2816
    %v2818 = vpop.f32.mrb[0].mxu0
    %v2819 = vadd.f32 %v2732, %v2818
    %v2820 = vpop.f32.mrb[0].mxu0
    %2821 = vdwg.mxu0
    %2822 = vmatprep.subr.mxu0 0.0
    %v2823 = vand.u32 %v2628, 4294901760
    %v2824 = vsub.f32 %v2628, %v2823
    %2825 = vmatpush1.msra.mxu0 %v2824
    %2826 = vmatprep.subr.mxu0 0.0
    %v2827 = vand.u32 %v2634, 4294901760
    %v2828 = vsub.f32 %v2634, %v2827
    %2829 = vmatpush1.msra.mxu0 %v2828
    %2830 = vmatprep.subr.mxu0 0.0
    %2831 = vmatpush1.msra.mxu0 0.0
    %2832 = vmatprep.subr.mxu0 0.0
    %2833 = vmatpush1.msra.mxu0 0.0
    %2834 = vmatprep.subr.mxu0 0.0
    %2835 = vmatpush1.msra.mxu0 0.0
    %2836 = vmatprep.subr.mxu0 0.0
    %2837 = vmatpush1.msra.mxu0 0.0
    %2838 = vmatprep.subr.mxu0 0.0
    %2839 = vmatpush1.msra.mxu0 0.0
    %2840 = vmatprep.subr.mxu0 0.0
    %2841 = vmatpush1.msra.mxu0 0.0
    %2842 = vmatprep.subr.mxu0 0.0
    %2843 = vmatpush1.msra.mxu0 0.0
    %2844 = vmatprep.subr.mxu0 0.0
    %2845 = vmatpush1.msra.mxu0 0.0
    %2846 = vmatprep.subr.mxu0 0.0
    %2847 = vmatpush1.msra.mxu0 0.0
    %2848 = vmatprep.subr.mxu0 0.0
    %2849 = vmatpush1.msra.mxu0 0.0
    %2850 = vmatprep.subr.mxu0 0.0
    %2851 = vmatpush1.msra.mxu0 0.0
    %2852 = vmatprep.subr.mxu0 0.0
    %2853 = vmatpush1.msra.mxu0 0.0
    %2854 = vmatprep.subr.mxu0 0.0
    %2855 = vmatpush1.msra.mxu0 0.0
    %2856 = vmatprep.subr.mxu0 0.0
    %2857 = vmatpush1.msra.mxu0 0.0
    %2858 = vmatprep.subr.mxu0 0.0
    %2859 = vmatpush1.msra.mxu0 0.0
    %2860 = vmatprep.subr.mxu0 0.0
    %2861 = vmatpush1.msra.mxu0 0.0
    %2862 = vmatprep.subr.mxu0 0.0
    %2863 = vmatpush1.msra.mxu0 0.0
    %2864 = vmatprep.subr.mxu0 0.0
    %2865 = vmatpush1.msra.mxu0 0.0
    %2866 = vmatprep.subr.mxu0 0.0
    %2867 = vmatpush1.msra.mxu0 0.0
    %2868 = vmatprep.subr.mxu0 0.0
    %2869 = vmatpush1.msra.mxu0 0.0
    %2870 = vmatprep.subr.mxu0 0.0
    %2871 = vmatpush1.msra.mxu0 0.0
    %2872 = vmatprep.subr.mxu0 0.0
    %2873 = vmatpush1.msra.mxu0 0.0
    %2874 = vmatprep.subr.mxu0 0.0
    %2875 = vmatpush1.msra.mxu0 0.0
    %2876 = vmatprep.subr.mxu0 0.0
    %2877 = vmatpush1.msra.mxu0 0.0
    %2878 = vmatprep.subr.mxu0 0.0
    %2879 = vmatpush1.msra.mxu0 0.0
    %2880 = vmatprep.subr.mxu0 0.0
    %2881 = vmatpush1.msra.mxu0 0.0
    %2882 = vmatprep.subr.mxu0 0.0
    %2883 = vmatpush1.msra.mxu0 0.0
    %2884 = vmatprep.subr.mxu0 0.0
    %2885 = vmatpush1.msra.mxu0 0.0
    %2886 = vmatprep.subr.mxu0 0.0
    %2887 = vmatpush1.msra.mxu0 0.0
    %2888 = vmatprep.subr.mxu0 0.0
    %2889 = vmatpush1.msra.mxu0 0.0
    %2890 = vmatprep.mubr.f32.mxu0 0.0
    %v2891 = vand.u32 %v37, 4294901760
    %v2892 = vsub.f32 %v37, %v2891
    %2893 = vmatmul.mubr.f32.gmra.mrb[0].mxu0 %v2892
    %v2894 = vpop.f32.mrb[0].mxu0
    %v2895 = vadd.f32 %v2813, %v2894
    %v2896 = vpop.f32.mrb[0].mxu0
    %2897 = vmatprep.mubr.f32.mxu0 0.0
    %v2898 = vand.u32 %v40, 4294901760
    %v2899 = vsub.f32 %v40, %v2898
    %2900 = vmatmul.mubr.f32.gmra.mrb[0].mxu0 %v2899
    %v2901 = vpop.f32.mrb[0].mxu0
    %v2902 = vadd.f32 %v2819, %v2901
    %v2903 = vpop.f32.mrb[0].mxu0
    %2904 = vdwg.mxu0
    %2905 = vmatprep.subr.mxu0 0.0
    %v2906 = vand.u32 %v2628, 4294901760
    %2907 = vmatpush1.msra.mxu0 %v2906
    %2908 = vmatprep.subr.mxu0 0.0
    %v2909 = vand.u32 %v2634, 4294901760
    %2910 = vmatpush1.msra.mxu0 %v2909
    %2911 = vmatprep.subr.mxu0 0.0
    %2912 = vmatpush1.msra.mxu0 0.0
    %2913 = vmatprep.subr.mxu0 0.0
    %2914 = vmatpush1.msra.mxu0 0.0
    %2915 = vmatprep.subr.mxu0 0.0
    %2916 = vmatpush1.msra.mxu0 0.0
    %2917 = vmatprep.subr.mxu0 0.0
    %2918 = vmatpush1.msra.mxu0 0.0
    %2919 = vmatprep.subr.mxu0 0.0
    %2920 = vmatpush1.msra.mxu0 0.0
    %2921 = vmatprep.subr.mxu0 0.0
    %2922 = vmatpush1.msra.mxu0 0.0
    %2923 = vmatprep.subr.mxu0 0.0
    %2924 = vmatpush1.msra.mxu0 0.0
    %2925 = vmatprep.subr.mxu0 0.0
    %2926 = vmatpush1.msra.mxu0 0.0
    %2927 = vmatprep.subr.mxu0 0.0
    %2928 = vmatpush1.msra.mxu0 0.0
    %2929 = vmatprep.subr.mxu0 0.0
    %2930 = vmatpush1.msra.mxu0 0.0
    %2931 = vmatprep.subr.mxu0 0.0
    %2932 = vmatpush1.msra.mxu0 0.0
    %2933 = vmatprep.subr.mxu0 0.0
    %2934 = vmatpush1.msra.mxu0 0.0
    %2935 = vmatprep.subr.mxu0 0.0
    %2936 = vmatpush1.msra.mxu0 0.0
    %2937 = vmatprep.subr.mxu0 0.0
    %2938 = vmatpush1.msra.mxu0 0.0
    %2939 = vmatprep.subr.mxu0 0.0
    %2940 = vmatpush1.msra.mxu0 0.0
    %2941 = vmatprep.subr.mxu0 0.0
    %2942 = vmatpush1.msra.mxu0 0.0
    %2943 = vmatprep.subr.mxu0 0.0
    %2944 = vmatpush1.msra.mxu0 0.0
    %2945 = vmatprep.subr.mxu0 0.0
    %2946 = vmatpush1.msra.mxu0 0.0
    %2947 = vmatprep.subr.mxu0 0.0
    %2948 = vmatpush1.msra.mxu0 0.0
    %2949 = vmatprep.subr.mxu0 0.0
    %2950 = vmatpush1.msra.mxu0 0.0
    %2951 = vmatprep.subr.mxu0 0.0
    %2952 = vmatpush1.msra.mxu0 0.0
    %2953 = vmatprep.subr.mxu0 0.0
    %2954 = vmatpush1.msra.mxu0 0.0
    %2955 = vmatprep.subr.mxu0 0.0
    %2956 = vmatpush1.msra.mxu0 0.0
    %2957 = vmatprep.subr.mxu0 0.0
    %2958 = vmatpush1.msra.mxu0 0.0
    %2959 = vmatprep.subr.mxu0 0.0
    %2960 = vmatpush1.msra.mxu0 0.0
    %2961 = vmatprep.subr.mxu0 0.0
    %2962 = vmatpush1.msra.mxu0 0.0
    %2963 = vmatprep.subr.mxu0 0.0
    %2964 = vmatpush1.msra.mxu0 0.0
    %2965 = vmatprep.subr.mxu0 0.0
    %2966 = vmatpush1.msra.mxu0 0.0
    %2967 = vmatprep.subr.mxu0 0.0
    %2968 = vmatpush1.msra.mxu0 0.0
    %2969 = vmatprep.subr.mxu0 0.0
    %2970 = vmatpush1.msra.mxu0 0.0
    %2971 = vmatprep.mubr.f32.mxu0 0.0
    %v2972 = vand.u32 %v37, 4294901760
    %v2973 = vsub.f32 %v37, %v2972
    %v2974 = vand.u32 %v2973, 4294901760
    %2975 = vmatmul.mubr.f32.gmra.mrb[0].mxu0 %v2974
    %v2976 = vpop.f32.mrb[0].mxu0
    %v2977 = vadd.f32 %v2895, %v2976
    %v2978 = vpop.f32.mrb[0].mxu0
    %2979 = vmatprep.mubr.f32.mxu0 0.0
    %v2980 = vand.u32 %v40, 4294901760
    %v2981 = vsub.f32 %v40, %v2980
    %v2982 = vand.u32 %v2981, 4294901760
    %2983 = vmatmul.mubr.f32.gmra.mrb[0].mxu0 %v2982
    %v2984 = vpop.f32.mrb[0].mxu0
    %v2985 = vadd.f32 %v2902, %v2984
    %v2986 = vpop.f32.mrb[0].mxu0
    %2987 = vdwg.mxu0
    %2988 = vmatprep.subr.mxu0 0.0
    %v2989 = vand.u32 %v2628, 4294901760
    %v2990 = vsub.f32 %v2628, %v2989
    %v2991 = vand.u32 %v2990, 4294901760
    %2992 = vmatpush1.msra.mxu0 %v2991
    %2993 = vmatprep.subr.mxu0 0.0
    %v2994 = vand.u32 %v2634, 4294901760
    %v2995 = vsub.f32 %v2634, %v2994
    %v2996 = vand.u32 %v2995, 4294901760
    %2997 = vmatpush1.msra.mxu0 %v2996
    %2998 = vmatprep.subr.mxu0 0.0
    %2999 = vmatpush1.msra.mxu0 0.0
    %3000 = vmatprep.subr.mxu0 0.0
    %3001 = vmatpush1.msra.mxu0 0.0
    %3002 = vmatprep.subr.mxu0 0.0
    %3003 = vmatpush1.msra.mxu0 0.0
    %3004 = vmatprep.subr.mxu0 0.0
    %3005 = vmatpush1.msra.mxu0 0.0
    %3006 = vmatprep.subr.mxu0 0.0
    %3007 = vmatpush1.msra.mxu0 0.0
    %3008 = vmatprep.subr.mxu0 0.0
    %3009 = vmatpush1.msra.mxu0 0.0
    %3010 = vmatprep.subr.mxu0 0.0
    %3011 = vmatpush1.msra.mxu0 0.0
    %3012 = vmatprep.subr.mxu0 0.0
    %3013 = vmatpush1.msra.mxu0 0.0
    %3014 = vmatprep.subr.mxu0 0.0
    %3015 = vmatpush1.msra.mxu0 0.0
    %3016 = vmatprep.subr.mxu0 0.0
    %3017 = vmatpush1.msra.mxu0 0.0
    %3018 = vmatprep.subr.mxu0 0.0
    %3019 = vmatpush1.msra.mxu0 0.0
    %3020 = vmatprep.subr.mxu0 0.0
    %3021 = vmatpush1.msra.mxu0 0.0
    %3022 = vmatprep.subr.mxu0 0.0
    %3023 = vmatpush1.msra.mxu0 0.0
    %3024 = vmatprep.subr.mxu0 0.0
    %3025 = vmatpush1.msra.mxu0 0.0
    %3026 = vmatprep.subr.mxu0 0.0
    %3027 = vmatpush1.msra.mxu0 0.0
    %3028 = vmatprep.subr.mxu0 0.0
    %3029 = vmatpush1.msra.mxu0 0.0
    %3030 = vmatprep.subr.mxu0 0.0
    %3031 = vmatpush1.msra.mxu0 0.0
    %3032 = vmatprep.subr.mxu0 0.0
    %3033 = vmatpush1.msra.mxu0 0.0
    %3034 = vmatprep.subr.mxu0 0.0
    %3035 = vmatpush1.msra.mxu0 0.0
    %3036 = vmatprep.subr.mxu0 0.0
    %3037 = vmatpush1.msra.mxu0 0.0
    %3038 = vmatprep.subr.mxu0 0.0
    %3039 = vmatpush1.msra.mxu0 0.0
    %3040 = vmatprep.subr.mxu0 0.0
    %3041 = vmatpush1.msra.mxu0 0.0
    %3042 = vmatprep.subr.mxu0 0.0
    %3043 = vmatpush1.msra.mxu0 0.0
    %3044 = vmatprep.subr.mxu0 0.0
    %3045 = vmatpush1.msra.mxu0 0.0
    %3046 = vmatprep.subr.mxu0 0.0
    %3047 = vmatpush1.msra.mxu0 0.0
    %3048 = vmatprep.subr.mxu0 0.0
    %3049 = vmatpush1.msra.mxu0 0.0
    %3050 = vmatprep.subr.mxu0 0.0
    %3051 = vmatpush1.msra.mxu0 0.0
    %3052 = vmatprep.subr.mxu0 0.0
    %3053 = vmatpush1.msra.mxu0 0.0
    %3054 = vmatprep.subr.mxu0 0.0
    %3055 = vmatpush1.msra.mxu0 0.0
    %3056 = vmatprep.subr.mxu0 0.0
    %3057 = vmatpush1.msra.mxu0 0.0
    %3058 = vmatprep.mubr.f32.mxu0 0.0
    %v3059 = vand.u32 %v37, 4294901760
    %3060 = vmatmul.mubr.f32.gmra.mrb[0].mxu0 %v3059
    %v3061 = vpop.f32.mrb[0].mxu0
    %v3062 = vadd.f32 %v2977, %v3061
    %v3063 = vpop.f32.mrb[0].mxu0
    %3064 = vmatprep.mubr.f32.mxu0 0.0
    %v3065 = vand.u32 %v40, 4294901760
    %3066 = vmatmul.mubr.f32.gmra.mrb[0].mxu0 %v3065
    %v3067 = vpop.f32.mrb[0].mxu0
    %v3068 = vadd.f32 %v2985, %v3067
    %v3069 = vpop.f32.mrb[0].mxu0
    %3070 = vdwg.mxu0
    %3071 = vmatprep.subr.mxu0 0.0
    %v3072 = vand.u32 %v2628, 4294901760
    %3073 = vmatpush1.msra.mxu0 %v3072
    %3074 = vmatprep.subr.mxu0 0.0
    %v3075 = vand.u32 %v2634, 4294901760
    %3076 = vmatpush1.msra.mxu0 %v3075
    %3077 = vmatprep.subr.mxu0 0.0
    %3078 = vmatpush1.msra.mxu0 0.0
    %3079 = vmatprep.subr.mxu0 0.0
    %3080 = vmatpush1.msra.mxu0 0.0
    %3081 = vmatprep.subr.mxu0 0.0
    %3082 = vmatpush1.msra.mxu0 0.0
    %3083 = vmatprep.subr.mxu0 0.0
    %3084 = vmatpush1.msra.mxu0 0.0
    %3085 = vmatprep.subr.mxu0 0.0
    %3086 = vmatpush1.msra.mxu0 0.0
    %3087 = vmatprep.subr.mxu0 0.0
    %3088 = vmatpush1.msra.mxu0 0.0
    %3089 = vmatprep.subr.mxu0 0.0
    %3090 = vmatpush1.msra.mxu0 0.0
    %3091 = vmatprep.subr.mxu0 0.0
    %3092 = vmatpush1.msra.mxu0 0.0
    %3093 = vmatprep.subr.mxu0 0.0
    %3094 = vmatpush1.msra.mxu0 0.0
    %3095 = vmatprep.subr.mxu0 0.0
    %3096 = vmatpush1.msra.mxu0 0.0
    %3097 = vmatprep.subr.mxu0 0.0
    %3098 = vmatpush1.msra.mxu0 0.0
    %3099 = vmatprep.subr.mxu0 0.0
    %3100 = vmatpush1.msra.mxu0 0.0
    %3101 = vmatprep.subr.mxu0 0.0
    %3102 = vmatpush1.msra.mxu0 0.0
    %3103 = vmatprep.subr.mxu0 0.0
    %3104 = vmatpush1.msra.mxu0 0.0
    %3105 = vmatprep.subr.mxu0 0.0
    %3106 = vmatpush1.msra.mxu0 0.0
    %3107 = vmatprep.subr.mxu0 0.0
    %3108 = vmatpush1.msra.mxu0 0.0
    %3109 = vmatprep.subr.mxu0 0.0
    %3110 = vmatpush1.msra.mxu0 0.0
    %3111 = vmatprep.subr.mxu0 0.0
    %3112 = vmatpush1.msra.mxu0 0.0
    %3113 = vmatprep.subr.mxu0 0.0
    %3114 = vmatpush1.msra.mxu0 0.0
    %3115 = vmatprep.subr.mxu0 0.0
    %3116 = vmatpush1.msra.mxu0 0.0
    %3117 = vmatprep.subr.mxu0 0.0
    %3118 = vmatpush1.msra.mxu0 0.0
    %3119 = vmatprep.subr.mxu0 0.0
    %3120 = vmatpush1.msra.mxu0 0.0
    %3121 = vmatprep.subr.mxu0 0.0
    %3122 = vmatpush1.msra.mxu0 0.0
    %3123 = vmatprep.subr.mxu0 0.0
    %3124 = vmatpush1.msra.mxu0 0.0
    %3125 = vmatprep.subr.mxu0 0.0
    %3126 = vmatpush1.msra.mxu0 0.0
    %3127 = vmatprep.subr.mxu0 0.0
    %3128 = vmatpush1.msra.mxu0 0.0
    %3129 = vmatprep.subr.mxu0 0.0
    %3130 = vmatpush1.msra.mxu0 0.0
    %3131 = vmatprep.subr.mxu0 0.0
    %3132 = vmatpush1.msra.mxu0 0.0
    %3133 = vmatprep.subr.mxu0 0.0
    %3134 = vmatpush1.msra.mxu0 0.0
    %3135 = vmatprep.subr.mxu0 0.0
    %3136 = vmatpush1.msra.mxu0 0.0
    %3137 = vmatprep.mubr.f32.mxu0 0.0
    %v3138 = vand.u32 %v37, 4294901760
    %3139 = vmatmul.mubr.f32.gmra.mrb[0].mxu0 %v3138
    %v3140 = vpop.f32.mrb[0].mxu0
    %v3141 = vadd.f32 %v3062, %v3140
    %v3142 = vpop.f32.mrb[0].mxu0
    %3143 = vmatprep.mubr.f32.mxu0 0.0
    %v3144 = vand.u32 %v40, 4294901760
    %3145 = vmatmul.mubr.f32.gmra.mrb[0].mxu0 %v3144
    %v3146 = vpop.f32.mrb[0].mxu0
    %v3147 = vadd.f32 %v3068, %v3146
    %v3148 = vpop.f32.mrb[0].mxu0
    %3149 = vdwg.mxu0
    %3152 = vrot.lane.b32.xlu0 %v3141, 32
    %v3153 = vpop.permute.xlu0 %3152
    %3154 = vrot.lane.b32.xlu0 %v3147, 32
    %v3155 = vpop.permute.xlu0 %3154
    %vm3158 = vcmask 392448
    %3159 = vst.msk [vmem:[#allocation2] sm:$0xff] %vm3158, %v3153
    %3160 = vst.msk [vmem:[#allocation2 + $0x8] sm:$0xff] %vm3158, %v3155
    %3161 = vmatprep.subr.mxu0 0.0
    %v3162 = vand.u32 %v3141, 4294901760
    %3163 = vmatpush1.msra.mxu0 %v3162
    %3164 = vmatprep.subr.mxu0 0.0
    %v3165 = vand.u32 %v3147, 4294901760
    %3166 = vmatpush1.msra.mxu0 %v3165
    %3167 = vmatprep.subr.mxu0 0.0
    %3168 = vmatpush1.msra.mxu0 0.0
    %3169 = vmatprep.subr.mxu0 0.0
    %3170 = vmatpush1.msra.mxu0 0.0
    %3171 = vmatprep.subr.mxu0 0.0
    %3172 = vmatpush1.msra.mxu0 0.0
    %3173 = vmatprep.subr.mxu0 0.0
    %3174 = vmatpush1.msra.mxu0 0.0
    %3175 = vmatprep.subr.mxu0 0.0
    %3176 = vmatpush1.msra.mxu0 0.0
    %3177 = vmatprep.subr.mxu0 0.0
    %3178 = vmatpush1.msra.mxu0 0.0
    %3179 = vmatprep.subr.mxu0 0.0
    %3180 = vmatpush1.msra.mxu0 0.0
    %3181 = vmatprep.subr.mxu0 0.0
    %3182 = vmatpush1.msra.mxu0 0.0
    %3183 = vmatprep.subr.mxu0 0.0
    %3184 = vmatpush1.msra.mxu0 0.0
    %3185 = vmatprep.subr.mxu0 0.0
    %3186 = vmatpush1.msra.mxu0 0.0
    %3187 = vmatprep.subr.mxu0 0.0
    %3188 = vmatpush1.msra.mxu0 0.0
    %3189 = vmatprep.subr.mxu0 0.0
    %3190 = vmatpush1.msra.mxu0 0.0
    %3191 = vmatprep.subr.mxu0 0.0
    %3192 = vmatpush1.msra.mxu0 0.0
    %3193 = vmatprep.subr.mxu0 0.0
    %3194 = vmatpush1.msra.mxu0 0.0
    %3195 = vmatprep.subr.mxu0 0.0
    %3196 = vmatpush1.msra.mxu0 0.0
    %3197 = vmatprep.subr.mxu0 0.0
    %3198 = vmatpush1.msra.mxu0 0.0
    %3199 = vmatprep.subr.mxu0 0.0
    %3200 = vmatpush1.msra.mxu0 0.0
    %3201 = vmatprep.subr.mxu0 0.0
    %3202 = vmatpush1.msra.mxu0 0.0
    %3203 = vmatprep.subr.mxu0 0.0
    %3204 = vmatpush1.msra.mxu0 0.0
    %3205 = vmatprep.subr.mxu0 0.0
    %3206 = vmatpush1.msra.mxu0 0.0
    %3207 = vmatprep.subr.mxu0 0.0
    %3208 = vmatpush1.msra.mxu0 0.0
    %3209 = vmatprep.subr.mxu0 0.0
    %3210 = vmatpush1.msra.mxu0 0.0
    %3211 = vmatprep.subr.mxu0 0.0
    %3212 = vmatpush1.msra.mxu0 0.0
    %3213 = vmatprep.subr.mxu0 0.0
    %3214 = vmatpush1.msra.mxu0 0.0
    %3215 = vmatprep.subr.mxu0 0.0
    %3216 = vmatpush1.msra.mxu0 0.0
    %3217 = vmatprep.subr.mxu0 0.0
    %3218 = vmatpush1.msra.mxu0 0.0
    %3219 = vmatprep.subr.mxu0 0.0
    %3220 = vmatpush1.msra.mxu0 0.0
    %3221 = vmatprep.subr.mxu0 0.0
    %3222 = vmatpush1.msra.mxu0 0.0
    %3223 = vmatprep.subr.mxu0 0.0
    %3224 = vmatpush1.msra.mxu0 0.0
    %3225 = vmatprep.subr.mxu0 0.0
    %3226 = vmatpush1.msra.mxu0 0.0
    %3227 = vmatprep.mubr.f32.mxu0 0.0
    %v3228 = vand.u32 %v37, 4294901760
    %v3229 = vsub.f32 %v37, %v3228
    %v3230 = vand.u32 %v3229, 4294901760
    %v3231 = vsub.f32 %v3229, %v3230
    %v3232 = vand.u32 %v3231, 4294901760
    %3233 = vmatmul.mubr.f32.gmra.mrb[0].mxu0 %v3232
    %v3234 = vpop.f32.mrb[0].mxu0
    %v3235 = vadd.f32 0.0, %v3234
    %v3236 = vpop.f32.mrb[0].mxu0
    %3237 = vmatprep.mubr.f32.mxu0 0.0
    %v3238 = vand.u32 %v40, 4294901760
    %v3239 = vsub.f32 %v40, %v3238
    %v3240 = vand.u32 %v3239, 4294901760
    %v3241 = vsub.f32 %v3239, %v3240
    %v3242 = vand.u32 %v3241, 4294901760
    %3243 = vmatmul.mubr.f32.gmra.mrb[0].mxu0 %v3242
    %v3244 = vpop.f32.mrb[0].mxu0
    %v3245 = vadd.f32 0.0, %v3244
    %v3246 = vpop.f32.mrb[0].mxu0
    %3247 = vdwg.mxu0
    %3248 = vmatprep.subr.mxu0 0.0
    %v3249 = vand.u32 %v3141, 4294901760
    %v3250 = vsub.f32 %v3141, %v3249
    %v3251 = vand.u32 %v3250, 4294901760
    %v3252 = vsub.f32 %v3250, %v3251
    %v3253 = vand.u32 %v3252, 4294901760
    %3254 = vmatpush1.msra.mxu0 %v3253
    %3255 = vmatprep.subr.mxu0 0.0
    %v3256 = vand.u32 %v3147, 4294901760
    %v3257 = vsub.f32 %v3147, %v3256
    %v3258 = vand.u32 %v3257, 4294901760
    %v3259 = vsub.f32 %v3257, %v3258
    %v3260 = vand.u32 %v3259, 4294901760
    %3261 = vmatpush1.msra.mxu0 %v3260
    %3262 = vmatprep.subr.mxu0 0.0
    %3263 = vmatpush1.msra.mxu0 0.0
    %3264 = vmatprep.subr.mxu0 0.0
    %3265 = vmatpush1.msra.mxu0 0.0
    %3266 = vmatprep.subr.mxu0 0.0
    %3267 = vmatpush1.msra.mxu0 0.0
    %3268 = vmatprep.subr.mxu0 0.0
    %3269 = vmatpush1.msra.mxu0 0.0
    %3270 = vmatprep.subr.mxu0 0.0
    %3271 = vmatpush1.msra.mxu0 0.0
    %3272 = vmatprep.subr.mxu0 0.0
    %3273 = vmatpush1.msra.mxu0 0.0
    %3274 = vmatprep.subr.mxu0 0.0
    %3275 = vmatpush1.msra.mxu0 0.0
    %3276 = vmatprep.subr.mxu0 0.0
    %3277 = vmatpush1.msra.mxu0 0.0
    %3278 = vmatprep.subr.mxu0 0.0
    %3279 = vmatpush1.msra.mxu0 0.0
    %3280 = vmatprep.subr.mxu0 0.0
    %3281 = vmatpush1.msra.mxu0 0.0
    %3282 = vmatprep.subr.mxu0 0.0
    %3283 = vmatpush1.msra.mxu0 0.0
    %3284 = vmatprep.subr.mxu0 0.0
    %3285 = vmatpush1.msra.mxu0 0.0
    %3286 = vmatprep.subr.mxu0 0.0
    %3287 = vmatpush1.msra.mxu0 0.0
    %3288 = vmatprep.subr.mxu0 0.0
    %3289 = vmatpush1.msra.mxu0 0.0
    %3290 = vmatprep.subr.mxu0 0.0
    %3291 = vmatpush1.msra.mxu0 0.0
    %3292 = vmatprep.subr.mxu0 0.0
    %3293 = vmatpush1.msra.mxu0 0.0
    %3294 = vmatprep.subr.mxu0 0.0
    %3295 = vmatpush1.msra.mxu0 0.0
    %3296 = vmatprep.subr.mxu0 0.0
    %3297 = vmatpush1.msra.mxu0 0.0
    %3298 = vmatprep.subr.mxu0 0.0
    %3299 = vmatpush1.msra.mxu0 0.0
    %3300 = vmatprep.subr.mxu0 0.0
    %3301 = vmatpush1.msra.mxu0 0.0
    %3302 = vmatprep.subr.mxu0 0.0
    %3303 = vmatpush1.msra.mxu0 0.0
    %3304 = vmatprep.subr.mxu0 0.0
    %3305 = vmatpush1.msra.mxu0 0.0
    %3306 = vmatprep.subr.mxu0 0.0
    %3307 = vmatpush1.msra.mxu0 0.0
    %3308 = vmatprep.subr.mxu0 0.0
    %3309 = vmatpush1.msra.mxu0 0.0
    %3310 = vmatprep.subr.mxu0 0.0
    %3311 = vmatpush1.msra.mxu0 0.0
    %3312 = vmatprep.subr.mxu0 0.0
    %3313 = vmatpush1.msra.mxu0 0.0
    %3314 = vmatprep.subr.mxu0 0.0
    %3315 = vmatpush1.msra.mxu0 0.0
    %3316 = vmatprep.subr.mxu0 0.0
    %3317 = vmatpush1.msra.mxu0 0.0
    %3318 = vmatprep.subr.mxu0 0.0
    %3319 = vmatpush1.msra.mxu0 0.0
    %3320 = vmatprep.subr.mxu0 0.0
    %3321 = vmatpush1.msra.mxu0 0.0
    %3322 = vmatprep.mubr.f32.mxu0 0.0
    %v3323 = vand.u32 %v37, 4294901760
    %3324 = vmatmul.mubr.f32.gmra.mrb[0].mxu0 %v3323
    %v3325 = vpop.f32.mrb[0].mxu0
    %v3326 = vadd.f32 %v3235, %v3325
    %v3327 = vpop.f32.mrb[0].mxu0
    %3328 = vmatprep.mubr.f32.mxu0 0.0
    %v3329 = vand.u32 %v40, 4294901760
    %3330 = vmatmul.mubr.f32.gmra.mrb[0].mxu0 %v3329
    %v3331 = vpop.f32.mrb[0].mxu0
    %v3332 = vadd.f32 %v3245, %v3331
    %v3333 = vpop.f32.mrb[0].mxu0
    %3334 = vdwg.mxu0
    %3335 = vmatprep.subr.mxu0 0.0
    %v3336 = vand.u32 %v3141, 4294901760
    %v3337 = vsub.f32 %v3141, %v3336
    %3338 = vmatpush1.msra.mxu0 %v3337
    %3339 = vmatprep.subr.mxu0 0.0
    %v3340 = vand.u32 %v3147, 4294901760
    %v3341 = vsub.f32 %v3147, %v3340
    %3342 = vmatpush1.msra.mxu0 %v3341
    %3343 = vmatprep.subr.mxu0 0.0
    %3344 = vmatpush1.msra.mxu0 0.0
    %3345 = vmatprep.subr.mxu0 0.0
    %3346 = vmatpush1.msra.mxu0 0.0
    %3347 = vmatprep.subr.mxu0 0.0
    %3348 = vmatpush1.msra.mxu0 0.0
    %3349 = vmatprep.subr.mxu0 0.0
    %3350 = vmatpush1.msra.mxu0 0.0
    %3351 = vmatprep.subr.mxu0 0.0
    %3352 = vmatpush1.msra.mxu0 0.0
    %3353 = vmatprep.subr.mxu0 0.0
    %3354 = vmatpush1.msra.mxu0 0.0
    %3355 = vmatprep.subr.mxu0 0.0
    %3356 = vmatpush1.msra.mxu0 0.0
    %3357 = vmatprep.subr.mxu0 0.0
    %3358 = vmatpush1.msra.mxu0 0.0
    %3359 = vmatprep.subr.mxu0 0.0
    %3360 = vmatpush1.msra.mxu0 0.0
    %3361 = vmatprep.subr.mxu0 0.0
    %3362 = vmatpush1.msra.mxu0 0.0
    %3363 = vmatprep.subr.mxu0 0.0
    %3364 = vmatpush1.msra.mxu0 0.0
    %3365 = vmatprep.subr.mxu0 0.0
    %3366 = vmatpush1.msra.mxu0 0.0
    %3367 = vmatprep.subr.mxu0 0.0
    %3368 = vmatpush1.msra.mxu0 0.0
    %3369 = vmatprep.subr.mxu0 0.0
    %3370 = vmatpush1.msra.mxu0 0.0
    %3371 = vmatprep.subr.mxu0 0.0
    %3372 = vmatpush1.msra.mxu0 0.0
    %3373 = vmatprep.subr.mxu0 0.0
    %3374 = vmatpush1.msra.mxu0 0.0
    %3375 = vmatprep.subr.mxu0 0.0
    %3376 = vmatpush1.msra.mxu0 0.0
    %3377 = vmatprep.subr.mxu0 0.0
    %3378 = vmatpush1.msra.mxu0 0.0
    %3379 = vmatprep.subr.mxu0 0.0
    %3380 = vmatpush1.msra.mxu0 0.0
    %3381 = vmatprep.subr.mxu0 0.0
    %3382 = vmatpush1.msra.mxu0 0.0
    %3383 = vmatprep.subr.mxu0 0.0
    %3384 = vmatpush1.msra.mxu0 0.0
    %3385 = vmatprep.subr.mxu0 0.0
    %3386 = vmatpush1.msra.mxu0 0.0
    %3387 = vmatprep.subr.mxu0 0.0
    %3388 = vmatpush1.msra.mxu0 0.0
    %3389 = vmatprep.subr.mxu0 0.0
    %3390 = vmatpush1.msra.mxu0 0.0
    %3391 = vmatprep.subr.mxu0 0.0
    %3392 = vmatpush1.msra.mxu0 0.0
    %3393 = vmatprep.subr.mxu0 0.0
    %3394 = vmatpush1.msra.mxu0 0.0
    %3395 = vmatprep.subr.mxu0 0.0
    %3396 = vmatpush1.msra.mxu0 0.0
    %3397 = vmatprep.subr.mxu0 0.0
    %3398 = vmatpush1.msra.mxu0 0.0
    %3399 = vmatprep.subr.mxu0 0.0
    %3400 = vmatpush1.msra.mxu0 0.0
    %3401 = vmatprep.subr.mxu0 0.0
    %3402 = vmatpush1.msra.mxu0 0.0
    %3403 = vmatprep.mubr.f32.mxu0 0.0
    %v3404 = vand.u32 %v37, 4294901760
    %v3405 = vsub.f32 %v37, %v3404
    %3406 = vmatmul.mubr.f32.gmra.mrb[0].mxu0 %v3405
    %v3407 = vpop.f32.mrb[0].mxu0
    %v3408 = vadd.f32 %v3326, %v3407
    %v3409 = vpop.f32.mrb[0].mxu0
    %3410 = vmatprep.mubr.f32.mxu0 0.0
    %v3411 = vand.u32 %v40, 4294901760
    %v3412 = vsub.f32 %v40, %v3411
    %3413 = vmatmul.mubr.f32.gmra.mrb[0].mxu0 %v3412
    %v3414 = vpop.f32.mrb[0].mxu0
    %v3415 = vadd.f32 %v3332, %v3414
    %v3416 = vpop.f32.mrb[0].mxu0
    %3417 = vdwg.mxu0
    %3418 = vmatprep.subr.mxu0 0.0
    %v3419 = vand.u32 %v3141, 4294901760
    %3420 = vmatpush1.msra.mxu0 %v3419
    %3421 = vmatprep.subr.mxu0 0.0
    %v3422 = vand.u32 %v3147, 4294901760
    %3423 = vmatpush1.msra.mxu0 %v3422
    %3424 = vmatprep.subr.mxu0 0.0
    %3425 = vmatpush1.msra.mxu0 0.0
    %3426 = vmatprep.subr.mxu0 0.0
    %3427 = vmatpush1.msra.mxu0 0.0
    %3428 = vmatprep.subr.mxu0 0.0
    %3429 = vmatpush1.msra.mxu0 0.0
    %3430 = vmatprep.subr.mxu0 0.0
    %3431 = vmatpush1.msra.mxu0 0.0
    %3432 = vmatprep.subr.mxu0 0.0
    %3433 = vmatpush1.msra.mxu0 0.0
    %3434 = vmatprep.subr.mxu0 0.0
    %3435 = vmatpush1.msra.mxu0 0.0
    %3436 = vmatprep.subr.mxu0 0.0
    %3437 = vmatpush1.msra.mxu0 0.0
    %3438 = vmatprep.subr.mxu0 0.0
    %3439 = vmatpush1.msra.mxu0 0.0
    %3440 = vmatprep.subr.mxu0 0.0
    %3441 = vmatpush1.msra.mxu0 0.0
    %3442 = vmatprep.subr.mxu0 0.0
    %3443 = vmatpush1.msra.mxu0 0.0
    %3444 = vmatprep.subr.mxu0 0.0
    %3445 = vmatpush1.msra.mxu0 0.0
    %3446 = vmatprep.subr.mxu0 0.0
    %3447 = vmatpush1.msra.mxu0 0.0
    %3448 = vmatprep.subr.mxu0 0.0
    %3449 = vmatpush1.msra.mxu0 0.0
    %3450 = vmatprep.subr.mxu0 0.0
    %3451 = vmatpush1.msra.mxu0 0.0
    %3452 = vmatprep.subr.mxu0 0.0
    %3453 = vmatpush1.msra.mxu0 0.0
    %3454 = vmatprep.subr.mxu0 0.0
    %3455 = vmatpush1.msra.mxu0 0.0
    %3456 = vmatprep.subr.mxu0 0.0
    %3457 = vmatpush1.msra.mxu0 0.0
    %3458 = vmatprep.subr.mxu0 0.0
    %3459 = vmatpush1.msra.mxu0 0.0
    %3460 = vmatprep.subr.mxu0 0.0
    %3461 = vmatpush1.msra.mxu0 0.0
    %3462 = vmatprep.subr.mxu0 0.0
    %3463 = vmatpush1.msra.mxu0 0.0
    %3464 = vmatprep.subr.mxu0 0.0
    %3465 = vmatpush1.msra.mxu0 0.0
    %3466 = vmatprep.subr.mxu0 0.0
    %3467 = vmatpush1.msra.mxu0 0.0
    %3468 = vmatprep.subr.mxu0 0.0
    %3469 = vmatpush1.msra.mxu0 0.0
    %3470 = vmatprep.subr.mxu0 0.0
    %3471 = vmatpush1.msra.mxu0 0.0
    %3472 = vmatprep.subr.mxu0 0.0
    %3473 = vmatpush1.msra.mxu0 0.0
    %3474 = vmatprep.subr.mxu0 0.0
    %3475 = vmatpush1.msra.mxu0 0.0
    %3476 = vmatprep.subr.mxu0 0.0
    %3477 = vmatpush1.msra.mxu0 0.0
    %3478 = vmatprep.subr.mxu0 0.0
    %3479 = vmatpush1.msra.mxu0 0.0
    %3480 = vmatprep.subr.mxu0 0.0
    %3481 = vmatpush1.msra.mxu0 0.0
    %3482 = vmatprep.subr.mxu0 0.0
    %3483 = vmatpush1.msra.mxu0 0.0
    %3484 = vmatprep.mubr.f32.mxu0 0.0
    %v3485 = vand.u32 %v37, 4294901760
    %v3486 = vsub.f32 %v37, %v3485
    %v3487 = vand.u32 %v3486, 4294901760
    %3488 = vmatmul.mubr.f32.gmra.mrb[0].mxu0 %v3487
    %v3489 = vpop.f32.mrb[0].mxu0
    %v3490 = vadd.f32 %v3408, %v3489
    %v3491 = vpop.f32.mrb[0].mxu0
    %3492 = vmatprep.mubr.f32.mxu0 0.0
    %v3493 = vand.u32 %v40, 4294901760
    %v3494 = vsub.f32 %v40, %v3493
    %v3495 = vand.u32 %v3494, 4294901760
    %3496 = vmatmul.mubr.f32.gmra.mrb[0].mxu0 %v3495
    %v3497 = vpop.f32.mrb[0].mxu0
    %v3498 = vadd.f32 %v3415, %v3497
    %v3499 = vpop.f32.mrb[0].mxu0
    %3500 = vdwg.mxu0
    %3501 = vmatprep.subr.mxu0 0.0
    %v3502 = vand.u32 %v3141, 4294901760
    %v3503 = vsub.f32 %v3141, %v3502
    %v3504 = vand.u32 %v3503, 4294901760
    %3505 = vmatpush1.msra.mxu0 %v3504
    %3506 = vmatprep.subr.mxu0 0.0
    %v3507 = vand.u32 %v3147, 4294901760
    %v3508 = vsub.f32 %v3147, %v3507
    %v3509 = vand.u32 %v3508, 4294901760
    %3510 = vmatpush1.msra.mxu0 %v3509
    %3511 = vmatprep.subr.mxu0 0.0
    %3512 = vmatpush1.msra.mxu0 0.0
    %3513 = vmatprep.subr.mxu0 0.0
    %3514 = vmatpush1.msra.mxu0 0.0
    %3515 = vmatprep.subr.mxu0 0.0
    %3516 = vmatpush1.msra.mxu0 0.0
    %3517 = vmatprep.subr.mxu0 0.0
    %3518 = vmatpush1.msra.mxu0 0.0
    %3519 = vmatprep.subr.mxu0 0.0
    %3520 = vmatpush1.msra.mxu0 0.0
    %3521 = vmatprep.subr.mxu0 0.0
    %3522 = vmatpush1.msra.mxu0 0.0
    %3523 = vmatprep.subr.mxu0 0.0
    %3524 = vmatpush1.msra.mxu0 0.0
    %3525 = vmatprep.subr.mxu0 0.0
    %3526 = vmatpush1.msra.mxu0 0.0
    %3527 = vmatprep.subr.mxu0 0.0
    %3528 = vmatpush1.msra.mxu0 0.0
    %3529 = vmatprep.subr.mxu0 0.0
    %3530 = vmatpush1.msra.mxu0 0.0
    %3531 = vmatprep.subr.mxu0 0.0
    %3532 = vmatpush1.msra.mxu0 0.0
    %3533 = vmatprep.subr.mxu0 0.0
    %3534 = vmatpush1.msra.mxu0 0.0
    %3535 = vmatprep.subr.mxu0 0.0
    %3536 = vmatpush1.msra.mxu0 0.0
    %3537 = vmatprep.subr.mxu0 0.0
    %3538 = vmatpush1.msra.mxu0 0.0
    %3539 = vmatprep.subr.mxu0 0.0
    %3540 = vmatpush1.msra.mxu0 0.0
    %3541 = vmatprep.subr.mxu0 0.0
    %3542 = vmatpush1.msra.mxu0 0.0
    %3543 = vmatprep.subr.mxu0 0.0
    %3544 = vmatpush1.msra.mxu0 0.0
    %3545 = vmatprep.subr.mxu0 0.0
    %3546 = vmatpush1.msra.mxu0 0.0
    %3547 = vmatprep.subr.mxu0 0.0
    %3548 = vmatpush1.msra.mxu0 0.0
    %3549 = vmatprep.subr.mxu0 0.0
    %3550 = vmatpush1.msra.mxu0 0.0
    %3551 = vmatprep.subr.mxu0 0.0
    %3552 = vmatpush1.msra.mxu0 0.0
    %3553 = vmatprep.subr.mxu0 0.0
    %3554 = vmatpush1.msra.mxu0 0.0
    %3555 = vmatprep.subr.mxu0 0.0
    %3556 = vmatpush1.msra.mxu0 0.0
    %3557 = vmatprep.subr.mxu0 0.0
    %3558 = vmatpush1.msra.mxu0 0.0
    %3559 = vmatprep.subr.mxu0 0.0
    %3560 = vmatpush1.msra.mxu0 0.0
    %3561 = vmatprep.subr.mxu0 0.0
    %3562 = vmatpush1.msra.mxu0 0.0
    %3563 = vmatprep.subr.mxu0 0.0
    %3564 = vmatpush1.msra.mxu0 0.0
    %3565 = vmatprep.subr.mxu0 0.0
    %3566 = vmatpush1.msra.mxu0 0.0
    %3567 = vmatprep.subr.mxu0 0.0
    %3568 = vmatpush1.msra.mxu0 0.0
    %3569 = vmatprep.subr.mxu0 0.0
    %3570 = vmatpush1.msra.mxu0 0.0
    %3571 = vmatprep.mubr.f32.mxu0 0.0
    %v3572 = vand.u32 %v37, 4294901760
    %3573 = vmatmul.mubr.f32.gmra.mrb[0].mxu0 %v3572
    %v3574 = vpop.f32.mrb[0].mxu0
    %v3575 = vadd.f32 %v3490, %v3574
    %v3576 = vpop.f32.mrb[0].mxu0
    %3577 = vmatprep.mubr.f32.mxu0 0.0
    %v3578 = vand.u32 %v40, 4294901760
    %3579 = vmatmul.mubr.f32.gmra.mrb[0].mxu0 %v3578
    %v3580 = vpop.f32.mrb[0].mxu0
    %v3581 = vadd.f32 %v3498, %v3580
    %v3582 = vpop.f32.mrb[0].mxu0
    %3583 = vdwg.mxu0
    %3584 = vmatprep.subr.mxu0 0.0
    %v3585 = vand.u32 %v3141, 4294901760
    %3586 = vmatpush1.msra.mxu0 %v3585
    %3587 = vmatprep.subr.mxu0 0.0
    %v3588 = vand.u32 %v3147, 4294901760
    %3589 = vmatpush1.msra.mxu0 %v3588
    %3590 = vmatprep.subr.mxu0 0.0
    %3591 = vmatpush1.msra.mxu0 0.0
    %3592 = vmatprep.subr.mxu0 0.0
    %3593 = vmatpush1.msra.mxu0 0.0
    %3594 = vmatprep.subr.mxu0 0.0
    %3595 = vmatpush1.msra.mxu0 0.0
    %3596 = vmatprep.subr.mxu0 0.0
    %3597 = vmatpush1.msra.mxu0 0.0
    %3598 = vmatprep.subr.mxu0 0.0
    %3599 = vmatpush1.msra.mxu0 0.0
    %3600 = vmatprep.subr.mxu0 0.0
    %3601 = vmatpush1.msra.mxu0 0.0
    %3602 = vmatprep.subr.mxu0 0.0
    %3603 = vmatpush1.msra.mxu0 0.0
    %3604 = vmatprep.subr.mxu0 0.0
    %3605 = vmatpush1.msra.mxu0 0.0
    %3606 = vmatprep.subr.mxu0 0.0
    %3607 = vmatpush1.msra.mxu0 0.0
    %3608 = vmatprep.subr.mxu0 0.0
    %3609 = vmatpush1.msra.mxu0 0.0
    %3610 = vmatprep.subr.mxu0 0.0
    %3611 = vmatpush1.msra.mxu0 0.0
    %3612 = vmatprep.subr.mxu0 0.0
    %3613 = vmatpush1.msra.mxu0 0.0
    %3614 = vmatprep.subr.mxu0 0.0
    %3615 = vmatpush1.msra.mxu0 0.0
    %3616 = vmatprep.subr.mxu0 0.0
    %3617 = vmatpush1.msra.mxu0 0.0
    %3618 = vmatprep.subr.mxu0 0.0
    %3619 = vmatpush1.msra.mxu0 0.0
    %3620 = vmatprep.subr.mxu0 0.0
    %3621 = vmatpush1.msra.mxu0 0.0
    %3622 = vmatprep.subr.mxu0 0.0
    %3623 = vmatpush1.msra.mxu0 0.0
    %3624 = vmatprep.subr.mxu0 0.0
    %3625 = vmatpush1.msra.mxu0 0.0
    %3626 = vmatprep.subr.mxu0 0.0
    %3627 = vmatpush1.msra.mxu0 0.0
    %3628 = vmatprep.subr.mxu0 0.0
    %3629 = vmatpush1.msra.mxu0 0.0
    %3630 = vmatprep.subr.mxu0 0.0
    %3631 = vmatpush1.msra.mxu0 0.0
    %3632 = vmatprep.subr.mxu0 0.0
    %3633 = vmatpush1.msra.mxu0 0.0
    %3634 = vmatprep.subr.mxu0 0.0
    %3635 = vmatpush1.msra.mxu0 0.0
    %3636 = vmatprep.subr.mxu0 0.0
    %3637 = vmatpush1.msra.mxu0 0.0
    %3638 = vmatprep.subr.mxu0 0.0
    %3639 = vmatpush1.msra.mxu0 0.0
    %3640 = vmatprep.subr.mxu0 0.0
    %3641 = vmatpush1.msra.mxu0 0.0
    %3642 = vmatprep.subr.mxu0 0.0
    %3643 = vmatpush1.msra.mxu0 0.0
    %3644 = vmatprep.subr.mxu0 0.0
    %3645 = vmatpush1.msra.mxu0 0.0
    %3646 = vmatprep.subr.mxu0 0.0
    %3647 = vmatpush1.msra.mxu0 0.0
    %3648 = vmatprep.subr.mxu0 0.0
    %3649 = vmatpush1.msra.mxu0 0.0
    %3650 = vmatprep.mubr.f32.mxu0 0.0
    %v3651 = vand.u32 %v37, 4294901760
    %3652 = vmatmul.mubr.f32.gmra.mrb[0].mxu0 %v3651
    %v3653 = vpop.f32.mrb[0].mxu0
    %v3654 = vadd.f32 %v3575, %v3653
    %v3655 = vpop.f32.mrb[0].mxu0
    %3656 = vmatprep.mubr.f32.mxu0 0.0
    %v3657 = vand.u32 %v40, 4294901760
    %3658 = vmatmul.mubr.f32.gmra.mrb[0].mxu0 %v3657
    %v3659 = vpop.f32.mrb[0].mxu0
    %v3660 = vadd.f32 %v3581, %v3659
    %v3661 = vpop.f32.mrb[0].mxu0
    %3662 = vdwg.mxu0
    %3665 = vrot.lane.b32.xlu0 %v3654, 48
    %v3666 = vpop.permute.xlu0 %3665
    %3667 = vrot.lane.b32.xlu0 %v3660, 48
    %v3668 = vpop.permute.xlu0 %3667
    %vm3671 = vcmask 523648
    %3672 = vst.msk [vmem:[#allocation2] sm:$0xff] %vm3671, %v3666
    %3673 = vst.msk [vmem:[#allocation2 + $0x8] sm:$0xff] %vm3671, %v3668
    %v3674 = vld [vmem:[#allocation3 + $0x20] sm:$0xff]
    %v3675 = vld [vmem:[#allocation3 + $0x28] sm:$0xff]
    %v3676 = vld [vmem:[#allocation3 + $0x30] sm:$0xff]
    %v3677 = vld [vmem:[#allocation3 + $0x38] sm:$0xff]
    %v3678 = vld [vmem:[#allocation3 + $0x40] sm:$0xff]
    %v3679 = vld [vmem:[#allocation3 + $0x48] sm:$0xff]
    %v3680 = vld [vmem:[#allocation3 + $0x50] sm:$0xff]
    %v3681 = vld [vmem:[#allocation3 + $0x58] sm:$0xff]
    %v3682 = vld [vmem:[#allocation3 + $0xa1] sm:$0x1]
    %v3683 = vld [vmem:[#allocation2] sm:$0xff]
    %v3684 = vld [vmem:[#allocation2 + $0x8] sm:$0xff]
    %v3685 = vlaneseq
    %v3686 = vshrl.u32 %v3685, 7
    %v3687 = vsub.s32 0, %v3686
    %v3688 = vrot.slane %v3682, %v3687
    %vm3689 = vcmask 523264
    %v3691 = vsel %vm3689, %v3683, 0
    %v3694 = vsel %vm3689, %v3684, 0
    %3696 = vmatprep.subr.mxu0 0.0
    %v3697 = vand.u32 %v3674, 4294901760
    %3698 = vmatpush1.msra.mxu0 %v3697
    %3699 = vmatprep.subr.mxu0 0.0
    %v3700 = vand.u32 %v3675, 4294901760
    %3701 = vmatpush1.msra.mxu0 %v3700
    %3702 = vmatprep.subr.mxu0 0.0
    %v3703 = vand.u32 %v3676, 4294901760
    %3704 = vmatpush1.msra.mxu0 %v3703
    %3705 = vmatprep.subr.mxu0 0.0
    %v3706 = vand.u32 %v3677, 4294901760
    %3707 = vmatpush1.msra.mxu0 %v3706
    %3708 = vmatprep.subr.mxu0 0.0
    %v3709 = vand.u32 %v3678, 4294901760
    %3710 = vmatpush1.msra.mxu0 %v3709
    %3711 = vmatprep.subr.mxu0 0.0
    %v3712 = vand.u32 %v3679, 4294901760
    %3713 = vmatpush1.msra.mxu0 %v3712
    %3714 = vmatprep.subr.mxu0 0.0
    %v3715 = vand.u32 %v3680, 4294901760
    %3716 = vmatpush1.msra.mxu0 %v3715
    %3717 = vmatprep.subr.mxu0 0.0
    %v3718 = vand.u32 %v3681, 4294901760
    %3719 = vmatpush1.msra.mxu0 %v3718
    %3720 = vmatprep.subr.mxu0 0.0
    %3721 = vmatpush1.msra.mxu0 0.0
    %3722 = vmatprep.subr.mxu0 0.0
    %3723 = vmatpush1.msra.mxu0 0.0
    %3724 = vmatprep.subr.mxu0 0.0
    %3725 = vmatpush1.msra.mxu0 0.0
    %3726 = vmatprep.subr.mxu0 0.0
    %3727 = vmatpush1.msra.mxu0 0.0
    %3728 = vmatprep.subr.mxu0 0.0
    %3729 = vmatpush1.msra.mxu0 0.0
    %3730 = vmatprep.subr.mxu0 0.0
    %3731 = vmatpush1.msra.mxu0 0.0
    %3732 = vmatprep.subr.mxu0 0.0
    %3733 = vmatpush1.msra.mxu0 0.0
    %3734 = vmatprep.subr.mxu0 0.0
    %3735 = vmatpush1.msra.mxu0 0.0
    %3736 = vmatprep.subr.mxu0 0.0
    %3737 = vmatpush1.msra.mxu0 0.0
    %3738 = vmatprep.subr.mxu0 0.0
    %3739 = vmatpush1.msra.mxu0 0.0
    %3740 = vmatprep.subr.mxu0 0.0
    %3741 = vmatpush1.msra.mxu0 0.0
    %3742 = vmatprep.subr.mxu0 0.0
    %3743 = vmatpush1.msra.mxu0 0.0
    %3744 = vmatprep.subr.mxu0 0.0
    %3745 = vmatpush1.msra.mxu0 0.0
    %3746 = vmatprep.subr.mxu0 0.0
    %3747 = vmatpush1.msra.mxu0 0.0
    %3748 = vmatprep.subr.mxu0 0.0
    %3749 = vmatpush1.msra.mxu0 0.0
    %3750 = vmatprep.subr.mxu0 0.0
    %3751 = vmatpush1.msra.mxu0 0.0
    %3752 = vmatprep.subr.mxu0 0.0
    %3753 = vmatpush1.msra.mxu0 0.0
    %3754 = vmatprep.subr.mxu0 0.0
    %3755 = vmatpush1.msra.mxu0 0.0
    %3756 = vmatprep.subr.mxu0 0.0
    %3757 = vmatpush1.msra.mxu0 0.0
    %3758 = vmatprep.subr.mxu0 0.0
    %3759 = vmatpush1.msra.mxu0 0.0
    %3760 = vmatprep.subr.mxu0 0.0
    %3761 = vmatpush1.msra.mxu0 0.0
    %3762 = vmatprep.subr.mxu0 0.0
    %3763 = vmatpush1.msra.mxu0 0.0
    %3764 = vmatprep.subr.mxu0 0.0
    %3765 = vmatpush1.msra.mxu0 0.0
    %3766 = vmatprep.subr.mxu0 0.0
    %3767 = vmatpush1.msra.mxu0 0.0
    %3768 = vmatprep.mubr.f32.mxu0 0.0
    %v3769 = vand.u32 %v3691, 4294901760
    %v3770 = vsub.f32 %v3691, %v3769
    %v3771 = vand.u32 %v3770, 4294901760
    %v3772 = vsub.f32 %v3770, %v3771
    %v3773 = vand.u32 %v3772, 4294901760
    %3774 = vmatmul.mubr.f32.gmra.mrb[0].mxu0 %v3773
    %v3775 = vpop.f32.mrb[0].mxu0
    %v3776 = vadd.f32 %v3688, %v3775
    %v3777 = vpop.f32.mrb[0].mxu0
    %3778 = vmatprep.mubr.f32.mxu0 0.0
    %v3779 = vand.u32 %v3694, 4294901760
    %v3780 = vsub.f32 %v3694, %v3779
    %v3781 = vand.u32 %v3780, 4294901760
    %v3782 = vsub.f32 %v3780, %v3781
    %v3783 = vand.u32 %v3782, 4294901760
    %3784 = vmatmul.mubr.f32.gmra.mrb[0].mxu0 %v3783
    %v3785 = vpop.f32.mrb[0].mxu0
    %v3786 = vadd.f32 %v3688, %v3785
    %v3787 = vpop.f32.mrb[0].mxu0
    %3788 = vdwg.mxu0
    %3789 = vmatprep.subr.mxu0 0.0
    %v3790 = vand.u32 %v3674, 4294901760
    %v3791 = vsub.f32 %v3674, %v3790
    %v3792 = vand.u32 %v3791, 4294901760
    %v3793 = vsub.f32 %v3791, %v3792
    %v3794 = vand.u32 %v3793, 4294901760
    %3795 = vmatpush1.msra.mxu0 %v3794
    %3796 = vmatprep.subr.mxu0 0.0
    %v3797 = vand.u32 %v3675, 4294901760
    %v3798 = vsub.f32 %v3675, %v3797
    %v3799 = vand.u32 %v3798, 4294901760
    %v3800 = vsub.f32 %v3798, %v3799
    %v3801 = vand.u32 %v3800, 4294901760
    %3802 = vmatpush1.msra.mxu0 %v3801
    %3803 = vmatprep.subr.mxu0 0.0
    %v3804 = vand.u32 %v3676, 4294901760
    %v3805 = vsub.f32 %v3676, %v3804
    %v3806 = vand.u32 %v3805, 4294901760
    %v3807 = vsub.f32 %v3805, %v3806
    %v3808 = vand.u32 %v3807, 4294901760
    %3809 = vmatpush1.msra.mxu0 %v3808
    %3810 = vmatprep.subr.mxu0 0.0
    %v3811 = vand.u32 %v3677, 4294901760
    %v3812 = vsub.f32 %v3677, %v3811
    %v3813 = vand.u32 %v3812, 4294901760
    %v3814 = vsub.f32 %v3812, %v3813
    %v3815 = vand.u32 %v3814, 4294901760
    %3816 = vmatpush1.msra.mxu0 %v3815
    %3817 = vmatprep.subr.mxu0 0.0
    %v3818 = vand.u32 %v3678, 4294901760
    %v3819 = vsub.f32 %v3678, %v3818
    %v3820 = vand.u32 %v3819, 4294901760
    %v3821 = vsub.f32 %v3819, %v3820
    %v3822 = vand.u32 %v3821, 4294901760
    %3823 = vmatpush1.msra.mxu0 %v3822
    %3824 = vmatprep.subr.mxu0 0.0
    %v3825 = vand.u32 %v3679, 4294901760
    %v3826 = vsub.f32 %v3679, %v3825
    %v3827 = vand.u32 %v3826, 4294901760
    %v3828 = vsub.f32 %v3826, %v3827
    %v3829 = vand.u32 %v3828, 4294901760
    %3830 = vmatpush1.msra.mxu0 %v3829
    %3831 = vmatprep.subr.mxu0 0.0
    %v3832 = vand.u32 %v3680, 4294901760
    %v3833 = vsub.f32 %v3680, %v3832
    %v3834 = vand.u32 %v3833, 4294901760
    %v3835 = vsub.f32 %v3833, %v3834
    %v3836 = vand.u32 %v3835, 4294901760
    %3837 = vmatpush1.msra.mxu0 %v3836
    %3838 = vmatprep.subr.mxu0 0.0
    %v3839 = vand.u32 %v3681, 4294901760
    %v3840 = vsub.f32 %v3681, %v3839
    %v3841 = vand.u32 %v3840, 4294901760
    %v3842 = vsub.f32 %v3840, %v3841
    %v3843 = vand.u32 %v3842, 4294901760
    %3844 = vmatpush1.msra.mxu0 %v3843
    %3845 = vmatprep.subr.mxu0 0.0
    %3846 = vmatpush1.msra.mxu0 0.0
    %3847 = vmatprep.subr.mxu0 0.0
    %3848 = vmatpush1.msra.mxu0 0.0
    %3849 = vmatprep.subr.mxu0 0.0
    %3850 = vmatpush1.msra.mxu0 0.0
    %3851 = vmatprep.subr.mxu0 0.0
    %3852 = vmatpush1.msra.mxu0 0.0
    %3853 = vmatprep.subr.mxu0 0.0
    %3854 = vmatpush1.msra.mxu0 0.0
    %3855 = vmatprep.subr.mxu0 0.0
    %3856 = vmatpush1.msra.mxu0 0.0
    %3857 = vmatprep.subr.mxu0 0.0
    %3858 = vmatpush1.msra.mxu0 0.0
    %3859 = vmatprep.subr.mxu0 0.0
    %3860 = vmatpush1.msra.mxu0 0.0
    %3861 = vmatprep.subr.mxu0 0.0
    %3862 = vmatpush1.msra.mxu0 0.0
    %3863 = vmatprep.subr.mxu0 0.0
    %3864 = vmatpush1.msra.mxu0 0.0
    %3865 = vmatprep.subr.mxu0 0.0
    %3866 = vmatpush1.msra.mxu0 0.0
    %3867 = vmatprep.subr.mxu0 0.0
    %3868 = vmatpush1.msra.mxu0 0.0
    %3869 = vmatprep.subr.mxu0 0.0
    %3870 = vmatpush1.msra.mxu0 0.0
    %3871 = vmatprep.subr.mxu0 0.0
    %3872 = vmatpush1.msra.mxu0 0.0
    %3873 = vmatprep.subr.mxu0 0.0
    %3874 = vmatpush1.msra.mxu0 0.0
    %3875 = vmatprep.subr.mxu0 0.0
    %3876 = vmatpush1.msra.mxu0 0.0
    %3877 = vmatprep.subr.mxu0 0.0
    %3878 = vmatpush1.msra.mxu0 0.0
    %3879 = vmatprep.subr.mxu0 0.0
    %3880 = vmatpush1.msra.mxu0 0.0
    %3881 = vmatprep.subr.mxu0 0.0
    %3882 = vmatpush1.msra.mxu0 0.0
    %3883 = vmatprep.subr.mxu0 0.0
    %3884 = vmatpush1.msra.mxu0 0.0
    %3885 = vmatprep.subr.mxu0 0.0
    %3886 = vmatpush1.msra.mxu0 0.0
    %3887 = vmatprep.subr.mxu0 0.0
    %3888 = vmatpush1.msra.mxu0 0.0
    %3889 = vmatprep.subr.mxu0 0.0
    %3890 = vmatpush1.msra.mxu0 0.0
    %3891 = vmatprep.subr.mxu0 0.0
    %3892 = vmatpush1.msra.mxu0 0.0
    %3893 = vmatprep.mubr.f32.mxu0 0.0
    %v3894 = vand.u32 %v3691, 4294901760
    %3895 = vmatmul.mubr.f32.gmra.mrb[0].mxu0 %v3894
    %v3896 = vpop.f32.mrb[0].mxu0
    %v3897 = vadd.f32 %v3776, %v3896
    %v3898 = vpop.f32.mrb[0].mxu0
    %3899 = vmatprep.mubr.f32.mxu0 0.0
    %v3900 = vand.u32 %v3694, 4294901760
    %3901 = vmatmul.mubr.f32.gmra.mrb[0].mxu0 %v3900
    %v3902 = vpop.f32.mrb[0].mxu0
    %v3903 = vadd.f32 %v3786, %v3902
    %v3904 = vpop.f32.mrb[0].mxu0
    %3905 = vdwg.mxu0
    %3906 = vmatprep.subr.mxu0 0.0
    %v3907 = vand.u32 %v3674, 4294901760
    %v3908 = vsub.f32 %v3674, %v3907
    %3909 = vmatpush1.msra.mxu0 %v3908
    %3910 = vmatprep.subr.mxu0 0.0
    %v3911 = vand.u32 %v3675, 4294901760
    %v3912 = vsub.f32 %v3675, %v3911
    %3913 = vmatpush1.msra.mxu0 %v3912
    %3914 = vmatprep.subr.mxu0 0.0
    %v3915 = vand.u32 %v3676, 4294901760
    %v3916 = vsub.f32 %v3676, %v3915
    %3917 = vmatpush1.msra.mxu0 %v3916
    %3918 = vmatprep.subr.mxu0 0.0
    %v3919 = vand.u32 %v3677, 4294901760
    %v3920 = vsub.f32 %v3677, %v3919
    %3921 = vmatpush1.msra.mxu0 %v3920
    %3922 = vmatprep.subr.mxu0 0.0
    %v3923 = vand.u32 %v3678, 4294901760
    %v3924 = vsub.f32 %v3678, %v3923
    %3925 = vmatpush1.msra.mxu0 %v3924
    %3926 = vmatprep.subr.mxu0 0.0
    %v3927 = vand.u32 %v3679, 4294901760
    %v3928 = vsub.f32 %v3679, %v3927
    %3929 = vmatpush1.msra.mxu0 %v3928
    %3930 = vmatprep.subr.mxu0 0.0
    %v3931 = vand.u32 %v3680, 4294901760
    %v3932 = vsub.f32 %v3680, %v3931
    %3933 = vmatpush1.msra.mxu0 %v3932
    %3934 = vmatprep.subr.mxu0 0.0
    %v3935 = vand.u32 %v3681, 4294901760
    %v3936 = vsub.f32 %v3681, %v3935
    %3937 = vmatpush1.msra.mxu0 %v3936
    %3938 = vmatprep.subr.mxu0 0.0
    %3939 = vmatpush1.msra.mxu0 0.0
    %3940 = vmatprep.subr.mxu0 0.0
    %3941 = vmatpush1.msra.mxu0 0.0
    %3942 = vmatprep.subr.mxu0 0.0
    %3943 = vmatpush1.msra.mxu0 0.0
    %3944 = vmatprep.subr.mxu0 0.0
    %3945 = vmatpush1.msra.mxu0 0.0
    %3946 = vmatprep.subr.mxu0 0.0
    %3947 = vmatpush1.msra.mxu0 0.0
    %3948 = vmatprep.subr.mxu0 0.0
    %3949 = vmatpush1.msra.mxu0 0.0
    %3950 = vmatprep.subr.mxu0 0.0
    %3951 = vmatpush1.msra.mxu0 0.0
    %3952 = vmatprep.subr.mxu0 0.0
    %3953 = vmatpush1.msra.mxu0 0.0
    %3954 = vmatprep.subr.mxu0 0.0
    %3955 = vmatpush1.msra.mxu0 0.0
    %3956 = vmatprep.subr.mxu0 0.0
    %3957 = vmatpush1.msra.mxu0 0.0
    %3958 = vmatprep.subr.mxu0 0.0
    %3959 = vmatpush1.msra.mxu0 0.0
    %3960 = vmatprep.subr.mxu0 0.0
    %3961 = vmatpush1.msra.mxu0 0.0
    %3962 = vmatprep.subr.mxu0 0.0
    %3963 = vmatpush1.msra.mxu0 0.0
    %3964 = vmatprep.subr.mxu0 0.0
    %3965 = vmatpush1.msra.mxu0 0.0
    %3966 = vmatprep.subr.mxu0 0.0
    %3967 = vmatpush1.msra.mxu0 0.0
    %3968 = vmatprep.subr.mxu0 0.0
    %3969 = vmatpush1.msra.mxu0 0.0
    %3970 = vmatprep.subr.mxu0 0.0
    %3971 = vmatpush1.msra.mxu0 0.0
    %3972 = vmatprep.subr.mxu0 0.0
    %3973 = vmatpush1.msra.mxu0 0.0
    %3974 = vmatprep.subr.mxu0 0.0
    %3975 = vmatpush1.msra.mxu0 0.0
    %3976 = vmatprep.subr.mxu0 0.0
    %3977 = vmatpush1.msra.mxu0 0.0
    %3978 = vmatprep.subr.mxu0 0.0
    %3979 = vmatpush1.msra.mxu0 0.0
    %3980 = vmatprep.subr.mxu0 0.0
    %3981 = vmatpush1.msra.mxu0 0.0
    %3982 = vmatprep.subr.mxu0 0.0
    %3983 = vmatpush1.msra.mxu0 0.0
    %3984 = vmatprep.subr.mxu0 0.0
    %3985 = vmatpush1.msra.mxu0 0.0
    %3986 = vmatprep.mubr.f32.mxu0 0.0
    %v3987 = vand.u32 %v3691, 4294901760
    %v3988 = vsub.f32 %v3691, %v3987
    %3989 = vmatmul.mubr.f32.gmra.mrb[0].mxu0 %v3988
    %v3990 = vpop.f32.mrb[0].mxu0
    %v3991 = vadd.f32 %v3897, %v3990
    %v3992 = vpop.f32.mrb[0].mxu0
    %3993 = vmatprep.mubr.f32.mxu0 0.0
    %v3994 = vand.u32 %v3694, 4294901760
    %v3995 = vsub.f32 %v3694, %v3994
    %3996 = vmatmul.mubr.f32.gmra.mrb[0].mxu0 %v3995
    %v3997 = vpop.f32.mrb[0].mxu0
    %v3998 = vadd.f32 %v3903, %v3997
    %v3999 = vpop.f32.mrb[0].mxu0
    %4000 = vdwg.mxu0
    %4001 = vmatprep.subr.mxu0 0.0
    %v4002 = vand.u32 %v3674, 4294901760
    %4003 = vmatpush1.msra.mxu0 %v4002
    %4004 = vmatprep.subr.mxu0 0.0
    %v4005 = vand.u32 %v3675, 4294901760
    %4006 = vmatpush1.msra.mxu0 %v4005
    %4007 = vmatprep.subr.mxu0 0.0
    %v4008 = vand.u32 %v3676, 4294901760
    %4009 = vmatpush1.msra.mxu0 %v4008
    %4010 = vmatprep.subr.mxu0 0.0
    %v4011 = vand.u32 %v3677, 4294901760
    %4012 = vmatpush1.msra.mxu0 %v4011
    %4013 = vmatprep.subr.mxu0 0.0
    %v4014 = vand.u32 %v3678, 4294901760
    %4015 = vmatpush1.msra.mxu0 %v4014
    %4016 = vmatprep.subr.mxu0 0.0
    %v4017 = vand.u32 %v3679, 4294901760
    %4018 = vmatpush1.msra.mxu0 %v4017
    %4019 = vmatprep.subr.mxu0 0.0
    %v4020 = vand.u32 %v3680, 4294901760
    %4021 = vmatpush1.msra.mxu0 %v4020
    %4022 = vmatprep.subr.mxu0 0.0
    %v4023 = vand.u32 %v3681, 4294901760
    %4024 = vmatpush1.msra.mxu0 %v4023
    %4025 = vmatprep.subr.mxu0 0.0
    %4026 = vmatpush1.msra.mxu0 0.0
    %4027 = vmatprep.subr.mxu0 0.0
    %4028 = vmatpush1.msra.mxu0 0.0
    %4029 = vmatprep.subr.mxu0 0.0
    %4030 = vmatpush1.msra.mxu0 0.0
    %4031 = vmatprep.subr.mxu0 0.0
    %4032 = vmatpush1.msra.mxu0 0.0
    %4033 = vmatprep.subr.mxu0 0.0
    %4034 = vmatpush1.msra.mxu0 0.0
    %4035 = vmatprep.subr.mxu0 0.0
    %4036 = vmatpush1.msra.mxu0 0.0
    %4037 = vmatprep.subr.mxu0 0.0
    %4038 = vmatpush1.msra.mxu0 0.0
    %4039 = vmatprep.subr.mxu0 0.0
    %4040 = vmatpush1.msra.mxu0 0.0
    %4041 = vmatprep.subr.mxu0 0.0
    %4042 = vmatpush1.msra.mxu0 0.0
    %4043 = vmatprep.subr.mxu0 0.0
    %4044 = vmatpush1.msra.mxu0 0.0
    %4045 = vmatprep.subr.mxu0 0.0
    %4046 = vmatpush1.msra.mxu0 0.0
    %4047 = vmatprep.subr.mxu0 0.0
    %4048 = vmatpush1.msra.mxu0 0.0
    %4049 = vmatprep.subr.mxu0 0.0
    %4050 = vmatpush1.msra.mxu0 0.0
    %4051 = vmatprep.subr.mxu0 0.0
    %4052 = vmatpush1.msra.mxu0 0.0
    %4053 = vmatprep.subr.mxu0 0.0
    %4054 = vmatpush1.msra.mxu0 0.0
    %4055 = vmatprep.subr.mxu0 0.0
    %4056 = vmatpush1.msra.mxu0 0.0
    %4057 = vmatprep.subr.mxu0 0.0
    %4058 = vmatpush1.msra.mxu0 0.0
    %4059 = vmatprep.subr.mxu0 0.0
    %4060 = vmatpush1.msra.mxu0 0.0
    %4061 = vmatprep.subr.mxu0 0.0
    %4062 = vmatpush1.msra.mxu0 0.0
    %4063 = vmatprep.subr.mxu0 0.0
    %4064 = vmatpush1.msra.mxu0 0.0
    %4065 = vmatprep.subr.mxu0 0.0
    %4066 = vmatpush1.msra.mxu0 0.0
    %4067 = vmatprep.subr.mxu0 0.0
    %4068 = vmatpush1.msra.mxu0 0.0
    %4069 = vmatprep.subr.mxu0 0.0
    %4070 = vmatpush1.msra.mxu0 0.0
    %4071 = vmatprep.subr.mxu0 0.0
    %4072 = vmatpush1.msra.mxu0 0.0
    %4073 = vmatprep.mubr.f32.mxu0 0.0
    %v4074 = vand.u32 %v3691, 4294901760
    %v4075 = vsub.f32 %v3691, %v4074
    %v4076 = vand.u32 %v4075, 4294901760
    %4077 = vmatmul.mubr.f32.gmra.mrb[0].mxu0 %v4076
    %v4078 = vpop.f32.mrb[0].mxu0
    %v4079 = vadd.f32 %v3991, %v4078
    %v4080 = vpop.f32.mrb[0].mxu0
    %4081 = vmatprep.mubr.f32.mxu0 0.0
    %v4082 = vand.u32 %v3694, 4294901760
    %v4083 = vsub.f32 %v3694, %v4082
    %v4084 = vand.u32 %v4083, 4294901760
    %4085 = vmatmul.mubr.f32.gmra.mrb[0].mxu0 %v4084
    %v4086 = vpop.f32.mrb[0].mxu0
    %v4087 = vadd.f32 %v3998, %v4086
    %v4088 = vpop.f32.mrb[0].mxu0
    %4089 = vdwg.mxu0
    %4090 = vmatprep.subr.mxu0 0.0
    %v4091 = vand.u32 %v3674, 4294901760
    %v4092 = vsub.f32 %v3674, %v4091
    %v4093 = vand.u32 %v4092, 4294901760
    %4094 = vmatpush1.msra.mxu0 %v4093
    %4095 = vmatprep.subr.mxu0 0.0
    %v4096 = vand.u32 %v3675, 4294901760
    %v4097 = vsub.f32 %v3675, %v4096
    %v4098 = vand.u32 %v4097, 4294901760
    %4099 = vmatpush1.msra.mxu0 %v4098
    %4100 = vmatprep.subr.mxu0 0.0
    %v4101 = vand.u32 %v3676, 4294901760
    %v4102 = vsub.f32 %v3676, %v4101
    %v4103 = vand.u32 %v4102, 4294901760
    %4104 = vmatpush1.msra.mxu0 %v4103
    %4105 = vmatprep.subr.mxu0 0.0
    %v4106 = vand.u32 %v3677, 4294901760
    %v4107 = vsub.f32 %v3677, %v4106
    %v4108 = vand.u32 %v4107, 4294901760
    %4109 = vmatpush1.msra.mxu0 %v4108
    %4110 = vmatprep.subr.mxu0 0.0
    %v4111 = vand.u32 %v3678, 4294901760
    %v4112 = vsub.f32 %v3678, %v4111
    %v4113 = vand.u32 %v4112, 4294901760
    %4114 = vmatpush1.msra.mxu0 %v4113
    %4115 = vmatprep.subr.mxu0 0.0
    %v4116 = vand.u32 %v3679, 4294901760
    %v4117 = vsub.f32 %v3679, %v4116
    %v4118 = vand.u32 %v4117, 4294901760
    %4119 = vmatpush1.msra.mxu0 %v4118
    %4120 = vmatprep.subr.mxu0 0.0
    %v4121 = vand.u32 %v3680, 4294901760
    %v4122 = vsub.f32 %v3680, %v4121
    %v4123 = vand.u32 %v4122, 4294901760
    %4124 = vmatpush1.msra.mxu0 %v4123
    %4125 = vmatprep.subr.mxu0 0.0
    %v4126 = vand.u32 %v3681, 4294901760
    %v4127 = vsub.f32 %v3681, %v4126
    %v4128 = vand.u32 %v4127, 4294901760
    %4129 = vmatpush1.msra.mxu0 %v4128
    %4130 = vmatprep.subr.mxu0 0.0
    %4131 = vmatpush1.msra.mxu0 0.0
    %4132 = vmatprep.subr.mxu0 0.0
    %4133 = vmatpush1.msra.mxu0 0.0
    %4134 = vmatprep.subr.mxu0 0.0
    %4135 = vmatpush1.msra.mxu0 0.0
    %4136 = vmatprep.subr.mxu0 0.0
    %4137 = vmatpush1.msra.mxu0 0.0
    %4138 = vmatprep.subr.mxu0 0.0
    %4139 = vmatpush1.msra.mxu0 0.0
    %4140 = vmatprep.subr.mxu0 0.0
    %4141 = vmatpush1.msra.mxu0 0.0
    %4142 = vmatprep.subr.mxu0 0.0
    %4143 = vmatpush1.msra.mxu0 0.0
    %4144 = vmatprep.subr.mxu0 0.0
    %4145 = vmatpush1.msra.mxu0 0.0
    %4146 = vmatprep.subr.mxu0 0.0
    %4147 = vmatpush1.msra.mxu0 0.0
    %4148 = vmatprep.subr.mxu0 0.0
    %4149 = vmatpush1.msra.mxu0 0.0
    %4150 = vmatprep.subr.mxu0 0.0
    %4151 = vmatpush1.msra.mxu0 0.0
    %4152 = vmatprep.subr.mxu0 0.0
    %4153 = vmatpush1.msra.mxu0 0.0
    %4154 = vmatprep.subr.mxu0 0.0
    %4155 = vmatpush1.msra.mxu0 0.0
    %4156 = vmatprep.subr.mxu0 0.0
    %4157 = vmatpush1.msra.mxu0 0.0
    %4158 = vmatprep.subr.mxu0 0.0
    %4159 = vmatpush1.msra.mxu0 0.0
    %4160 = vmatprep.subr.mxu0 0.0
    %4161 = vmatpush1.msra.mxu0 0.0
    %4162 = vmatprep.subr.mxu0 0.0
    %4163 = vmatpush1.msra.mxu0 0.0
    %4164 = vmatprep.subr.mxu0 0.0
    %4165 = vmatpush1.msra.mxu0 0.0
    %4166 = vmatprep.subr.mxu0 0.0
    %4167 = vmatpush1.msra.mxu0 0.0
    %4168 = vmatprep.subr.mxu0 0.0
    %4169 = vmatpush1.msra.mxu0 0.0
    %4170 = vmatprep.subr.mxu0 0.0
    %4171 = vmatpush1.msra.mxu0 0.0
    %4172 = vmatprep.subr.mxu0 0.0
    %4173 = vmatpush1.msra.mxu0 0.0
    %4174 = vmatprep.subr.mxu0 0.0
    %4175 = vmatpush1.msra.mxu0 0.0
    %4176 = vmatprep.subr.mxu0 0.0
    %4177 = vmatpush1.msra.mxu0 0.0
    %4178 = vmatprep.mubr.f32.mxu0 0.0
    %v4179 = vand.u32 %v3691, 4294901760
    %4180 = vmatmul.mubr.f32.gmra.mrb[0].mxu0 %v4179
    %v4181 = vpop.f32.mrb[0].mxu0
    %v4182 = vadd.f32 %v4079, %v4181
    %v4183 = vpop.f32.mrb[0].mxu0
    %4184 = vmatprep.mubr.f32.mxu0 0.0
    %v4185 = vand.u32 %v3694, 4294901760
    %4186 = vmatmul.mubr.f32.gmra.mrb[0].mxu0 %v4185
    %v4187 = vpop.f32.mrb[0].mxu0
    %v4188 = vadd.f32 %v4087, %v4187
    %v4189 = vpop.f32.mrb[0].mxu0
    %4190 = vdwg.mxu0
    %4191 = vmatprep.subr.mxu0 0.0
    %v4192 = vand.u32 %v3674, 4294901760
    %4193 = vmatpush1.msra.mxu0 %v4192
    %4194 = vmatprep.subr.mxu0 0.0
    %v4195 = vand.u32 %v3675, 4294901760
    %4196 = vmatpush1.msra.mxu0 %v4195
    %4197 = vmatprep.subr.mxu0 0.0
    %v4198 = vand.u32 %v3676, 4294901760
    %4199 = vmatpush1.msra.mxu0 %v4198
    %4200 = vmatprep.subr.mxu0 0.0
    %v4201 = vand.u32 %v3677, 4294901760
    %4202 = vmatpush1.msra.mxu0 %v4201
    %4203 = vmatprep.subr.mxu0 0.0
    %v4204 = vand.u32 %v3678, 4294901760
    %4205 = vmatpush1.msra.mxu0 %v4204
    %4206 = vmatprep.subr.mxu0 0.0
    %v4207 = vand.u32 %v3679, 4294901760
    %4208 = vmatpush1.msra.mxu0 %v4207
    %4209 = vmatprep.subr.mxu0 0.0
    %v4210 = vand.u32 %v3680, 4294901760
    %4211 = vmatpush1.msra.mxu0 %v4210
    %4212 = vmatprep.subr.mxu0 0.0
    %v4213 = vand.u32 %v3681, 4294901760
    %4214 = vmatpush1.msra.mxu0 %v4213
    %4215 = vmatprep.subr.mxu0 0.0
    %4216 = vmatpush1.msra.mxu0 0.0
    %4217 = vmatprep.subr.mxu0 0.0
    %4218 = vmatpush1.msra.mxu0 0.0
    %4219 = vmatprep.subr.mxu0 0.0
    %4220 = vmatpush1.msra.mxu0 0.0
    %4221 = vmatprep.subr.mxu0 0.0
    %4222 = vmatpush1.msra.mxu0 0.0
    %4223 = vmatprep.subr.mxu0 0.0
    %4224 = vmatpush1.msra.mxu0 0.0
    %4225 = vmatprep.subr.mxu0 0.0
    %4226 = vmatpush1.msra.mxu0 0.0
    %4227 = vmatprep.subr.mxu0 0.0
    %4228 = vmatpush1.msra.mxu0 0.0
    %4229 = vmatprep.subr.mxu0 0.0
    %4230 = vmatpush1.msra.mxu0 0.0
    %4231 = vmatprep.subr.mxu0 0.0
    %4232 = vmatpush1.msra.mxu0 0.0
    %4233 = vmatprep.subr.mxu0 0.0
    %4234 = vmatpush1.msra.mxu0 0.0
    %4235 = vmatprep.subr.mxu0 0.0
    %4236 = vmatpush1.msra.mxu0 0.0
    %4237 = vmatprep.subr.mxu0 0.0
    %4238 = vmatpush1.msra.mxu0 0.0
    %4239 = vmatprep.subr.mxu0 0.0
    %4240 = vmatpush1.msra.mxu0 0.0
    %4241 = vmatprep.subr.mxu0 0.0
    %4242 = vmatpush1.msra.mxu0 0.0
    %4243 = vmatprep.subr.mxu0 0.0
    %4244 = vmatpush1.msra.mxu0 0.0
    %4245 = vmatprep.subr.mxu0 0.0
    %4246 = vmatpush1.msra.mxu0 0.0
    %4247 = vmatprep.subr.mxu0 0.0
    %4248 = vmatpush1.msra.mxu0 0.0
    %4249 = vmatprep.subr.mxu0 0.0
    %4250 = vmatpush1.msra.mxu0 0.0
    %4251 = vmatprep.subr.mxu0 0.0
    %4252 = vmatpush1.msra.mxu0 0.0
    %4253 = vmatprep.subr.mxu0 0.0
    %4254 = vmatpush1.msra.mxu0 0.0
    %4255 = vmatprep.subr.mxu0 0.0
    %4256 = vmatpush1.msra.mxu0 0.0
    %4257 = vmatprep.subr.mxu0 0.0
    %4258 = vmatpush1.msra.mxu0 0.0
    %4259 = vmatprep.subr.mxu0 0.0
    %4260 = vmatpush1.msra.mxu0 0.0
    %4261 = vmatprep.subr.mxu0 0.0
    %4262 = vmatpush1.msra.mxu0 0.0
    %4263 = vmatprep.mubr.f32.mxu0 0.0
    %v4264 = vand.u32 %v3691, 4294901760
    %4265 = vmatmul.mubr.f32.gmra.mrb[0].mxu0 %v4264
    %v4266 = vpop.f32.mrb[0].mxu0
    %v4267 = vadd.f32 %v4182, %v4266
    %v4268 = vpop.f32.mrb[0].mxu0
    %4269 = vmatprep.mubr.f32.mxu0 0.0
    %v4270 = vand.u32 %v3694, 4294901760
    %4271 = vmatmul.mubr.f32.gmra.mrb[0].mxu0 %v4270
    %v4272 = vpop.f32.mrb[0].mxu0
    %v4273 = vadd.f32 %v4188, %v4272
    %v4274 = vpop.f32.mrb[0].mxu0
    %4275 = vdwg.mxu0
    %vm4276 = vcmp.ge.f32.partialorder %v4267, 0.0
    %vm4277 = vcmp.ge.f32.partialorder %v4273, 0.0
    %v4278 = vmul.f32 %v4267, 0.02
    %v4279 = vmul.f32 %v4273, 0.02
    %v4280 = vsel %vm4276, %v4267, %v4278
    %v4281 = vsel %vm4277, %v4273, %v4279
    %4282 = vst.msk [vmem:[#allocation2] sm:$0xff] %vm35, %v4280
    %4283 = vst.msk [vmem:[#allocation2 + $0x8] sm:$0xff] %vm35, %v4281
    %4284 = vmatprep.subr.mxu0 0.0
    %v4285 = vand.u32 %v4280, 4294901760
    %4286 = vmatpush1.msra.mxu0 %v4285
    %4287 = vmatprep.subr.mxu0 0.0
    %v4288 = vand.u32 %v4281, 4294901760
    %4289 = vmatpush1.msra.mxu0 %v4288
    %4290 = vmatprep.subr.mxu0 0.0
    %4291 = vmatpush1.msra.mxu0 0.0
    %4292 = vmatprep.subr.mxu0 0.0
    %4293 = vmatpush1.msra.mxu0 0.0
    %4294 = vmatprep.subr.mxu0 0.0
    %4295 = vmatpush1.msra.mxu0 0.0
    %4296 = vmatprep.subr.mxu0 0.0
    %4297 = vmatpush1.msra.mxu0 0.0
    %4298 = vmatprep.subr.mxu0 0.0
    %4299 = vmatpush1.msra.mxu0 0.0
    %4300 = vmatprep.subr.mxu0 0.0
    %4301 = vmatpush1.msra.mxu0 0.0
    %4302 = vmatprep.subr.mxu0 0.0
    %4303 = vmatpush1.msra.mxu0 0.0
    %4304 = vmatprep.subr.mxu0 0.0
    %4305 = vmatpush1.msra.mxu0 0.0
    %4306 = vmatprep.subr.mxu0 0.0
    %4307 = vmatpush1.msra.mxu0 0.0
    %4308 = vmatprep.subr.mxu0 0.0
    %4309 = vmatpush1.msra.mxu0 0.0
    %4310 = vmatprep.subr.mxu0 0.0
    %4311 = vmatpush1.msra.mxu0 0.0
    %4312 = vmatprep.subr.mxu0 0.0
    %4313 = vmatpush1.msra.mxu0 0.0
    %4314 = vmatprep.subr.mxu0 0.0
    %4315 = vmatpush1.msra.mxu0 0.0
    %4316 = vmatprep.subr.mxu0 0.0
    %4317 = vmatpush1.msra.mxu0 0.0
    %4318 = vmatprep.subr.mxu0 0.0
    %4319 = vmatpush1.msra.mxu0 0.0
    %4320 = vmatprep.subr.mxu0 0.0
    %4321 = vmatpush1.msra.mxu0 0.0
    %4322 = vmatprep.subr.mxu0 0.0
    %4323 = vmatpush1.msra.mxu0 0.0
    %4324 = vmatprep.subr.mxu0 0.0
    %4325 = vmatpush1.msra.mxu0 0.0
    %4326 = vmatprep.subr.mxu0 0.0
    %4327 = vmatpush1.msra.mxu0 0.0
    %4328 = vmatprep.subr.mxu0 0.0
    %4329 = vmatpush1.msra.mxu0 0.0
    %4330 = vmatprep.subr.mxu0 0.0
    %4331 = vmatpush1.msra.mxu0 0.0
    %4332 = vmatprep.subr.mxu0 0.0
    %4333 = vmatpush1.msra.mxu0 0.0
    %4334 = vmatprep.subr.mxu0 0.0
    %4335 = vmatpush1.msra.mxu0 0.0
    %4336 = vmatprep.subr.mxu0 0.0
    %4337 = vmatpush1.msra.mxu0 0.0
    %4338 = vmatprep.subr.mxu0 0.0
    %4339 = vmatpush1.msra.mxu0 0.0
    %4340 = vmatprep.subr.mxu0 0.0
    %4341 = vmatpush1.msra.mxu0 0.0
    %4342 = vmatprep.subr.mxu0 0.0
    %4343 = vmatpush1.msra.mxu0 0.0
    %4344 = vmatprep.subr.mxu0 0.0
    %4345 = vmatpush1.msra.mxu0 0.0
    %4346 = vmatprep.subr.mxu0 0.0
    %4347 = vmatpush1.msra.mxu0 0.0
    %4348 = vmatprep.subr.mxu0 0.0
    %4349 = vmatpush1.msra.mxu0 0.0
    %4350 = vmatprep.mubr.f32.mxu0 0.0
    %v4351 = vand.u32 %v37, 4294901760
    %v4352 = vsub.f32 %v37, %v4351
    %v4353 = vand.u32 %v4352, 4294901760
    %v4354 = vsub.f32 %v4352, %v4353
    %v4355 = vand.u32 %v4354, 4294901760
    %4356 = vmatmul.mubr.f32.gmra.mrb[0].mxu0 %v4355
    %v4357 = vpop.f32.mrb[0].mxu0
    %v4358 = vadd.f32 0.0, %v4357
    %v4359 = vpop.f32.mrb[0].mxu0
    %4360 = vmatprep.mubr.f32.mxu0 0.0
    %v4361 = vand.u32 %v40, 4294901760
    %v4362 = vsub.f32 %v40, %v4361
    %v4363 = vand.u32 %v4362, 4294901760
    %v4364 = vsub.f32 %v4362, %v4363
    %v4365 = vand.u32 %v4364, 4294901760
    %4366 = vmatmul.mubr.f32.gmra.mrb[0].mxu0 %v4365
    %v4367 = vpop.f32.mrb[0].mxu0
    %v4368 = vadd.f32 0.0, %v4367
    %v4369 = vpop.f32.mrb[0].mxu0
    %4370 = vdwg.mxu0
    %4371 = vmatprep.subr.mxu0 0.0
    %v4372 = vand.u32 %v4280, 4294901760
    %v4373 = vsub.f32 %v4280, %v4372
    %v4374 = vand.u32 %v4373, 4294901760
    %v4375 = vsub.f32 %v4373, %v4374
    %v4376 = vand.u32 %v4375, 4294901760
    %4377 = vmatpush1.msra.mxu0 %v4376
    %4378 = vmatprep.subr.mxu0 0.0
    %v4379 = vand.u32 %v4281, 4294901760
    %v4380 = vsub.f32 %v4281, %v4379
    %v4381 = vand.u32 %v4380, 4294901760
    %v4382 = vsub.f32 %v4380, %v4381
    %v4383 = vand.u32 %v4382, 4294901760
    %4384 = vmatpush1.msra.mxu0 %v4383
    %4385 = vmatprep.subr.mxu0 0.0
    %4386 = vmatpush1.msra.mxu0 0.0
    %4387 = vmatprep.subr.mxu0 0.0
    %4388 = vmatpush1.msra.mxu0 0.0
    %4389 = vmatprep.subr.mxu0 0.0
    %4390 = vmatpush1.msra.mxu0 0.0
    %4391 = vmatprep.subr.mxu0 0.0
    %4392 = vmatpush1.msra.mxu0 0.0
    %4393 = vmatprep.subr.mxu0 0.0
    %4394 = vmatpush1.msra.mxu0 0.0
    %4395 = vmatprep.subr.mxu0 0.0
    %4396 = vmatpush1.msra.mxu0 0.0
    %4397 = vmatprep.subr.mxu0 0.0
    %4398 = vmatpush1.msra.mxu0 0.0
    %4399 = vmatprep.subr.mxu0 0.0
    %4400 = vmatpush1.msra.mxu0 0.0
    %4401 = vmatprep.subr.mxu0 0.0
    %4402 = vmatpush1.msra.mxu0 0.0
    %4403 = vmatprep.subr.mxu0 0.0
    %4404 = vmatpush1.msra.mxu0 0.0
    %4405 = vmatprep.subr.mxu0 0.0
    %4406 = vmatpush1.msra.mxu0 0.0
    %4407 = vmatprep.subr.mxu0 0.0
    %4408 = vmatpush1.msra.mxu0 0.0
    %4409 = vmatprep.subr.mxu0 0.0
    %4410 = vmatpush1.msra.mxu0 0.0
    %4411 = vmatprep.subr.mxu0 0.0
    %4412 = vmatpush1.msra.mxu0 0.0
    %4413 = vmatprep.subr.mxu0 0.0
    %4414 = vmatpush1.msra.mxu0 0.0
    %4415 = vmatprep.subr.mxu0 0.0
    %4416 = vmatpush1.msra.mxu0 0.0
    %4417 = vmatprep.subr.mxu0 0.0
    %4418 = vmatpush1.msra.mxu0 0.0
    %4419 = vmatprep.subr.mxu0 0.0
    %4420 = vmatpush1.msra.mxu0 0.0
    %4421 = vmatprep.subr.mxu0 0.0
    %4422 = vmatpush1.msra.mxu0 0.0
    %4423 = vmatprep.subr.mxu0 0.0
    %4424 = vmatpush1.msra.mxu0 0.0
    %4425 = vmatprep.subr.mxu0 0.0
    %4426 = vmatpush1.msra.mxu0 0.0
    %4427 = vmatprep.subr.mxu0 0.0
    %4428 = vmatpush1.msra.mxu0 0.0
    %4429 = vmatprep.subr.mxu0 0.0
    %4430 = vmatpush1.msra.mxu0 0.0
    %4431 = vmatprep.subr.mxu0 0.0
    %4432 = vmatpush1.msra.mxu0 0.0
    %4433 = vmatprep.subr.mxu0 0.0
    %4434 = vmatpush1.msra.mxu0 0.0
    %4435 = vmatprep.subr.mxu0 0.0
    %4436 = vmatpush1.msra.mxu0 0.0
    %4437 = vmatprep.subr.mxu0 0.0
    %4438 = vmatpush1.msra.mxu0 0.0
    %4439 = vmatprep.subr.mxu0 0.0
    %4440 = vmatpush1.msra.mxu0 0.0
    %4441 = vmatprep.subr.mxu0 0.0
    %4442 = vmatpush1.msra.mxu0 0.0
    %4443 = vmatprep.subr.mxu0 0.0
    %4444 = vmatpush1.msra.mxu0 0.0
    %4445 = vmatprep.mubr.f32.mxu0 0.0
    %v4446 = vand.u32 %v37, 4294901760
    %4447 = vmatmul.mubr.f32.gmra.mrb[0].mxu0 %v4446
    %v4448 = vpop.f32.mrb[0].mxu0
    %v4449 = vadd.f32 %v4358, %v4448
    %v4450 = vpop.f32.mrb[0].mxu0
    %4451 = vmatprep.mubr.f32.mxu0 0.0
    %v4452 = vand.u32 %v40, 4294901760
    %4453 = vmatmul.mubr.f32.gmra.mrb[0].mxu0 %v4452
    %v4454 = vpop.f32.mrb[0].mxu0
    %v4455 = vadd.f32 %v4368, %v4454
    %v4456 = vpop.f32.mrb[0].mxu0
    %4457 = vdwg.mxu0
    %4458 = vmatprep.subr.mxu0 0.0
    %v4459 = vand.u32 %v4280, 4294901760
    %v4460 = vsub.f32 %v4280, %v4459
    %4461 = vmatpush1.msra.mxu0 %v4460
    %4462 = vmatprep.subr.mxu0 0.0
    %v4463 = vand.u32 %v4281, 4294901760
    %v4464 = vsub.f32 %v4281, %v4463
    %4465 = vmatpush1.msra.mxu0 %v4464
    %4466 = vmatprep.subr.mxu0 0.0
    %4467 = vmatpush1.msra.mxu0 0.0
    %4468 = vmatprep.subr.mxu0 0.0
    %4469 = vmatpush1.msra.mxu0 0.0
    %4470 = vmatprep.subr.mxu0 0.0
    %4471 = vmatpush1.msra.mxu0 0.0
    %4472 = vmatprep.subr.mxu0 0.0
    %4473 = vmatpush1.msra.mxu0 0.0
    %4474 = vmatprep.subr.mxu0 0.0
    %4475 = vmatpush1.msra.mxu0 0.0
    %4476 = vmatprep.subr.mxu0 0.0
    %4477 = vmatpush1.msra.mxu0 0.0
    %4478 = vmatprep.subr.mxu0 0.0
    %4479 = vmatpush1.msra.mxu0 0.0
    %4480 = vmatprep.subr.mxu0 0.0
    %4481 = vmatpush1.msra.mxu0 0.0
    %4482 = vmatprep.subr.mxu0 0.0
    %4483 = vmatpush1.msra.mxu0 0.0
    %4484 = vmatprep.subr.mxu0 0.0
    %4485 = vmatpush1.msra.mxu0 0.0
    %4486 = vmatprep.subr.mxu0 0.0
    %4487 = vmatpush1.msra.mxu0 0.0
    %4488 = vmatprep.subr.mxu0 0.0
    %4489 = vmatpush1.msra.mxu0 0.0
    %4490 = vmatprep.subr.mxu0 0.0
    %4491 = vmatpush1.msra.mxu0 0.0
    %4492 = vmatprep.subr.mxu0 0.0
    %4493 = vmatpush1.msra.mxu0 0.0
    %4494 = vmatprep.subr.mxu0 0.0
    %4495 = vmatpush1.msra.mxu0 0.0
    %4496 = vmatprep.subr.mxu0 0.0
    %4497 = vmatpush1.msra.mxu0 0.0
    %4498 = vmatprep.subr.mxu0 0.0
    %4499 = vmatpush1.msra.mxu0 0.0
    %4500 = vmatprep.subr.mxu0 0.0
    %4501 = vmatpush1.msra.mxu0 0.0
    %4502 = vmatprep.subr.mxu0 0.0
    %4503 = vmatpush1.msra.mxu0 0.0
    %4504 = vmatprep.subr.mxu0 0.0
    %4505 = vmatpush1.msra.mxu0 0.0
    %4506 = vmatprep.subr.mxu0 0.0
    %4507 = vmatpush1.msra.mxu0 0.0
    %4508 = vmatprep.subr.mxu0 0.0
    %4509 = vmatpush1.msra.mxu0 0.0
    %4510 = vmatprep.subr.mxu0 0.0
    %4511 = vmatpush1.msra.mxu0 0.0
    %4512 = vmatprep.subr.mxu0 0.0
    %4513 = vmatpush1.msra.mxu0 0.0
    %4514 = vmatprep.subr.mxu0 0.0
    %4515 = vmatpush1.msra.mxu0 0.0
    %4516 = vmatprep.subr.mxu0 0.0
    %4517 = vmatpush1.msra.mxu0 0.0
    %4518 = vmatprep.subr.mxu0 0.0
    %4519 = vmatpush1.msra.mxu0 0.0
    %4520 = vmatprep.subr.mxu0 0.0
    %4521 = vmatpush1.msra.mxu0 0.0
    %4522 = vmatprep.subr.mxu0 0.0
    %4523 = vmatpush1.msra.mxu0 0.0
    %4524 = vmatprep.subr.mxu0 0.0
    %4525 = vmatpush1.msra.mxu0 0.0
    %4526 = vmatprep.mubr.f32.mxu0 0.0
    %v4527 = vand.u32 %v37, 4294901760
    %v4528 = vsub.f32 %v37, %v4527
    %4529 = vmatmul.mubr.f32.gmra.mrb[0].mxu0 %v4528
    %v4530 = vpop.f32.mrb[0].mxu0
    %v4531 = vadd.f32 %v4449, %v4530
    %v4532 = vpop.f32.mrb[0].mxu0
    %4533 = vmatprep.mubr.f32.mxu0 0.0
    %v4534 = vand.u32 %v40, 4294901760
    %v4535 = vsub.f32 %v40, %v4534
    %4536 = vmatmul.mubr.f32.gmra.mrb[0].mxu0 %v4535
    %v4537 = vpop.f32.mrb[0].mxu0
    %v4538 = vadd.f32 %v4455, %v4537
    %v4539 = vpop.f32.mrb[0].mxu0
    %4540 = vdwg.mxu0
    %4541 = vmatprep.subr.mxu0 0.0
    %v4542 = vand.u32 %v4280, 4294901760
    %4543 = vmatpush1.msra.mxu0 %v4542
    %4544 = vmatprep.subr.mxu0 0.0
    %v4545 = vand.u32 %v4281, 4294901760
    %4546 = vmatpush1.msra.mxu0 %v4545
    %4547 = vmatprep.subr.mxu0 0.0
    %4548 = vmatpush1.msra.mxu0 0.0
    %4549 = vmatprep.subr.mxu0 0.0
    %4550 = vmatpush1.msra.mxu0 0.0
    %4551 = vmatprep.subr.mxu0 0.0
    %4552 = vmatpush1.msra.mxu0 0.0
    %4553 = vmatprep.subr.mxu0 0.0
    %4554 = vmatpush1.msra.mxu0 0.0
    %4555 = vmatprep.subr.mxu0 0.0
    %4556 = vmatpush1.msra.mxu0 0.0
    %4557 = vmatprep.subr.mxu0 0.0
    %4558 = vmatpush1.msra.mxu0 0.0
    %4559 = vmatprep.subr.mxu0 0.0
    %4560 = vmatpush1.msra.mxu0 0.0
    %4561 = vmatprep.subr.mxu0 0.0
    %4562 = vmatpush1.msra.mxu0 0.0
    %4563 = vmatprep.subr.mxu0 0.0
    %4564 = vmatpush1.msra.mxu0 0.0
    %4565 = vmatprep.subr.mxu0 0.0
    %4566 = vmatpush1.msra.mxu0 0.0
    %4567 = vmatprep.subr.mxu0 0.0
    %4568 = vmatpush1.msra.mxu0 0.0
    %4569 = vmatprep.subr.mxu0 0.0
    %4570 = vmatpush1.msra.mxu0 0.0
    %4571 = vmatprep.subr.mxu0 0.0
    %4572 = vmatpush1.msra.mxu0 0.0
    %4573 = vmatprep.subr.mxu0 0.0
    %4574 = vmatpush1.msra.mxu0 0.0
    %4575 = vmatprep.subr.mxu0 0.0
    %4576 = vmatpush1.msra.mxu0 0.0
    %4577 = vmatprep.subr.mxu0 0.0
    %4578 = vmatpush1.msra.mxu0 0.0
    %4579 = vmatprep.subr.mxu0 0.0
    %4580 = vmatpush1.msra.mxu0 0.0
    %4581 = vmatprep.subr.mxu0 0.0
    %4582 = vmatpush1.msra.mxu0 0.0
    %4583 = vmatprep.subr.mxu0 0.0
    %4584 = vmatpush1.msra.mxu0 0.0
    %4585 = vmatprep.subr.mxu0 0.0
    %4586 = vmatpush1.msra.mxu0 0.0
    %4587 = vmatprep.subr.mxu0 0.0
    %4588 = vmatpush1.msra.mxu0 0.0
    %4589 = vmatprep.subr.mxu0 0.0
    %4590 = vmatpush1.msra.mxu0 0.0
    %4591 = vmatprep.subr.mxu0 0.0
    %4592 = vmatpush1.msra.mxu0 0.0
    %4593 = vmatprep.subr.mxu0 0.0
    %4594 = vmatpush1.msra.mxu0 0.0
    %4595 = vmatprep.subr.mxu0 0.0
    %4596 = vmatpush1.msra.mxu0 0.0
    %4597 = vmatprep.subr.mxu0 0.0
    %4598 = vmatpush1.msra.mxu0 0.0
    %4599 = vmatprep.subr.mxu0 0.0
    %4600 = vmatpush1.msra.mxu0 0.0
    %4601 = vmatprep.subr.mxu0 0.0
    %4602 = vmatpush1.msra.mxu0 0.0
    %4603 = vmatprep.subr.mxu0 0.0
    %4604 = vmatpush1.msra.mxu0 0.0
    %4605 = vmatprep.subr.mxu0 0.0
    %4606 = vmatpush1.msra.mxu0 0.0
    %4607 = vmatprep.mubr.f32.mxu0 0.0
    %v4608 = vand.u32 %v37, 4294901760
    %v4609 = vsub.f32 %v37, %v4608
    %v4610 = vand.u32 %v4609, 4294901760
    %4611 = vmatmul.mubr.f32.gmra.mrb[0].mxu0 %v4610
    %v4612 = vpop.f32.mrb[0].mxu0
    %v4613 = vadd.f32 %v4531, %v4612
    %v4614 = vpop.f32.mrb[0].mxu0
    %4615 = vmatprep.mubr.f32.mxu0 0.0
    %v4616 = vand.u32 %v40, 4294901760
    %v4617 = vsub.f32 %v40, %v4616
    %v4618 = vand.u32 %v4617, 4294901760
    %4619 = vmatmul.mubr.f32.gmra.mrb[0].mxu0 %v4618
    %v4620 = vpop.f32.mrb[0].mxu0
    %v4621 = vadd.f32 %v4538, %v4620
    %v4622 = vpop.f32.mrb[0].mxu0
    %4623 = vdwg.mxu0
    %4624 = vmatprep.subr.mxu0 0.0
    %v4625 = vand.u32 %v4280, 4294901760
    %v4626 = vsub.f32 %v4280, %v4625
    %v4627 = vand.u32 %v4626, 4294901760
    %4628 = vmatpush1.msra.mxu0 %v4627
    %4629 = vmatprep.subr.mxu0 0.0
    %v4630 = vand.u32 %v4281, 4294901760
    %v4631 = vsub.f32 %v4281, %v4630
    %v4632 = vand.u32 %v4631, 4294901760
    %4633 = vmatpush1.msra.mxu0 %v4632
    %4634 = vmatprep.subr.mxu0 0.0
    %4635 = vmatpush1.msra.mxu0 0.0
    %4636 = vmatprep.subr.mxu0 0.0
    %4637 = vmatpush1.msra.mxu0 0.0
    %4638 = vmatprep.subr.mxu0 0.0
    %4639 = vmatpush1.msra.mxu0 0.0
    %4640 = vmatprep.subr.mxu0 0.0
    %4641 = vmatpush1.msra.mxu0 0.0
    %4642 = vmatprep.subr.mxu0 0.0
    %4643 = vmatpush1.msra.mxu0 0.0
    %4644 = vmatprep.subr.mxu0 0.0
    %4645 = vmatpush1.msra.mxu0 0.0
    %4646 = vmatprep.subr.mxu0 0.0
    %4647 = vmatpush1.msra.mxu0 0.0
    %4648 = vmatprep.subr.mxu0 0.0
    %4649 = vmatpush1.msra.mxu0 0.0
    %4650 = vmatprep.subr.mxu0 0.0
    %4651 = vmatpush1.msra.mxu0 0.0
    %4652 = vmatprep.subr.mxu0 0.0
    %4653 = vmatpush1.msra.mxu0 0.0
    %4654 = vmatprep.subr.mxu0 0.0
    %4655 = vmatpush1.msra.mxu0 0.0
    %4656 = vmatprep.subr.mxu0 0.0
    %4657 = vmatpush1.msra.mxu0 0.0
    %4658 = vmatprep.subr.mxu0 0.0
    %4659 = vmatpush1.msra.mxu0 0.0
    %4660 = vmatprep.subr.mxu0 0.0
    %4661 = vmatpush1.msra.mxu0 0.0
    %4662 = vmatprep.subr.mxu0 0.0
    %4663 = vmatpush1.msra.mxu0 0.0
    %4664 = vmatprep.subr.mxu0 0.0
    %4665 = vmatpush1.msra.mxu0 0.0
    %4666 = vmatprep.subr.mxu0 0.0
    %4667 = vmatpush1.msra.mxu0 0.0
    %4668 = vmatprep.subr.mxu0 0.0
    %4669 = vmatpush1.msra.mxu0 0.0
    %4670 = vmatprep.subr.mxu0 0.0
    %4671 = vmatpush1.msra.mxu0 0.0
    %4672 = vmatprep.subr.mxu0 0.0
    %4673 = vmatpush1.msra.mxu0 0.0
    %4674 = vmatprep.subr.mxu0 0.0
    %4675 = vmatpush1.msra.mxu0 0.0
    %4676 = vmatprep.subr.mxu0 0.0
    %4677 = vmatpush1.msra.mxu0 0.0
    %4678 = vmatprep.subr.mxu0 0.0
    %4679 = vmatpush1.msra.mxu0 0.0
    %4680 = vmatprep.subr.mxu0 0.0
    %4681 = vmatpush1.msra.mxu0 0.0
    %4682 = vmatprep.subr.mxu0 0.0
    %4683 = vmatpush1.msra.mxu0 0.0
    %4684 = vmatprep.subr.mxu0 0.0
    %4685 = vmatpush1.msra.mxu0 0.0
    %4686 = vmatprep.subr.mxu0 0.0
    %4687 = vmatpush1.msra.mxu0 0.0
    %4688 = vmatprep.subr.mxu0 0.0
    %4689 = vmatpush1.msra.mxu0 0.0
    %4690 = vmatprep.subr.mxu0 0.0
    %4691 = vmatpush1.msra.mxu0 0.0
    %4692 = vmatprep.subr.mxu0 0.0
    %4693 = vmatpush1.msra.mxu0 0.0
    %4694 = vmatprep.mubr.f32.mxu0 0.0
    %v4695 = vand.u32 %v37, 4294901760
    %4696 = vmatmul.mubr.f32.gmra.mrb[0].mxu0 %v4695
    %v4697 = vpop.f32.mrb[0].mxu0
    %v4698 = vadd.f32 %v4613, %v4697
    %v4699 = vpop.f32.mrb[0].mxu0
    %4700 = vmatprep.mubr.f32.mxu0 0.0
    %v4701 = vand.u32 %v40, 4294901760
    %4702 = vmatmul.mubr.f32.gmra.mrb[0].mxu0 %v4701
    %v4703 = vpop.f32.mrb[0].mxu0
    %v4704 = vadd.f32 %v4621, %v4703
    %v4705 = vpop.f32.mrb[0].mxu0
    %4706 = vdwg.mxu0
    %4707 = vmatprep.subr.mxu0 0.0
    %v4708 = vand.u32 %v4280, 4294901760
    %4709 = vmatpush1.msra.mxu0 %v4708
    %4710 = vmatprep.subr.mxu0 0.0
    %v4711 = vand.u32 %v4281, 4294901760
    %4712 = vmatpush1.msra.mxu0 %v4711
    %4713 = vmatprep.subr.mxu0 0.0
    %4714 = vmatpush1.msra.mxu0 0.0
    %4715 = vmatprep.subr.mxu0 0.0
    %4716 = vmatpush1.msra.mxu0 0.0
    %4717 = vmatprep.subr.mxu0 0.0
    %4718 = vmatpush1.msra.mxu0 0.0
    %4719 = vmatprep.subr.mxu0 0.0
    %4720 = vmatpush1.msra.mxu0 0.0
    %4721 = vmatprep.subr.mxu0 0.0
    %4722 = vmatpush1.msra.mxu0 0.0
    %4723 = vmatprep.subr.mxu0 0.0
    %4724 = vmatpush1.msra.mxu0 0.0
    %4725 = vmatprep.subr.mxu0 0.0
    %4726 = vmatpush1.msra.mxu0 0.0
    %4727 = vmatprep.subr.mxu0 0.0
    %4728 = vmatpush1.msra.mxu0 0.0
    %4729 = vmatprep.subr.mxu0 0.0
    %4730 = vmatpush1.msra.mxu0 0.0
    %4731 = vmatprep.subr.mxu0 0.0
    %4732 = vmatpush1.msra.mxu0 0.0
    %4733 = vmatprep.subr.mxu0 0.0
    %4734 = vmatpush1.msra.mxu0 0.0
    %4735 = vmatprep.subr.mxu0 0.0
    %4736 = vmatpush1.msra.mxu0 0.0
    %4737 = vmatprep.subr.mxu0 0.0
    %4738 = vmatpush1.msra.mxu0 0.0
    %4739 = vmatprep.subr.mxu0 0.0
    %4740 = vmatpush1.msra.mxu0 0.0
    %4741 = vmatprep.subr.mxu0 0.0
    %4742 = vmatpush1.msra.mxu0 0.0
    %4743 = vmatprep.subr.mxu0 0.0
    %4744 = vmatpush1.msra.mxu0 0.0
    %4745 = vmatprep.subr.mxu0 0.0
    %4746 = vmatpush1.msra.mxu0 0.0
    %4747 = vmatprep.subr.mxu0 0.0
    %4748 = vmatpush1.msra.mxu0 0.0
    %4749 = vmatprep.subr.mxu0 0.0
    %4750 = vmatpush1.msra.mxu0 0.0
    %4751 = vmatprep.subr.mxu0 0.0
    %4752 = vmatpush1.msra.mxu0 0.0
    %4753 = vmatprep.subr.mxu0 0.0
    %4754 = vmatpush1.msra.mxu0 0.0
    %4755 = vmatprep.subr.mxu0 0.0
    %4756 = vmatpush1.msra.mxu0 0.0
    %4757 = vmatprep.subr.mxu0 0.0
    %4758 = vmatpush1.msra.mxu0 0.0
    %4759 = vmatprep.subr.mxu0 0.0
    %4760 = vmatpush1.msra.mxu0 0.0
    %4761 = vmatprep.subr.mxu0 0.0
    %4762 = vmatpush1.msra.mxu0 0.0
    %4763 = vmatprep.subr.mxu0 0.0
    %4764 = vmatpush1.msra.mxu0 0.0
    %4765 = vmatprep.subr.mxu0 0.0
    %4766 = vmatpush1.msra.mxu0 0.0
    %4767 = vmatprep.subr.mxu0 0.0
    %4768 = vmatpush1.msra.mxu0 0.0
    %4769 = vmatprep.subr.mxu0 0.0
    %4770 = vmatpush1.msra.mxu0 0.0
    %4771 = vmatprep.subr.mxu0 0.0
    %4772 = vmatpush1.msra.mxu0 0.0
    %4773 = vmatprep.mubr.f32.mxu0 0.0
    %v4774 = vand.u32 %v37, 4294901760
    %4775 = vmatmul.mubr.f32.gmra.mrb[0].mxu0 %v4774
    %v4776 = vpop.f32.mrb[0].mxu0
    %v4777 = vadd.f32 %v4698, %v4776
    %v4778 = vpop.f32.mrb[0].mxu0
    %4779 = vmatprep.mubr.f32.mxu0 0.0
    %v4780 = vand.u32 %v40, 4294901760
    %4781 = vmatmul.mubr.f32.gmra.mrb[0].mxu0 %v4780
    %v4782 = vpop.f32.mrb[0].mxu0
    %v4783 = vadd.f32 %v4704, %v4782
    %v4784 = vpop.f32.mrb[0].mxu0
    %4785 = vdwg.mxu0
    %4788 = vrot.lane.b32.xlu0 %v4777, 16
    %v4789 = vpop.permute.xlu0 %4788
    %4790 = vrot.lane.b32.xlu0 %v4783, 16
    %v4791 = vpop.permute.xlu0 %4790
    %4794 = vst.msk [vmem:[#allocation2] sm:$0xff] %vm2645, %v4789
    %4795 = vst.msk [vmem:[#allocation2 + $0x8] sm:$0xff] %vm2645, %v4791
    %4796 = vmatprep.subr.mxu0 0.0
    %v4797 = vand.u32 %v4777, 4294901760
    %4798 = vmatpush1.msra.mxu0 %v4797
    %4799 = vmatprep.subr.mxu0 0.0
    %v4800 = vand.u32 %v4783, 4294901760
    %4801 = vmatpush1.msra.mxu0 %v4800
    %4802 = vmatprep.subr.mxu0 0.0
    %4803 = vmatpush1.msra.mxu0 0.0
    %4804 = vmatprep.subr.mxu0 0.0
    %4805 = vmatpush1.msra.mxu0 0.0
    %4806 = vmatprep.subr.mxu0 0.0
    %4807 = vmatpush1.msra.mxu0 0.0
    %4808 = vmatprep.subr.mxu0 0.0
    %4809 = vmatpush1.msra.mxu0 0.0
    %4810 = vmatprep.subr.mxu0 0.0
    %4811 = vmatpush1.msra.mxu0 0.0
    %4812 = vmatprep.subr.mxu0 0.0
    %4813 = vmatpush1.msra.mxu0 0.0
    %4814 = vmatprep.subr.mxu0 0.0
    %4815 = vmatpush1.msra.mxu0 0.0
    %4816 = vmatprep.subr.mxu0 0.0
    %4817 = vmatpush1.msra.mxu0 0.0
    %4818 = vmatprep.subr.mxu0 0.0
    %4819 = vmatpush1.msra.mxu0 0.0
    %4820 = vmatprep.subr.mxu0 0.0
    %4821 = vmatpush1.msra.mxu0 0.0
    %4822 = vmatprep.subr.mxu0 0.0
    %4823 = vmatpush1.msra.mxu0 0.0
    %4824 = vmatprep.subr.mxu0 0.0
    %4825 = vmatpush1.msra.mxu0 0.0
    %4826 = vmatprep.subr.mxu0 0.0
    %4827 = vmatpush1.msra.mxu0 0.0
    %4828 = vmatprep.subr.mxu0 0.0
    %4829 = vmatpush1.msra.mxu0 0.0
    %4830 = vmatprep.subr.mxu0 0.0
    %4831 = vmatpush1.msra.mxu0 0.0
    %4832 = vmatprep.subr.mxu0 0.0
    %4833 = vmatpush1.msra.mxu0 0.0
    %4834 = vmatprep.subr.mxu0 0.0
    %4835 = vmatpush1.msra.mxu0 0.0
    %4836 = vmatprep.subr.mxu0 0.0
    %4837 = vmatpush1.msra.mxu0 0.0
    %4838 = vmatprep.subr.mxu0 0.0
    %4839 = vmatpush1.msra.mxu0 0.0
    %4840 = vmatprep.subr.mxu0 0.0
    %4841 = vmatpush1.msra.mxu0 0.0
    %4842 = vmatprep.subr.mxu0 0.0
    %4843 = vmatpush1.msra.mxu0 0.0
    %4844 = vmatprep.subr.mxu0 0.0
    %4845 = vmatpush1.msra.mxu0 0.0
    %4846 = vmatprep.subr.mxu0 0.0
    %4847 = vmatpush1.msra.mxu0 0.0
    %4848 = vmatprep.subr.mxu0 0.0
    %4849 = vmatpush1.msra.mxu0 0.0
    %4850 = vmatprep.subr.mxu0 0.0
    %4851 = vmatpush1.msra.mxu0 0.0
    %4852 = vmatprep.subr.mxu0 0.0
    %4853 = vmatpush1.msra.mxu0 0.0
    %4854 = vmatprep.subr.mxu0 0.0
    %4855 = vmatpush1.msra.mxu0 0.0
    %4856 = vmatprep.subr.mxu0 0.0
    %4857 = vmatpush1.msra.mxu0 0.0
    %4858 = vmatprep.subr.mxu0 0.0
    %4859 = vmatpush1.msra.mxu0 0.0
    %4860 = vmatprep.subr.mxu0 0.0
    %4861 = vmatpush1.msra.mxu0 0.0
    %4862 = vmatprep.mubr.f32.mxu0 0.0
    %v4863 = vand.u32 %v37, 4294901760
    %v4864 = vsub.f32 %v37, %v4863
    %v4865 = vand.u32 %v4864, 4294901760
    %v4866 = vsub.f32 %v4864, %v4865
    %v4867 = vand.u32 %v4866, 4294901760
    %4868 = vmatmul.mubr.f32.gmra.mrb[0].mxu0 %v4867
    %v4869 = vpop.f32.mrb[0].mxu0
    %v4870 = vadd.f32 0.0, %v4869
    %v4871 = vpop.f32.mrb[0].mxu0
    %4872 = vmatprep.mubr.f32.mxu0 0.0
    %v4873 = vand.u32 %v40, 4294901760
    %v4874 = vsub.f32 %v40, %v4873
    %v4875 = vand.u32 %v4874, 4294901760
    %v4876 = vsub.f32 %v4874, %v4875
    %v4877 = vand.u32 %v4876, 4294901760
    %4878 = vmatmul.mubr.f32.gmra.mrb[0].mxu0 %v4877
    %v4879 = vpop.f32.mrb[0].mxu0
    %v4880 = vadd.f32 0.0, %v4879
    %v4881 = vpop.f32.mrb[0].mxu0
    %4882 = vdwg.mxu0
    %4883 = vmatprep.subr.mxu0 0.0
    %v4884 = vand.u32 %v4777, 4294901760
    %v4885 = vsub.f32 %v4777, %v4884
    %v4886 = vand.u32 %v4885, 4294901760
    %v4887 = vsub.f32 %v4885, %v4886
    %v4888 = vand.u32 %v4887, 4294901760
    %4889 = vmatpush1.msra.mxu0 %v4888
    %4890 = vmatprep.subr.mxu0 0.0
    %v4891 = vand.u32 %v4783, 4294901760
    %v4892 = vsub.f32 %v4783, %v4891
    %v4893 = vand.u32 %v4892, 4294901760
    %v4894 = vsub.f32 %v4892, %v4893
    %v4895 = vand.u32 %v4894, 4294901760
    %4896 = vmatpush1.msra.mxu0 %v4895
    %4897 = vmatprep.subr.mxu0 0.0
    %4898 = vmatpush1.msra.mxu0 0.0
    %4899 = vmatprep.subr.mxu0 0.0
    %4900 = vmatpush1.msra.mxu0 0.0
    %4901 = vmatprep.subr.mxu0 0.0
    %4902 = vmatpush1.msra.mxu0 0.0
    %4903 = vmatprep.subr.mxu0 0.0
    %4904 = vmatpush1.msra.mxu0 0.0
    %4905 = vmatprep.subr.mxu0 0.0
    %4906 = vmatpush1.msra.mxu0 0.0
    %4907 = vmatprep.subr.mxu0 0.0
    %4908 = vmatpush1.msra.mxu0 0.0
    %4909 = vmatprep.subr.mxu0 0.0
    %4910 = vmatpush1.msra.mxu0 0.0
    %4911 = vmatprep.subr.mxu0 0.0
    %4912 = vmatpush1.msra.mxu0 0.0
    %4913 = vmatprep.subr.mxu0 0.0
    %4914 = vmatpush1.msra.mxu0 0.0
    %4915 = vmatprep.subr.mxu0 0.0
    %4916 = vmatpush1.msra.mxu0 0.0
    %4917 = vmatprep.subr.mxu0 0.0
    %4918 = vmatpush1.msra.mxu0 0.0
    %4919 = vmatprep.subr.mxu0 0.0
    %4920 = vmatpush1.msra.mxu0 0.0
    %4921 = vmatprep.subr.mxu0 0.0
    %4922 = vmatpush1.msra.mxu0 0.0
    %4923 = vmatprep.subr.mxu0 0.0
    %4924 = vmatpush1.msra.mxu0 0.0
    %4925 = vmatprep.subr.mxu0 0.0
    %4926 = vmatpush1.msra.mxu0 0.0
    %4927 = vmatprep.subr.mxu0 0.0
    %4928 = vmatpush1.msra.mxu0 0.0
    %4929 = vmatprep.subr.mxu0 0.0
    %4930 = vmatpush1.msra.mxu0 0.0
    %4931 = vmatprep.subr.mxu0 0.0
    %4932 = vmatpush1.msra.mxu0 0.0
    %4933 = vmatprep.subr.mxu0 0.0
    %4934 = vmatpush1.msra.mxu0 0.0
    %4935 = vmatprep.subr.mxu0 0.0
    %4936 = vmatpush1.msra.mxu0 0.0
    %4937 = vmatprep.subr.mxu0 0.0
    %4938 = vmatpush1.msra.mxu0 0.0
    %4939 = vmatprep.subr.mxu0 0.0
    %4940 = vmatpush1.msra.mxu0 0.0
    %4941 = vmatprep.subr.mxu0 0.0
    %4942 = vmatpush1.msra.mxu0 0.0
    %4943 = vmatprep.subr.mxu0 0.0
    %4944 = vmatpush1.msra.mxu0 0.0
    %4945 = vmatprep.subr.mxu0 0.0
    %4946 = vmatpush1.msra.mxu0 0.0
    %4947 = vmatprep.subr.mxu0 0.0
    %4948 = vmatpush1.msra.mxu0 0.0
    %4949 = vmatprep.subr.mxu0 0.0
    %4950 = vmatpush1.msra.mxu0 0.0
    %4951 = vmatprep.subr.mxu0 0.0
    %4952 = vmatpush1.msra.mxu0 0.0
    %4953 = vmatprep.subr.mxu0 0.0
    %4954 = vmatpush1.msra.mxu0 0.0
    %4955 = vmatprep.subr.mxu0 0.0
    %4956 = vmatpush1.msra.mxu0 0.0
    %4957 = vmatprep.mubr.f32.mxu0 0.0
    %v4958 = vand.u32 %v37, 4294901760
    %4959 = vmatmul.mubr.f32.gmra.mrb[0].mxu0 %v4958
    %v4960 = vpop.f32.mrb[0].mxu0
    %v4961 = vadd.f32 %v4870, %v4960
    %v4962 = vpop.f32.mrb[0].mxu0
    %4963 = vmatprep.mubr.f32.mxu0 0.0
    %v4964 = vand.u32 %v40, 4294901760
    %4965 = vmatmul.mubr.f32.gmra.mrb[0].mxu0 %v4964
    %v4966 = vpop.f32.mrb[0].mxu0
    %v4967 = vadd.f32 %v4880, %v4966
    %v4968 = vpop.f32.mrb[0].mxu0
    %4969 = vdwg.mxu0
    %4970 = vmatprep.subr.mxu0 0.0
    %v4971 = vand.u32 %v4777, 4294901760
    %v4972 = vsub.f32 %v4777, %v4971
    %4973 = vmatpush1.msra.mxu0 %v4972
    %4974 = vmatprep.subr.mxu0 0.0
    %v4975 = vand.u32 %v4783, 4294901760
    %v4976 = vsub.f32 %v4783, %v4975
    %4977 = vmatpush1.msra.mxu0 %v4976
    %4978 = vmatprep.subr.mxu0 0.0
    %4979 = vmatpush1.msra.mxu0 0.0
    %4980 = vmatprep.subr.mxu0 0.0
    %4981 = vmatpush1.msra.mxu0 0.0
    %4982 = vmatprep.subr.mxu0 0.0
    %4983 = vmatpush1.msra.mxu0 0.0
    %4984 = vmatprep.subr.mxu0 0.0
    %4985 = vmatpush1.msra.mxu0 0.0
    %4986 = vmatprep.subr.mxu0 0.0
    %4987 = vmatpush1.msra.mxu0 0.0
    %4988 = vmatprep.subr.mxu0 0.0
    %4989 = vmatpush1.msra.mxu0 0.0
    %4990 = vmatprep.subr.mxu0 0.0
    %4991 = vmatpush1.msra.mxu0 0.0
    %4992 = vmatprep.subr.mxu0 0.0
    %4993 = vmatpush1.msra.mxu0 0.0
    %4994 = vmatprep.subr.mxu0 0.0
    %4995 = vmatpush1.msra.mxu0 0.0
    %4996 = vmatprep.subr.mxu0 0.0
    %4997 = vmatpush1.msra.mxu0 0.0
    %4998 = vmatprep.subr.mxu0 0.0
    %4999 = vmatpush1.msra.mxu0 0.0
    %5000 = vmatprep.subr.mxu0 0.0
    %5001 = vmatpush1.msra.mxu0 0.0
    %5002 = vmatprep.subr.mxu0 0.0
    %5003 = vmatpush1.msra.mxu0 0.0
    %5004 = vmatprep.subr.mxu0 0.0
    %5005 = vmatpush1.msra.mxu0 0.0
    %5006 = vmatprep.subr.mxu0 0.0
    %5007 = vmatpush1.msra.mxu0 0.0
    %5008 = vmatprep.subr.mxu0 0.0
    %5009 = vmatpush1.msra.mxu0 0.0
    %5010 = vmatprep.subr.mxu0 0.0
    %5011 = vmatpush1.msra.mxu0 0.0
    %5012 = vmatprep.subr.mxu0 0.0
    %5013 = vmatpush1.msra.mxu0 0.0
    %5014 = vmatprep.subr.mxu0 0.0
    %5015 = vmatpush1.msra.mxu0 0.0
    %5016 = vmatprep.subr.mxu0 0.0
    %5017 = vmatpush1.msra.mxu0 0.0
    %5018 = vmatprep.subr.mxu0 0.0
    %5019 = vmatpush1.msra.mxu0 0.0
    %5020 = vmatprep.subr.mxu0 0.0
    %5021 = vmatpush1.msra.mxu0 0.0
    %5022 = vmatprep.subr.mxu0 0.0
    %5023 = vmatpush1.msra.mxu0 0.0
    %5024 = vmatprep.subr.mxu0 0.0
    %5025 = vmatpush1.msra.mxu0 0.0
    %5026 = vmatprep.subr.mxu0 0.0
    %5027 = vmatpush1.msra.mxu0 0.0
    %5028 = vmatprep.subr.mxu0 0.0
    %5029 = vmatpush1.msra.mxu0 0.0
    %5030 = vmatprep.subr.mxu0 0.0
    %5031 = vmatpush1.msra.mxu0 0.0
    %5032 = vmatprep.subr.mxu0 0.0
    %5033 = vmatpush1.msra.mxu0 0.0
    %5034 = vmatprep.subr.mxu0 0.0
    %5035 = vmatpush1.msra.mxu0 0.0
    %5036 = vmatprep.subr.mxu0 0.0
    %5037 = vmatpush1.msra.mxu0 0.0
    %5038 = vmatprep.mubr.f32.mxu0 0.0
    %v5039 = vand.u32 %v37, 4294901760
    %v5040 = vsub.f32 %v37, %v5039
    %5041 = vmatmul.mubr.f32.gmra.mrb[0].mxu0 %v5040
    %v5042 = vpop.f32.mrb[0].mxu0
    %v5043 = vadd.f32 %v4961, %v5042
    %v5044 = vpop.f32.mrb[0].mxu0
    %5045 = vmatprep.mubr.f32.mxu0 0.0
    %v5046 = vand.u32 %v40, 4294901760
    %v5047 = vsub.f32 %v40, %v5046
    %5048 = vmatmul.mubr.f32.gmra.mrb[0].mxu0 %v5047
    %v5049 = vpop.f32.mrb[0].mxu0
    %v5050 = vadd.f32 %v4967, %v5049
    %v5051 = vpop.f32.mrb[0].mxu0
    %5052 = vdwg.mxu0
    %5053 = vmatprep.subr.mxu0 0.0
    %v5054 = vand.u32 %v4777, 4294901760
    %5055 = vmatpush1.msra.mxu0 %v5054
    %5056 = vmatprep.subr.mxu0 0.0
    %v5057 = vand.u32 %v4783, 4294901760
    %5058 = vmatpush1.msra.mxu0 %v5057
    %5059 = vmatprep.subr.mxu0 0.0
    %5060 = vmatpush1.msra.mxu0 0.0
    %5061 = vmatprep.subr.mxu0 0.0
    %5062 = vmatpush1.msra.mxu0 0.0
    %5063 = vmatprep.subr.mxu0 0.0
    %5064 = vmatpush1.msra.mxu0 0.0
    %5065 = vmatprep.subr.mxu0 0.0
    %5066 = vmatpush1.msra.mxu0 0.0
    %5067 = vmatprep.subr.mxu0 0.0
    %5068 = vmatpush1.msra.mxu0 0.0
    %5069 = vmatprep.subr.mxu0 0.0
    %5070 = vmatpush1.msra.mxu0 0.0
    %5071 = vmatprep.subr.mxu0 0.0
    %5072 = vmatpush1.msra.mxu0 0.0
    %5073 = vmatprep.subr.mxu0 0.0
    %5074 = vmatpush1.msra.mxu0 0.0
    %5075 = vmatprep.subr.mxu0 0.0
    %5076 = vmatpush1.msra.mxu0 0.0
    %5077 = vmatprep.subr.mxu0 0.0
    %5078 = vmatpush1.msra.mxu0 0.0
    %5079 = vmatprep.subr.mxu0 0.0
    %5080 = vmatpush1.msra.mxu0 0.0
    %5081 = vmatprep.subr.mxu0 0.0
    %5082 = vmatpush1.msra.mxu0 0.0
    %5083 = vmatprep.subr.mxu0 0.0
    %5084 = vmatpush1.msra.mxu0 0.0
    %5085 = vmatprep.subr.mxu0 0.0
    %5086 = vmatpush1.msra.mxu0 0.0
    %5087 = vmatprep.subr.mxu0 0.0
    %5088 = vmatpush1.msra.mxu0 0.0
    %5089 = vmatprep.subr.mxu0 0.0
    %5090 = vmatpush1.msra.mxu0 0.0
    %5091 = vmatprep.subr.mxu0 0.0
    %5092 = vmatpush1.msra.mxu0 0.0
    %5093 = vmatprep.subr.mxu0 0.0
    %5094 = vmatpush1.msra.mxu0 0.0
    %5095 = vmatprep.subr.mxu0 0.0
    %5096 = vmatpush1.msra.mxu0 0.0
    %5097 = vmatprep.subr.mxu0 0.0
    %5098 = vmatpush1.msra.mxu0 0.0
    %5099 = vmatprep.subr.mxu0 0.0
    %5100 = vmatpush1.msra.mxu0 0.0
    %5101 = vmatprep.subr.mxu0 0.0
    %5102 = vmatpush1.msra.mxu0 0.0
    %5103 = vmatprep.subr.mxu0 0.0
    %5104 = vmatpush1.msra.mxu0 0.0
    %5105 = vmatprep.subr.mxu0 0.0
    %5106 = vmatpush1.msra.mxu0 0.0
    %5107 = vmatprep.subr.mxu0 0.0
    %5108 = vmatpush1.msra.mxu0 0.0
    %5109 = vmatprep.subr.mxu0 0.0
    %5110 = vmatpush1.msra.mxu0 0.0
    %5111 = vmatprep.subr.mxu0 0.0
    %5112 = vmatpush1.msra.mxu0 0.0
    %5113 = vmatprep.subr.mxu0 0.0
    %5114 = vmatpush1.msra.mxu0 0.0
    %5115 = vmatprep.subr.mxu0 0.0
    %5116 = vmatpush1.msra.mxu0 0.0
    %5117 = vmatprep.subr.mxu0 0.0
    %5118 = vmatpush1.msra.mxu0 0.0
    %5119 = vmatprep.mubr.f32.mxu0 0.0
    %v5120 = vand.u32 %v37, 4294901760
    %v5121 = vsub.f32 %v37, %v5120
    %v5122 = vand.u32 %v5121, 4294901760
    %5123 = vmatmul.mubr.f32.gmra.mrb[0].mxu0 %v5122
    %v5124 = vpop.f32.mrb[0].mxu0
    %v5125 = vadd.f32 %v5043, %v5124
    %v5126 = vpop.f32.mrb[0].mxu0
    %5127 = vmatprep.mubr.f32.mxu0 0.0
    %v5128 = vand.u32 %v40, 4294901760
    %v5129 = vsub.f32 %v40, %v5128
    %v5130 = vand.u32 %v5129, 4294901760
    %5131 = vmatmul.mubr.f32.gmra.mrb[0].mxu0 %v5130
    %v5132 = vpop.f32.mrb[0].mxu0
    %v5133 = vadd.f32 %v5050, %v5132
    %v5134 = vpop.f32.mrb[0].mxu0
    %5135 = vdwg.mxu0
    %5136 = vmatprep.subr.mxu0 0.0
    %v5137 = vand.u32 %v4777, 4294901760
    %v5138 = vsub.f32 %v4777, %v5137
    %v5139 = vand.u32 %v5138, 4294901760
    %5140 = vmatpush1.msra.mxu0 %v5139
    %5141 = vmatprep.subr.mxu0 0.0
    %v5142 = vand.u32 %v4783, 4294901760
    %v5143 = vsub.f32 %v4783, %v5142
    %v5144 = vand.u32 %v5143, 4294901760
    %5145 = vmatpush1.msra.mxu0 %v5144
    %5146 = vmatprep.subr.mxu0 0.0
    %5147 = vmatpush1.msra.mxu0 0.0
    %5148 = vmatprep.subr.mxu0 0.0
    %5149 = vmatpush1.msra.mxu0 0.0
    %5150 = vmatprep.subr.mxu0 0.0
    %5151 = vmatpush1.msra.mxu0 0.0
    %5152 = vmatprep.subr.mxu0 0.0
    %5153 = vmatpush1.msra.mxu0 0.0
    %5154 = vmatprep.subr.mxu0 0.0
    %5155 = vmatpush1.msra.mxu0 0.0
    %5156 = vmatprep.subr.mxu0 0.0
    %5157 = vmatpush1.msra.mxu0 0.0
    %5158 = vmatprep.subr.mxu0 0.0
    %5159 = vmatpush1.msra.mxu0 0.0
    %5160 = vmatprep.subr.mxu0 0.0
    %5161 = vmatpush1.msra.mxu0 0.0
    %5162 = vmatprep.subr.mxu0 0.0
    %5163 = vmatpush1.msra.mxu0 0.0
    %5164 = vmatprep.subr.mxu0 0.0
    %5165 = vmatpush1.msra.mxu0 0.0
    %5166 = vmatprep.subr.mxu0 0.0
    %5167 = vmatpush1.msra.mxu0 0.0
    %5168 = vmatprep.subr.mxu0 0.0
    %5169 = vmatpush1.msra.mxu0 0.0
    %5170 = vmatprep.subr.mxu0 0.0
    %5171 = vmatpush1.msra.mxu0 0.0
    %5172 = vmatprep.subr.mxu0 0.0
    %5173 = vmatpush1.msra.mxu0 0.0
    %5174 = vmatprep.subr.mxu0 0.0
    %5175 = vmatpush1.msra.mxu0 0.0
    %5176 = vmatprep.subr.mxu0 0.0
    %5177 = vmatpush1.msra.mxu0 0.0
    %5178 = vmatprep.subr.mxu0 0.0
    %5179 = vmatpush1.msra.mxu0 0.0
    %5180 = vmatprep.subr.mxu0 0.0
    %5181 = vmatpush1.msra.mxu0 0.0
    %5182 = vmatprep.subr.mxu0 0.0
    %5183 = vmatpush1.msra.mxu0 0.0
    %5184 = vmatprep.subr.mxu0 0.0
    %5185 = vmatpush1.msra.mxu0 0.0
    %5186 = vmatprep.subr.mxu0 0.0
    %5187 = vmatpush1.msra.mxu0 0.0
    %5188 = vmatprep.subr.mxu0 0.0
    %5189 = vmatpush1.msra.mxu0 0.0
    %5190 = vmatprep.subr.mxu0 0.0
    %5191 = vmatpush1.msra.mxu0 0.0
    %5192 = vmatprep.subr.mxu0 0.0
    %5193 = vmatpush1.msra.mxu0 0.0
    %5194 = vmatprep.subr.mxu0 0.0
    %5195 = vmatpush1.msra.mxu0 0.0
    %5196 = vmatprep.subr.mxu0 0.0
    %5197 = vmatpush1.msra.mxu0 0.0
    %5198 = vmatprep.subr.mxu0 0.0
    %5199 = vmatpush1.msra.mxu0 0.0
    %5200 = vmatprep.subr.mxu0 0.0
    %5201 = vmatpush1.msra.mxu0 0.0
    %5202 = vmatprep.subr.mxu0 0.0
    %5203 = vmatpush1.msra.mxu0 0.0
    %5204 = vmatprep.subr.mxu0 0.0
    %5205 = vmatpush1.msra.mxu0 0.0
    %5206 = vmatprep.mubr.f32.mxu0 0.0
    %v5207 = vand.u32 %v37, 4294901760
    %5208 = vmatmul.mubr.f32.gmra.mrb[0].mxu0 %v5207
    %v5209 = vpop.f32.mrb[0].mxu0
    %v5210 = vadd.f32 %v5125, %v5209
    %v5211 = vpop.f32.mrb[0].mxu0
    %5212 = vmatprep.mubr.f32.mxu0 0.0
    %v5213 = vand.u32 %v40, 4294901760
    %5214 = vmatmul.mubr.f32.gmra.mrb[0].mxu0 %v5213
    %v5215 = vpop.f32.mrb[0].mxu0
    %v5216 = vadd.f32 %v5133, %v5215
    %v5217 = vpop.f32.mrb[0].mxu0
    %5218 = vdwg.mxu0
    %5219 = vmatprep.subr.mxu0 0.0
    %v5220 = vand.u32 %v4777, 4294901760
    %5221 = vmatpush1.msra.mxu0 %v5220
    %5222 = vmatprep.subr.mxu0 0.0
    %v5223 = vand.u32 %v4783, 4294901760
    %5224 = vmatpush1.msra.mxu0 %v5223
    %5225 = vmatprep.subr.mxu0 0.0
    %5226 = vmatpush1.msra.mxu0 0.0
    %5227 = vmatprep.subr.mxu0 0.0
    %5228 = vmatpush1.msra.mxu0 0.0
    %5229 = vmatprep.subr.mxu0 0.0
    %5230 = vmatpush1.msra.mxu0 0.0
    %5231 = vmatprep.subr.mxu0 0.0
    %5232 = vmatpush1.msra.mxu0 0.0
    %5233 = vmatprep.subr.mxu0 0.0
    %5234 = vmatpush1.msra.mxu0 0.0
    %5235 = vmatprep.subr.mxu0 0.0
    %5236 = vmatpush1.msra.mxu0 0.0
    %5237 = vmatprep.subr.mxu0 0.0
    %5238 = vmatpush1.msra.mxu0 0.0
    %5239 = vmatprep.subr.mxu0 0.0
    %5240 = vmatpush1.msra.mxu0 0.0
    %5241 = vmatprep.subr.mxu0 0.0
    %5242 = vmatpush1.msra.mxu0 0.0
    %5243 = vmatprep.subr.mxu0 0.0
    %5244 = vmatpush1.msra.mxu0 0.0
    %5245 = vmatprep.subr.mxu0 0.0
    %5246 = vmatpush1.msra.mxu0 0.0
    %5247 = vmatprep.subr.mxu0 0.0
    %5248 = vmatpush1.msra.mxu0 0.0
    %5249 = vmatprep.subr.mxu0 0.0
    %5250 = vmatpush1.msra.mxu0 0.0
    %5251 = vmatprep.subr.mxu0 0.0
    %5252 = vmatpush1.msra.mxu0 0.0
    %5253 = vmatprep.subr.mxu0 0.0
    %5254 = vmatpush1.msra.mxu0 0.0
    %5255 = vmatprep.subr.mxu0 0.0
    %5256 = vmatpush1.msra.mxu0 0.0
    %5257 = vmatprep.subr.mxu0 0.0
    %5258 = vmatpush1.msra.mxu0 0.0
    %5259 = vmatprep.subr.mxu0 0.0
    %5260 = vmatpush1.msra.mxu0 0.0
    %5261 = vmatprep.subr.mxu0 0.0
    %5262 = vmatpush1.msra.mxu0 0.0
    %5263 = vmatprep.subr.mxu0 0.0
    %5264 = vmatpush1.msra.mxu0 0.0
    %5265 = vmatprep.subr.mxu0 0.0
    %5266 = vmatpush1.msra.mxu0 0.0
    %5267 = vmatprep.subr.mxu0 0.0
    %5268 = vmatpush1.msra.mxu0 0.0
    %5269 = vmatprep.subr.mxu0 0.0
    %5270 = vmatpush1.msra.mxu0 0.0
    %5271 = vmatprep.subr.mxu0 0.0
    %5272 = vmatpush1.msra.mxu0 0.0
    %5273 = vmatprep.subr.mxu0 0.0
    %5274 = vmatpush1.msra.mxu0 0.0
    %5275 = vmatprep.subr.mxu0 0.0
    %5276 = vmatpush1.msra.mxu0 0.0
    %5277 = vmatprep.subr.mxu0 0.0
    %5278 = vmatpush1.msra.mxu0 0.0
    %5279 = vmatprep.subr.mxu0 0.0
    %5280 = vmatpush1.msra.mxu0 0.0
    %5281 = vmatprep.subr.mxu0 0.0
    %5282 = vmatpush1.msra.mxu0 0.0
    %5283 = vmatprep.subr.mxu0 0.0
    %5284 = vmatpush1.msra.mxu0 0.0
    %5285 = vmatprep.mubr.f32.mxu0 0.0
    %v5286 = vand.u32 %v37, 4294901760
    %5287 = vmatmul.mubr.f32.gmra.mrb[0].mxu0 %v5286
    %v5288 = vpop.f32.mrb[0].mxu0
    %v5289 = vadd.f32 %v5210, %v5288
    %v5290 = vpop.f32.mrb[0].mxu0
    %5291 = vmatprep.mubr.f32.mxu0 0.0
    %v5292 = vand.u32 %v40, 4294901760
    %5293 = vmatmul.mubr.f32.gmra.mrb[0].mxu0 %v5292
    %v5294 = vpop.f32.mrb[0].mxu0
    %v5295 = vadd.f32 %v5216, %v5294
    %v5296 = vpop.f32.mrb[0].mxu0
    %5297 = vdwg.mxu0
    %5300 = vrot.lane.b32.xlu0 %v5289, 32
    %v5301 = vpop.permute.xlu0 %5300
    %5302 = vrot.lane.b32.xlu0 %v5295, 32
    %v5303 = vpop.permute.xlu0 %5302
    %5306 = vst.msk [vmem:[#allocation2] sm:$0xff] %vm3158, %v5301
    %5307 = vst.msk [vmem:[#allocation2 + $0x8] sm:$0xff] %vm3158, %v5303
    %5308 = vmatprep.subr.mxu0 0.0
    %v5309 = vand.u32 %v5289, 4294901760
    %5310 = vmatpush1.msra.mxu0 %v5309
    %5311 = vmatprep.subr.mxu0 0.0
    %v5312 = vand.u32 %v5295, 4294901760
    %5313 = vmatpush1.msra.mxu0 %v5312
    %5314 = vmatprep.subr.mxu0 0.0
    %5315 = vmatpush1.msra.mxu0 0.0
    %5316 = vmatprep.subr.mxu0 0.0
    %5317 = vmatpush1.msra.mxu0 0.0
    %5318 = vmatprep.subr.mxu0 0.0
    %5319 = vmatpush1.msra.mxu0 0.0
    %5320 = vmatprep.subr.mxu0 0.0
    %5321 = vmatpush1.msra.mxu0 0.0
    %5322 = vmatprep.subr.mxu0 0.0
    %5323 = vmatpush1.msra.mxu0 0.0
    %5324 = vmatprep.subr.mxu0 0.0
    %5325 = vmatpush1.msra.mxu0 0.0
    %5326 = vmatprep.subr.mxu0 0.0
    %5327 = vmatpush1.msra.mxu0 0.0
    %5328 = vmatprep.subr.mxu0 0.0
    %5329 = vmatpush1.msra.mxu0 0.0
    %5330 = vmatprep.subr.mxu0 0.0
    %5331 = vmatpush1.msra.mxu0 0.0
    %5332 = vmatprep.subr.mxu0 0.0
    %5333 = vmatpush1.msra.mxu0 0.0
    %5334 = vmatprep.subr.mxu0 0.0
    %5335 = vmatpush1.msra.mxu0 0.0
    %5336 = vmatprep.subr.mxu0 0.0
    %5337 = vmatpush1.msra.mxu0 0.0
    %5338 = vmatprep.subr.mxu0 0.0
    %5339 = vmatpush1.msra.mxu0 0.0
    %5340 = vmatprep.subr.mxu0 0.0
    %5341 = vmatpush1.msra.mxu0 0.0
    %5342 = vmatprep.subr.mxu0 0.0
    %5343 = vmatpush1.msra.mxu0 0.0
    %5344 = vmatprep.subr.mxu0 0.0
    %5345 = vmatpush1.msra.mxu0 0.0
    %5346 = vmatprep.subr.mxu0 0.0
    %5347 = vmatpush1.msra.mxu0 0.0
    %5348 = vmatprep.subr.mxu0 0.0
    %5349 = vmatpush1.msra.mxu0 0.0
    %5350 = vmatprep.subr.mxu0 0.0
    %5351 = vmatpush1.msra.mxu0 0.0
    %5352 = vmatprep.subr.mxu0 0.0
    %5353 = vmatpush1.msra.mxu0 0.0
    %5354 = vmatprep.subr.mxu0 0.0
    %5355 = vmatpush1.msra.mxu0 0.0
    %5356 = vmatprep.subr.mxu0 0.0
    %5357 = vmatpush1.msra.mxu0 0.0
    %5358 = vmatprep.subr.mxu0 0.0
    %5359 = vmatpush1.msra.mxu0 0.0
    %5360 = vmatprep.subr.mxu0 0.0
    %5361 = vmatpush1.msra.mxu0 0.0
    %5362 = vmatprep.subr.mxu0 0.0
    %5363 = vmatpush1.msra.mxu0 0.0
    %5364 = vmatprep.subr.mxu0 0.0
    %5365 = vmatpush1.msra.mxu0 0.0
    %5366 = vmatprep.subr.mxu0 0.0
    %5367 = vmatpush1.msra.mxu0 0.0
    %5368 = vmatprep.subr.mxu0 0.0
    %5369 = vmatpush1.msra.mxu0 0.0
    %5370 = vmatprep.subr.mxu0 0.0
    %5371 = vmatpush1.msra.mxu0 0.0
    %5372 = vmatprep.subr.mxu0 0.0
    %5373 = vmatpush1.msra.mxu0 0.0
    %5374 = vmatprep.mubr.f32.mxu0 0.0
    %v5375 = vand.u32 %v37, 4294901760
    %v5376 = vsub.f32 %v37, %v5375
    %v5377 = vand.u32 %v5376, 4294901760
    %v5378 = vsub.f32 %v5376, %v5377
    %v5379 = vand.u32 %v5378, 4294901760
    %5380 = vmatmul.mubr.f32.gmra.mrb[0].mxu0 %v5379
    %v5381 = vpop.f32.mrb[0].mxu0
    %v5382 = vadd.f32 0.0, %v5381
    %v5383 = vpop.f32.mrb[0].mxu0
    %5384 = vmatprep.mubr.f32.mxu0 0.0
    %v5385 = vand.u32 %v40, 4294901760
    %v5386 = vsub.f32 %v40, %v5385
    %v5387 = vand.u32 %v5386, 4294901760
    %v5388 = vsub.f32 %v5386, %v5387
    %v5389 = vand.u32 %v5388, 4294901760
    %5390 = vmatmul.mubr.f32.gmra.mrb[0].mxu0 %v5389
    %v5391 = vpop.f32.mrb[0].mxu0
    %v5392 = vadd.f32 0.0, %v5391
    %v5393 = vpop.f32.mrb[0].mxu0
    %5394 = vdwg.mxu0
    %5395 = vmatprep.subr.mxu0 0.0
    %v5396 = vand.u32 %v5289, 4294901760
    %v5397 = vsub.f32 %v5289, %v5396
    %v5398 = vand.u32 %v5397, 4294901760
    %v5399 = vsub.f32 %v5397, %v5398
    %v5400 = vand.u32 %v5399, 4294901760
    %5401 = vmatpush1.msra.mxu0 %v5400
    %5402 = vmatprep.subr.mxu0 0.0
    %v5403 = vand.u32 %v5295, 4294901760
    %v5404 = vsub.f32 %v5295, %v5403
    %v5405 = vand.u32 %v5404, 4294901760
    %v5406 = vsub.f32 %v5404, %v5405
    %v5407 = vand.u32 %v5406, 4294901760
    %5408 = vmatpush1.msra.mxu0 %v5407
    %5409 = vmatprep.subr.mxu0 0.0
    %5410 = vmatpush1.msra.mxu0 0.0
    %5411 = vmatprep.subr.mxu0 0.0
    %5412 = vmatpush1.msra.mxu0 0.0
    %5413 = vmatprep.subr.mxu0 0.0
    %5414 = vmatpush1.msra.mxu0 0.0
    %5415 = vmatprep.subr.mxu0 0.0
    %5416 = vmatpush1.msra.mxu0 0.0
    %5417 = vmatprep.subr.mxu0 0.0
    %5418 = vmatpush1.msra.mxu0 0.0
    %5419 = vmatprep.subr.mxu0 0.0
    %5420 = vmatpush1.msra.mxu0 0.0
    %5421 = vmatprep.subr.mxu0 0.0
    %5422 = vmatpush1.msra.mxu0 0.0
    %5423 = vmatprep.subr.mxu0 0.0
    %5424 = vmatpush1.msra.mxu0 0.0
    %5425 = vmatprep.subr.mxu0 0.0
    %5426 = vmatpush1.msra.mxu0 0.0
    %5427 = vmatprep.subr.mxu0 0.0
    %5428 = vmatpush1.msra.mxu0 0.0
    %5429 = vmatprep.subr.mxu0 0.0
    %5430 = vmatpush1.msra.mxu0 0.0
    %5431 = vmatprep.subr.mxu0 0.0
    %5432 = vmatpush1.msra.mxu0 0.0
    %5433 = vmatprep.subr.mxu0 0.0
    %5434 = vmatpush1.msra.mxu0 0.0
    %5435 = vmatprep.subr.mxu0 0.0
    %5436 = vmatpush1.msra.mxu0 0.0
    %5437 = vmatprep.subr.mxu0 0.0
    %5438 = vmatpush1.msra.mxu0 0.0
    %5439 = vmatprep.subr.mxu0 0.0
    %5440 = vmatpush1.msra.mxu0 0.0
    %5441 = vmatprep.subr.mxu0 0.0
    %5442 = vmatpush1.msra.mxu0 0.0
    %5443 = vmatprep.subr.mxu0 0.0
    %5444 = vmatpush1.msra.mxu0 0.0
    %5445 = vmatprep.subr.mxu0 0.0
    %5446 = vmatpush1.msra.mxu0 0.0
    %5447 = vmatprep.subr.mxu0 0.0
    %5448 = vmatpush1.msra.mxu0 0.0
    %5449 = vmatprep.subr.mxu0 0.0
    %5450 = vmatpush1.msra.mxu0 0.0
    %5451 = vmatprep.subr.mxu0 0.0
    %5452 = vmatpush1.msra.mxu0 0.0
    %5453 = vmatprep.subr.mxu0 0.0
    %5454 = vmatpush1.msra.mxu0 0.0
    %5455 = vmatprep.subr.mxu0 0.0
    %5456 = vmatpush1.msra.mxu0 0.0
    %5457 = vmatprep.subr.mxu0 0.0
    %5458 = vmatpush1.msra.mxu0 0.0
    %5459 = vmatprep.subr.mxu0 0.0
    %5460 = vmatpush1.msra.mxu0 0.0
    %5461 = vmatprep.subr.mxu0 0.0
    %5462 = vmatpush1.msra.mxu0 0.0
    %5463 = vmatprep.subr.mxu0 0.0
    %5464 = vmatpush1.msra.mxu0 0.0
    %5465 = vmatprep.subr.mxu0 0.0
    %5466 = vmatpush1.msra.mxu0 0.0
    %5467 = vmatprep.subr.mxu0 0.0
    %5468 = vmatpush1.msra.mxu0 0.0
    %5469 = vmatprep.mubr.f32.mxu0 0.0
    %v5470 = vand.u32 %v37, 4294901760
    %5471 = vmatmul.mubr.f32.gmra.mrb[0].mxu0 %v5470
    %v5472 = vpop.f32.mrb[0].mxu0
    %v5473 = vadd.f32 %v5382, %v5472
    %v5474 = vpop.f32.mrb[0].mxu0
    %5475 = vmatprep.mubr.f32.mxu0 0.0
    %v5476 = vand.u32 %v40, 4294901760
    %5477 = vmatmul.mubr.f32.gmra.mrb[0].mxu0 %v5476
    %v5478 = vpop.f32.mrb[0].mxu0
    %v5479 = vadd.f32 %v5392, %v5478
    %v5480 = vpop.f32.mrb[0].mxu0
    %5481 = vdwg.mxu0
    %5482 = vmatprep.subr.mxu0 0.0
    %v5483 = vand.u32 %v5289, 4294901760
    %v5484 = vsub.f32 %v5289, %v5483
    %5485 = vmatpush1.msra.mxu0 %v5484
    %5486 = vmatprep.subr.mxu0 0.0
    %v5487 = vand.u32 %v5295, 4294901760
    %v5488 = vsub.f32 %v5295, %v5487
    %5489 = vmatpush1.msra.mxu0 %v5488
    %5490 = vmatprep.subr.mxu0 0.0
    %5491 = vmatpush1.msra.mxu0 0.0
    %5492 = vmatprep.subr.mxu0 0.0
    %5493 = vmatpush1.msra.mxu0 0.0
    %5494 = vmatprep.subr.mxu0 0.0
    %5495 = vmatpush1.msra.mxu0 0.0
    %5496 = vmatprep.subr.mxu0 0.0
    %5497 = vmatpush1.msra.mxu0 0.0
    %5498 = vmatprep.subr.mxu0 0.0
    %5499 = vmatpush1.msra.mxu0 0.0
    %5500 = vmatprep.subr.mxu0 0.0
    %5501 = vmatpush1.msra.mxu0 0.0
    %5502 = vmatprep.subr.mxu0 0.0
    %5503 = vmatpush1.msra.mxu0 0.0
    %5504 = vmatprep.subr.mxu0 0.0
    %5505 = vmatpush1.msra.mxu0 0.0
    %5506 = vmatprep.subr.mxu0 0.0
    %5507 = vmatpush1.msra.mxu0 0.0
    %5508 = vmatprep.subr.mxu0 0.0
    %5509 = vmatpush1.msra.mxu0 0.0
    %5510 = vmatprep.subr.mxu0 0.0
    %5511 = vmatpush1.msra.mxu0 0.0
    %5512 = vmatprep.subr.mxu0 0.0
    %5513 = vmatpush1.msra.mxu0 0.0
    %5514 = vmatprep.subr.mxu0 0.0
    %5515 = vmatpush1.msra.mxu0 0.0
    %5516 = vmatprep.subr.mxu0 0.0
    %5517 = vmatpush1.msra.mxu0 0.0
    %5518 = vmatprep.subr.mxu0 0.0
    %5519 = vmatpush1.msra.mxu0 0.0
    %5520 = vmatprep.subr.mxu0 0.0
    %5521 = vmatpush1.msra.mxu0 0.0
    %5522 = vmatprep.subr.mxu0 0.0
    %5523 = vmatpush1.msra.mxu0 0.0
    %5524 = vmatprep.subr.mxu0 0.0
    %5525 = vmatpush1.msra.mxu0 0.0
    %5526 = vmatprep.subr.mxu0 0.0
    %5527 = vmatpush1.msra.mxu0 0.0
    %5528 = vmatprep.subr.mxu0 0.0
    %5529 = vmatpush1.msra.mxu0 0.0
    %5530 = vmatprep.subr.mxu0 0.0
    %5531 = vmatpush1.msra.mxu0 0.0
    %5532 = vmatprep.subr.mxu0 0.0
    %5533 = vmatpush1.msra.mxu0 0.0
    %5534 = vmatprep.subr.mxu0 0.0
    %5535 = vmatpush1.msra.mxu0 0.0
    %5536 = vmatprep.subr.mxu0 0.0
    %5537 = vmatpush1.msra.mxu0 0.0
    %5538 = vmatprep.subr.mxu0 0.0
    %5539 = vmatpush1.msra.mxu0 0.0
    %5540 = vmatprep.subr.mxu0 0.0
    %5541 = vmatpush1.msra.mxu0 0.0
    %5542 = vmatprep.subr.mxu0 0.0
    %5543 = vmatpush1.msra.mxu0 0.0
    %5544 = vmatprep.subr.mxu0 0.0
    %5545 = vmatpush1.msra.mxu0 0.0
    %5546 = vmatprep.subr.mxu0 0.0
    %5547 = vmatpush1.msra.mxu0 0.0
    %5548 = vmatprep.subr.mxu0 0.0
    %5549 = vmatpush1.msra.mxu0 0.0
    %5550 = vmatprep.mubr.f32.mxu0 0.0
    %v5551 = vand.u32 %v37, 4294901760
    %v5552 = vsub.f32 %v37, %v5551
    %5553 = vmatmul.mubr.f32.gmra.mrb[0].mxu0 %v5552
    %v5554 = vpop.f32.mrb[0].mxu0
    %v5555 = vadd.f32 %v5473, %v5554
    %v5556 = vpop.f32.mrb[0].mxu0
    %5557 = vmatprep.mubr.f32.mxu0 0.0
    %v5558 = vand.u32 %v40, 4294901760
    %v5559 = vsub.f32 %v40, %v5558
    %5560 = vmatmul.mubr.f32.gmra.mrb[0].mxu0 %v5559
    %v5561 = vpop.f32.mrb[0].mxu0
    %v5562 = vadd.f32 %v5479, %v5561
    %v5563 = vpop.f32.mrb[0].mxu0
    %5564 = vdwg.mxu0
    %5565 = vmatprep.subr.mxu0 0.0
    %v5566 = vand.u32 %v5289, 4294901760
    %5567 = vmatpush1.msra.mxu0 %v5566
    %5568 = vmatprep.subr.mxu0 0.0
    %v5569 = vand.u32 %v5295, 4294901760
    %5570 = vmatpush1.msra.mxu0 %v5569
    %5571 = vmatprep.subr.mxu0 0.0
    %5572 = vmatpush1.msra.mxu0 0.0
    %5573 = vmatprep.subr.mxu0 0.0
    %5574 = vmatpush1.msra.mxu0 0.0
    %5575 = vmatprep.subr.mxu0 0.0
    %5576 = vmatpush1.msra.mxu0 0.0
    %5577 = vmatprep.subr.mxu0 0.0
    %5578 = vmatpush1.msra.mxu0 0.0
    %5579 = vmatprep.subr.mxu0 0.0
    %5580 = vmatpush1.msra.mxu0 0.0
    %5581 = vmatprep.subr.mxu0 0.0
    %5582 = vmatpush1.msra.mxu0 0.0
    %5583 = vmatprep.subr.mxu0 0.0
    %5584 = vmatpush1.msra.mxu0 0.0
    %5585 = vmatprep.subr.mxu0 0.0
    %5586 = vmatpush1.msra.mxu0 0.0
    %5587 = vmatprep.subr.mxu0 0.0
    %5588 = vmatpush1.msra.mxu0 0.0
    %5589 = vmatprep.subr.mxu0 0.0
    %5590 = vmatpush1.msra.mxu0 0.0
    %5591 = vmatprep.subr.mxu0 0.0
    %5592 = vmatpush1.msra.mxu0 0.0
    %5593 = vmatprep.subr.mxu0 0.0
    %5594 = vmatpush1.msra.mxu0 0.0
    %5595 = vmatprep.subr.mxu0 0.0
    %5596 = vmatpush1.msra.mxu0 0.0
    %5597 = vmatprep.subr.mxu0 0.0
    %5598 = vmatpush1.msra.mxu0 0.0
    %5599 = vmatprep.subr.mxu0 0.0
    %5600 = vmatpush1.msra.mxu0 0.0
    %5601 = vmatprep.subr.mxu0 0.0
    %5602 = vmatpush1.msra.mxu0 0.0
    %5603 = vmatprep.subr.mxu0 0.0
    %5604 = vmatpush1.msra.mxu0 0.0
    %5605 = vmatprep.subr.mxu0 0.0
    %5606 = vmatpush1.msra.mxu0 0.0
    %5607 = vmatprep.subr.mxu0 0.0
    %5608 = vmatpush1.msra.mxu0 0.0
    %5609 = vmatprep.subr.mxu0 0.0
    %5610 = vmatpush1.msra.mxu0 0.0
    %5611 = vmatprep.subr.mxu0 0.0
    %5612 = vmatpush1.msra.mxu0 0.0
    %5613 = vmatprep.subr.mxu0 0.0
    %5614 = vmatpush1.msra.mxu0 0.0
    %5615 = vmatprep.subr.mxu0 0.0
    %5616 = vmatpush1.msra.mxu0 0.0
    %5617 = vmatprep.subr.mxu0 0.0
    %5618 = vmatpush1.msra.mxu0 0.0
    %5619 = vmatprep.subr.mxu0 0.0
    %5620 = vmatpush1.msra.mxu0 0.0
    %5621 = vmatprep.subr.mxu0 0.0
    %5622 = vmatpush1.msra.mxu0 0.0
    %5623 = vmatprep.subr.mxu0 0.0
    %5624 = vmatpush1.msra.mxu0 0.0
    %5625 = vmatprep.subr.mxu0 0.0
    %5626 = vmatpush1.msra.mxu0 0.0
    %5627 = vmatprep.subr.mxu0 0.0
    %5628 = vmatpush1.msra.mxu0 0.0
    %5629 = vmatprep.subr.mxu0 0.0
    %5630 = vmatpush1.msra.mxu0 0.0
    %5631 = vmatprep.mubr.f32.mxu0 0.0
    %v5632 = vand.u32 %v37, 4294901760
    %v5633 = vsub.f32 %v37, %v5632
    %v5634 = vand.u32 %v5633, 4294901760
    %5635 = vmatmul.mubr.f32.gmra.mrb[0].mxu0 %v5634
    %v5636 = vpop.f32.mrb[0].mxu0
    %v5637 = vadd.f32 %v5555, %v5636
    %v5638 = vpop.f32.mrb[0].mxu0
    %5639 = vmatprep.mubr.f32.mxu0 0.0
    %v5640 = vand.u32 %v40, 4294901760
    %v5641 = vsub.f32 %v40, %v5640
    %v5642 = vand.u32 %v5641, 4294901760
    %5643 = vmatmul.mubr.f32.gmra.mrb[0].mxu0 %v5642
    %v5644 = vpop.f32.mrb[0].mxu0
    %v5645 = vadd.f32 %v5562, %v5644
    %v5646 = vpop.f32.mrb[0].mxu0
    %5647 = vdwg.mxu0
    %5648 = vmatprep.subr.mxu0 0.0
    %v5649 = vand.u32 %v5289, 4294901760
    %v5650 = vsub.f32 %v5289, %v5649
    %v5651 = vand.u32 %v5650, 4294901760
    %5652 = vmatpush1.msra.mxu0 %v5651
    %5653 = vmatprep.subr.mxu0 0.0
    %v5654 = vand.u32 %v5295, 4294901760
    %v5655 = vsub.f32 %v5295, %v5654
    %v5656 = vand.u32 %v5655, 4294901760
    %5657 = vmatpush1.msra.mxu0 %v5656
    %5658 = vmatprep.subr.mxu0 0.0
    %5659 = vmatpush1.msra.mxu0 0.0
    %5660 = vmatprep.subr.mxu0 0.0
    %5661 = vmatpush1.msra.mxu0 0.0
    %5662 = vmatprep.subr.mxu0 0.0
    %5663 = vmatpush1.msra.mxu0 0.0
    %5664 = vmatprep.subr.mxu0 0.0
    %5665 = vmatpush1.msra.mxu0 0.0
    %5666 = vmatprep.subr.mxu0 0.0
    %5667 = vmatpush1.msra.mxu0 0.0
    %5668 = vmatprep.subr.mxu0 0.0
    %5669 = vmatpush1.msra.mxu0 0.0
    %5670 = vmatprep.subr.mxu0 0.0
    %5671 = vmatpush1.msra.mxu0 0.0
    %5672 = vmatprep.subr.mxu0 0.0
    %5673 = vmatpush1.msra.mxu0 0.0
    %5674 = vmatprep.subr.mxu0 0.0
    %5675 = vmatpush1.msra.mxu0 0.0
    %5676 = vmatprep.subr.mxu0 0.0
    %5677 = vmatpush1.msra.mxu0 0.0
    %5678 = vmatprep.subr.mxu0 0.0
    %5679 = vmatpush1.msra.mxu0 0.0
    %5680 = vmatprep.subr.mxu0 0.0
    %5681 = vmatpush1.msra.mxu0 0.0
    %5682 = vmatprep.subr.mxu0 0.0
    %5683 = vmatpush1.msra.mxu0 0.0
    %5684 = vmatprep.subr.mxu0 0.0
    %5685 = vmatpush1.msra.mxu0 0.0
    %5686 = vmatprep.subr.mxu0 0.0
    %5687 = vmatpush1.msra.mxu0 0.0
    %5688 = vmatprep.subr.mxu0 0.0
    %5689 = vmatpush1.msra.mxu0 0.0
    %5690 = vmatprep.subr.mxu0 0.0
    %5691 = vmatpush1.msra.mxu0 0.0
    %5692 = vmatprep.subr.mxu0 0.0
    %5693 = vmatpush1.msra.mxu0 0.0
    %5694 = vmatprep.subr.mxu0 0.0
    %5695 = vmatpush1.msra.mxu0 0.0
    %5696 = vmatprep.subr.mxu0 0.0
    %5697 = vmatpush1.msra.mxu0 0.0
    %5698 = vmatprep.subr.mxu0 0.0
    %5699 = vmatpush1.msra.mxu0 0.0
    %5700 = vmatprep.subr.mxu0 0.0
    %5701 = vmatpush1.msra.mxu0 0.0
    %5702 = vmatprep.subr.mxu0 0.0
    %5703 = vmatpush1.msra.mxu0 0.0
    %5704 = vmatprep.subr.mxu0 0.0
    %5705 = vmatpush1.msra.mxu0 0.0
    %5706 = vmatprep.subr.mxu0 0.0
    %5707 = vmatpush1.msra.mxu0 0.0
    %5708 = vmatprep.subr.mxu0 0.0
    %5709 = vmatpush1.msra.mxu0 0.0
    %5710 = vmatprep.subr.mxu0 0.0
    %5711 = vmatpush1.msra.mxu0 0.0
    %5712 = vmatprep.subr.mxu0 0.0
    %5713 = vmatpush1.msra.mxu0 0.0
    %5714 = vmatprep.subr.mxu0 0.0
    %5715 = vmatpush1.msra.mxu0 0.0
    %5716 = vmatprep.subr.mxu0 0.0
    %5717 = vmatpush1.msra.mxu0 0.0
    %5718 = vmatprep.mubr.f32.mxu0 0.0
    %v5719 = vand.u32 %v37, 4294901760
    %5720 = vmatmul.mubr.f32.gmra.mrb[0].mxu0 %v5719
    %v5721 = vpop.f32.mrb[0].mxu0
    %v5722 = vadd.f32 %v5637, %v5721
    %v5723 = vpop.f32.mrb[0].mxu0
    %5724 = vmatprep.mubr.f32.mxu0 0.0
    %v5725 = vand.u32 %v40, 4294901760
    %5726 = vmatmul.mubr.f32.gmra.mrb[0].mxu0 %v5725
    %v5727 = vpop.f32.mrb[0].mxu0
    %v5728 = vadd.f32 %v5645, %v5727
    %v5729 = vpop.f32.mrb[0].mxu0
    %5730 = vdwg.mxu0
    %5731 = vmatprep.subr.mxu0 0.0
    %v5732 = vand.u32 %v5289, 4294901760
    %5733 = vmatpush1.msra.mxu0 %v5732
    %5734 = vmatprep.subr.mxu0 0.0
    %v5735 = vand.u32 %v5295, 4294901760
    %5736 = vmatpush1.msra.mxu0 %v5735
    %5737 = vmatprep.subr.mxu0 0.0
    %5738 = vmatpush1.msra.mxu0 0.0
    %5739 = vmatprep.subr.mxu0 0.0
    %5740 = vmatpush1.msra.mxu0 0.0
    %5741 = vmatprep.subr.mxu0 0.0
    %5742 = vmatpush1.msra.mxu0 0.0
    %5743 = vmatprep.subr.mxu0 0.0
    %5744 = vmatpush1.msra.mxu0 0.0
    %5745 = vmatprep.subr.mxu0 0.0
    %5746 = vmatpush1.msra.mxu0 0.0
    %5747 = vmatprep.subr.mxu0 0.0
    %5748 = vmatpush1.msra.mxu0 0.0
    %5749 = vmatprep.subr.mxu0 0.0
    %5750 = vmatpush1.msra.mxu0 0.0
    %5751 = vmatprep.subr.mxu0 0.0
    %5752 = vmatpush1.msra.mxu0 0.0
    %5753 = vmatprep.subr.mxu0 0.0
    %5754 = vmatpush1.msra.mxu0 0.0
    %5755 = vmatprep.subr.mxu0 0.0
    %5756 = vmatpush1.msra.mxu0 0.0
    %5757 = vmatprep.subr.mxu0 0.0
    %5758 = vmatpush1.msra.mxu0 0.0
    %5759 = vmatprep.subr.mxu0 0.0
    %5760 = vmatpush1.msra.mxu0 0.0
    %5761 = vmatprep.subr.mxu0 0.0
    %5762 = vmatpush1.msra.mxu0 0.0
    %5763 = vmatprep.subr.mxu0 0.0
    %5764 = vmatpush1.msra.mxu0 0.0
    %5765 = vmatprep.subr.mxu0 0.0
    %5766 = vmatpush1.msra.mxu0 0.0
    %5767 = vmatprep.subr.mxu0 0.0
    %5768 = vmatpush1.msra.mxu0 0.0
    %5769 = vmatprep.subr.mxu0 0.0
    %5770 = vmatpush1.msra.mxu0 0.0
    %5771 = vmatprep.subr.mxu0 0.0
    %5772 = vmatpush1.msra.mxu0 0.0
    %5773 = vmatprep.subr.mxu0 0.0
    %5774 = vmatpush1.msra.mxu0 0.0
    %5775 = vmatprep.subr.mxu0 0.0
    %5776 = vmatpush1.msra.mxu0 0.0
    %5777 = vmatprep.subr.mxu0 0.0
    %5778 = vmatpush1.msra.mxu0 0.0
    %5779 = vmatprep.subr.mxu0 0.0
    %5780 = vmatpush1.msra.mxu0 0.0
    %5781 = vmatprep.subr.mxu0 0.0
    %5782 = vmatpush1.msra.mxu0 0.0
    %5783 = vmatprep.subr.mxu0 0.0
    %5784 = vmatpush1.msra.mxu0 0.0
    %5785 = vmatprep.subr.mxu0 0.0
    %5786 = vmatpush1.msra.mxu0 0.0
    %5787 = vmatprep.subr.mxu0 0.0
    %5788 = vmatpush1.msra.mxu0 0.0
    %5789 = vmatprep.subr.mxu0 0.0
    %5790 = vmatpush1.msra.mxu0 0.0
    %5791 = vmatprep.subr.mxu0 0.0
    %5792 = vmatpush1.msra.mxu0 0.0
    %5793 = vmatprep.subr.mxu0 0.0
    %5794 = vmatpush1.msra.mxu0 0.0
    %5795 = vmatprep.subr.mxu0 0.0
    %5796 = vmatpush1.msra.mxu0 0.0
    %5797 = vmatprep.mubr.f32.mxu0 0.0
    %v5798 = vand.u32 %v37, 4294901760
    %5799 = vmatmul.mubr.f32.gmra.mrb[0].mxu0 %v5798
    %v5800 = vpop.f32.mrb[0].mxu0
    %v5801 = vadd.f32 %v5722, %v5800
    %v5802 = vpop.f32.mrb[0].mxu0
    %5803 = vmatprep.mubr.f32.mxu0 0.0
    %v5804 = vand.u32 %v40, 4294901760
    %5805 = vmatmul.mubr.f32.gmra.mrb[0].mxu0 %v5804
    %v5806 = vpop.f32.mrb[0].mxu0
    %v5807 = vadd.f32 %v5728, %v5806
    %v5808 = vpop.f32.mrb[0].mxu0
    %5809 = vdwg.mxu0
    %5812 = vrot.lane.b32.xlu0 %v5801, 48
    %v5813 = vpop.permute.xlu0 %5812
    %5814 = vrot.lane.b32.xlu0 %v5807, 48
    %v5815 = vpop.permute.xlu0 %5814
    %5818 = vst.msk [vmem:[#allocation2] sm:$0xff] %vm3671, %v5813
    %5819 = vst.msk [vmem:[#allocation2 + $0x8] sm:$0xff] %vm3671, %v5815
    %v5820 = vld [vmem:[#allocation3 + $0x60] sm:$0xff]
    %v5821 = vld [vmem:[#allocation3 + $0x68] sm:$0xff]
    %v5822 = vld [vmem:[#allocation3 + $0x70] sm:$0xff]
    %v5823 = vld [vmem:[#allocation3 + $0x78] sm:$0xff]
    %v5824 = vld [vmem:[#allocation3 + $0x80] sm:$0xff]
    %v5825 = vld [vmem:[#allocation3 + $0x88] sm:$0xff]
    %v5826 = vld [vmem:[#allocation3 + $0x90] sm:$0xff]
    %v5827 = vld [vmem:[#allocation3 + $0x98] sm:$0xff]
    %v5828 = vld [vmem:[#allocation3 + $0xa2] sm:$0x1]
    %v5829 = vld [vmem:[#allocation2] sm:$0xff]
    %v5830 = vld [vmem:[#allocation2 + $0x8] sm:$0xff]
    %v5831 = vlaneseq
    %v5832 = vshrl.u32 %v5831, 7
    %v5833 = vsub.s32 0, %v5832
    %v5834 = vrot.slane %v5828, %v5833
    %v5836 = vsel %vm3689, %v5829, 0
    %v5839 = vsel %vm3689, %v5830, 0
    %5841 = vmatprep.subr.mxu0 0.0
    %v5842 = vand.u32 %v5820, 4294901760
    %5843 = vmatpush1.msra.mxu0 %v5842
    %5844 = vmatprep.subr.mxu0 0.0
    %v5845 = vand.u32 %v5821, 4294901760
    %5846 = vmatpush1.msra.mxu0 %v5845
    %5847 = vmatprep.subr.mxu0 0.0
    %v5848 = vand.u32 %v5822, 4294901760
    %5849 = vmatpush1.msra.mxu0 %v5848
    %5850 = vmatprep.subr.mxu0 0.0
    %v5851 = vand.u32 %v5823, 4294901760
    %5852 = vmatpush1.msra.mxu0 %v5851
    %5853 = vmatprep.subr.mxu0 0.0
    %v5854 = vand.u32 %v5824, 4294901760
    %5855 = vmatpush1.msra.mxu0 %v5854
    %5856 = vmatprep.subr.mxu0 0.0
    %v5857 = vand.u32 %v5825, 4294901760
    %5858 = vmatpush1.msra.mxu0 %v5857
    %5859 = vmatprep.subr.mxu0 0.0
    %v5860 = vand.u32 %v5826, 4294901760
    %5861 = vmatpush1.msra.mxu0 %v5860
    %5862 = vmatprep.subr.mxu0 0.0
    %v5863 = vand.u32 %v5827, 4294901760
    %5864 = vmatpush1.msra.mxu0 %v5863
    %5865 = vmatprep.subr.mxu0 0.0
    %5866 = vmatpush1.msra.mxu0 0.0
    %5867 = vmatprep.subr.mxu0 0.0
    %5868 = vmatpush1.msra.mxu0 0.0
    %5869 = vmatprep.subr.mxu0 0.0
    %5870 = vmatpush1.msra.mxu0 0.0
    %5871 = vmatprep.subr.mxu0 0.0
    %5872 = vmatpush1.msra.mxu0 0.0
    %5873 = vmatprep.subr.mxu0 0.0
    %5874 = vmatpush1.msra.mxu0 0.0
    %5875 = vmatprep.subr.mxu0 0.0
    %5876 = vmatpush1.msra.mxu0 0.0
    %5877 = vmatprep.subr.mxu0 0.0
    %5878 = vmatpush1.msra.mxu0 0.0
    %5879 = vmatprep.subr.mxu0 0.0
    %5880 = vmatpush1.msra.mxu0 0.0
    %5881 = vmatprep.subr.mxu0 0.0
    %5882 = vmatpush1.msra.mxu0 0.0
    %5883 = vmatprep.subr.mxu0 0.0
    %5884 = vmatpush1.msra.mxu0 0.0
    %5885 = vmatprep.subr.mxu0 0.0
    %5886 = vmatpush1.msra.mxu0 0.0
    %5887 = vmatprep.subr.mxu0 0.0
    %5888 = vmatpush1.msra.mxu0 0.0
    %5889 = vmatprep.subr.mxu0 0.0
    %5890 = vmatpush1.msra.mxu0 0.0
    %5891 = vmatprep.subr.mxu0 0.0
    %5892 = vmatpush1.msra.mxu0 0.0
    %5893 = vmatprep.subr.mxu0 0.0
    %5894 = vmatpush1.msra.mxu0 0.0
    %5895 = vmatprep.subr.mxu0 0.0
    %5896 = vmatpush1.msra.mxu0 0.0
    %5897 = vmatprep.subr.mxu0 0.0
    %5898 = vmatpush1.msra.mxu0 0.0
    %5899 = vmatprep.subr.mxu0 0.0
    %5900 = vmatpush1.msra.mxu0 0.0
    %5901 = vmatprep.subr.mxu0 0.0
    %5902 = vmatpush1.msra.mxu0 0.0
    %5903 = vmatprep.subr.mxu0 0.0
    %5904 = vmatpush1.msra.mxu0 0.0
    %5905 = vmatprep.subr.mxu0 0.0
    %5906 = vmatpush1.msra.mxu0 0.0
    %5907 = vmatprep.subr.mxu0 0.0
    %5908 = vmatpush1.msra.mxu0 0.0
    %5909 = vmatprep.subr.mxu0 0.0
    %5910 = vmatpush1.msra.mxu0 0.0
    %5911 = vmatprep.subr.mxu0 0.0
    %5912 = vmatpush1.msra.mxu0 0.0
    %5913 = vmatprep.mubr.f32.mxu0 0.0
    %v5914 = vand.u32 %v5836, 4294901760
    %v5915 = vsub.f32 %v5836, %v5914
    %v5916 = vand.u32 %v5915, 4294901760
    %v5917 = vsub.f32 %v5915, %v5916
    %v5918 = vand.u32 %v5917, 4294901760
    %5919 = vmatmul.mubr.f32.gmra.mrb[0].mxu0 %v5918
    %v5920 = vpop.f32.mrb[0].mxu0
    %v5921 = vadd.f32 %v5834, %v5920
    %v5922 = vpop.f32.mrb[0].mxu0
    %5923 = vmatprep.mubr.f32.mxu0 0.0
    %v5924 = vand.u32 %v5839, 4294901760
    %v5925 = vsub.f32 %v5839, %v5924
    %v5926 = vand.u32 %v5925, 4294901760
    %v5927 = vsub.f32 %v5925, %v5926
    %v5928 = vand.u32 %v5927, 4294901760
    %5929 = vmatmul.mubr.f32.gmra.mrb[0].mxu0 %v5928
    %v5930 = vpop.f32.mrb[0].mxu0
    %v5931 = vadd.f32 %v5834, %v5930
    %v5932 = vpop.f32.mrb[0].mxu0
    %5933 = vdwg.mxu0
    %5934 = vmatprep.subr.mxu0 0.0
    %v5935 = vand.u32 %v5820, 4294901760
    %v5936 = vsub.f32 %v5820, %v5935
    %v5937 = vand.u32 %v5936, 4294901760
    %v5938 = vsub.f32 %v5936, %v5937
    %v5939 = vand.u32 %v5938, 4294901760
    %5940 = vmatpush1.msra.mxu0 %v5939
    %5941 = vmatprep.subr.mxu0 0.0
    %v5942 = vand.u32 %v5821, 4294901760
    %v5943 = vsub.f32 %v5821, %v5942
    %v5944 = vand.u32 %v5943, 4294901760
    %v5945 = vsub.f32 %v5943, %v5944
    %v5946 = vand.u32 %v5945, 4294901760
    %5947 = vmatpush1.msra.mxu0 %v5946
    %5948 = vmatprep.subr.mxu0 0.0
    %v5949 = vand.u32 %v5822, 4294901760
    %v5950 = vsub.f32 %v5822, %v5949
    %v5951 = vand.u32 %v5950, 4294901760
    %v5952 = vsub.f32 %v5950, %v5951
    %v5953 = vand.u32 %v5952, 4294901760
    %5954 = vmatpush1.msra.mxu0 %v5953
    %5955 = vmatprep.subr.mxu0 0.0
    %v5956 = vand.u32 %v5823, 4294901760
    %v5957 = vsub.f32 %v5823, %v5956
    %v5958 = vand.u32 %v5957, 4294901760
    %v5959 = vsub.f32 %v5957, %v5958
    %v5960 = vand.u32 %v5959, 4294901760
    %5961 = vmatpush1.msra.mxu0 %v5960
    %5962 = vmatprep.subr.mxu0 0.0
    %v5963 = vand.u32 %v5824, 4294901760
    %v5964 = vsub.f32 %v5824, %v5963
    %v5965 = vand.u32 %v5964, 4294901760
    %v5966 = vsub.f32 %v5964, %v5965
    %v5967 = vand.u32 %v5966, 4294901760
    %5968 = vmatpush1.msra.mxu0 %v5967
    %5969 = vmatprep.subr.mxu0 0.0
    %v5970 = vand.u32 %v5825, 4294901760
    %v5971 = vsub.f32 %v5825, %v5970
    %v5972 = vand.u32 %v5971, 4294901760
    %v5973 = vsub.f32 %v5971, %v5972
    %v5974 = vand.u32 %v5973, 4294901760
    %5975 = vmatpush1.msra.mxu0 %v5974
    %5976 = vmatprep.subr.mxu0 0.0
    %v5977 = vand.u32 %v5826, 4294901760
    %v5978 = vsub.f32 %v5826, %v5977
    %v5979 = vand.u32 %v5978, 4294901760
    %v5980 = vsub.f32 %v5978, %v5979
    %v5981 = vand.u32 %v5980, 4294901760
    %5982 = vmatpush1.msra.mxu0 %v5981
    %5983 = vmatprep.subr.mxu0 0.0
    %v5984 = vand.u32 %v5827, 4294901760
    %v5985 = vsub.f32 %v5827, %v5984
    %v5986 = vand.u32 %v5985, 4294901760
    %v5987 = vsub.f32 %v5985, %v5986
    %v5988 = vand.u32 %v5987, 4294901760
    %5989 = vmatpush1.msra.mxu0 %v5988
    %5990 = vmatprep.subr.mxu0 0.0
    %5991 = vmatpush1.msra.mxu0 0.0
    %5992 = vmatprep.subr.mxu0 0.0
    %5993 = vmatpush1.msra.mxu0 0.0
    %5994 = vmatprep.subr.mxu0 0.0
    %5995 = vmatpush1.msra.mxu0 0.0
    %5996 = vmatprep.subr.mxu0 0.0
    %5997 = vmatpush1.msra.mxu0 0.0
    %5998 = vmatprep.subr.mxu0 0.0
    %5999 = vmatpush1.msra.mxu0 0.0
    %6000 = vmatprep.subr.mxu0 0.0
    %6001 = vmatpush1.msra.mxu0 0.0
    %6002 = vmatprep.subr.mxu0 0.0
    %6003 = vmatpush1.msra.mxu0 0.0
    %6004 = vmatprep.subr.mxu0 0.0
    %6005 = vmatpush1.msra.mxu0 0.0
    %6006 = vmatprep.subr.mxu0 0.0
    %6007 = vmatpush1.msra.mxu0 0.0
    %6008 = vmatprep.subr.mxu0 0.0
    %6009 = vmatpush1.msra.mxu0 0.0
    %6010 = vmatprep.subr.mxu0 0.0
    %6011 = vmatpush1.msra.mxu0 0.0
    %6012 = vmatprep.subr.mxu0 0.0
    %6013 = vmatpush1.msra.mxu0 0.0
    %6014 = vmatprep.subr.mxu0 0.0
    %6015 = vmatpush1.msra.mxu0 0.0
    %6016 = vmatprep.subr.mxu0 0.0
    %6017 = vmatpush1.msra.mxu0 0.0
    %6018 = vmatprep.subr.mxu0 0.0
    %6019 = vmatpush1.msra.mxu0 0.0
    %6020 = vmatprep.subr.mxu0 0.0
    %6021 = vmatpush1.msra.mxu0 0.0
    %6022 = vmatprep.subr.mxu0 0.0
    %6023 = vmatpush1.msra.mxu0 0.0
    %6024 = vmatprep.subr.mxu0 0.0
    %6025 = vmatpush1.msra.mxu0 0.0
    %6026 = vmatprep.subr.mxu0 0.0
    %6027 = vmatpush1.msra.mxu0 0.0
    %6028 = vmatprep.subr.mxu0 0.0
    %6029 = vmatpush1.msra.mxu0 0.0
    %6030 = vmatprep.subr.mxu0 0.0
    %6031 = vmatpush1.msra.mxu0 0.0
    %6032 = vmatprep.subr.mxu0 0.0
    %6033 = vmatpush1.msra.mxu0 0.0
    %6034 = vmatprep.subr.mxu0 0.0
    %6035 = vmatpush1.msra.mxu0 0.0
    %6036 = vmatprep.subr.mxu0 0.0
    %6037 = vmatpush1.msra.mxu0 0.0
    %6038 = vmatprep.mubr.f32.mxu0 0.0
    %v6039 = vand.u32 %v5836, 4294901760
    %6040 = vmatmul.mubr.f32.gmra.mrb[0].mxu0 %v6039
    %v6041 = vpop.f32.mrb[0].mxu0
    %v6042 = vadd.f32 %v5921, %v6041
    %v6043 = vpop.f32.mrb[0].mxu0
    %6044 = vmatprep.mubr.f32.mxu0 0.0
    %v6045 = vand.u32 %v5839, 4294901760
    %6046 = vmatmul.mubr.f32.gmra.mrb[0].mxu0 %v6045
    %v6047 = vpop.f32.mrb[0].mxu0
    %v6048 = vadd.f32 %v5931, %v6047
    %v6049 = vpop.f32.mrb[0].mxu0
    %6050 = vdwg.mxu0
    %6051 = vmatprep.subr.mxu0 0.0
    %v6052 = vand.u32 %v5820, 4294901760
    %v6053 = vsub.f32 %v5820, %v6052
    %6054 = vmatpush1.msra.mxu0 %v6053
    %6055 = vmatprep.subr.mxu0 0.0
    %v6056 = vand.u32 %v5821, 4294901760
    %v6057 = vsub.f32 %v5821, %v6056
    %6058 = vmatpush1.msra.mxu0 %v6057
    %6059 = vmatprep.subr.mxu0 0.0
    %v6060 = vand.u32 %v5822, 4294901760
    %v6061 = vsub.f32 %v5822, %v6060
    %6062 = vmatpush1.msra.mxu0 %v6061
    %6063 = vmatprep.subr.mxu0 0.0
    %v6064 = vand.u32 %v5823, 4294901760
    %v6065 = vsub.f32 %v5823, %v6064
    %6066 = vmatpush1.msra.mxu0 %v6065
    %6067 = vmatprep.subr.mxu0 0.0
    %v6068 = vand.u32 %v5824, 4294901760
    %v6069 = vsub.f32 %v5824, %v6068
    %6070 = vmatpush1.msra.mxu0 %v6069
    %6071 = vmatprep.subr.mxu0 0.0
    %v6072 = vand.u32 %v5825, 4294901760
    %v6073 = vsub.f32 %v5825, %v6072
    %6074 = vmatpush1.msra.mxu0 %v6073
    %6075 = vmatprep.subr.mxu0 0.0
    %v6076 = vand.u32 %v5826, 4294901760
    %v6077 = vsub.f32 %v5826, %v6076
    %6078 = vmatpush1.msra.mxu0 %v6077
    %6079 = vmatprep.subr.mxu0 0.0
    %v6080 = vand.u32 %v5827, 4294901760
    %v6081 = vsub.f32 %v5827, %v6080
    %6082 = vmatpush1.msra.mxu0 %v6081
    %6083 = vmatprep.subr.mxu0 0.0
    %6084 = vmatpush1.msra.mxu0 0.0
    %6085 = vmatprep.subr.mxu0 0.0
    %6086 = vmatpush1.msra.mxu0 0.0
    %6087 = vmatprep.subr.mxu0 0.0
    %6088 = vmatpush1.msra.mxu0 0.0
    %6089 = vmatprep.subr.mxu0 0.0
    %6090 = vmatpush1.msra.mxu0 0.0
    %6091 = vmatprep.subr.mxu0 0.0
    %6092 = vmatpush1.msra.mxu0 0.0
    %6093 = vmatprep.subr.mxu0 0.0
    %6094 = vmatpush1.msra.mxu0 0.0
    %6095 = vmatprep.subr.mxu0 0.0
    %6096 = vmatpush1.msra.mxu0 0.0
    %6097 = vmatprep.subr.mxu0 0.0
    %6098 = vmatpush1.msra.mxu0 0.0
    %6099 = vmatprep.subr.mxu0 0.0
    %6100 = vmatpush1.msra.mxu0 0.0
    %6101 = vmatprep.subr.mxu0 0.0
    %6102 = vmatpush1.msra.mxu0 0.0
    %6103 = vmatprep.subr.mxu0 0.0
    %6104 = vmatpush1.msra.mxu0 0.0
    %6105 = vmatprep.subr.mxu0 0.0
    %6106 = vmatpush1.msra.mxu0 0.0
    %6107 = vmatprep.subr.mxu0 0.0
    %6108 = vmatpush1.msra.mxu0 0.0
    %6109 = vmatprep.subr.mxu0 0.0
    %6110 = vmatpush1.msra.mxu0 0.0
    %6111 = vmatprep.subr.mxu0 0.0
    %6112 = vmatpush1.msra.mxu0 0.0
    %6113 = vmatprep.subr.mxu0 0.0
    %6114 = vmatpush1.msra.mxu0 0.0
    %6115 = vmatprep.subr.mxu0 0.0
    %6116 = vmatpush1.msra.mxu0 0.0
    %6117 = vmatprep.subr.mxu0 0.0
    %6118 = vmatpush1.msra.mxu0 0.0
    %6119 = vmatprep.subr.mxu0 0.0
    %6120 = vmatpush1.msra.mxu0 0.0
    %6121 = vmatprep.subr.mxu0 0.0
    %6122 = vmatpush1.msra.mxu0 0.0
    %6123 = vmatprep.subr.mxu0 0.0
    %6124 = vmatpush1.msra.mxu0 0.0
    %6125 = vmatprep.subr.mxu0 0.0
    %6126 = vmatpush1.msra.mxu0 0.0
    %6127 = vmatprep.subr.mxu0 0.0
    %6128 = vmatpush1.msra.mxu0 0.0
    %6129 = vmatprep.subr.mxu0 0.0
    %6130 = vmatpush1.msra.mxu0 0.0
    %6131 = vmatprep.mubr.f32.mxu0 0.0
    %v6132 = vand.u32 %v5836, 4294901760
    %v6133 = vsub.f32 %v5836, %v6132
    %6134 = vmatmul.mubr.f32.gmra.mrb[0].mxu0 %v6133
    %v6135 = vpop.f32.mrb[0].mxu0
    %v6136 = vadd.f32 %v6042, %v6135
    %v6137 = vpop.f32.mrb[0].mxu0
    %6138 = vmatprep.mubr.f32.mxu0 0.0
    %v6139 = vand.u32 %v5839, 4294901760
    %v6140 = vsub.f32 %v5839, %v6139
    %6141 = vmatmul.mubr.f32.gmra.mrb[0].mxu0 %v6140
    %v6142 = vpop.f32.mrb[0].mxu0
    %v6143 = vadd.f32 %v6048, %v6142
    %v6144 = vpop.f32.mrb[0].mxu0
    %6145 = vdwg.mxu0
    %6146 = vmatprep.subr.mxu0 0.0
    %v6147 = vand.u32 %v5820, 4294901760
    %6148 = vmatpush1.msra.mxu0 %v6147
    %6149 = vmatprep.subr.mxu0 0.0
    %v6150 = vand.u32 %v5821, 4294901760
    %6151 = vmatpush1.msra.mxu0 %v6150
    %6152 = vmatprep.subr.mxu0 0.0
    %v6153 = vand.u32 %v5822, 4294901760
    %6154 = vmatpush1.msra.mxu0 %v6153
    %6155 = vmatprep.subr.mxu0 0.0
    %v6156 = vand.u32 %v5823, 4294901760
    %6157 = vmatpush1.msra.mxu0 %v6156
    %6158 = vmatprep.subr.mxu0 0.0
    %v6159 = vand.u32 %v5824, 4294901760
    %6160 = vmatpush1.msra.mxu0 %v6159
    %6161 = vmatprep.subr.mxu0 0.0
    %v6162 = vand.u32 %v5825, 4294901760
    %6163 = vmatpush1.msra.mxu0 %v6162
    %6164 = vmatprep.subr.mxu0 0.0
    %v6165 = vand.u32 %v5826, 4294901760
    %6166 = vmatpush1.msra.mxu0 %v6165
    %6167 = vmatprep.subr.mxu0 0.0
    %v6168 = vand.u32 %v5827, 4294901760
    %6169 = vmatpush1.msra.mxu0 %v6168
    %6170 = vmatprep.subr.mxu0 0.0
    %6171 = vmatpush1.msra.mxu0 0.0
    %6172 = vmatprep.subr.mxu0 0.0
    %6173 = vmatpush1.msra.mxu0 0.0
    %6174 = vmatprep.subr.mxu0 0.0
    %6175 = vmatpush1.msra.mxu0 0.0
    %6176 = vmatprep.subr.mxu0 0.0
    %6177 = vmatpush1.msra.mxu0 0.0
    %6178 = vmatprep.subr.mxu0 0.0
    %6179 = vmatpush1.msra.mxu0 0.0
    %6180 = vmatprep.subr.mxu0 0.0
    %6181 = vmatpush1.msra.mxu0 0.0
    %6182 = vmatprep.subr.mxu0 0.0
    %6183 = vmatpush1.msra.mxu0 0.0
    %6184 = vmatprep.subr.mxu0 0.0
    %6185 = vmatpush1.msra.mxu0 0.0
    %6186 = vmatprep.subr.mxu0 0.0
    %6187 = vmatpush1.msra.mxu0 0.0
    %6188 = vmatprep.subr.mxu0 0.0
    %6189 = vmatpush1.msra.mxu0 0.0
    %6190 = vmatprep.subr.mxu0 0.0
    %6191 = vmatpush1.msra.mxu0 0.0
    %6192 = vmatprep.subr.mxu0 0.0
    %6193 = vmatpush1.msra.mxu0 0.0
    %6194 = vmatprep.subr.mxu0 0.0
    %6195 = vmatpush1.msra.mxu0 0.0
    %6196 = vmatprep.subr.mxu0 0.0
    %6197 = vmatpush1.msra.mxu0 0.0
    %6198 = vmatprep.subr.mxu0 0.0
    %6199 = vmatpush1.msra.mxu0 0.0
    %6200 = vmatprep.subr.mxu0 0.0
    %6201 = vmatpush1.msra.mxu0 0.0
    %6202 = vmatprep.subr.mxu0 0.0
    %6203 = vmatpush1.msra.mxu0 0.0
    %6204 = vmatprep.subr.mxu0 0.0
    %6205 = vmatpush1.msra.mxu0 0.0
    %6206 = vmatprep.subr.mxu0 0.0
    %6207 = vmatpush1.msra.mxu0 0.0
    %6208 = vmatprep.subr.mxu0 0.0
    %6209 = vmatpush1.msra.mxu0 0.0
    %6210 = vmatprep.subr.mxu0 0.0
    %6211 = vmatpush1.msra.mxu0 0.0
    %6212 = vmatprep.subr.mxu0 0.0
    %6213 = vmatpush1.msra.mxu0 0.0
    %6214 = vmatprep.subr.mxu0 0.0
    %6215 = vmatpush1.msra.mxu0 0.0
    %6216 = vmatprep.subr.mxu0 0.0
    %6217 = vmatpush1.msra.mxu0 0.0
    %6218 = vmatprep.mubr.f32.mxu0 0.0
    %v6219 = vand.u32 %v5836, 4294901760
    %v6220 = vsub.f32 %v5836, %v6219
    %v6221 = vand.u32 %v6220, 4294901760
    %6222 = vmatmul.mubr.f32.gmra.mrb[0].mxu0 %v6221
    %v6223 = vpop.f32.mrb[0].mxu0
    %v6224 = vadd.f32 %v6136, %v6223
    %v6225 = vpop.f32.mrb[0].mxu0
    %6226 = vmatprep.mubr.f32.mxu0 0.0
    %v6227 = vand.u32 %v5839, 4294901760
    %v6228 = vsub.f32 %v5839, %v6227
    %v6229 = vand.u32 %v6228, 4294901760
    %6230 = vmatmul.mubr.f32.gmra.mrb[0].mxu0 %v6229
    %v6231 = vpop.f32.mrb[0].mxu0
    %v6232 = vadd.f32 %v6143, %v6231
    %v6233 = vpop.f32.mrb[0].mxu0
    %6234 = vdwg.mxu0
    %6235 = vmatprep.subr.mxu0 0.0
    %v6236 = vand.u32 %v5820, 4294901760
    %v6237 = vsub.f32 %v5820, %v6236
    %v6238 = vand.u32 %v6237, 4294901760
    %6239 = vmatpush1.msra.mxu0 %v6238
    %6240 = vmatprep.subr.mxu0 0.0
    %v6241 = vand.u32 %v5821, 4294901760
    %v6242 = vsub.f32 %v5821, %v6241
    %v6243 = vand.u32 %v6242, 4294901760
    %6244 = vmatpush1.msra.mxu0 %v6243
    %6245 = vmatprep.subr.mxu0 0.0
    %v6246 = vand.u32 %v5822, 4294901760
    %v6247 = vsub.f32 %v5822, %v6246
    %v6248 = vand.u32 %v6247, 4294901760
    %6249 = vmatpush1.msra.mxu0 %v6248
    %6250 = vmatprep.subr.mxu0 0.0
    %v6251 = vand.u32 %v5823, 4294901760
    %v6252 = vsub.f32 %v5823, %v6251
    %v6253 = vand.u32 %v6252, 4294901760
    %6254 = vmatpush1.msra.mxu0 %v6253
    %6255 = vmatprep.subr.mxu0 0.0
    %v6256 = vand.u32 %v5824, 4294901760
    %v6257 = vsub.f32 %v5824, %v6256
    %v6258 = vand.u32 %v6257, 4294901760
    %6259 = vmatpush1.msra.mxu0 %v6258
    %6260 = vmatprep.subr.mxu0 0.0
    %v6261 = vand.u32 %v5825, 4294901760
    %v6262 = vsub.f32 %v5825, %v6261
    %v6263 = vand.u32 %v6262, 4294901760
    %6264 = vmatpush1.msra.mxu0 %v6263
    %6265 = vmatprep.subr.mxu0 0.0
    %v6266 = vand.u32 %v5826, 4294901760
    %v6267 = vsub.f32 %v5826, %v6266
    %v6268 = vand.u32 %v6267, 4294901760
    %6269 = vmatpush1.msra.mxu0 %v6268
    %6270 = vmatprep.subr.mxu0 0.0
    %v6271 = vand.u32 %v5827, 4294901760
    %v6272 = vsub.f32 %v5827, %v6271
    %v6273 = vand.u32 %v6272, 4294901760
    %6274 = vmatpush1.msra.mxu0 %v6273
    %6275 = vmatprep.subr.mxu0 0.0
    %6276 = vmatpush1.msra.mxu0 0.0
    %6277 = vmatprep.subr.mxu0 0.0
    %6278 = vmatpush1.msra.mxu0 0.0
    %6279 = vmatprep.subr.mxu0 0.0
    %6280 = vmatpush1.msra.mxu0 0.0
    %6281 = vmatprep.subr.mxu0 0.0
    %6282 = vmatpush1.msra.mxu0 0.0
    %6283 = vmatprep.subr.mxu0 0.0
    %6284 = vmatpush1.msra.mxu0 0.0
    %6285 = vmatprep.subr.mxu0 0.0
    %6286 = vmatpush1.msra.mxu0 0.0
    %6287 = vmatprep.subr.mxu0 0.0
    %6288 = vmatpush1.msra.mxu0 0.0
    %6289 = vmatprep.subr.mxu0 0.0
    %6290 = vmatpush1.msra.mxu0 0.0
    %6291 = vmatprep.subr.mxu0 0.0
    %6292 = vmatpush1.msra.mxu0 0.0
    %6293 = vmatprep.subr.mxu0 0.0
    %6294 = vmatpush1.msra.mxu0 0.0
    %6295 = vmatprep.subr.mxu0 0.0
    %6296 = vmatpush1.msra.mxu0 0.0
    %6297 = vmatprep.subr.mxu0 0.0
    %6298 = vmatpush1.msra.mxu0 0.0
    %6299 = vmatprep.subr.mxu0 0.0
    %6300 = vmatpush1.msra.mxu0 0.0
    %6301 = vmatprep.subr.mxu0 0.0
    %6302 = vmatpush1.msra.mxu0 0.0
    %6303 = vmatprep.subr.mxu0 0.0
    %6304 = vmatpush1.msra.mxu0 0.0
    %6305 = vmatprep.subr.mxu0 0.0
    %6306 = vmatpush1.msra.mxu0 0.0
    %6307 = vmatprep.subr.mxu0 0.0
    %6308 = vmatpush1.msra.mxu0 0.0
    %6309 = vmatprep.subr.mxu0 0.0
    %6310 = vmatpush1.msra.mxu0 0.0
    %6311 = vmatprep.subr.mxu0 0.0
    %6312 = vmatpush1.msra.mxu0 0.0
    %6313 = vmatprep.subr.mxu0 0.0
    %6314 = vmatpush1.msra.mxu0 0.0
    %6315 = vmatprep.subr.mxu0 0.0
    %6316 = vmatpush1.msra.mxu0 0.0
    %6317 = vmatprep.subr.mxu0 0.0
    %6318 = vmatpush1.msra.mxu0 0.0
    %6319 = vmatprep.subr.mxu0 0.0
    %6320 = vmatpush1.msra.mxu0 0.0
    %6321 = vmatprep.subr.mxu0 0.0
    %6322 = vmatpush1.msra.mxu0 0.0
    %6323 = vmatprep.mubr.f32.mxu0 0.0
    %v6324 = vand.u32 %v5836, 4294901760
    %6325 = vmatmul.mubr.f32.gmra.mrb[0].mxu0 %v6324
    %v6326 = vpop.f32.mrb[0].mxu0
    %v6327 = vadd.f32 %v6224, %v6326
    %v6328 = vpop.f32.mrb[0].mxu0
    %6329 = vmatprep.mubr.f32.mxu0 0.0
    %v6330 = vand.u32 %v5839, 4294901760
    %6331 = vmatmul.mubr.f32.gmra.mrb[0].mxu0 %v6330
    %v6332 = vpop.f32.mrb[0].mxu0
    %v6333 = vadd.f32 %v6232, %v6332
    %v6334 = vpop.f32.mrb[0].mxu0
    %6335 = vdwg.mxu0
    %6336 = vmatprep.subr.mxu0 0.0
    %v6337 = vand.u32 %v5820, 4294901760
    %6338 = vmatpush1.msra.mxu0 %v6337
    %6339 = vmatprep.subr.mxu0 0.0
    %v6340 = vand.u32 %v5821, 4294901760
    %6341 = vmatpush1.msra.mxu0 %v6340
    %6342 = vmatprep.subr.mxu0 0.0
    %v6343 = vand.u32 %v5822, 4294901760
    %6344 = vmatpush1.msra.mxu0 %v6343
    %6345 = vmatprep.subr.mxu0 0.0
    %v6346 = vand.u32 %v5823, 4294901760
    %6347 = vmatpush1.msra.mxu0 %v6346
    %6348 = vmatprep.subr.mxu0 0.0
    %v6349 = vand.u32 %v5824, 4294901760
    %6350 = vmatpush1.msra.mxu0 %v6349
    %6351 = vmatprep.subr.mxu0 0.0
    %v6352 = vand.u32 %v5825, 4294901760
    %6353 = vmatpush1.msra.mxu0 %v6352
    %6354 = vmatprep.subr.mxu0 0.0
    %v6355 = vand.u32 %v5826, 4294901760
    %6356 = vmatpush1.msra.mxu0 %v6355
    %6357 = vmatprep.subr.mxu0 0.0
    %v6358 = vand.u32 %v5827, 4294901760
    %6359 = vmatpush1.msra.mxu0 %v6358
    %6360 = vmatprep.subr.mxu0 0.0
    %6361 = vmatpush1.msra.mxu0 0.0
    %6362 = vmatprep.subr.mxu0 0.0
    %6363 = vmatpush1.msra.mxu0 0.0
    %6364 = vmatprep.subr.mxu0 0.0
    %6365 = vmatpush1.msra.mxu0 0.0
    %6366 = vmatprep.subr.mxu0 0.0
    %6367 = vmatpush1.msra.mxu0 0.0
    %6368 = vmatprep.subr.mxu0 0.0
    %6369 = vmatpush1.msra.mxu0 0.0
    %6370 = vmatprep.subr.mxu0 0.0
    %6371 = vmatpush1.msra.mxu0 0.0
    %6372 = vmatprep.subr.mxu0 0.0
    %6373 = vmatpush1.msra.mxu0 0.0
    %6374 = vmatprep.subr.mxu0 0.0
    %6375 = vmatpush1.msra.mxu0 0.0
    %6376 = vmatprep.subr.mxu0 0.0
    %6377 = vmatpush1.msra.mxu0 0.0
    %6378 = vmatprep.subr.mxu0 0.0
    %6379 = vmatpush1.msra.mxu0 0.0
    %6380 = vmatprep.subr.mxu0 0.0
    %6381 = vmatpush1.msra.mxu0 0.0
    %6382 = vmatprep.subr.mxu0 0.0
    %6383 = vmatpush1.msra.mxu0 0.0
    %6384 = vmatprep.subr.mxu0 0.0
    %6385 = vmatpush1.msra.mxu0 0.0
    %6386 = vmatprep.subr.mxu0 0.0
    %6387 = vmatpush1.msra.mxu0 0.0
    %6388 = vmatprep.subr.mxu0 0.0
    %6389 = vmatpush1.msra.mxu0 0.0
    %6390 = vmatprep.subr.mxu0 0.0
    %6391 = vmatpush1.msra.mxu0 0.0
    %6392 = vmatprep.subr.mxu0 0.0
    %6393 = vmatpush1.msra.mxu0 0.0
    %6394 = vmatprep.subr.mxu0 0.0
    %6395 = vmatpush1.msra.mxu0 0.0
    %6396 = vmatprep.subr.mxu0 0.0
    %6397 = vmatpush1.msra.mxu0 0.0
    %6398 = vmatprep.subr.mxu0 0.0
    %6399 = vmatpush1.msra.mxu0 0.0
    %6400 = vmatprep.subr.mxu0 0.0
    %6401 = vmatpush1.msra.mxu0 0.0
    %6402 = vmatprep.subr.mxu0 0.0
    %6403 = vmatpush1.msra.mxu0 0.0
    %6404 = vmatprep.subr.mxu0 0.0
    %6405 = vmatpush1.msra.mxu0 0.0
    %6406 = vmatprep.subr.mxu0 0.0
    %6407 = vmatpush1.msra.mxu0 0.0
    %6408 = vmatprep.mubr.f32.mxu0 0.0
    %v6409 = vand.u32 %v5836, 4294901760
    %6410 = vmatmul.mubr.f32.gmra.mrb[0].mxu0 %v6409
    %v6411 = vpop.f32.mrb[0].mxu0
    %v6412 = vadd.f32 %v6327, %v6411
    %v6413 = vpop.f32.mrb[0].mxu0
    %6414 = vmatprep.mubr.f32.mxu0 0.0
    %v6415 = vand.u32 %v5839, 4294901760
    %6416 = vmatmul.mubr.f32.gmra.mrb[0].mxu0 %v6415
    %v6417 = vpop.f32.mrb[0].mxu0
    %v6418 = vadd.f32 %v6333, %v6417
    %v6419 = vpop.f32.mrb[0].mxu0
    %6420 = vdwg.mxu0
    %v6421 = vld [vmem:[#allocation3 + $0xa8] sm:$0xff]
    %v6422 = vld [vmem:[#allocation3 + $0xb0] sm:$0xff]
    %v6423 = vld [vmem:[#allocation3 + $0x108] sm:$0x1]
    %v6424 = vlaneseq
    %v6425 = vshrl.u32 %v6424, 7
    %v6426 = vsub.s32 0, %v6425
    %v6427 = vrot.slane %v6423, %v6426
    %v6429 = vsel %vm35, %v6412, 0
    %v6432 = vsel %vm35, %v6418, 0
    %6434 = vmatprep.subr.mxu0 0.0
    %v6435 = vand.u32 %v6421, 4294901760
    %6436 = vmatpush1.msra.mxu0 %v6435
    %6437 = vmatprep.subr.mxu0 0.0
    %v6438 = vand.u32 %v6422, 4294901760
    %6439 = vmatpush1.msra.mxu0 %v6438
    %6440 = vmatprep.subr.mxu0 0.0
    %6441 = vmatpush1.msra.mxu0 0.0
    %6442 = vmatprep.subr.mxu0 0.0
    %6443 = vmatpush1.msra.mxu0 0.0
    %6444 = vmatprep.subr.mxu0 0.0
    %6445 = vmatpush1.msra.mxu0 0.0
    %6446 = vmatprep.subr.mxu0 0.0
    %6447 = vmatpush1.msra.mxu0 0.0
    %6448 = vmatprep.subr.mxu0 0.0
    %6449 = vmatpush1.msra.mxu0 0.0
    %6450 = vmatprep.subr.mxu0 0.0
    %6451 = vmatpush1.msra.mxu0 0.0
    %6452 = vmatprep.subr.mxu0 0.0
    %6453 = vmatpush1.msra.mxu0 0.0
    %6454 = vmatprep.subr.mxu0 0.0
    %6455 = vmatpush1.msra.mxu0 0.0
    %6456 = vmatprep.subr.mxu0 0.0
    %6457 = vmatpush1.msra.mxu0 0.0
    %6458 = vmatprep.subr.mxu0 0.0
    %6459 = vmatpush1.msra.mxu0 0.0
    %6460 = vmatprep.subr.mxu0 0.0
    %6461 = vmatpush1.msra.mxu0 0.0
    %6462 = vmatprep.subr.mxu0 0.0
    %6463 = vmatpush1.msra.mxu0 0.0
    %6464 = vmatprep.subr.mxu0 0.0
    %6465 = vmatpush1.msra.mxu0 0.0
    %6466 = vmatprep.subr.mxu0 0.0
    %6467 = vmatpush1.msra.mxu0 0.0
    %6468 = vmatprep.subr.mxu0 0.0
    %6469 = vmatpush1.msra.mxu0 0.0
    %6470 = vmatprep.subr.mxu0 0.0
    %6471 = vmatpush1.msra.mxu0 0.0
    %6472 = vmatprep.subr.mxu0 0.0
    %6473 = vmatpush1.msra.mxu0 0.0
    %6474 = vmatprep.subr.mxu0 0.0
    %6475 = vmatpush1.msra.mxu0 0.0
    %6476 = vmatprep.subr.mxu0 0.0
    %6477 = vmatpush1.msra.mxu0 0.0
    %6478 = vmatprep.subr.mxu0 0.0
    %6479 = vmatpush1.msra.mxu0 0.0
    %6480 = vmatprep.subr.mxu0 0.0
    %6481 = vmatpush1.msra.mxu0 0.0
    %6482 = vmatprep.subr.mxu0 0.0
    %6483 = vmatpush1.msra.mxu0 0.0
    %6484 = vmatprep.subr.mxu0 0.0
    %6485 = vmatpush1.msra.mxu0 0.0
    %6486 = vmatprep.subr.mxu0 0.0
    %6487 = vmatpush1.msra.mxu0 0.0
    %6488 = vmatprep.subr.mxu0 0.0
    %6489 = vmatpush1.msra.mxu0 0.0
    %6490 = vmatprep.subr.mxu0 0.0
    %6491 = vmatpush1.msra.mxu0 0.0
    %6492 = vmatprep.subr.mxu0 0.0
    %6493 = vmatpush1.msra.mxu0 0.0
    %6494 = vmatprep.subr.mxu0 0.0
    %6495 = vmatpush1.msra.mxu0 0.0
    %6496 = vmatprep.subr.mxu0 0.0
    %6497 = vmatpush1.msra.mxu0 0.0
    %6498 = vmatprep.subr.mxu0 0.0
    %6499 = vmatpush1.msra.mxu0 0.0
    %6500 = vmatprep.mubr.f32.mxu0 0.0
    %v6501 = vand.u32 %v6429, 4294901760
    %v6502 = vsub.f32 %v6429, %v6501
    %v6503 = vand.u32 %v6502, 4294901760
    %v6504 = vsub.f32 %v6502, %v6503
    %v6505 = vand.u32 %v6504, 4294901760
    %6506 = vmatmul.mubr.f32.gmra.mrb[0].mxu0 %v6505
    %v6507 = vpop.f32.mrb[0].mxu0
    %v6508 = vadd.f32 %v6427, %v6507
    %v6509 = vpop.f32.mrb[0].mxu0
    %6510 = vmatprep.mubr.f32.mxu0 0.0
    %v6511 = vand.u32 %v6432, 4294901760
    %v6512 = vsub.f32 %v6432, %v6511
    %v6513 = vand.u32 %v6512, 4294901760
    %v6514 = vsub.f32 %v6512, %v6513
    %v6515 = vand.u32 %v6514, 4294901760
    %6516 = vmatmul.mubr.f32.gmra.mrb[0].mxu0 %v6515
    %v6517 = vpop.f32.mrb[0].mxu0
    %v6518 = vadd.f32 %v6427, %v6517
    %v6519 = vpop.f32.mrb[0].mxu0
    %6520 = vdwg.mxu0
    %6521 = vmatprep.subr.mxu0 0.0
    %v6522 = vand.u32 %v6421, 4294901760
    %v6523 = vsub.f32 %v6421, %v6522
    %v6524 = vand.u32 %v6523, 4294901760
    %v6525 = vsub.f32 %v6523, %v6524
    %v6526 = vand.u32 %v6525, 4294901760
    %6527 = vmatpush1.msra.mxu0 %v6526
    %6528 = vmatprep.subr.mxu0 0.0
    %v6529 = vand.u32 %v6422, 4294901760
    %v6530 = vsub.f32 %v6422, %v6529
    %v6531 = vand.u32 %v6530, 4294901760
    %v6532 = vsub.f32 %v6530, %v6531
    %v6533 = vand.u32 %v6532, 4294901760
    %6534 = vmatpush1.msra.mxu0 %v6533
    %6535 = vmatprep.subr.mxu0 0.0
    %6536 = vmatpush1.msra.mxu0 0.0
    %6537 = vmatprep.subr.mxu0 0.0
    %6538 = vmatpush1.msra.mxu0 0.0
    %6539 = vmatprep.subr.mxu0 0.0
    %6540 = vmatpush1.msra.mxu0 0.0
    %6541 = vmatprep.subr.mxu0 0.0
    %6542 = vmatpush1.msra.mxu0 0.0
    %6543 = vmatprep.subr.mxu0 0.0
    %6544 = vmatpush1.msra.mxu0 0.0
    %6545 = vmatprep.subr.mxu0 0.0
    %6546 = vmatpush1.msra.mxu0 0.0
    %6547 = vmatprep.subr.mxu0 0.0
    %6548 = vmatpush1.msra.mxu0 0.0
    %6549 = vmatprep.subr.mxu0 0.0
    %6550 = vmatpush1.msra.mxu0 0.0
    %6551 = vmatprep.subr.mxu0 0.0
    %6552 = vmatpush1.msra.mxu0 0.0
    %6553 = vmatprep.subr.mxu0 0.0
    %6554 = vmatpush1.msra.mxu0 0.0
    %6555 = vmatprep.subr.mxu0 0.0
    %6556 = vmatpush1.msra.mxu0 0.0
    %6557 = vmatprep.subr.mxu0 0.0
    %6558 = vmatpush1.msra.mxu0 0.0
    %6559 = vmatprep.subr.mxu0 0.0
    %6560 = vmatpush1.msra.mxu0 0.0
    %6561 = vmatprep.subr.mxu0 0.0
    %6562 = vmatpush1.msra.mxu0 0.0
    %6563 = vmatprep.subr.mxu0 0.0
    %6564 = vmatpush1.msra.mxu0 0.0
    %6565 = vmatprep.subr.mxu0 0.0
    %6566 = vmatpush1.msra.mxu0 0.0
    %6567 = vmatprep.subr.mxu0 0.0
    %6568 = vmatpush1.msra.mxu0 0.0
    %6569 = vmatprep.subr.mxu0 0.0
    %6570 = vmatpush1.msra.mxu0 0.0
    %6571 = vmatprep.subr.mxu0 0.0
    %6572 = vmatpush1.msra.mxu0 0.0
    %6573 = vmatprep.subr.mxu0 0.0
    %6574 = vmatpush1.msra.mxu0 0.0
    %6575 = vmatprep.subr.mxu0 0.0
    %6576 = vmatpush1.msra.mxu0 0.0
    %6577 = vmatprep.subr.mxu0 0.0
    %6578 = vmatpush1.msra.mxu0 0.0
    %6579 = vmatprep.subr.mxu0 0.0
    %6580 = vmatpush1.msra.mxu0 0.0
    %6581 = vmatprep.subr.mxu0 0.0
    %6582 = vmatpush1.msra.mxu0 0.0
    %6583 = vmatprep.subr.mxu0 0.0
    %6584 = vmatpush1.msra.mxu0 0.0
    %6585 = vmatprep.subr.mxu0 0.0
    %6586 = vmatpush1.msra.mxu0 0.0
    %6587 = vmatprep.subr.mxu0 0.0
    %6588 = vmatpush1.msra.mxu0 0.0
    %6589 = vmatprep.subr.mxu0 0.0
    %6590 = vmatpush1.msra.mxu0 0.0
    %6591 = vmatprep.subr.mxu0 0.0
    %6592 = vmatpush1.msra.mxu0 0.0
    %6593 = vmatprep.subr.mxu0 0.0
    %6594 = vmatpush1.msra.mxu0 0.0
    %6595 = vmatprep.mubr.f32.mxu0 0.0
    %v6596 = vand.u32 %v6429, 4294901760
    %6597 = vmatmul.mubr.f32.gmra.mrb[0].mxu0 %v6596
    %v6598 = vpop.f32.mrb[0].mxu0
    %v6599 = vadd.f32 %v6508, %v6598
    %v6600 = vpop.f32.mrb[0].mxu0
    %6601 = vmatprep.mubr.f32.mxu0 0.0
    %v6602 = vand.u32 %v6432, 4294901760
    %6603 = vmatmul.mubr.f32.gmra.mrb[0].mxu0 %v6602
    %v6604 = vpop.f32.mrb[0].mxu0
    %v6605 = vadd.f32 %v6518, %v6604
    %v6606 = vpop.f32.mrb[0].mxu0
    %6607 = vdwg.mxu0
    %6608 = vmatprep.subr.mxu0 0.0
    %v6609 = vand.u32 %v6421, 4294901760
    %v6610 = vsub.f32 %v6421, %v6609
    %6611 = vmatpush1.msra.mxu0 %v6610
    %6612 = vmatprep.subr.mxu0 0.0
    %v6613 = vand.u32 %v6422, 4294901760
    %v6614 = vsub.f32 %v6422, %v6613
    %6615 = vmatpush1.msra.mxu0 %v6614
    %6616 = vmatprep.subr.mxu0 0.0
    %6617 = vmatpush1.msra.mxu0 0.0
    %6618 = vmatprep.subr.mxu0 0.0
    %6619 = vmatpush1.msra.mxu0 0.0
    %6620 = vmatprep.subr.mxu0 0.0
    %6621 = vmatpush1.msra.mxu0 0.0
    %6622 = vmatprep.subr.mxu0 0.0
    %6623 = vmatpush1.msra.mxu0 0.0
    %6624 = vmatprep.subr.mxu0 0.0
    %6625 = vmatpush1.msra.mxu0 0.0
    %6626 = vmatprep.subr.mxu0 0.0
    %6627 = vmatpush1.msra.mxu0 0.0
    %6628 = vmatprep.subr.mxu0 0.0
    %6629 = vmatpush1.msra.mxu0 0.0
    %6630 = vmatprep.subr.mxu0 0.0
    %6631 = vmatpush1.msra.mxu0 0.0
    %6632 = vmatprep.subr.mxu0 0.0
    %6633 = vmatpush1.msra.mxu0 0.0
    %6634 = vmatprep.subr.mxu0 0.0
    %6635 = vmatpush1.msra.mxu0 0.0
    %6636 = vmatprep.subr.mxu0 0.0
    %6637 = vmatpush1.msra.mxu0 0.0
    %6638 = vmatprep.subr.mxu0 0.0
    %6639 = vmatpush1.msra.mxu0 0.0
    %6640 = vmatprep.subr.mxu0 0.0
    %6641 = vmatpush1.msra.mxu0 0.0
    %6642 = vmatprep.subr.mxu0 0.0
    %6643 = vmatpush1.msra.mxu0 0.0
    %6644 = vmatprep.subr.mxu0 0.0
    %6645 = vmatpush1.msra.mxu0 0.0
    %6646 = vmatprep.subr.mxu0 0.0
    %6647 = vmatpush1.msra.mxu0 0.0
    %6648 = vmatprep.subr.mxu0 0.0
    %6649 = vmatpush1.msra.mxu0 0.0
    %6650 = vmatprep.subr.mxu0 0.0
    %6651 = vmatpush1.msra.mxu0 0.0
    %6652 = vmatprep.subr.mxu0 0.0
    %6653 = vmatpush1.msra.mxu0 0.0
    %6654 = vmatprep.subr.mxu0 0.0
    %6655 = vmatpush1.msra.mxu0 0.0
    %6656 = vmatprep.subr.mxu0 0.0
    %6657 = vmatpush1.msra.mxu0 0.0
    %6658 = vmatprep.subr.mxu0 0.0
    %6659 = vmatpush1.msra.mxu0 0.0
    %6660 = vmatprep.subr.mxu0 0.0
    %6661 = vmatpush1.msra.mxu0 0.0
    %6662 = vmatprep.subr.mxu0 0.0
    %6663 = vmatpush1.msra.mxu0 0.0
    %6664 = vmatprep.subr.mxu0 0.0
    %6665 = vmatpush1.msra.mxu0 0.0
    %6666 = vmatprep.subr.mxu0 0.0
    %6667 = vmatpush1.msra.mxu0 0.0
    %6668 = vmatprep.subr.mxu0 0.0
    %6669 = vmatpush1.msra.mxu0 0.0
    %6670 = vmatprep.subr.mxu0 0.0
    %6671 = vmatpush1.msra.mxu0 0.0
    %6672 = vmatprep.subr.mxu0 0.0
    %6673 = vmatpush1.msra.mxu0 0.0
    %6674 = vmatprep.subr.mxu0 0.0
    %6675 = vmatpush1.msra.mxu0 0.0
    %6676 = vmatprep.mubr.f32.mxu0 0.0
    %v6677 = vand.u32 %v6429, 4294901760
    %v6678 = vsub.f32 %v6429, %v6677
    %6679 = vmatmul.mubr.f32.gmra.mrb[0].mxu0 %v6678
    %v6680 = vpop.f32.mrb[0].mxu0
    %v6681 = vadd.f32 %v6599, %v6680
    %v6682 = vpop.f32.mrb[0].mxu0
    %6683 = vmatprep.mubr.f32.mxu0 0.0
    %v6684 = vand.u32 %v6432, 4294901760
    %v6685 = vsub.f32 %v6432, %v6684
    %6686 = vmatmul.mubr.f32.gmra.mrb[0].mxu0 %v6685
    %v6687 = vpop.f32.mrb[0].mxu0
    %v6688 = vadd.f32 %v6605, %v6687
    %v6689 = vpop.f32.mrb[0].mxu0
    %6690 = vdwg.mxu0
    %6691 = vmatprep.subr.mxu0 0.0
    %v6692 = vand.u32 %v6421, 4294901760
    %6693 = vmatpush1.msra.mxu0 %v6692
    %6694 = vmatprep.subr.mxu0 0.0
    %v6695 = vand.u32 %v6422, 4294901760
    %6696 = vmatpush1.msra.mxu0 %v6695
    %6697 = vmatprep.subr.mxu0 0.0
    %6698 = vmatpush1.msra.mxu0 0.0
    %6699 = vmatprep.subr.mxu0 0.0
    %6700 = vmatpush1.msra.mxu0 0.0
    %6701 = vmatprep.subr.mxu0 0.0
    %6702 = vmatpush1.msra.mxu0 0.0
    %6703 = vmatprep.subr.mxu0 0.0
    %6704 = vmatpush1.msra.mxu0 0.0
    %6705 = vmatprep.subr.mxu0 0.0
    %6706 = vmatpush1.msra.mxu0 0.0
    %6707 = vmatprep.subr.mxu0 0.0
    %6708 = vmatpush1.msra.mxu0 0.0
    %6709 = vmatprep.subr.mxu0 0.0
    %6710 = vmatpush1.msra.mxu0 0.0
    %6711 = vmatprep.subr.mxu0 0.0
    %6712 = vmatpush1.msra.mxu0 0.0
    %6713 = vmatprep.subr.mxu0 0.0
    %6714 = vmatpush1.msra.mxu0 0.0
    %6715 = vmatprep.subr.mxu0 0.0
    %6716 = vmatpush1.msra.mxu0 0.0
    %6717 = vmatprep.subr.mxu0 0.0
    %6718 = vmatpush1.msra.mxu0 0.0
    %6719 = vmatprep.subr.mxu0 0.0
    %6720 = vmatpush1.msra.mxu0 0.0
    %6721 = vmatprep.subr.mxu0 0.0
    %6722 = vmatpush1.msra.mxu0 0.0
    %6723 = vmatprep.subr.mxu0 0.0
    %6724 = vmatpush1.msra.mxu0 0.0
    %6725 = vmatprep.subr.mxu0 0.0
    %6726 = vmatpush1.msra.mxu0 0.0
    %6727 = vmatprep.subr.mxu0 0.0
    %6728 = vmatpush1.msra.mxu0 0.0
    %6729 = vmatprep.subr.mxu0 0.0
    %6730 = vmatpush1.msra.mxu0 0.0
    %6731 = vmatprep.subr.mxu0 0.0
    %6732 = vmatpush1.msra.mxu0 0.0
    %6733 = vmatprep.subr.mxu0 0.0
    %6734 = vmatpush1.msra.mxu0 0.0
    %6735 = vmatprep.subr.mxu0 0.0
    %6736 = vmatpush1.msra.mxu0 0.0
    %6737 = vmatprep.subr.mxu0 0.0
    %6738 = vmatpush1.msra.mxu0 0.0
    %6739 = vmatprep.subr.mxu0 0.0
    %6740 = vmatpush1.msra.mxu0 0.0
    %6741 = vmatprep.subr.mxu0 0.0
    %6742 = vmatpush1.msra.mxu0 0.0
    %6743 = vmatprep.subr.mxu0 0.0
    %6744 = vmatpush1.msra.mxu0 0.0
    %6745 = vmatprep.subr.mxu0 0.0
    %6746 = vmatpush1.msra.mxu0 0.0
    %6747 = vmatprep.subr.mxu0 0.0
    %6748 = vmatpush1.msra.mxu0 0.0
    %6749 = vmatprep.subr.mxu0 0.0
    %6750 = vmatpush1.msra.mxu0 0.0
    %6751 = vmatprep.subr.mxu0 0.0
    %6752 = vmatpush1.msra.mxu0 0.0
    %6753 = vmatprep.subr.mxu0 0.0
    %6754 = vmatpush1.msra.mxu0 0.0
    %6755 = vmatprep.subr.mxu0 0.0
    %6756 = vmatpush1.msra.mxu0 0.0
    %6757 = vmatprep.mubr.f32.mxu0 0.0
    %v6758 = vand.u32 %v6429, 4294901760
    %v6759 = vsub.f32 %v6429, %v6758
    %v6760 = vand.u32 %v6759, 4294901760
    %6761 = vmatmul.mubr.f32.gmra.mrb[0].mxu0 %v6760
    %v6762 = vpop.f32.mrb[0].mxu0
    %v6763 = vadd.f32 %v6681, %v6762
    %v6764 = vpop.f32.mrb[0].mxu0
    %6765 = vmatprep.mubr.f32.mxu0 0.0
    %v6766 = vand.u32 %v6432, 4294901760
    %v6767 = vsub.f32 %v6432, %v6766
    %v6768 = vand.u32 %v6767, 4294901760
    %6769 = vmatmul.mubr.f32.gmra.mrb[0].mxu0 %v6768
    %v6770 = vpop.f32.mrb[0].mxu0
    %v6771 = vadd.f32 %v6688, %v6770
    %v6772 = vpop.f32.mrb[0].mxu0
    %6773 = vdwg.mxu0
    %6774 = vmatprep.subr.mxu0 0.0
    %v6775 = vand.u32 %v6421, 4294901760
    %v6776 = vsub.f32 %v6421, %v6775
    %v6777 = vand.u32 %v6776, 4294901760
    %6778 = vmatpush1.msra.mxu0 %v6777
    %6779 = vmatprep.subr.mxu0 0.0
    %v6780 = vand.u32 %v6422, 4294901760
    %v6781 = vsub.f32 %v6422, %v6780
    %v6782 = vand.u32 %v6781, 4294901760
    %6783 = vmatpush1.msra.mxu0 %v6782
    %6784 = vmatprep.subr.mxu0 0.0
    %6785 = vmatpush1.msra.mxu0 0.0
    %6786 = vmatprep.subr.mxu0 0.0
    %6787 = vmatpush1.msra.mxu0 0.0
    %6788 = vmatprep.subr.mxu0 0.0
    %6789 = vmatpush1.msra.mxu0 0.0
    %6790 = vmatprep.subr.mxu0 0.0
    %6791 = vmatpush1.msra.mxu0 0.0
    %6792 = vmatprep.subr.mxu0 0.0
    %6793 = vmatpush1.msra.mxu0 0.0
    %6794 = vmatprep.subr.mxu0 0.0
    %6795 = vmatpush1.msra.mxu0 0.0
    %6796 = vmatprep.subr.mxu0 0.0
    %6797 = vmatpush1.msra.mxu0 0.0
    %6798 = vmatprep.subr.mxu0 0.0
    %6799 = vmatpush1.msra.mxu0 0.0
    %6800 = vmatprep.subr.mxu0 0.0
    %6801 = vmatpush1.msra.mxu0 0.0
    %6802 = vmatprep.subr.mxu0 0.0
    %6803 = vmatpush1.msra.mxu0 0.0
    %6804 = vmatprep.subr.mxu0 0.0
    %6805 = vmatpush1.msra.mxu0 0.0
    %6806 = vmatprep.subr.mxu0 0.0
    %6807 = vmatpush1.msra.mxu0 0.0
    %6808 = vmatprep.subr.mxu0 0.0
    %6809 = vmatpush1.msra.mxu0 0.0
    %6810 = vmatprep.subr.mxu0 0.0
    %6811 = vmatpush1.msra.mxu0 0.0
    %6812 = vmatprep.subr.mxu0 0.0
    %6813 = vmatpush1.msra.mxu0 0.0
    %6814 = vmatprep.subr.mxu0 0.0
    %6815 = vmatpush1.msra.mxu0 0.0
    %6816 = vmatprep.subr.mxu0 0.0
    %6817 = vmatpush1.msra.mxu0 0.0
    %6818 = vmatprep.subr.mxu0 0.0
    %6819 = vmatpush1.msra.mxu0 0.0
    %6820 = vmatprep.subr.mxu0 0.0
    %6821 = vmatpush1.msra.mxu0 0.0
    %6822 = vmatprep.subr.mxu0 0.0
    %6823 = vmatpush1.msra.mxu0 0.0
    %6824 = vmatprep.subr.mxu0 0.0
    %6825 = vmatpush1.msra.mxu0 0.0
    %6826 = vmatprep.subr.mxu0 0.0
    %6827 = vmatpush1.msra.mxu0 0.0
    %6828 = vmatprep.subr.mxu0 0.0
    %6829 = vmatpush1.msra.mxu0 0.0
    %6830 = vmatprep.subr.mxu0 0.0
    %6831 = vmatpush1.msra.mxu0 0.0
    %6832 = vmatprep.subr.mxu0 0.0
    %6833 = vmatpush1.msra.mxu0 0.0
    %6834 = vmatprep.subr.mxu0 0.0
    %6835 = vmatpush1.msra.mxu0 0.0
    %6836 = vmatprep.subr.mxu0 0.0
    %6837 = vmatpush1.msra.mxu0 0.0
    %6838 = vmatprep.subr.mxu0 0.0
    %6839 = vmatpush1.msra.mxu0 0.0
    %6840 = vmatprep.subr.mxu0 0.0
    %6841 = vmatpush1.msra.mxu0 0.0
    %6842 = vmatprep.subr.mxu0 0.0
    %6843 = vmatpush1.msra.mxu0 0.0
    %6844 = vmatprep.mubr.f32.mxu0 0.0
    %v6845 = vand.u32 %v6429, 4294901760
    %6846 = vmatmul.mubr.f32.gmra.mrb[0].mxu0 %v6845
    %v6847 = vpop.f32.mrb[0].mxu0
    %v6848 = vadd.f32 %v6763, %v6847
    %v6849 = vpop.f32.mrb[0].mxu0
    %6850 = vmatprep.mubr.f32.mxu0 0.0
    %v6851 = vand.u32 %v6432, 4294901760
    %6852 = vmatmul.mubr.f32.gmra.mrb[0].mxu0 %v6851
    %v6853 = vpop.f32.mrb[0].mxu0
    %v6854 = vadd.f32 %v6771, %v6853
    %v6855 = vpop.f32.mrb[0].mxu0
    %6856 = vdwg.mxu0
    %6857 = vmatprep.subr.mxu0 0.0
    %v6858 = vand.u32 %v6421, 4294901760
    %6859 = vmatpush1.msra.mxu0 %v6858
    %6860 = vmatprep.subr.mxu0 0.0
    %v6861 = vand.u32 %v6422, 4294901760
    %6862 = vmatpush1.msra.mxu0 %v6861
    %6863 = vmatprep.subr.mxu0 0.0
    %6864 = vmatpush1.msra.mxu0 0.0
    %6865 = vmatprep.subr.mxu0 0.0
    %6866 = vmatpush1.msra.mxu0 0.0
    %6867 = vmatprep.subr.mxu0 0.0
    %6868 = vmatpush1.msra.mxu0 0.0
    %6869 = vmatprep.subr.mxu0 0.0
    %6870 = vmatpush1.msra.mxu0 0.0
    %6871 = vmatprep.subr.mxu0 0.0
    %6872 = vmatpush1.msra.mxu0 0.0
    %6873 = vmatprep.subr.mxu0 0.0
    %6874 = vmatpush1.msra.mxu0 0.0
    %6875 = vmatprep.subr.mxu0 0.0
    %6876 = vmatpush1.msra.mxu0 0.0
    %6877 = vmatprep.subr.mxu0 0.0
    %6878 = vmatpush1.msra.mxu0 0.0
    %6879 = vmatprep.subr.mxu0 0.0
    %6880 = vmatpush1.msra.mxu0 0.0
    %6881 = vmatprep.subr.mxu0 0.0
    %6882 = vmatpush1.msra.mxu0 0.0
    %6883 = vmatprep.subr.mxu0 0.0
    %6884 = vmatpush1.msra.mxu0 0.0
    %6885 = vmatprep.subr.mxu0 0.0
    %6886 = vmatpush1.msra.mxu0 0.0
    %6887 = vmatprep.subr.mxu0 0.0
    %6888 = vmatpush1.msra.mxu0 0.0
    %6889 = vmatprep.subr.mxu0 0.0
    %6890 = vmatpush1.msra.mxu0 0.0
    %6891 = vmatprep.subr.mxu0 0.0
    %6892 = vmatpush1.msra.mxu0 0.0
    %6893 = vmatprep.subr.mxu0 0.0
    %6894 = vmatpush1.msra.mxu0 0.0
    %6895 = vmatprep.subr.mxu0 0.0
    %6896 = vmatpush1.msra.mxu0 0.0
    %6897 = vmatprep.subr.mxu0 0.0
    %6898 = vmatpush1.msra.mxu0 0.0
    %6899 = vmatprep.subr.mxu0 0.0
    %6900 = vmatpush1.msra.mxu0 0.0
    %6901 = vmatprep.subr.mxu0 0.0
    %6902 = vmatpush1.msra.mxu0 0.0
    %6903 = vmatprep.subr.mxu0 0.0
    %6904 = vmatpush1.msra.mxu0 0.0
    %6905 = vmatprep.subr.mxu0 0.0
    %6906 = vmatpush1.msra.mxu0 0.0
    %6907 = vmatprep.subr.mxu0 0.0
    %6908 = vmatpush1.msra.mxu0 0.0
    %6909 = vmatprep.subr.mxu0 0.0
    %6910 = vmatpush1.msra.mxu0 0.0
    %6911 = vmatprep.subr.mxu0 0.0
    %6912 = vmatpush1.msra.mxu0 0.0
    %6913 = vmatprep.subr.mxu0 0.0
    %6914 = vmatpush1.msra.mxu0 0.0
    %6915 = vmatprep.subr.mxu0 0.0
    %6916 = vmatpush1.msra.mxu0 0.0
    %6917 = vmatprep.subr.mxu0 0.0
    %6918 = vmatpush1.msra.mxu0 0.0
    %6919 = vmatprep.subr.mxu0 0.0
    %6920 = vmatpush1.msra.mxu0 0.0
    %6921 = vmatprep.subr.mxu0 0.0
    %6922 = vmatpush1.msra.mxu0 0.0
    %6923 = vmatprep.mubr.f32.mxu0 0.0
    %v6924 = vand.u32 %v6429, 4294901760
    %6925 = vmatmul.mubr.f32.gmra.mrb[0].mxu0 %v6924
    %v6926 = vpop.f32.mrb[0].mxu0
    %v6927 = vadd.f32 %v6848, %v6926
    %v6928 = vpop.f32.mrb[0].mxu0
    %6929 = vmatprep.mubr.f32.mxu0 0.0
    %v6930 = vand.u32 %v6432, 4294901760
    %6931 = vmatmul.mubr.f32.gmra.mrb[0].mxu0 %v6930
    %v6932 = vpop.f32.mrb[0].mxu0
    %v6933 = vadd.f32 %v6854, %v6932
    %v6934 = vpop.f32.mrb[0].mxu0
    %6935 = vdwg.mxu0
    %vm6936 = vcmp.ge.f32.partialorder %v6927, 0.0
    %vm6937 = vcmp.ge.f32.partialorder %v6933, 0.0
    %v6938 = vmul.f32 %v6927, 0.02
    %v6939 = vmul.f32 %v6933, 0.02
    %v6940 = vsel %vm6936, %v6927, %v6938
    %v6941 = vsel %vm6937, %v6933, %v6939
    %v6942 = vld [vmem:[#allocation3 + $0xb8] sm:$0xff]
    %v6943 = vld [vmem:[#allocation3 + $0xc0] sm:$0xff]
    %v6944 = vld [vmem:[#allocation3 + $0xc8] sm:$0xff]
    %v6945 = vld [vmem:[#allocation3 + $0xd0] sm:$0xff]
    %v6946 = vld [vmem:[#allocation3 + $0xd8] sm:$0xff]
    %v6947 = vld [vmem:[#allocation3 + $0xe0] sm:$0xff]
    %v6948 = vld [vmem:[#allocation3 + $0xe8] sm:$0xff]
    %v6949 = vld [vmem:[#allocation3 + $0xf0] sm:$0xff]
    %v6950 = vld [vmem:[#allocation3 + $0x109] sm:$0x1]
    %v6951 = vlaneseq
    %v6952 = vshrl.u32 %v6951, 7
    %v6953 = vsub.s32 0, %v6952
    %v6954 = vrot.slane %v6950, %v6953
    %v6956 = vsel %vm3689, %v6940, 0
    %v6959 = vsel %vm3689, %v6941, 0
    %6961 = vmatprep.subr.mxu0 0.0
    %v6962 = vand.u32 %v6942, 4294901760
    %6963 = vmatpush1.msra.mxu0 %v6962
    %6964 = vmatprep.subr.mxu0 0.0
    %v6965 = vand.u32 %v6943, 4294901760
    %6966 = vmatpush1.msra.mxu0 %v6965
    %6967 = vmatprep.subr.mxu0 0.0
    %v6968 = vand.u32 %v6944, 4294901760
    %6969 = vmatpush1.msra.mxu0 %v6968
    %6970 = vmatprep.subr.mxu0 0.0
    %v6971 = vand.u32 %v6945, 4294901760
    %6972 = vmatpush1.msra.mxu0 %v6971
    %6973 = vmatprep.subr.mxu0 0.0
    %v6974 = vand.u32 %v6946, 4294901760
    %6975 = vmatpush1.msra.mxu0 %v6974
    %6976 = vmatprep.subr.mxu0 0.0
    %v6977 = vand.u32 %v6947, 4294901760
    %6978 = vmatpush1.msra.mxu0 %v6977
    %6979 = vmatprep.subr.mxu0 0.0
    %v6980 = vand.u32 %v6948, 4294901760
    %6981 = vmatpush1.msra.mxu0 %v6980
    %6982 = vmatprep.subr.mxu0 0.0
    %v6983 = vand.u32 %v6949, 4294901760
    %6984 = vmatpush1.msra.mxu0 %v6983
    %6985 = vmatprep.subr.mxu0 0.0
    %6986 = vmatpush1.msra.mxu0 0.0
    %6987 = vmatprep.subr.mxu0 0.0
    %6988 = vmatpush1.msra.mxu0 0.0
    %6989 = vmatprep.subr.mxu0 0.0
    %6990 = vmatpush1.msra.mxu0 0.0
    %6991 = vmatprep.subr.mxu0 0.0
    %6992 = vmatpush1.msra.mxu0 0.0
    %6993 = vmatprep.subr.mxu0 0.0
    %6994 = vmatpush1.msra.mxu0 0.0
    %6995 = vmatprep.subr.mxu0 0.0
    %6996 = vmatpush1.msra.mxu0 0.0
    %6997 = vmatprep.subr.mxu0 0.0
    %6998 = vmatpush1.msra.mxu0 0.0
    %6999 = vmatprep.subr.mxu0 0.0
    %7000 = vmatpush1.msra.mxu0 0.0
    %7001 = vmatprep.subr.mxu0 0.0
    %7002 = vmatpush1.msra.mxu0 0.0
    %7003 = vmatprep.subr.mxu0 0.0
    %7004 = vmatpush1.msra.mxu0 0.0
    %7005 = vmatprep.subr.mxu0 0.0
    %7006 = vmatpush1.msra.mxu0 0.0
    %7007 = vmatprep.subr.mxu0 0.0
    %7008 = vmatpush1.msra.mxu0 0.0
    %7009 = vmatprep.subr.mxu0 0.0
    %7010 = vmatpush1.msra.mxu0 0.0
    %7011 = vmatprep.subr.mxu0 0.0
    %7012 = vmatpush1.msra.mxu0 0.0
    %7013 = vmatprep.subr.mxu0 0.0
    %7014 = vmatpush1.msra.mxu0 0.0
    %7015 = vmatprep.subr.mxu0 0.0
    %7016 = vmatpush1.msra.mxu0 0.0
    %7017 = vmatprep.subr.mxu0 0.0
    %7018 = vmatpush1.msra.mxu0 0.0
    %7019 = vmatprep.subr.mxu0 0.0
    %7020 = vmatpush1.msra.mxu0 0.0
    %7021 = vmatprep.subr.mxu0 0.0
    %7022 = vmatpush1.msra.mxu0 0.0
    %7023 = vmatprep.subr.mxu0 0.0
    %7024 = vmatpush1.msra.mxu0 0.0
    %7025 = vmatprep.subr.mxu0 0.0
    %7026 = vmatpush1.msra.mxu0 0.0
    %7027 = vmatprep.subr.mxu0 0.0
    %7028 = vmatpush1.msra.mxu0 0.0
    %7029 = vmatprep.subr.mxu0 0.0
    %7030 = vmatpush1.msra.mxu0 0.0
    %7031 = vmatprep.subr.mxu0 0.0
    %7032 = vmatpush1.msra.mxu0 0.0
    %7033 = vmatprep.mubr.f32.mxu0 0.0
    %v7034 = vand.u32 %v6956, 4294901760
    %v7035 = vsub.f32 %v6956, %v7034
    %v7036 = vand.u32 %v7035, 4294901760
    %v7037 = vsub.f32 %v7035, %v7036
    %v7038 = vand.u32 %v7037, 4294901760
    %7039 = vmatmul.mubr.f32.gmra.mrb[0].mxu0 %v7038
    %v7040 = vpop.f32.mrb[0].mxu0
    %v7041 = vadd.f32 %v6954, %v7040
    %v7042 = vpop.f32.mrb[0].mxu0
    %7043 = vmatprep.mubr.f32.mxu0 0.0
    %v7044 = vand.u32 %v6959, 4294901760
    %v7045 = vsub.f32 %v6959, %v7044
    %v7046 = vand.u32 %v7045, 4294901760
    %v7047 = vsub.f32 %v7045, %v7046
    %v7048 = vand.u32 %v7047, 4294901760
    %7049 = vmatmul.mubr.f32.gmra.mrb[0].mxu0 %v7048
    %v7050 = vpop.f32.mrb[0].mxu0
    %v7051 = vadd.f32 %v6954, %v7050
    %v7052 = vpop.f32.mrb[0].mxu0
    %7053 = vdwg.mxu0
    %7054 = vmatprep.subr.mxu0 0.0
    %v7055 = vand.u32 %v6942, 4294901760
    %v7056 = vsub.f32 %v6942, %v7055
    %v7057 = vand.u32 %v7056, 4294901760
    %v7058 = vsub.f32 %v7056, %v7057
    %v7059 = vand.u32 %v7058, 4294901760
    %7060 = vmatpush1.msra.mxu0 %v7059
    %7061 = vmatprep.subr.mxu0 0.0
    %v7062 = vand.u32 %v6943, 4294901760
    %v7063 = vsub.f32 %v6943, %v7062
    %v7064 = vand.u32 %v7063, 4294901760
    %v7065 = vsub.f32 %v7063, %v7064
    %v7066 = vand.u32 %v7065, 4294901760
    %7067 = vmatpush1.msra.mxu0 %v7066
    %7068 = vmatprep.subr.mxu0 0.0
    %v7069 = vand.u32 %v6944, 4294901760
    %v7070 = vsub.f32 %v6944, %v7069
    %v7071 = vand.u32 %v7070, 4294901760
    %v7072 = vsub.f32 %v7070, %v7071
    %v7073 = vand.u32 %v7072, 4294901760
    %7074 = vmatpush1.msra.mxu0 %v7073
    %7075 = vmatprep.subr.mxu0 0.0
    %v7076 = vand.u32 %v6945, 4294901760
    %v7077 = vsub.f32 %v6945, %v7076
    %v7078 = vand.u32 %v7077, 4294901760
    %v7079 = vsub.f32 %v7077, %v7078
    %v7080 = vand.u32 %v7079, 4294901760
    %7081 = vmatpush1.msra.mxu0 %v7080
    %7082 = vmatprep.subr.mxu0 0.0
    %v7083 = vand.u32 %v6946, 4294901760
    %v7084 = vsub.f32 %v6946, %v7083
    %v7085 = vand.u32 %v7084, 4294901760
    %v7086 = vsub.f32 %v7084, %v7085
    %v7087 = vand.u32 %v7086, 4294901760
    %7088 = vmatpush1.msra.mxu0 %v7087
    %7089 = vmatprep.subr.mxu0 0.0
    %v7090 = vand.u32 %v6947, 4294901760
    %v7091 = vsub.f32 %v6947, %v7090
    %v7092 = vand.u32 %v7091, 4294901760
    %v7093 = vsub.f32 %v7091, %v7092
    %v7094 = vand.u32 %v7093, 4294901760
    %7095 = vmatpush1.msra.mxu0 %v7094
    %7096 = vmatprep.subr.mxu0 0.0
    %v7097 = vand.u32 %v6948, 4294901760
    %v7098 = vsub.f32 %v6948, %v7097
    %v7099 = vand.u32 %v7098, 4294901760
    %v7100 = vsub.f32 %v7098, %v7099
    %v7101 = vand.u32 %v7100, 4294901760
    %7102 = vmatpush1.msra.mxu0 %v7101
    %7103 = vmatprep.subr.mxu0 0.0
    %v7104 = vand.u32 %v6949, 4294901760
    %v7105 = vsub.f32 %v6949, %v7104
    %v7106 = vand.u32 %v7105, 4294901760
    %v7107 = vsub.f32 %v7105, %v7106
    %v7108 = vand.u32 %v7107, 4294901760
    %7109 = vmatpush1.msra.mxu0 %v7108
    %7110 = vmatprep.subr.mxu0 0.0
    %7111 = vmatpush1.msra.mxu0 0.0
    %7112 = vmatprep.subr.mxu0 0.0
    %7113 = vmatpush1.msra.mxu0 0.0
    %7114 = vmatprep.subr.mxu0 0.0
    %7115 = vmatpush1.msra.mxu0 0.0
    %7116 = vmatprep.subr.mxu0 0.0
    %7117 = vmatpush1.msra.mxu0 0.0
    %7118 = vmatprep.subr.mxu0 0.0
    %7119 = vmatpush1.msra.mxu0 0.0
    %7120 = vmatprep.subr.mxu0 0.0
    %7121 = vmatpush1.msra.mxu0 0.0
    %7122 = vmatprep.subr.mxu0 0.0
    %7123 = vmatpush1.msra.mxu0 0.0
    %7124 = vmatprep.subr.mxu0 0.0
    %7125 = vmatpush1.msra.mxu0 0.0
    %7126 = vmatprep.subr.mxu0 0.0
    %7127 = vmatpush1.msra.mxu0 0.0
    %7128 = vmatprep.subr.mxu0 0.0
    %7129 = vmatpush1.msra.mxu0 0.0
    %7130 = vmatprep.subr.mxu0 0.0
    %7131 = vmatpush1.msra.mxu0 0.0
    %7132 = vmatprep.subr.mxu0 0.0
    %7133 = vmatpush1.msra.mxu0 0.0
    %7134 = vmatprep.subr.mxu0 0.0
    %7135 = vmatpush1.msra.mxu0 0.0
    %7136 = vmatprep.subr.mxu0 0.0
    %7137 = vmatpush1.msra.mxu0 0.0
    %7138 = vmatprep.subr.mxu0 0.0
    %7139 = vmatpush1.msra.mxu0 0.0
    %7140 = vmatprep.subr.mxu0 0.0
    %7141 = vmatpush1.msra.mxu0 0.0
    %7142 = vmatprep.subr.mxu0 0.0
    %7143 = vmatpush1.msra.mxu0 0.0
    %7144 = vmatprep.subr.mxu0 0.0
    %7145 = vmatpush1.msra.mxu0 0.0
    %7146 = vmatprep.subr.mxu0 0.0
    %7147 = vmatpush1.msra.mxu0 0.0
    %7148 = vmatprep.subr.mxu0 0.0
    %7149 = vmatpush1.msra.mxu0 0.0
    %7150 = vmatprep.subr.mxu0 0.0
    %7151 = vmatpush1.msra.mxu0 0.0
    %7152 = vmatprep.subr.mxu0 0.0
    %7153 = vmatpush1.msra.mxu0 0.0
    %7154 = vmatprep.subr.mxu0 0.0
    %7155 = vmatpush1.msra.mxu0 0.0
    %7156 = vmatprep.subr.mxu0 0.0
    %7157 = vmatpush1.msra.mxu0 0.0
    %7158 = vmatprep.mubr.f32.mxu0 0.0
    %v7159 = vand.u32 %v6956, 4294901760
    %7160 = vmatmul.mubr.f32.gmra.mrb[0].mxu0 %v7159
    %v7161 = vpop.f32.mrb[0].mxu0
    %v7162 = vadd.f32 %v7041, %v7161
    %v7163 = vpop.f32.mrb[0].mxu0
    %7164 = vmatprep.mubr.f32.mxu0 0.0
    %v7165 = vand.u32 %v6959, 4294901760
    %7166 = vmatmul.mubr.f32.gmra.mrb[0].mxu0 %v7165
    %v7167 = vpop.f32.mrb[0].mxu0
    %v7168 = vadd.f32 %v7051, %v7167
    %v7169 = vpop.f32.mrb[0].mxu0
    %7170 = vdwg.mxu0
    %7171 = vmatprep.subr.mxu0 0.0
    %v7172 = vand.u32 %v6942, 4294901760
    %v7173 = vsub.f32 %v6942, %v7172
    %7174 = vmatpush1.msra.mxu0 %v7173
    %7175 = vmatprep.subr.mxu0 0.0
    %v7176 = vand.u32 %v6943, 4294901760
    %v7177 = vsub.f32 %v6943, %v7176
    %7178 = vmatpush1.msra.mxu0 %v7177
    %7179 = vmatprep.subr.mxu0 0.0
    %v7180 = vand.u32 %v6944, 4294901760
    %v7181 = vsub.f32 %v6944, %v7180
    %7182 = vmatpush1.msra.mxu0 %v7181
    %7183 = vmatprep.subr.mxu0 0.0
    %v7184 = vand.u32 %v6945, 4294901760
    %v7185 = vsub.f32 %v6945, %v7184
    %7186 = vmatpush1.msra.mxu0 %v7185
    %7187 = vmatprep.subr.mxu0 0.0
    %v7188 = vand.u32 %v6946, 4294901760
    %v7189 = vsub.f32 %v6946, %v7188
    %7190 = vmatpush1.msra.mxu0 %v7189
    %7191 = vmatprep.subr.mxu0 0.0
    %v7192 = vand.u32 %v6947, 4294901760
    %v7193 = vsub.f32 %v6947, %v7192
    %7194 = vmatpush1.msra.mxu0 %v7193
    %7195 = vmatprep.subr.mxu0 0.0
    %v7196 = vand.u32 %v6948, 4294901760
    %v7197 = vsub.f32 %v6948, %v7196
    %7198 = vmatpush1.msra.mxu0 %v7197
    %7199 = vmatprep.subr.mxu0 0.0
    %v7200 = vand.u32 %v6949, 4294901760
    %v7201 = vsub.f32 %v6949, %v7200
    %7202 = vmatpush1.msra.mxu0 %v7201
    %7203 = vmatprep.subr.mxu0 0.0
    %7204 = vmatpush1.msra.mxu0 0.0
    %7205 = vmatprep.subr.mxu0 0.0
    %7206 = vmatpush1.msra.mxu0 0.0
    %7207 = vmatprep.subr.mxu0 0.0
    %7208 = vmatpush1.msra.mxu0 0.0
    %7209 = vmatprep.subr.mxu0 0.0
    %7210 = vmatpush1.msra.mxu0 0.0
    %7211 = vmatprep.subr.mxu0 0.0
    %7212 = vmatpush1.msra.mxu0 0.0
    %7213 = vmatprep.subr.mxu0 0.0
    %7214 = vmatpush1.msra.mxu0 0.0
    %7215 = vmatprep.subr.mxu0 0.0
    %7216 = vmatpush1.msra.mxu0 0.0
    %7217 = vmatprep.subr.mxu0 0.0
    %7218 = vmatpush1.msra.mxu0 0.0
    %7219 = vmatprep.subr.mxu0 0.0
    %7220 = vmatpush1.msra.mxu0 0.0
    %7221 = vmatprep.subr.mxu0 0.0
    %7222 = vmatpush1.msra.mxu0 0.0
    %7223 = vmatprep.subr.mxu0 0.0
    %7224 = vmatpush1.msra.mxu0 0.0
    %7225 = vmatprep.subr.mxu0 0.0
    %7226 = vmatpush1.msra.mxu0 0.0
    %7227 = vmatprep.subr.mxu0 0.0
    %7228 = vmatpush1.msra.mxu0 0.0
    %7229 = vmatprep.subr.mxu0 0.0
    %7230 = vmatpush1.msra.mxu0 0.0
    %7231 = vmatprep.subr.mxu0 0.0
    %7232 = vmatpush1.msra.mxu0 0.0
    %7233 = vmatprep.subr.mxu0 0.0
    %7234 = vmatpush1.msra.mxu0 0.0
    %7235 = vmatprep.subr.mxu0 0.0
    %7236 = vmatpush1.msra.mxu0 0.0
    %7237 = vmatprep.subr.mxu0 0.0
    %7238 = vmatpush1.msra.mxu0 0.0
    %7239 = vmatprep.subr.mxu0 0.0
    %7240 = vmatpush1.msra.mxu0 0.0
    %7241 = vmatprep.subr.mxu0 0.0
    %7242 = vmatpush1.msra.mxu0 0.0
    %7243 = vmatprep.subr.mxu0 0.0
    %7244 = vmatpush1.msra.mxu0 0.0
    %7245 = vmatprep.subr.mxu0 0.0
    %7246 = vmatpush1.msra.mxu0 0.0
    %7247 = vmatprep.subr.mxu0 0.0
    %7248 = vmatpush1.msra.mxu0 0.0
    %7249 = vmatprep.subr.mxu0 0.0
    %7250 = vmatpush1.msra.mxu0 0.0
    %7251 = vmatprep.mubr.f32.mxu0 0.0
    %v7252 = vand.u32 %v6956, 4294901760
    %v7253 = vsub.f32 %v6956, %v7252
    %7254 = vmatmul.mubr.f32.gmra.mrb[0].mxu0 %v7253
    %v7255 = vpop.f32.mrb[0].mxu0
    %v7256 = vadd.f32 %v7162, %v7255
    %v7257 = vpop.f32.mrb[0].mxu0
    %7258 = vmatprep.mubr.f32.mxu0 0.0
    %v7259 = vand.u32 %v6959, 4294901760
    %v7260 = vsub.f32 %v6959, %v7259
    %7261 = vmatmul.mubr.f32.gmra.mrb[0].mxu0 %v7260
    %v7262 = vpop.f32.mrb[0].mxu0
    %v7263 = vadd.f32 %v7168, %v7262
    %v7264 = vpop.f32.mrb[0].mxu0
    %7265 = vdwg.mxu0
    %7266 = vmatprep.subr.mxu0 0.0
    %v7267 = vand.u32 %v6942, 4294901760
    %7268 = vmatpush1.msra.mxu0 %v7267
    %7269 = vmatprep.subr.mxu0 0.0
    %v7270 = vand.u32 %v6943, 4294901760
    %7271 = vmatpush1.msra.mxu0 %v7270
    %7272 = vmatprep.subr.mxu0 0.0
    %v7273 = vand.u32 %v6944, 4294901760
    %7274 = vmatpush1.msra.mxu0 %v7273
    %7275 = vmatprep.subr.mxu0 0.0
    %v7276 = vand.u32 %v6945, 4294901760
    %7277 = vmatpush1.msra.mxu0 %v7276
    %7278 = vmatprep.subr.mxu0 0.0
    %v7279 = vand.u32 %v6946, 4294901760
    %7280 = vmatpush1.msra.mxu0 %v7279
    %7281 = vmatprep.subr.mxu0 0.0
    %v7282 = vand.u32 %v6947, 4294901760
    %7283 = vmatpush1.msra.mxu0 %v7282
    %7284 = vmatprep.subr.mxu0 0.0
    %v7285 = vand.u32 %v6948, 4294901760
    %7286 = vmatpush1.msra.mxu0 %v7285
    %7287 = vmatprep.subr.mxu0 0.0
    %v7288 = vand.u32 %v6949, 4294901760
    %7289 = vmatpush1.msra.mxu0 %v7288
    %7290 = vmatprep.subr.mxu0 0.0
    %7291 = vmatpush1.msra.mxu0 0.0
    %7292 = vmatprep.subr.mxu0 0.0
    %7293 = vmatpush1.msra.mxu0 0.0
    %7294 = vmatprep.subr.mxu0 0.0
    %7295 = vmatpush1.msra.mxu0 0.0
    %7296 = vmatprep.subr.mxu0 0.0
    %7297 = vmatpush1.msra.mxu0 0.0
    %7298 = vmatprep.subr.mxu0 0.0
    %7299 = vmatpush1.msra.mxu0 0.0
    %7300 = vmatprep.subr.mxu0 0.0
    %7301 = vmatpush1.msra.mxu0 0.0
    %7302 = vmatprep.subr.mxu0 0.0
    %7303 = vmatpush1.msra.mxu0 0.0
    %7304 = vmatprep.subr.mxu0 0.0
    %7305 = vmatpush1.msra.mxu0 0.0
    %7306 = vmatprep.subr.mxu0 0.0
    %7307 = vmatpush1.msra.mxu0 0.0
    %7308 = vmatprep.subr.mxu0 0.0
    %7309 = vmatpush1.msra.mxu0 0.0
    %7310 = vmatprep.subr.mxu0 0.0
    %7311 = vmatpush1.msra.mxu0 0.0
    %7312 = vmatprep.subr.mxu0 0.0
    %7313 = vmatpush1.msra.mxu0 0.0
    %7314 = vmatprep.subr.mxu0 0.0
    %7315 = vmatpush1.msra.mxu0 0.0
    %7316 = vmatprep.subr.mxu0 0.0
    %7317 = vmatpush1.msra.mxu0 0.0
    %7318 = vmatprep.subr.mxu0 0.0
    %7319 = vmatpush1.msra.mxu0 0.0
    %7320 = vmatprep.subr.mxu0 0.0
    %7321 = vmatpush1.msra.mxu0 0.0
    %7322 = vmatprep.subr.mxu0 0.0
    %7323 = vmatpush1.msra.mxu0 0.0
    %7324 = vmatprep.subr.mxu0 0.0
    %7325 = vmatpush1.msra.mxu0 0.0
    %7326 = vmatprep.subr.mxu0 0.0
    %7327 = vmatpush1.msra.mxu0 0.0
    %7328 = vmatprep.subr.mxu0 0.0
    %7329 = vmatpush1.msra.mxu0 0.0
    %7330 = vmatprep.subr.mxu0 0.0
    %7331 = vmatpush1.msra.mxu0 0.0
    %7332 = vmatprep.subr.mxu0 0.0
    %7333 = vmatpush1.msra.mxu0 0.0
    %7334 = vmatprep.subr.mxu0 0.0
    %7335 = vmatpush1.msra.mxu0 0.0
    %7336 = vmatprep.subr.mxu0 0.0
    %7337 = vmatpush1.msra.mxu0 0.0
    %7338 = vmatprep.mubr.f32.mxu0 0.0
    %v7339 = vand.u32 %v6956, 4294901760
    %v7340 = vsub.f32 %v6956, %v7339
    %v7341 = vand.u32 %v7340, 4294901760
    %7342 = vmatmul.mubr.f32.gmra.mrb[0].mxu0 %v7341
    %v7343 = vpop.f32.mrb[0].mxu0
    %v7344 = vadd.f32 %v7256, %v7343
    %v7345 = vpop.f32.mrb[0].mxu0
    %7346 = vmatprep.mubr.f32.mxu0 0.0
    %v7347 = vand.u32 %v6959, 4294901760
    %v7348 = vsub.f32 %v6959, %v7347
    %v7349 = vand.u32 %v7348, 4294901760
    %7350 = vmatmul.mubr.f32.gmra.mrb[0].mxu0 %v7349
    %v7351 = vpop.f32.mrb[0].mxu0
    %v7352 = vadd.f32 %v7263, %v7351
    %v7353 = vpop.f32.mrb[0].mxu0
    %7354 = vdwg.mxu0
    %7355 = vmatprep.subr.mxu0 0.0
    %v7356 = vand.u32 %v6942, 4294901760
    %v7357 = vsub.f32 %v6942, %v7356
    %v7358 = vand.u32 %v7357, 4294901760
    %7359 = vmatpush1.msra.mxu0 %v7358
    %7360 = vmatprep.subr.mxu0 0.0
    %v7361 = vand.u32 %v6943, 4294901760
    %v7362 = vsub.f32 %v6943, %v7361
    %v7363 = vand.u32 %v7362, 4294901760
    %7364 = vmatpush1.msra.mxu0 %v7363
    %7365 = vmatprep.subr.mxu0 0.0
    %v7366 = vand.u32 %v6944, 4294901760
    %v7367 = vsub.f32 %v6944, %v7366
    %v7368 = vand.u32 %v7367, 4294901760
    %7369 = vmatpush1.msra.mxu0 %v7368
    %7370 = vmatprep.subr.mxu0 0.0
    %v7371 = vand.u32 %v6945, 4294901760
    %v7372 = vsub.f32 %v6945, %v7371
    %v7373 = vand.u32 %v7372, 4294901760
    %7374 = vmatpush1.msra.mxu0 %v7373
    %7375 = vmatprep.subr.mxu0 0.0
    %v7376 = vand.u32 %v6946, 4294901760
    %v7377 = vsub.f32 %v6946, %v7376
    %v7378 = vand.u32 %v7377, 4294901760
    %7379 = vmatpush1.msra.mxu0 %v7378
    %7380 = vmatprep.subr.mxu0 0.0
    %v7381 = vand.u32 %v6947, 4294901760
    %v7382 = vsub.f32 %v6947, %v7381
    %v7383 = vand.u32 %v7382, 4294901760
    %7384 = vmatpush1.msra.mxu0 %v7383
    %7385 = vmatprep.subr.mxu0 0.0
    %v7386 = vand.u32 %v6948, 4294901760
    %v7387 = vsub.f32 %v6948, %v7386
    %v7388 = vand.u32 %v7387, 4294901760
    %7389 = vmatpush1.msra.mxu0 %v7388
    %7390 = vmatprep.subr.mxu0 0.0
    %v7391 = vand.u32 %v6949, 4294901760
    %v7392 = vsub.f32 %v6949, %v7391
    %v7393 = vand.u32 %v7392, 4294901760
    %7394 = vmatpush1.msra.mxu0 %v7393
    %7395 = vmatprep.subr.mxu0 0.0
    %7396 = vmatpush1.msra.mxu0 0.0
    %7397 = vmatprep.subr.mxu0 0.0
    %7398 = vmatpush1.msra.mxu0 0.0
    %7399 = vmatprep.subr.mxu0 0.0
    %7400 = vmatpush1.msra.mxu0 0.0
    %7401 = vmatprep.subr.mxu0 0.0
    %7402 = vmatpush1.msra.mxu0 0.0
    %7403 = vmatprep.subr.mxu0 0.0
    %7404 = vmatpush1.msra.mxu0 0.0
    %7405 = vmatprep.subr.mxu0 0.0
    %7406 = vmatpush1.msra.mxu0 0.0
    %7407 = vmatprep.subr.mxu0 0.0
    %7408 = vmatpush1.msra.mxu0 0.0
    %7409 = vmatprep.subr.mxu0 0.0
    %7410 = vmatpush1.msra.mxu0 0.0
    %7411 = vmatprep.subr.mxu0 0.0
    %7412 = vmatpush1.msra.mxu0 0.0
    %7413 = vmatprep.subr.mxu0 0.0
    %7414 = vmatpush1.msra.mxu0 0.0
    %7415 = vmatprep.subr.mxu0 0.0
    %7416 = vmatpush1.msra.mxu0 0.0
    %7417 = vmatprep.subr.mxu0 0.0
    %7418 = vmatpush1.msra.mxu0 0.0
    %7419 = vmatprep.subr.mxu0 0.0
    %7420 = vmatpush1.msra.mxu0 0.0
    %7421 = vmatprep.subr.mxu0 0.0
    %7422 = vmatpush1.msra.mxu0 0.0
    %7423 = vmatprep.subr.mxu0 0.0
    %7424 = vmatpush1.msra.mxu0 0.0
    %7425 = vmatprep.subr.mxu0 0.0
    %7426 = vmatpush1.msra.mxu0 0.0
    %7427 = vmatprep.subr.mxu0 0.0
    %7428 = vmatpush1.msra.mxu0 0.0
    %7429 = vmatprep.subr.mxu0 0.0
    %7430 = vmatpush1.msra.mxu0 0.0
    %7431 = vmatprep.subr.mxu0 0.0
    %7432 = vmatpush1.msra.mxu0 0.0
    %7433 = vmatprep.subr.mxu0 0.0
    %7434 = vmatpush1.msra.mxu0 0.0
    %7435 = vmatprep.subr.mxu0 0.0
    %7436 = vmatpush1.msra.mxu0 0.0
    %7437 = vmatprep.subr.mxu0 0.0
    %7438 = vmatpush1.msra.mxu0 0.0
    %7439 = vmatprep.subr.mxu0 0.0
    %7440 = vmatpush1.msra.mxu0 0.0
    %7441 = vmatprep.subr.mxu0 0.0
    %7442 = vmatpush1.msra.mxu0 0.0
    %7443 = vmatprep.mubr.f32.mxu0 0.0
    %v7444 = vand.u32 %v6956, 4294901760
    %7445 = vmatmul.mubr.f32.gmra.mrb[0].mxu0 %v7444
    %v7446 = vpop.f32.mrb[0].mxu0
    %v7447 = vadd.f32 %v7344, %v7446
    %v7448 = vpop.f32.mrb[0].mxu0
    %7449 = vmatprep.mubr.f32.mxu0 0.0
    %v7450 = vand.u32 %v6959, 4294901760
    %7451 = vmatmul.mubr.f32.gmra.mrb[0].mxu0 %v7450
    %v7452 = vpop.f32.mrb[0].mxu0
    %v7453 = vadd.f32 %v7352, %v7452
    %v7454 = vpop.f32.mrb[0].mxu0
    %7455 = vdwg.mxu0
    %7456 = vmatprep.subr.mxu0 0.0
    %v7457 = vand.u32 %v6942, 4294901760
    %7458 = vmatpush1.msra.mxu0 %v7457
    %7459 = vmatprep.subr.mxu0 0.0
    %v7460 = vand.u32 %v6943, 4294901760
    %7461 = vmatpush1.msra.mxu0 %v7460
    %7462 = vmatprep.subr.mxu0 0.0
    %v7463 = vand.u32 %v6944, 4294901760
    %7464 = vmatpush1.msra.mxu0 %v7463
    %7465 = vmatprep.subr.mxu0 0.0
    %v7466 = vand.u32 %v6945, 4294901760
    %7467 = vmatpush1.msra.mxu0 %v7466
    %7468 = vmatprep.subr.mxu0 0.0
    %v7469 = vand.u32 %v6946, 4294901760
    %7470 = vmatpush1.msra.mxu0 %v7469
    %7471 = vmatprep.subr.mxu0 0.0
    %v7472 = vand.u32 %v6947, 4294901760
    %7473 = vmatpush1.msra.mxu0 %v7472
    %7474 = vmatprep.subr.mxu0 0.0
    %v7475 = vand.u32 %v6948, 4294901760
    %7476 = vmatpush1.msra.mxu0 %v7475
    %7477 = vmatprep.subr.mxu0 0.0
    %v7478 = vand.u32 %v6949, 4294901760
    %7479 = vmatpush1.msra.mxu0 %v7478
    %7480 = vmatprep.subr.mxu0 0.0
    %7481 = vmatpush1.msra.mxu0 0.0
    %7482 = vmatprep.subr.mxu0 0.0
    %7483 = vmatpush1.msra.mxu0 0.0
    %7484 = vmatprep.subr.mxu0 0.0
    %7485 = vmatpush1.msra.mxu0 0.0
    %7486 = vmatprep.subr.mxu0 0.0
    %7487 = vmatpush1.msra.mxu0 0.0
    %7488 = vmatprep.subr.mxu0 0.0
    %7489 = vmatpush1.msra.mxu0 0.0
    %7490 = vmatprep.subr.mxu0 0.0
    %7491 = vmatpush1.msra.mxu0 0.0
    %7492 = vmatprep.subr.mxu0 0.0
    %7493 = vmatpush1.msra.mxu0 0.0
    %7494 = vmatprep.subr.mxu0 0.0
    %7495 = vmatpush1.msra.mxu0 0.0
    %7496 = vmatprep.subr.mxu0 0.0
    %7497 = vmatpush1.msra.mxu0 0.0
    %7498 = vmatprep.subr.mxu0 0.0
    %7499 = vmatpush1.msra.mxu0 0.0
    %7500 = vmatprep.subr.mxu0 0.0
    %7501 = vmatpush1.msra.mxu0 0.0
    %7502 = vmatprep.subr.mxu0 0.0
    %7503 = vmatpush1.msra.mxu0 0.0
    %7504 = vmatprep.subr.mxu0 0.0
    %7505 = vmatpush1.msra.mxu0 0.0
    %7506 = vmatprep.subr.mxu0 0.0
    %7507 = vmatpush1.msra.mxu0 0.0
    %7508 = vmatprep.subr.mxu0 0.0
    %7509 = vmatpush1.msra.mxu0 0.0
    %7510 = vmatprep.subr.mxu0 0.0
    %7511 = vmatpush1.msra.mxu0 0.0
    %7512 = vmatprep.subr.mxu0 0.0
    %7513 = vmatpush1.msra.mxu0 0.0
    %7514 = vmatprep.subr.mxu0 0.0
    %7515 = vmatpush1.msra.mxu0 0.0
    %7516 = vmatprep.subr.mxu0 0.0
    %7517 = vmatpush1.msra.mxu0 0.0
    %7518 = vmatprep.subr.mxu0 0.0
    %7519 = vmatpush1.msra.mxu0 0.0
    %7520 = vmatprep.subr.mxu0 0.0
    %7521 = vmatpush1.msra.mxu0 0.0
    %7522 = vmatprep.subr.mxu0 0.0
    %7523 = vmatpush1.msra.mxu0 0.0
    %7524 = vmatprep.subr.mxu0 0.0
    %7525 = vmatpush1.msra.mxu0 0.0
    %7526 = vmatprep.subr.mxu0 0.0
    %7527 = vmatpush1.msra.mxu0 0.0
    %7528 = vmatprep.mubr.f32.mxu0 0.0
    %v7529 = vand.u32 %v6956, 4294901760
    %7530 = vmatmul.mubr.f32.gmra.mrb[0].mxu0 %v7529
    %v7531 = vpop.f32.mrb[0].mxu0
    %v7532 = vadd.f32 %v7447, %v7531
    %v7533 = vpop.f32.mrb[0].mxu0
    %7534 = vmatprep.mubr.f32.mxu0 0.0
    %v7535 = vand.u32 %v6959, 4294901760
    %7536 = vmatmul.mubr.f32.gmra.mrb[0].mxu0 %v7535
    %v7537 = vpop.f32.mrb[0].mxu0
    %v7538 = vadd.f32 %v7453, %v7537
    %v7539 = vpop.f32.mrb[0].mxu0
    %7540 = vdwg.mxu0
    %vm7541 = vcmp.ge.f32.partialorder %v7532, 0.0
    %vm7542 = vcmp.ge.f32.partialorder %v7538, 0.0
    %v7543 = vmul.f32 %v7532, 0.02
    %v7544 = vmul.f32 %v7538, 0.02
    %v7545 = vsel %vm7541, %v7532, %v7543
    %v7546 = vsel %vm7542, %v7538, %v7544
    %v7547 = vld [vmem:[#allocation3 + $0xf8] sm:$0xff]
    %v7548 = vld [vmem:[#allocation3 + $0x100] sm:$0xff]
    %v7549 = vld [vmem:[#allocation3 + $0x10a] sm:$0x1]
    %v7550 = vlaneseq
    %v7551 = vshrl.u32 %v7550, 7
    %v7552 = vsub.s32 0, %v7551
    %v7553 = vrot.slane %v7549, %v7552
    %v7555 = vsel %vm35, %v7545, 0
    %v7558 = vsel %vm35, %v7546, 0
    %7560 = vmatprep.subr.mxu0 0.0
    %v7561 = vand.u32 %v7547, 4294901760
    %7562 = vmatpush1.msra.mxu0 %v7561
    %7563 = vmatprep.subr.mxu0 0.0
    %v7564 = vand.u32 %v7548, 4294901760
    %7565 = vmatpush1.msra.mxu0 %v7564
    %7566 = vmatprep.subr.mxu0 0.0
    %7567 = vmatpush1.msra.mxu0 0.0
    %7568 = vmatprep.subr.mxu0 0.0
    %7569 = vmatpush1.msra.mxu0 0.0
    %7570 = vmatprep.subr.mxu0 0.0
    %7571 = vmatpush1.msra.mxu0 0.0
    %7572 = vmatprep.subr.mxu0 0.0
    %7573 = vmatpush1.msra.mxu0 0.0
    %7574 = vmatprep.subr.mxu0 0.0
    %7575 = vmatpush1.msra.mxu0 0.0
    %7576 = vmatprep.subr.mxu0 0.0
    %7577 = vmatpush1.msra.mxu0 0.0
    %7578 = vmatprep.subr.mxu0 0.0
    %7579 = vmatpush1.msra.mxu0 0.0
    %7580 = vmatprep.subr.mxu0 0.0
    %7581 = vmatpush1.msra.mxu0 0.0
    %7582 = vmatprep.subr.mxu0 0.0
    %7583 = vmatpush1.msra.mxu0 0.0
    %7584 = vmatprep.subr.mxu0 0.0
    %7585 = vmatpush1.msra.mxu0 0.0
    %7586 = vmatprep.subr.mxu0 0.0
    %7587 = vmatpush1.msra.mxu0 0.0
    %7588 = vmatprep.subr.mxu0 0.0
    %7589 = vmatpush1.msra.mxu0 0.0
    %7590 = vmatprep.subr.mxu0 0.0
    %7591 = vmatpush1.msra.mxu0 0.0
    %7592 = vmatprep.subr.mxu0 0.0
    %7593 = vmatpush1.msra.mxu0 0.0
    %7594 = vmatprep.subr.mxu0 0.0
    %7595 = vmatpush1.msra.mxu0 0.0
    %7596 = vmatprep.subr.mxu0 0.0
    %7597 = vmatpush1.msra.mxu0 0.0
    %7598 = vmatprep.subr.mxu0 0.0
    %7599 = vmatpush1.msra.mxu0 0.0
    %7600 = vmatprep.subr.mxu0 0.0
    %7601 = vmatpush1.msra.mxu0 0.0
    %7602 = vmatprep.subr.mxu0 0.0
    %7603 = vmatpush1.msra.mxu0 0.0
    %7604 = vmatprep.subr.mxu0 0.0
    %7605 = vmatpush1.msra.mxu0 0.0
    %7606 = vmatprep.subr.mxu0 0.0
    %7607 = vmatpush1.msra.mxu0 0.0
    %7608 = vmatprep.subr.mxu0 0.0
    %7609 = vmatpush1.msra.mxu0 0.0
    %7610 = vmatprep.subr.mxu0 0.0
    %7611 = vmatpush1.msra.mxu0 0.0
    %7612 = vmatprep.subr.mxu0 0.0
    %7613 = vmatpush1.msra.mxu0 0.0
    %7614 = vmatprep.subr.mxu0 0.0
    %7615 = vmatpush1.msra.mxu0 0.0
    %7616 = vmatprep.subr.mxu0 0.0
    %7617 = vmatpush1.msra.mxu0 0.0
    %7618 = vmatprep.subr.mxu0 0.0
    %7619 = vmatpush1.msra.mxu0 0.0
    %7620 = vmatprep.subr.mxu0 0.0
    %7621 = vmatpush1.msra.mxu0 0.0
    %7622 = vmatprep.subr.mxu0 0.0
    %7623 = vmatpush1.msra.mxu0 0.0
    %7624 = vmatprep.subr.mxu0 0.0
    %7625 = vmatpush1.msra.mxu0 0.0
    %7626 = vmatprep.mubr.f32.mxu0 0.0
    %v7627 = vand.u32 %v7555, 4294901760
    %v7628 = vsub.f32 %v7555, %v7627
    %v7629 = vand.u32 %v7628, 4294901760
    %v7630 = vsub.f32 %v7628, %v7629
    %v7631 = vand.u32 %v7630, 4294901760
    %7632 = vmatmul.mubr.f32.gmra.mrb[0].mxu0 %v7631
    %v7633 = vpop.f32.mrb[0].mxu0
    %v7634 = vadd.f32 %v7553, %v7633
    %v7635 = vpop.f32.mrb[0].mxu0
    %7636 = vmatprep.mubr.f32.mxu0 0.0
    %v7637 = vand.u32 %v7558, 4294901760
    %v7638 = vsub.f32 %v7558, %v7637
    %v7639 = vand.u32 %v7638, 4294901760
    %v7640 = vsub.f32 %v7638, %v7639
    %v7641 = vand.u32 %v7640, 4294901760
    %7642 = vmatmul.mubr.f32.gmra.mrb[0].mxu0 %v7641
    %v7643 = vpop.f32.mrb[0].mxu0
    %v7644 = vadd.f32 %v7553, %v7643
    %v7645 = vpop.f32.mrb[0].mxu0
    %7646 = vdwg.mxu0
    %7647 = vmatprep.subr.mxu0 0.0
    %v7648 = vand.u32 %v7547, 4294901760
    %v7649 = vsub.f32 %v7547, %v7648
    %v7650 = vand.u32 %v7649, 4294901760
    %v7651 = vsub.f32 %v7649, %v7650
    %v7652 = vand.u32 %v7651, 4294901760
    %7653 = vmatpush1.msra.mxu0 %v7652
    %7654 = vmatprep.subr.mxu0 0.0
    %v7655 = vand.u32 %v7548, 4294901760
    %v7656 = vsub.f32 %v7548, %v7655
    %v7657 = vand.u32 %v7656, 4294901760
    %v7658 = vsub.f32 %v7656, %v7657
    %v7659 = vand.u32 %v7658, 4294901760
    %7660 = vmatpush1.msra.mxu0 %v7659
    %7661 = vmatprep.subr.mxu0 0.0
    %7662 = vmatpush1.msra.mxu0 0.0
    %7663 = vmatprep.subr.mxu0 0.0
    %7664 = vmatpush1.msra.mxu0 0.0
    %7665 = vmatprep.subr.mxu0 0.0
    %7666 = vmatpush1.msra.mxu0 0.0
    %7667 = vmatprep.subr.mxu0 0.0
    %7668 = vmatpush1.msra.mxu0 0.0
    %7669 = vmatprep.subr.mxu0 0.0
    %7670 = vmatpush1.msra.mxu0 0.0
    %7671 = vmatprep.subr.mxu0 0.0
    %7672 = vmatpush1.msra.mxu0 0.0
    %7673 = vmatprep.subr.mxu0 0.0
    %7674 = vmatpush1.msra.mxu0 0.0
    %7675 = vmatprep.subr.mxu0 0.0
    %7676 = vmatpush1.msra.mxu0 0.0
    %7677 = vmatprep.subr.mxu0 0.0
    %7678 = vmatpush1.msra.mxu0 0.0
    %7679 = vmatprep.subr.mxu0 0.0
    %7680 = vmatpush1.msra.mxu0 0.0
    %7681 = vmatprep.subr.mxu0 0.0
    %7682 = vmatpush1.msra.mxu0 0.0
    %7683 = vmatprep.subr.mxu0 0.0
    %7684 = vmatpush1.msra.mxu0 0.0
    %7685 = vmatprep.subr.mxu0 0.0
    %7686 = vmatpush1.msra.mxu0 0.0
    %7687 = vmatprep.subr.mxu0 0.0
    %7688 = vmatpush1.msra.mxu0 0.0
    %7689 = vmatprep.subr.mxu0 0.0
    %7690 = vmatpush1.msra.mxu0 0.0
    %7691 = vmatprep.subr.mxu0 0.0
    %7692 = vmatpush1.msra.mxu0 0.0
    %7693 = vmatprep.subr.mxu0 0.0
    %7694 = vmatpush1.msra.mxu0 0.0
    %7695 = vmatprep.subr.mxu0 0.0
    %7696 = vmatpush1.msra.mxu0 0.0
    %7697 = vmatprep.subr.mxu0 0.0
    %7698 = vmatpush1.msra.mxu0 0.0
    %7699 = vmatprep.subr.mxu0 0.0
    %7700 = vmatpush1.msra.mxu0 0.0
    %7701 = vmatprep.subr.mxu0 0.0
    %7702 = vmatpush1.msra.mxu0 0.0
    %7703 = vmatprep.subr.mxu0 0.0
    %7704 = vmatpush1.msra.mxu0 0.0
    %7705 = vmatprep.subr.mxu0 0.0
    %7706 = vmatpush1.msra.mxu0 0.0
    %7707 = vmatprep.subr.mxu0 0.0
    %7708 = vmatpush1.msra.mxu0 0.0
    %7709 = vmatprep.subr.mxu0 0.0
    %7710 = vmatpush1.msra.mxu0 0.0
    %7711 = vmatprep.subr.mxu0 0.0
    %7712 = vmatpush1.msra.mxu0 0.0
    %7713 = vmatprep.subr.mxu0 0.0
    %7714 = vmatpush1.msra.mxu0 0.0
    %7715 = vmatprep.subr.mxu0 0.0
    %7716 = vmatpush1.msra.mxu0 0.0
    %7717 = vmatprep.subr.mxu0 0.0
    %7718 = vmatpush1.msra.mxu0 0.0
    %7719 = vmatprep.subr.mxu0 0.0
    %7720 = vmatpush1.msra.mxu0 0.0
    %7721 = vmatprep.mubr.f32.mxu0 0.0
    %v7722 = vand.u32 %v7555, 4294901760
    %7723 = vmatmul.mubr.f32.gmra.mrb[0].mxu0 %v7722
    %v7724 = vpop.f32.mrb[0].mxu0
    %v7725 = vadd.f32 %v7634, %v7724
    %v7726 = vpop.f32.mrb[0].mxu0
    %7727 = vmatprep.mubr.f32.mxu0 0.0
    %v7728 = vand.u32 %v7558, 4294901760
    %7729 = vmatmul.mubr.f32.gmra.mrb[0].mxu0 %v7728
    %v7730 = vpop.f32.mrb[0].mxu0
    %v7731 = vadd.f32 %v7644, %v7730
    %v7732 = vpop.f32.mrb[0].mxu0
    %7733 = vdwg.mxu0
    %7734 = vmatprep.subr.mxu0 0.0
    %v7735 = vand.u32 %v7547, 4294901760
    %v7736 = vsub.f32 %v7547, %v7735
    %7737 = vmatpush1.msra.mxu0 %v7736
    %7738 = vmatprep.subr.mxu0 0.0
    %v7739 = vand.u32 %v7548, 4294901760
    %v7740 = vsub.f32 %v7548, %v7739
    %7741 = vmatpush1.msra.mxu0 %v7740
    %7742 = vmatprep.subr.mxu0 0.0
    %7743 = vmatpush1.msra.mxu0 0.0
    %7744 = vmatprep.subr.mxu0 0.0
    %7745 = vmatpush1.msra.mxu0 0.0
    %7746 = vmatprep.subr.mxu0 0.0
    %7747 = vmatpush1.msra.mxu0 0.0
    %7748 = vmatprep.subr.mxu0 0.0
    %7749 = vmatpush1.msra.mxu0 0.0
    %7750 = vmatprep.subr.mxu0 0.0
    %7751 = vmatpush1.msra.mxu0 0.0
    %7752 = vmatprep.subr.mxu0 0.0
    %7753 = vmatpush1.msra.mxu0 0.0
    %7754 = vmatprep.subr.mxu0 0.0
    %7755 = vmatpush1.msra.mxu0 0.0
    %7756 = vmatprep.subr.mxu0 0.0
    %7757 = vmatpush1.msra.mxu0 0.0
    %7758 = vmatprep.subr.mxu0 0.0
    %7759 = vmatpush1.msra.mxu0 0.0
    %7760 = vmatprep.subr.mxu0 0.0
    %7761 = vmatpush1.msra.mxu0 0.0
    %7762 = vmatprep.subr.mxu0 0.0
    %7763 = vmatpush1.msra.mxu0 0.0
    %7764 = vmatprep.subr.mxu0 0.0
    %7765 = vmatpush1.msra.mxu0 0.0
    %7766 = vmatprep.subr.mxu0 0.0
    %7767 = vmatpush1.msra.mxu0 0.0
    %7768 = vmatprep.subr.mxu0 0.0
    %7769 = vmatpush1.msra.mxu0 0.0
    %7770 = vmatprep.subr.mxu0 0.0
    %7771 = vmatpush1.msra.mxu0 0.0
    %7772 = vmatprep.subr.mxu0 0.0
    %7773 = vmatpush1.msra.mxu0 0.0
    %7774 = vmatprep.subr.mxu0 0.0
    %7775 = vmatpush1.msra.mxu0 0.0
    %7776 = vmatprep.subr.mxu0 0.0
    %7777 = vmatpush1.msra.mxu0 0.0
    %7778 = vmatprep.subr.mxu0 0.0
    %7779 = vmatpush1.msra.mxu0 0.0
    %7780 = vmatprep.subr.mxu0 0.0
    %7781 = vmatpush1.msra.mxu0 0.0
    %7782 = vmatprep.subr.mxu0 0.0
    %7783 = vmatpush1.msra.mxu0 0.0
    %7784 = vmatprep.subr.mxu0 0.0
    %7785 = vmatpush1.msra.mxu0 0.0
    %7786 = vmatprep.subr.mxu0 0.0
    %7787 = vmatpush1.msra.mxu0 0.0
    %7788 = vmatprep.subr.mxu0 0.0
    %7789 = vmatpush1.msra.mxu0 0.0
    %7790 = vmatprep.subr.mxu0 0.0
    %7791 = vmatpush1.msra.mxu0 0.0
    %7792 = vmatprep.subr.mxu0 0.0
    %7793 = vmatpush1.msra.mxu0 0.0
    %7794 = vmatprep.subr.mxu0 0.0
    %7795 = vmatpush1.msra.mxu0 0.0
    %7796 = vmatprep.subr.mxu0 0.0
    %7797 = vmatpush1.msra.mxu0 0.0
    %7798 = vmatprep.subr.mxu0 0.0
    %7799 = vmatpush1.msra.mxu0 0.0
    %7800 = vmatprep.subr.mxu0 0.0
    %7801 = vmatpush1.msra.mxu0 0.0
    %7802 = vmatprep.mubr.f32.mxu0 0.0
    %v7803 = vand.u32 %v7555, 4294901760
    %v7804 = vsub.f32 %v7555, %v7803
    %7805 = vmatmul.mubr.f32.gmra.mrb[0].mxu0 %v7804
    %v7806 = vpop.f32.mrb[0].mxu0
    %v7807 = vadd.f32 %v7725, %v7806
    %v7808 = vpop.f32.mrb[0].mxu0
    %7809 = vmatprep.mubr.f32.mxu0 0.0
    %v7810 = vand.u32 %v7558, 4294901760
    %v7811 = vsub.f32 %v7558, %v7810
    %7812 = vmatmul.mubr.f32.gmra.mrb[0].mxu0 %v7811
    %v7813 = vpop.f32.mrb[0].mxu0
    %v7814 = vadd.f32 %v7731, %v7813
    %v7815 = vpop.f32.mrb[0].mxu0
    %7816 = vdwg.mxu0
    %7817 = vmatprep.subr.mxu0 0.0
    %v7818 = vand.u32 %v7547, 4294901760
    %7819 = vmatpush1.msra.mxu0 %v7818
    %7820 = vmatprep.subr.mxu0 0.0
    %v7821 = vand.u32 %v7548, 4294901760
    %7822 = vmatpush1.msra.mxu0 %v7821
    %7823 = vmatprep.subr.mxu0 0.0
    %7824 = vmatpush1.msra.mxu0 0.0
    %7825 = vmatprep.subr.mxu0 0.0
    %7826 = vmatpush1.msra.mxu0 0.0
    %7827 = vmatprep.subr.mxu0 0.0
    %7828 = vmatpush1.msra.mxu0 0.0
    %7829 = vmatprep.subr.mxu0 0.0
    %7830 = vmatpush1.msra.mxu0 0.0
    %7831 = vmatprep.subr.mxu0 0.0
    %7832 = vmatpush1.msra.mxu0 0.0
    %7833 = vmatprep.subr.mxu0 0.0
    %7834 = vmatpush1.msra.mxu0 0.0
    %7835 = vmatprep.subr.mxu0 0.0
    %7836 = vmatpush1.msra.mxu0 0.0
    %7837 = vmatprep.subr.mxu0 0.0
    %7838 = vmatpush1.msra.mxu0 0.0
    %7839 = vmatprep.subr.mxu0 0.0
    %7840 = vmatpush1.msra.mxu0 0.0
    %7841 = vmatprep.subr.mxu0 0.0
    %7842 = vmatpush1.msra.mxu0 0.0
    %7843 = vmatprep.subr.mxu0 0.0
    %7844 = vmatpush1.msra.mxu0 0.0
    %7845 = vmatprep.subr.mxu0 0.0
    %7846 = vmatpush1.msra.mxu0 0.0
    %7847 = vmatprep.subr.mxu0 0.0
    %7848 = vmatpush1.msra.mxu0 0.0
    %7849 = vmatprep.subr.mxu0 0.0
    %7850 = vmatpush1.msra.mxu0 0.0
    %7851 = vmatprep.subr.mxu0 0.0
    %7852 = vmatpush1.msra.mxu0 0.0
    %7853 = vmatprep.subr.mxu0 0.0
    %7854 = vmatpush1.msra.mxu0 0.0
    %7855 = vmatprep.subr.mxu0 0.0
    %7856 = vmatpush1.msra.mxu0 0.0
    %7857 = vmatprep.subr.mxu0 0.0
    %7858 = vmatpush1.msra.mxu0 0.0
    %7859 = vmatprep.subr.mxu0 0.0
    %7860 = vmatpush1.msra.mxu0 0.0
    %7861 = vmatprep.subr.mxu0 0.0
    %7862 = vmatpush1.msra.mxu0 0.0
    %7863 = vmatprep.subr.mxu0 0.0
    %7864 = vmatpush1.msra.mxu0 0.0
    %7865 = vmatprep.subr.mxu0 0.0
    %7866 = vmatpush1.msra.mxu0 0.0
    %7867 = vmatprep.subr.mxu0 0.0
    %7868 = vmatpush1.msra.mxu0 0.0
    %7869 = vmatprep.subr.mxu0 0.0
    %7870 = vmatpush1.msra.mxu0 0.0
    %7871 = vmatprep.subr.mxu0 0.0
    %7872 = vmatpush1.msra.mxu0 0.0
    %7873 = vmatprep.subr.mxu0 0.0
    %7874 = vmatpush1.msra.mxu0 0.0
    %7875 = vmatprep.subr.mxu0 0.0
    %7876 = vmatpush1.msra.mxu0 0.0
    %7877 = vmatprep.subr.mxu0 0.0
    %7878 = vmatpush1.msra.mxu0 0.0
    %7879 = vmatprep.subr.mxu0 0.0
    %7880 = vmatpush1.msra.mxu0 0.0
    %7881 = vmatprep.subr.mxu0 0.0
    %7882 = vmatpush1.msra.mxu0 0.0
    %7883 = vmatprep.mubr.f32.mxu0 0.0
    %v7884 = vand.u32 %v7555, 4294901760
    %v7885 = vsub.f32 %v7555, %v7884
    %v7886 = vand.u32 %v7885, 4294901760
    %7887 = vmatmul.mubr.f32.gmra.mrb[0].mxu0 %v7886
    %v7888 = vpop.f32.mrb[0].mxu0
    %v7889 = vadd.f32 %v7807, %v7888
    %v7890 = vpop.f32.mrb[0].mxu0
    %7891 = vmatprep.mubr.f32.mxu0 0.0
    %v7892 = vand.u32 %v7558, 4294901760
    %v7893 = vsub.f32 %v7558, %v7892
    %v7894 = vand.u32 %v7893, 4294901760
    %7895 = vmatmul.mubr.f32.gmra.mrb[0].mxu0 %v7894
    %v7896 = vpop.f32.mrb[0].mxu0
    %v7897 = vadd.f32 %v7814, %v7896
    %v7898 = vpop.f32.mrb[0].mxu0
    %7899 = vdwg.mxu0
    %7900 = vmatprep.subr.mxu0 0.0
    %v7901 = vand.u32 %v7547, 4294901760
    %v7902 = vsub.f32 %v7547, %v7901
    %v7903 = vand.u32 %v7902, 4294901760
    %7904 = vmatpush1.msra.mxu0 %v7903
    %7905 = vmatprep.subr.mxu0 0.0
    %v7906 = vand.u32 %v7548, 4294901760
    %v7907 = vsub.f32 %v7548, %v7906
    %v7908 = vand.u32 %v7907, 4294901760
    %7909 = vmatpush1.msra.mxu0 %v7908
    %7910 = vmatprep.subr.mxu0 0.0
    %7911 = vmatpush1.msra.mxu0 0.0
    %7912 = vmatprep.subr.mxu0 0.0
    %7913 = vmatpush1.msra.mxu0 0.0
    %7914 = vmatprep.subr.mxu0 0.0
    %7915 = vmatpush1.msra.mxu0 0.0
    %7916 = vmatprep.subr.mxu0 0.0
    %7917 = vmatpush1.msra.mxu0 0.0
    %7918 = vmatprep.subr.mxu0 0.0
    %7919 = vmatpush1.msra.mxu0 0.0
    %7920 = vmatprep.subr.mxu0 0.0
    %7921 = vmatpush1.msra.mxu0 0.0
    %7922 = vmatprep.subr.mxu0 0.0
    %7923 = vmatpush1.msra.mxu0 0.0
    %7924 = vmatprep.subr.mxu0 0.0
    %7925 = vmatpush1.msra.mxu0 0.0
    %7926 = vmatprep.subr.mxu0 0.0
    %7927 = vmatpush1.msra.mxu0 0.0
    %7928 = vmatprep.subr.mxu0 0.0
    %7929 = vmatpush1.msra.mxu0 0.0
    %7930 = vmatprep.subr.mxu0 0.0
    %7931 = vmatpush1.msra.mxu0 0.0
    %7932 = vmatprep.subr.mxu0 0.0
    %7933 = vmatpush1.msra.mxu0 0.0
    %7934 = vmatprep.subr.mxu0 0.0
    %7935 = vmatpush1.msra.mxu0 0.0
    %7936 = vmatprep.subr.mxu0 0.0
    %7937 = vmatpush1.msra.mxu0 0.0
    %7938 = vmatprep.subr.mxu0 0.0
    %7939 = vmatpush1.msra.mxu0 0.0
    %7940 = vmatprep.subr.mxu0 0.0
    %7941 = vmatpush1.msra.mxu0 0.0
    %7942 = vmatprep.subr.mxu0 0.0
    %7943 = vmatpush1.msra.mxu0 0.0
    %7944 = vmatprep.subr.mxu0 0.0
    %7945 = vmatpush1.msra.mxu0 0.0
    %7946 = vmatprep.subr.mxu0 0.0
    %7947 = vmatpush1.msra.mxu0 0.0
    %7948 = vmatprep.subr.mxu0 0.0
    %7949 = vmatpush1.msra.mxu0 0.0
    %7950 = vmatprep.subr.mxu0 0.0
    %7951 = vmatpush1.msra.mxu0 0.0
    %7952 = vmatprep.subr.mxu0 0.0
    %7953 = vmatpush1.msra.mxu0 0.0
    %7954 = vmatprep.subr.mxu0 0.0
    %7955 = vmatpush1.msra.mxu0 0.0
    %7956 = vmatprep.subr.mxu0 0.0
    %7957 = vmatpush1.msra.mxu0 0.0
    %7958 = vmatprep.subr.mxu0 0.0
    %7959 = vmatpush1.msra.mxu0 0.0
    %7960 = vmatprep.subr.mxu0 0.0
    %7961 = vmatpush1.msra.mxu0 0.0
    %7962 = vmatprep.subr.mxu0 0.0
    %7963 = vmatpush1.msra.mxu0 0.0
    %7964 = vmatprep.subr.mxu0 0.0
    %7965 = vmatpush1.msra.mxu0 0.0
    %7966 = vmatprep.subr.mxu0 0.0
    %7967 = vmatpush1.msra.mxu0 0.0
    %7968 = vmatprep.subr.mxu0 0.0
    %7969 = vmatpush1.msra.mxu0 0.0
    %7970 = vmatprep.mubr.f32.mxu0 0.0
    %v7971 = vand.u32 %v7555, 4294901760
    %7972 = vmatmul.mubr.f32.gmra.mrb[0].mxu0 %v7971
    %v7973 = vpop.f32.mrb[0].mxu0
    %v7974 = vadd.f32 %v7889, %v7973
    %v7975 = vpop.f32.mrb[0].mxu0
    %7976 = vmatprep.mubr.f32.mxu0 0.0
    %v7977 = vand.u32 %v7558, 4294901760
    %7978 = vmatmul.mubr.f32.gmra.mrb[0].mxu0 %v7977
    %v7979 = vpop.f32.mrb[0].mxu0
    %v7980 = vadd.f32 %v7897, %v7979
    %v7981 = vpop.f32.mrb[0].mxu0
    %7982 = vdwg.mxu0
    %7983 = vmatprep.subr.mxu0 0.0
    %v7984 = vand.u32 %v7547, 4294901760
    %7985 = vmatpush1.msra.mxu0 %v7984
    %7986 = vmatprep.subr.mxu0 0.0
    %v7987 = vand.u32 %v7548, 4294901760
    %7988 = vmatpush1.msra.mxu0 %v7987
    %7989 = vmatprep.subr.mxu0 0.0
    %7990 = vmatpush1.msra.mxu0 0.0
    %7991 = vmatprep.subr.mxu0 0.0
    %7992 = vmatpush1.msra.mxu0 0.0
    %7993 = vmatprep.subr.mxu0 0.0
    %7994 = vmatpush1.msra.mxu0 0.0
    %7995 = vmatprep.subr.mxu0 0.0
    %7996 = vmatpush1.msra.mxu0 0.0
    %7997 = vmatprep.subr.mxu0 0.0
    %7998 = vmatpush1.msra.mxu0 0.0
    %7999 = vmatprep.subr.mxu0 0.0
    %8000 = vmatpush1.msra.mxu0 0.0
    %8001 = vmatprep.subr.mxu0 0.0
    %8002 = vmatpush1.msra.mxu0 0.0
    %8003 = vmatprep.subr.mxu0 0.0
    %8004 = vmatpush1.msra.mxu0 0.0
    %8005 = vmatprep.subr.mxu0 0.0
    %8006 = vmatpush1.msra.mxu0 0.0
    %8007 = vmatprep.subr.mxu0 0.0
    %8008 = vmatpush1.msra.mxu0 0.0
    %8009 = vmatprep.subr.mxu0 0.0
    %8010 = vmatpush1.msra.mxu0 0.0
    %8011 = vmatprep.subr.mxu0 0.0
    %8012 = vmatpush1.msra.mxu0 0.0
    %8013 = vmatprep.subr.mxu0 0.0
    %8014 = vmatpush1.msra.mxu0 0.0
    %8015 = vmatprep.subr.mxu0 0.0
    %8016 = vmatpush1.msra.mxu0 0.0
    %8017 = vmatprep.subr.mxu0 0.0
    %8018 = vmatpush1.msra.mxu0 0.0
    %8019 = vmatprep.subr.mxu0 0.0
    %8020 = vmatpush1.msra.mxu0 0.0
    %8021 = vmatprep.subr.mxu0 0.0
    %8022 = vmatpush1.msra.mxu0 0.0
    %8023 = vmatprep.subr.mxu0 0.0
    %8024 = vmatpush1.msra.mxu0 0.0
    %8025 = vmatprep.subr.mxu0 0.0
    %8026 = vmatpush1.msra.mxu0 0.0
    %8027 = vmatprep.subr.mxu0 0.0
    %8028 = vmatpush1.msra.mxu0 0.0
    %8029 = vmatprep.subr.mxu0 0.0
    %8030 = vmatpush1.msra.mxu0 0.0
    %8031 = vmatprep.subr.mxu0 0.0
    %8032 = vmatpush1.msra.mxu0 0.0
    %8033 = vmatprep.subr.mxu0 0.0
    %8034 = vmatpush1.msra.mxu0 0.0
    %8035 = vmatprep.subr.mxu0 0.0
    %8036 = vmatpush1.msra.mxu0 0.0
    %8037 = vmatprep.subr.mxu0 0.0
    %8038 = vmatpush1.msra.mxu0 0.0
    %8039 = vmatprep.subr.mxu0 0.0
    %8040 = vmatpush1.msra.mxu0 0.0
    %8041 = vmatprep.subr.mxu0 0.0
    %8042 = vmatpush1.msra.mxu0 0.0
    %8043 = vmatprep.subr.mxu0 0.0
    %8044 = vmatpush1.msra.mxu0 0.0
    %8045 = vmatprep.subr.mxu0 0.0
    %8046 = vmatpush1.msra.mxu0 0.0
    %8047 = vmatprep.subr.mxu0 0.0
    %8048 = vmatpush1.msra.mxu0 0.0
    %8049 = vmatprep.mubr.f32.mxu0 0.0
    %v8050 = vand.u32 %v7555, 4294901760
    %8051 = vmatmul.mubr.f32.gmra.mrb[0].mxu0 %v8050
    %v8052 = vpop.f32.mrb[0].mxu0
    %v8053 = vadd.f32 %v7974, %v8052
    %v8054 = vpop.f32.mrb[0].mxu0
    %8055 = vmatprep.mubr.f32.mxu0 0.0
    %v8056 = vand.u32 %v7558, 4294901760
    %8057 = vmatmul.mubr.f32.gmra.mrb[0].mxu0 %v8056
    %v8058 = vpop.f32.mrb[0].mxu0
    %v8059 = vadd.f32 %v7980, %v8058
    %v8060 = vpop.f32.mrb[0].mxu0
    %8061 = vdwg.mxu0
    %vm8062 = vcmask 31744
    %v8063 = vsel %vm8062, %v8053, -inf
    %8064 = vmax.xlane.f32.xlu0 %v8063
    %v8065 = vpop.xlane.xlu0 %8064
    %v8066 = vsel %vm8062, %v8059, -inf
    %8067 = vmax.xlane.f32.xlu0 %v8066
    %v8068 = vpop.xlane.xlu0 %8067
    %v8069 = vsub.f32 %v8053, %v8065
    %v8070 = vsub.f32 %v8059, %v8068
    %v8071 = vmul.f32 %v8069, 1.442695
    %v8072 = vpow.pop %v8071
    %v8073 = vmul.f32 %v8070, 1.442695
    %v8074 = vpow.pop %v8073
    %v8075 = vsel %vm8062, %v8072, 0.0
    %8076 = vadd.xlane.f32.xlu0 %v8075
    %v8077 = vpop.xlane.xlu0 %8076
    %v8078 = vsel %vm8062, %v8074, 0.0
    %8079 = vadd.xlane.f32.xlu0 %v8078
    %v8080 = vpop.xlane.xlu0 %8079
    %v8081 = vlog2.pop %v8077
    %v8082 = vmul.f32 %v8081, 0.6931472
    %v8083 = vlog2.pop %v8080
    %v8084 = vmul.f32 %v8083, 0.6931472
    %v8085 = vadd.f32 %v8082, %v8065
    %v8086 = vadd.f32 %v8084, %v8068
    %v8087 = vsub.f32 %v8053, %v8085
    %v8088 = vsub.f32 %v8059, %v8086
    %8089 = vst.msk [vmem:[%s3] sm:$0xff] %vm8062, %v8087
    %8090 = vst.msk [vmem:[%s3 + $0x8] sm:$0xff] %vm8062, %v8088
    // Predicated region
    $region18: #{tpu_custom_call.1} parent=1 // pred_check
      _
    $region19: #{tpu_custom_call.1} parent=1 // pred_check_branch
      %8092 = sbr.rel (0) target = $region21
    $region20: #{tpu_custom_call.1} parent=1 // pred_region
      _
    $region21: #{tpu_custom_call.1} parent=1 // pred_fallthru
      _
    // Predicated region
    $region22: #{tpu_custom_call.1} parent=1 // pred_check
      _
    $region23: #{tpu_custom_call.1} parent=1 // pred_check_branch
      %8094 = sbr.rel (0) target = $region25
    $region24: #{tpu_custom_call.1} parent=1 // pred_region
      _
    $region25: #{tpu_custom_call.1} parent=1 // pred_fallthru
      _
    %8095 = vsyncpa [#allocation4], 1

</llo_original>
